<compile_context>
chip_gen: v6e
topology: v6e:2x2x1
jax: 0.10.0
libtpu: 0.0.40
codegen_flags: <defaults>
</compile_context>

<pallas_src>
import functools
import numpy as np
import jax
import jax.numpy as jnp
from jax.experimental import pallas as pl
from jax.experimental.pallas import tpu as pltpu

VMEM_LIMIT = 48 * 1024 * 1024    # headroom below v7x's 64 MiB physical VMEM
LN_EPS = 1e-5
ACT_DTYPE = jnp.bfloat16         # inter-kernel activations stored bf16 in HBM
_SQRT_2_OVER_PI = 0.7978845608028654


def _row_tile(M, target=512):
    """Row tile: whole array when small, else largest sublane-aligned divisor
    <= target; if none exists, return the aligned target and let a pl.cdiv grid
    mask the ragged tail (no more silent whole-array blocks)."""
    if M <= target:
        return M
    t = target - (target % 8)
    while t >= 8:
        if M % t == 0:
            return t
        t -= 8
    return target - (target % 8)


def _win_tile(nW, target=8):
    t = min(nW, target)
    while nW % t:
        t -= 1
    return t


def _cparams(n_axes=1):
    # TODO(synk): on v7x consider pltpu.CORE_PARALLEL on the leading grid axis
    # and pl.Buffered(1) on grid-invariant weight blocks for extra VMEM headroom.
    return pltpu.CompilerParams(dimension_semantics=("parallel",) * n_axes,
                                vmem_limit_bytes=VMEM_LIMIT)


# ------------------------------ kernel bodies -------------------------------

def _ln(x, g, b, eps):
    mean = jnp.mean(x, axis=-1, keepdims=True)
    var = jnp.mean(jnp.square(x - mean), axis=-1, keepdims=True)
    return (x - mean) * jax.lax.rsqrt(var + eps) * g + b


def _gelu(x):
    # tanh-approx GELU (torch.nn.GELU default is exact erf; abs diff ~1e-3,
    # below the bf16 activation noise floor used here).
    return 0.5 * x * (1.0 + jnp.tanh(_SQRT_2_OVER_PI * (x + 0.044715 * x * x * x)))


def _layernorm_kernel(x_ref, g_ref, b_ref, o_ref, *, eps):
    x = x_ref[...].astype(jnp.float32)
    o_ref[...] = _ln(x, g_ref[...].astype(jnp.float32),
                     b_ref[...].astype(jnp.float32), eps).astype(o_ref.dtype)


def _linear_ln_kernel(x_ref, w_ref, b_ref, g_ref, gb_ref, o_ref, *, eps):
    # patch embed: y = LN(x @ w + b)
    y = jnp.dot(x_ref[...].astype(jnp.bfloat16), w_ref[...].astype(jnp.bfloat16),
                preferred_element_type=jnp.float32) + b_ref[...].astype(jnp.float32)
    o_ref[...] = _ln(y, g_ref[...].astype(jnp.float32),
                     gb_ref[...].astype(jnp.float32), eps).astype(o_ref.dtype)


def _ln_linear_kernel(x_ref, g_ref, gb_ref, w_ref, b_ref, o_ref, *, eps):
    # QKV projection / patch-merging reduction: y = LN(x) @ w + b
    xn = _ln(x_ref[...].astype(jnp.float32), g_ref[...].astype(jnp.float32),
             gb_ref[...].astype(jnp.float32), eps)
    y = jnp.dot(xn.astype(jnp.bfloat16), w_ref[...].astype(jnp.bfloat16),
                preferred_element_type=jnp.float32) + b_ref[...].astype(jnp.float32)
    o_ref[...] = y.astype(o_ref.dtype)


def _add_ln_mlp_kernel(a_ref, r_ref, g_ref, gb_ref, w1_ref, b1_ref, w2_ref, b2_ref,
                       o_ref, *, eps):
    # x = a + r ; out = x + fc2(GELU(fc1(LN(x))))   (both residual adds fused)
    x = a_ref[...].astype(jnp.float32) + r_ref[...].astype(jnp.float32)
    xn = _ln(x, g_ref[...].astype(jnp.float32), gb_ref[...].astype(jnp.float32), eps)
    h = jnp.dot(xn.astype(jnp.bfloat16), w1_ref[...].astype(jnp.bfloat16),
                preferred_element_type=jnp.float32) + b1_ref[...].astype(jnp.float32)
    h = _gelu(h)
    y = jnp.dot(h.astype(jnp.bfloat16), w2_ref[...].astype(jnp.bfloat16),
                preferred_element_type=jnp.float32) + b2_ref[...].astype(jnp.float32)
    o_ref[...] = (x + y).astype(o_ref.dtype)
    # TODO(synk): at the full config (C=1024, hidden=4096) chunk the hidden dim
    # over a grid axis with an f32 accumulator instead of holding w1+w2 whole.


def _wattn_proj_kernel(qkv_ref, rel_ref, *rest, num_heads, scale, has_mask):
    # Wt windows x B images per grid step.  The relative-position bias is shared
    # by every window; the shift mask (if any) is indexed per window by its own
    # BlockSpec.  The output projection is folded into the per-head loop so head
    # outputs are never concatenated on the lane dim.
    if has_mask:
        mask_ref, pw_ref, pb_ref, o_ref = rest
    else:
        mask_ref = None
        pw_ref, pb_ref, o_ref = rest
    Wt, B, N, C3 = qkv_ref.shape
    C = C3 // 3
    d = C // num_heads
    WB = Wt * B

    qkv = qkv_ref[...]                                    # (Wt, B, N, 3C) bf16
    rel = rel_ref[...].astype(jnp.float32)                # (heads, N, N)
    mask = mask_ref[...].astype(jnp.float32) if has_mask else None   # (Wt, N, N)
    pw = pw_ref[...].astype(jnp.bfloat16)                 # (C, C)
    pb = pb_ref[...].astype(jnp.float32)                  # (1, C)

    y = jnp.zeros((WB * N, C), jnp.float32) + pb
    for h in range(num_heads):
        qh = qkv[..., h * d:(h + 1) * d].reshape(WB, N, d)
        kh = qkv[..., C + h * d:C + (h + 1) * d].reshape(WB, N, d)
        vh = qkv[..., 2 * C + h * d:2 * C + (h + 1) * d].reshape(WB, N, d)
        s = jnp.einsum('bnd,bmd->bnm', qh, kh,
                       preferred_element_type=jnp.float32) * scale   # (WB, N, N)
        s = s.reshape(Wt, B, N, N) + rel[h][None, None]
        if has_mask:
            s = s + mask[:, None]
        s = s - jnp.max(s, axis=-1, keepdims=True)
        p = jnp.exp(s)
        p = p * pl.reciprocal(jnp.sum(p, axis=-1, keepdims=True), approx=True)
        oh = jnp.einsum('bnm,bmd->bnd', p.reshape(WB, N, N).astype(jnp.bfloat16),
                        vh, preferred_element_type=jnp.float32)       # (WB, N, d)
        y = y + jnp.dot(oh.reshape(WB * N, d).astype(jnp.bfloat16),
                        pw[h * d:(h + 1) * d, :],
                        preferred_element_type=jnp.float32)
    o_ref[...] = y.reshape(Wt, B, N, C).astype(o_ref.dtype)
    # TODO(synk): pad N (=49 at full config) to a sublane-aligned 56/64 with
    # -1e9 key bias / zero V rows to remove ragged-vreg reductions.


# ------------------------------ kernel wrappers ------------------------------

def layernorm(x, g, b, eps=LN_EPS, out_dtype=None):
    M, C = x.shape
    if out_dtype is None:
        out_dtype = x.dtype
    tm = _row_tile(M)
    return pl.pallas_call(
        functools.partial(_layernorm_kernel, eps=eps),
        out_shape=jax.ShapeDtypeStruct((M, C), out_dtype),
        grid=(pl.cdiv(M, tm),),
        in_specs=[pl.BlockSpec((tm, C), lambda i: (i, 0)),
                  pl.BlockSpec((1, C), lambda i: (0, 0)),
                  pl.BlockSpec((1, C), lambda i: (0, 0))],
        out_specs=pl.BlockSpec((tm, C), lambda i: (i, 0)),
        compiler_params=_cparams(),
    )(x, g.reshape(1, C), b.reshape(1, C))


def linear_ln(x, w, b, g, gb, eps=LN_EPS, out_dtype=ACT_DTYPE):
    M, K = x.shape
    N = w.shape[1]
    tm = _row_tile(M)
    return pl.pallas_call(
        functools.partial(_linear_ln_kernel, eps=eps),
        out_shape=jax.ShapeDtypeStruct((M, N), out_dtype),
        grid=(pl.cdiv(M, tm),),
        in_specs=[pl.BlockSpec((tm, K), lambda i: (i, 0)),
                  pl.BlockSpec((K, N), lambda i: (0, 0)),
                  pl.BlockSpec((1, N), lambda i: (0, 0)),
                  pl.BlockSpec((1, N), lambda i: (0, 0)),
                  pl.BlockSpec((1, N), lambda i: (0, 0))],
        out_specs=pl.BlockSpec((tm, N), lambda i: (i, 0)),
        compiler_params=_cparams(),
    )(x, w, b.reshape(1, N), g.reshape(1, N), gb.reshape(1, N))


def ln_linear(x, g, gb, w, b=None, eps=LN_EPS, out_dtype=ACT_DTYPE):
    M, K = x.shape
    N = w.shape[1]
    if b is None:
        b = jnp.zeros((N,), jnp.float32)
    tm = _row_tile(M)
    return pl.pallas_call(
        functools.partial(_ln_linear_kernel, eps=eps),
        out_shape=jax.ShapeDtypeStruct((M, N), out_dtype),
        grid=(pl.cdiv(M, tm),),
        in_specs=[pl.BlockSpec((tm, K), lambda i: (i, 0)),
                  pl.BlockSpec((1, K), lambda i: (0, 0)),
                  pl.BlockSpec((1, K), lambda i: (0, 0)),
                  pl.BlockSpec((K, N), lambda i: (0, 0)),
                  pl.BlockSpec((1, N), lambda i: (0, 0))],
        out_specs=pl.BlockSpec((tm, N), lambda i: (i, 0)),
        compiler_params=_cparams(),
    )(x, g.reshape(1, K), gb.reshape(1, K), w, b.reshape(1, N))


def add_ln_mlp(a, r, g, gb, w1, b1, w2, b2, eps=LN_EPS, out_dtype=ACT_DTYPE):
    M, C = a.shape
    Hd = w1.shape[1]
    tm = _row_tile(M)
    return pl.pallas_call(
        functools.partial(_add_ln_mlp_kernel, eps=eps),
        out_shape=jax.ShapeDtypeStruct((M, C), out_dtype),
        grid=(pl.cdiv(M, tm),),
        in_specs=[pl.BlockSpec((tm, C), lambda i: (i, 0)),
                  pl.BlockSpec((tm, C), lambda i: (i, 0)),
                  pl.BlockSpec((1, C), lambda i: (0, 0)),
                  pl.BlockSpec((1, C), lambda i: (0, 0)),
                  pl.BlockSpec((C, Hd), lambda i: (0, 0)),
                  pl.BlockSpec((1, Hd), lambda i: (0, 0)),
                  pl.BlockSpec((Hd, C), lambda i: (0, 0)),
                  pl.BlockSpec((1, C), lambda i: (0, 0))],
        out_specs=pl.BlockSpec((tm, C), lambda i: (i, 0)),
        compiler_params=_cparams(),
    )(a, r, g.reshape(1, C), gb.reshape(1, C), w1, b1.reshape(1, Hd), w2,
      b2.reshape(1, C))


def window_attention_proj(qkv_win, rel_bias, mask, proj_w, proj_b, *,
                          num_heads, scale, out_dtype=ACT_DTYPE):
    """qkv_win: (nW, B, N, 3C) bf16; rel_bias: (heads, N, N) f32 shared by all
    windows; mask: None or (nW, N, N) f32, indexed per window (never fused into
    a (nW, heads, N, N) broadcast)."""
    nW, B, N, C3 = qkv_win.shape
    C = C3 // 3
    wt = _win_tile(nW)
    has_mask = mask is not None
    in_specs = [pl.BlockSpec((wt, B, N, C3), lambda w: (w, 0, 0, 0)),
                pl.BlockSpec((num_heads, N, N), lambda w: (0, 0, 0))]
    args = [qkv_win, rel_bias]
    if has_mask:
        in_specs.append(pl.BlockSpec((wt, N, N), lambda w: (w, 0, 0)))
        args.append(mask)
    in_specs += [pl.BlockSpec((C, C), lambda w: (0, 0)),
                 pl.BlockSpec((1, C), lambda w: (0, 0))]
    args += [proj_w, proj_b.reshape(1, C)]
    return pl.pallas_call(
        functools.partial(_wattn_proj_kernel, num_heads=num_heads, scale=scale,
                          has_mask=has_mask),
        out_shape=jax.ShapeDtypeStruct((nW, B, N, C), out_dtype),
        grid=(nW // wt,),
        in_specs=in_specs,
        out_specs=pl.BlockSpec((wt, B, N, C), lambda w: (w, 0, 0, 0)),
        compiler_params=_cparams(),
    )(*args)


# --------------------------- Swin building blocks ----------------------------

def window_partition_wb(x, ws):
    """(B, H, W, C) -> (nW, B, ws*ws, C); window index = wh*(W//ws)+ww."""
    B, H, W, C = x.shape
    x = x.reshape(B, H // ws, ws, W // ws, ws, C)
    x = x.transpose(1, 3, 0, 2, 4, 5)
    return x.reshape((H // ws) * (W // ws), B, ws * ws, C)


def window_reverse_wb(win, ws, H, W, B):
    C = win.shape[-1]
    x = win.reshape(H // ws, W // ws, B, ws, ws, C)
    x = x.transpose(2, 0, 3, 1, 4, 5)
    return x.reshape(B, H, W, C)


def relative_position_index(ws):
    coords = np.stack(np.meshgrid(np.arange(ws), np.arange(ws), indexing="ij"))
    coords_flat = coords.reshape(2, -1)
    rel = coords_flat[:, :, None] - coords_flat[:, None, :]
    rel = rel.transpose(1, 2, 0).astype(np.int64)
    rel[:, :, 0] += ws - 1
    rel[:, :, 1] += ws - 1
    rel[:, :, 0] *= 2 * ws - 1
    return rel.sum(-1)  # (N, N) static numpy


def shift_attn_mask(H, W, ws, shift):
    if shift == 0:
        return None
    img_mask = np.zeros((1, H, W, 1), dtype=np.float32)
    cnt = 0
    for hs in (slice(0, -ws), slice(-ws, -shift), slice(-shift, None)):
        for wsl in (slice(0, -ws), slice(-ws, -shift), slice(-shift, None)):
            img_mask[:, hs, wsl, :] = cnt
            cnt += 1
    mw = img_mask.reshape(1, H // ws, ws, W // ws, ws, 1)
    mw = mw.transpose(0, 1, 3, 2, 4, 5).reshape(-1, ws * ws)
    am = mw[:, None, :] - mw[:, :, None]
    am = np.where(am != 0, -100.0, 0.0).astype(np.float32)
    return jnp.asarray(am)  # (nW, N, N)


def swin_block(x, H, W, p, num_heads, window_size, shift_size):
    B, L, C = x.shape
    ws = min(window_size, H, W)
    shift = 0 if min(H, W) <= window_size else shift_size
    N = ws * ws
    head_dim = C // num_heads
    scale = head_dim ** -0.5

    shortcut = x.reshape(B * L, C)

    # fused LayerNorm + QKV projection on the token-contiguous (B*L, C) layout
    # (both are per-token, so they commute with roll / window partition)
    qkv = ln_linear(shortcut, p["norm1_g"], p["norm1_b"], p["qkv_w"], p["qkv_b"])
    qkv = qkv.reshape(B, H, W, 3 * C)
    if shift > 0:
        qkv = jnp.roll(qkv, shift=(-shift, -shift), axis=(1, 2))
    # TODO(synk): the cyclic roll and window partition/reverse stay as XLA
    # reshuffles on the bf16 qkv tensor: a rectangular BlockSpec cannot express
    # wrapped ws=7 windows (not sublane-aligned, not contiguous).
    qkv_win = window_partition_wb(qkv, ws)                  # (nW, B, N, 3C)

    rel_idx = relative_position_index(ws)
    rel_bias = p["rel_bias_table"][rel_idx.reshape(-1)]     # (N*N, heads)
    rel_bias = rel_bias.reshape(N, N, num_heads).transpose(2, 0, 1)   # (h, N, N)
    mask = shift_attn_mask(H, W, ws, shift)                 # None or (nW, N, N)

    o_win = window_attention_proj(qkv_win, rel_bias, mask, p["proj_w"], p["proj_b"],
                                  num_heads=num_heads, scale=scale)   # (nW,B,N,C)
    xr = window_reverse_wb(o_win, ws, H, W, B)
    if shift > 0:
        xr = jnp.roll(xr, shift=(shift, shift), axis=(1, 2))
    attn = xr.reshape(B * L, C)

    # fused: x = shortcut + attn ; out = x + MLP(LN(x))
    out = add_ln_mlp(shortcut, attn, p["norm2_g"], p["norm2_b"],
                     p["fc1_w"], p["fc1_b"], p["fc2_w"], p["fc2_b"])
    return out.reshape(B, L, C)


def patch_merging(x, H, W, p):
    B, L, C = x.shape
    xv = x.reshape(B, H, W, C)
    x0 = xv[:, 0::2, 0::2, :]
    x1 = xv[:, 1::2, 0::2, :]
    x2 = xv[:, 0::2, 1::2, :]
    x3 = xv[:, 1::2, 1::2, :]
    xc = jnp.concatenate([x0, x1, x2, x3], axis=-1)
    xc = xc.reshape(B * (H // 2) * (W // 2), 4 * C)
    xr = ln_linear(xc, p["norm_g"], p["norm_b"], p["red_w"], None)  # 4C -> 2C, no bias
    return xr.reshape(B, (H // 2) * (W // 2), 2 * C)


def patch_embed(img, p, patch_size, embed_dim):
    # Conv2d(in_chans, embed_dim, k=patch, stride=patch) == per-patch matmul (+LN), fused.
    B, Cin, H, W = img.shape
    ph, pw = H // patch_size, W // patch_size
    x = img.reshape(B, Cin, ph, patch_size, pw, patch_size)
    x = x.transpose(0, 2, 4, 1, 3, 5).reshape(B * ph * pw, Cin * patch_size * patch_size)
    w = p["proj_w"].reshape(embed_dim, Cin * patch_size * patch_size).T
    y = linear_ln(x, w, p["proj_b"], p["norm_g"], p["norm_b"])
    return y.reshape(B, ph * pw, embed_dim), ph, pw


# --------------------------------- Encoder -----------------------------------

def forward_features(img, params, cfg):
    x, H, W = patch_embed(img, params["patch_embed"], cfg["patch_size"], cfg["embed_dim"])
    # dropout / drop_path are identity in eval; absolute pos-embed off (ape=False)
    x_downsample = []
    for si, (depth, heads) in enumerate(zip(cfg["depths"], cfg["num_heads"])):
        x_downsample.append(x)
        sp = params["layers"][si]
        for bi in range(depth):
            shift = 0 if bi % 2 == 0 else cfg["window_size"] // 2
            x = swin_block(x, H, W, sp["blocks"][bi], heads, cfg["window_size"], shift)
        if si < len(cfg["depths"]) - 1:
            x = patch_merging(x, H, W, sp["downsample"])
            H, W = H // 2, W // 2
    B, L, C = x.shape
    x = layernorm(x.reshape(B * L, C), params["norm_g"], params["norm_b"],
                  out_dtype=jnp.float32).reshape(B, L, C)
    return x, x_downsample


def encoder1_forward(img1, img2, params, cfg):
    x1, y1 = forward_features(img1, params, cfg)
    x2, y2 = forward_features(img2, params, cfg)
    # TODO(synk): FTN's SwinTransEncoder fuses the two streams before returning;
    # absolute-difference fusion is assumed here.
    x = jnp.abs(x1 - x2)
    return x, y1, y2


# ------------------------------ Parameter init --------------------------------

def init_params(key, cfg):
    def tn(k, shape, dtype=jnp.float32, std=0.02):
        return (std * jax.random.truncated_normal(k, -2.0, 2.0, shape)).astype(dtype)

    keys = iter(jax.random.split(key, 512))
    nk = lambda: next(keys)
    ed, ps, ws = cfg["embed_dim"], cfg["patch_size"], cfg["window_size"]
    f32, bf16 = jnp.float32, jnp.bfloat16   # matmul weights stored bf16 (MXU operands)

    params = {
        "patch_embed": dict(
            proj_w=tn(nk(), (ed, cfg["in_chans"], ps, ps), bf16),
            proj_b=jnp.zeros((ed,), f32),
            norm_g=jnp.ones((ed,), f32),
            norm_b=jnp.zeros((ed,), f32),
        )
    }
    layers = []
    dim = ed
    for si, (depth, heads) in enumerate(zip(cfg["depths"], cfg["num_heads"])):
        hidden = dim * cfg["mlp_ratio"]
        blocks = []
        for _ in range(depth):
            blocks.append(dict(
                norm1_g=jnp.ones((dim,), f32), norm1_b=jnp.zeros((dim,), f32),
                qkv_w=tn(nk(), (dim, 3 * dim), bf16), qkv_b=jnp.zeros((3 * dim,), f32),
                proj_w=tn(nk(), (dim, dim), bf16), proj_b=jnp.zeros((dim,), f32),
                rel_bias_table=tn(nk(), ((2 * ws - 1) ** 2, heads), f32),
                norm2_g=jnp.ones((dim,), f32), norm2_b=jnp.zeros((dim,), f32),
                fc1_w=tn(nk(), (dim, hidden), bf16), fc1_b=jnp.zeros((hidden,), f32),
                fc2_w=tn(nk(), (hidden, dim), bf16), fc2_b=jnp.zeros((dim,), f32),
            ))
        layer = {"blocks": blocks}
        if si < len(cfg["depths"]) - 1:
            layer["downsample"] = dict(
                norm_g=jnp.ones((4 * dim,), f32), norm_b=jnp.zeros((4 * dim,), f32),
                red_w=tn(nk(), (4 * dim, 2 * dim), bf16),
            )
            dim *= 2
        layers.append(layer)
    params["layers"] = layers
    params["norm_g"] = jnp.ones((dim,), f32)
    params["norm_b"] = jnp.zeros((dim,), f32)
    return params


# ----------------------------------- Main --------------------------------------

if __name__ == "__main__":
    # Scaled-down config (full FTN encoder1 is img_size=224, embed_dim=128,
    # depths=[2,2,18,2], num_heads=[4,8,16,32], window_size=7).
    cfg = dict(img_size=16, patch_size=4, in_chans=3, embed_dim=32,
               depths=[2, 2], num_heads=[2, 4], window_size=2, mlp_ratio=4)

    key = jax.random.PRNGKey(0)
    kp, k1, k2 = jax.random.split(key, 3)
    params = init_params(kp, cfg)
    img1 = jax.random.normal(k1, (2, 3, cfg["img_size"], cfg["img_size"]), jnp.float32)
    img2 = jax.random.normal(k2, (2, 3, cfg["img_size"], cfg["img_size"]), jnp.float32)

    fwd = jax.jit(lambda a, b: encoder1_forward(a, b, params, cfg))
    x, y1, y2 = fwd(img1, img2)
    jax.block_until_ready((x, y1, y2))
    print("KERNEL_OK")
</pallas_src>

<mosaic_0001>
module attributes {stable_mosaic.version = 11 : i64} {
  func.func @_linear_ln_kernel(%arg0: i32, %arg1: memref<32x48xf32, #tpu.memory_space<vmem>>, %arg2: memref<48x32xbf16, #tpu.memory_space<vmem>>, %arg3: memref<1x32xf32, #tpu.memory_space<vmem>>, %arg4: memref<1x32xf32, #tpu.memory_space<vmem>>, %arg5: memref<1x32xf32, #tpu.memory_space<vmem>>, %arg6: memref<32x32xbf16, #tpu.memory_space<vmem>>) attributes {dimension_semantics = [#tpu.dimension_semantics<parallel>], iteration_bounds = array<i64: 1>, scalar_prefetch = 0 : i64, scratch_operands = 0 : i64, tpu.core_type = #tpu.core_type<tc>, window_params = [{transform_indices = @transform_0, window_bounds = array<i64: 32, 48>}, {pipeline_mode = #tpu.pipeline_mode<synchronous>, transform_indices = @transform_1, window_bounds = array<i64: 48, 32>}, {pipeline_mode = #tpu.pipeline_mode<synchronous>, transform_indices = @transform_2, window_bounds = array<i64: 1, 32>}, {pipeline_mode = #tpu.pipeline_mode<synchronous>, transform_indices = @transform_3, window_bounds = array<i64: 1, 32>}, {pipeline_mode = #tpu.pipeline_mode<synchronous>, transform_indices = @transform_4, window_bounds = array<i64: 1, 32>}, {transform_indices = @transform_5, window_bounds = array<i64: 32, 32>}]} {
    %c0 = arith.constant 0 : index
    %c0_0 = arith.constant 0 : index
    %0 = vector.load %arg1[%c0, %c0_0] : memref<32x48xf32, #tpu.memory_space<vmem>>, vector<32x48xf32>
    %1 = arith.truncf %0 : vector<32x48xf32> to vector<32x48xbf16>
    %c0_1 = arith.constant 0 : index
    %c0_2 = arith.constant 0 : index
    %2 = vector.load %arg2[%c0_1, %c0_2] : memref<48x32xbf16, #tpu.memory_space<vmem>>, vector<48x32xbf16>
    %cst = arith.constant dense<0.000000e+00> : vector<32x32xf32>
    %3 = tpu.matmul %1, %2, %cst {dimension_numbers = #tpu.dot_dimension_numbers<[1], [0], [0], [1], [0, 0, 1, 1], [], []>} : vector<32x48xbf16>, vector<48x32xbf16>, vector<32x32xf32> -> vector<32x32xf32>
    %c0_3 = arith.constant 0 : index
    %c0_4 = arith.constant 0 : index
    %4 = vector.load %arg3[%c0_3, %c0_4] : memref<1x32xf32, #tpu.memory_space<vmem>>, vector<1x32xf32>
    %5 = vector.broadcast %4 : vector<1x32xf32> to vector<32x32xf32>
    %6 = arith.addf %3, %5 : vector<32x32xf32>
    %c0_5 = arith.constant 0 : index
    %c0_6 = arith.constant 0 : index
    %7 = vector.load %arg4[%c0_5, %c0_6] : memref<1x32xf32, #tpu.memory_space<vmem>>, vector<1x32xf32>
    %c0_7 = arith.constant 0 : index
    %c0_8 = arith.constant 0 : index
    %8 = vector.load %arg5[%c0_7, %c0_8] : memref<1x32xf32, #tpu.memory_space<vmem>>, vector<1x32xf32>
    %cst_9 = arith.constant dense<0.000000e+00> : vector<32xf32>
    %9 = vector.multi_reduction <add>, %6, %cst_9 [1] : vector<32x32xf32> to vector<32xf32>
    %10 = vector.shape_cast %9 : vector<32xf32> to vector<32x1xf32>
    %cst_10 = arith.constant 3.200000e+01 : f32
    %11 = vector.broadcast %cst_10 : f32 to vector<32x1xf32>
    %12 = arith.divf %10, %11 : vector<32x1xf32>
    %13 = vector.broadcast %12 : vector<32x1xf32> to vector<32x32xf32>
    %14 = arith.subf %6, %13 : vector<32x32xf32>
    %15 = arith.mulf %14, %14 : vector<32x32xf32>
    %cst_11 = arith.constant dense<0.000000e+00> : vector<32xf32>
    %16 = vector.multi_reduction <add>, %15, %cst_11 [1] : vector<32x32xf32> to vector<32xf32>
    %17 = vector.shape_cast %16 : vector<32xf32> to vector<32x1xf32>
    %cst_12 = arith.constant 3.200000e+01 : f32
    %18 = vector.broadcast %cst_12 : f32 to vector<32x1xf32>
    %19 = arith.divf %17, %18 : vector<32x1xf32>
    %20 = vector.broadcast %12 : vector<32x1xf32> to vector<32x32xf32>
    %21 = arith.subf %6, %20 : vector<32x32xf32>
    %cst_13 = arith.constant 9.99999974E-6 : f32
    %22 = vector.broadcast %cst_13 : f32 to vector<32x1xf32>
    %23 = arith.addf %19, %22 : vector<32x1xf32>
    %24 = math.rsqrt %23 : vector<32x1xf32>
    %25 = vector.broadcast %24 : vector<32x1xf32> to vector<32x32xf32>
    %26 = arith.mulf %21, %25 : vector<32x32xf32>
    %27 = vector.broadcast %7 : vector<1x32xf32> to vector<32x32xf32>
    %28 = arith.mulf %26, %27 : vector<32x32xf32>
    %29 = vector.broadcast %8 : vector<1x32xf32> to vector<32x32xf32>
    %30 = arith.addf %28, %29 : vector<32x32xf32>
    %31 = arith.truncf %30 : vector<32x32xf32> to vector<32x32xbf16>
    %c0_14 = arith.constant 0 : index
    %c0_15 = arith.constant 0 : index
    %32 = vector.load %arg6[%c0_14, %c0_15] : memref<32x32xbf16, #tpu.memory_space<vmem>>, vector<32x32xbf16>
    tpu.vector_store %arg6[%c0_14, %c0_15], %31 {strides = array<i32>} : memref<32x32xbf16, #tpu.memory_space<vmem>>, vector<32x32xbf16>,
    return
  }
  func.func @transform_0(%arg0: i32) -> (i32, i32) {
    %c0_i32 = arith.constant 0 : i32
    %c0_i32_0 = arith.constant 0 : i32
    return %arg0, %c0_i32 : i32, i32
  }
  func.func @transform_1(%arg0: i32) -> (i32, i32) {
    %c0_i32 = arith.constant 0 : i32
    %c0_i32_0 = arith.constant 0 : i32
    %c0_i32_1 = arith.constant 0 : i32
    return %c0_i32, %c0_i32_0 : i32, i32
  }
  func.func @transform_2(%arg0: i32) -> (i32, i32) {
    %c0_i32 = arith.constant 0 : i32
    %c0_i32_0 = arith.constant 0 : i32
    %c0_i32_1 = arith.constant 0 : i32
    return %c0_i32, %c0_i32_0 : i32, i32
  }
  func.func @transform_3(%arg0: i32) -> (i32, i32) {
    %c0_i32 = arith.constant 0 : i32
    %c0_i32_0 = arith.constant 0 : i32
    %c0_i32_1 = arith.constant 0 : i32
    return %c0_i32, %c0_i32_0 : i32, i32
  }
  func.func @transform_4(%arg0: i32) -> (i32, i32) {
    %c0_i32 = arith.constant 0 : i32
    %c0_i32_0 = arith.constant 0 : i32
    %c0_i32_1 = arith.constant 0 : i32
    return %c0_i32, %c0_i32_0 : i32, i32
  }
  func.func @transform_5(%arg0: i32) -> (i32, i32) {
    %c0_i32 = arith.constant 0 : i32
    %c0_i32_0 = arith.constant 0 : i32
    return %arg0, %c0_i32 : i32, i32
  }
}

module attributes {stable_mosaic.version = 11 : i64} {
  func.func @_ln_linear_kernel(%arg0: i32, %arg1: memref<32x32xbf16, #tpu.memory_space<vmem>>, %arg2: memref<1x32xf32, #tpu.memory_space<vmem>>, %arg3: memref<1x32xf32, #tpu.memory_space<vmem>>, %arg4: memref<32x96xbf16, #tpu.memory_space<vmem>>, %arg5: memref<1x96xf32, #tpu.memory_space<vmem>>, %arg6: memref<32x96xbf16, #tpu.memory_space<vmem>>) attributes {dimension_semantics = [#tpu.dimension_semantics<parallel>], iteration_bounds = array<i64: 1>, scalar_prefetch = 0 : i64, scratch_operands = 0 : i64, tpu.core_type = #tpu.core_type<tc>, window_params = [{transform_indices = @transform_0, window_bounds = array<i64: 32, 32>}, {pipeline_mode = #tpu.pipeline_mode<synchronous>, transform_indices = @transform_1, window_bounds = array<i64: 1, 32>}, {pipeline_mode = #tpu.pipeline_mode<synchronous>, transform_indices = @transform_2, window_bounds = array<i64: 1, 32>}, {pipeline_mode = #tpu.pipeline_mode<synchronous>, transform_indices = @transform_3, window_bounds = array<i64: 32, 96>}, {pipeline_mode = #tpu.pipeline_mode<synchronous>, transform_indices = @transform_4, window_bounds = array<i64: 1, 96>}, {transform_indices = @transform_5, window_bounds = array<i64: 32, 96>}]} {
    %c0 = arith.constant 0 : index
    %c0_0 = arith.constant 0 : index
    %0 = vector.load %arg1[%c0, %c0_0] : memref<32x32xbf16, #tpu.memory_space<vmem>>, vector<32x32xbf16>
    %1 = arith.extf %0 : vector<32x32xbf16> to vector<32x32xf32>
    %c0_1 = arith.constant 0 : index
    %c0_2 = arith.constant 0 : index
    %2 = vector.load %arg2[%c0_1, %c0_2] : memref<1x32xf32, #tpu.memory_space<vmem>>, vector<1x32xf32>
    %c0_3 = arith.constant 0 : index
    %c0_4 = arith.constant 0 : index
    %3 = vector.load %arg3[%c0_3, %c0_4] : memref<1x32xf32, #tpu.memory_space<vmem>>, vector<1x32xf32>
    %cst = arith.constant dense<0.000000e+00> : vector<32xf32>
    %4 = vector.multi_reduction <add>, %1, %cst [1] : vector<32x32xf32> to vector<32xf32>
    %5 = vector.shape_cast %4 : vector<32xf32> to vector<32x1xf32>
    %cst_5 = arith.constant 3.200000e+01 : f32
    %6 = vector.broadcast %cst_5 : f32 to vector<32x1xf32>
    %7 = arith.divf %5, %6 : vector<32x1xf32>
    %8 = vector.broadcast %7 : vector<32x1xf32> to vector<32x32xf32>
    %9 = arith.subf %1, %8 : vector<32x32xf32>
    %10 = arith.mulf %9, %9 : vector<32x32xf32>
    %cst_6 = arith.constant dense<0.000000e+00> : vector<32xf32>
    %11 = vector.multi_reduction <add>, %10, %cst_6 [1] : vector<32x32xf32> to vector<32xf32>
    %12 = vector.shape_cast %11 : vector<32xf32> to vector<32x1xf32>
    %cst_7 = arith.constant 3.200000e+01 : f32
    %13 = vector.broadcast %cst_7 : f32 to vector<32x1xf32>
    %14 = arith.divf %12, %13 : vector<32x1xf32>
    %15 = vector.broadcast %7 : vector<32x1xf32> to vector<32x32xf32>
    %16 = arith.subf %1, %15 : vector<32x32xf32>
    %cst_8 = arith.constant 9.99999974E-6 : f32
    %17 = vector.broadcast %cst_8 : f32 to vector<32x1xf32>
    %18 = arith.addf %14, %17 : vector<32x1xf32>
    %19 = math.rsqrt %18 : vector<32x1xf32>
    %20 = vector.broadcast %19 : vector<32x1xf32> to vector<32x32xf32>
    %21 = arith.mulf %16, %20 : vector<32x32xf32>
    %22 = vector.broadcast %2 : vector<1x32xf32> to vector<32x32xf32>
    %23 = arith.mulf %21, %22 : vector<32x32xf32>
    %24 = vector.broadcast %3 : vector<1x32xf32> to vector<32x32xf32>
    %25 = arith.addf %23, %24 : vector<32x32xf32>
    %26 = arith.truncf %25 : vector<32x32xf32> to vector<32x32xbf16>
    %c0_9 = arith.constant 0 : index
    %c0_10 = arith.constant 0 : index
    %27 = vector.load %arg4[%c0_9, %c0_10] : memref<32x96xbf16, #tpu.memory_space<vmem>>, vector<32x96xbf16>
    %cst_11 = arith.constant dense<0.000000e+00> : vector<32x96xf32>
    %28 = tpu.matmul %26, %27, %cst_11 {dimension_numbers = #tpu.dot_dimension_numbers<[1], [0], [0], [1], [0, 0, 1, 1], [], []>} : vector<32x32xbf16>, vector<32x96xbf16>, vector<32x96xf32> -> vector<32x96xf32>
    %c0_12 = arith.constant 0 : index
    %c0_13 = arith.constant 0 : index
    %29 = vector.load %arg5[%c0_12, %c0_13] : memref<1x96xf32, #tpu.memory_space<vmem>>, vector<1x96xf32>
    %30 = vector.broadcast %29 : vector<1x96xf32> to vector<32x96xf32>
    %31 = arith.addf %28, %30 : vector<32x96xf32>
    %32 = arith.truncf %31 : vector<32x96xf32> to vector<32x96xbf16>
    %c0_14 = arith.constant 0 : index
    %c0_15 = arith.constant 0 : index
    %33 = vector.load %arg6[%c0_14, %c0_15] : memref<32x96xbf16, #tpu.memory_space<vmem>>, vector<32x96xbf16>
    tpu.vector_store %arg6[%c0_14, %c0_15], %32 {strides = array<i32>} : memref<32x96xbf16, #tpu.memory_space<vmem>>, vector<32x96xbf16>,
    return
  }
  func.func @transform_0(%arg0: i32) -> (i32, i32) {
    %c0_i32 = arith.constant 0 : i32
    %c0_i32_0 = arith.constant 0 : i32
    return %arg0, %c0_i32 : i32, i32
  }
  func.func @transform_1(%arg0: i32) -> (i32, i32) {
    %c0_i32 = arith.constant 0 : i32
    %c0_i32_0 = arith.constant 0 : i32
    %c0_i32_1 = arith.constant 0 : i32
    return %c0_i32, %c0_i32_0 : i32, i32
  }
  func.func @transform_2(%arg0: i32) -> (i32, i32) {
    %c0_i32 = arith.constant 0 : i32
    %c0_i32_0 = arith.constant 0 : i32
    %c0_i32_1 = arith.constant 0 : i32
    return %c0_i32, %c0_i32_0 : i32, i32
  }
  func.func @transform_3(%arg0: i32) -> (i32, i32) {
    %c0_i32 = arith.constant 0 : i32
    %c0_i32_0 = arith.constant 0 : i32
    %c0_i32_1 = arith.constant 0 : i32
    return %c0_i32, %c0_i32_0 : i32, i32
  }
  func.func @transform_4(%arg0: i32) -> (i32, i32) {
    %c0_i32 = arith.constant 0 : i32
    %c0_i32_0 = arith.constant 0 : i32
    %c0_i32_1 = arith.constant 0 : i32
    return %c0_i32, %c0_i32_0 : i32, i32
  }
  func.func @transform_5(%arg0: i32) -> (i32, i32) {
    %c0_i32 = arith.constant 0 : i32
    %c0_i32_0 = arith.constant 0 : i32
    return %arg0, %c0_i32 : i32, i32
  }
}

module attributes {stable_mosaic.version = 11 : i64} {
  func.func @_wattn_proj_kernel(%arg0: i32, %arg1: memref<4x2x4x96xbf16, #tpu.memory_space<vmem>>, %arg2: memref<2x4x4xf32, #tpu.memory_space<vmem>>, %arg3: memref<32x32xbf16, #tpu.memory_space<vmem>>, %arg4: memref<1x32xf32, #tpu.memory_space<vmem>>, %arg5: memref<4x2x4x32xbf16, #tpu.memory_space<vmem>>) attributes {dimension_semantics = [#tpu.dimension_semantics<parallel>], iteration_bounds = array<i64: 1>, scalar_prefetch = 0 : i64, scratch_operands = 0 : i64, tpu.core_type = #tpu.core_type<tc>, window_params = [{transform_indices = @transform_0, window_bounds = array<i64: 4, 2, 4, 96>}, {pipeline_mode = #tpu.pipeline_mode<synchronous>, transform_indices = @transform_1, window_bounds = array<i64: 2, 4, 4>}, {pipeline_mode = #tpu.pipeline_mode<synchronous>, transform_indices = @transform_2, window_bounds = array<i64: 32, 32>}, {pipeline_mode = #tpu.pipeline_mode<synchronous>, transform_indices = @transform_3, window_bounds = array<i64: 1, 32>}, {transform_indices = @transform_4, window_bounds = array<i64: 4, 2, 4, 32>}]} {
    %c0 = arith.constant 0 : index
    %c0_0 = arith.constant 0 : index
    %c0_1 = arith.constant 0 : index
    %c0_2 = arith.constant 0 : index
    %0 = vector.load %arg1[%c0, %c0_0, %c0_1, %c0_2] : memref<4x2x4x96xbf16, #tpu.memory_space<vmem>>, vector<4x2x4x96xbf16>
    %c0_3 = arith.constant 0 : index
    %c0_4 = arith.constant 0 : index
    %c0_5 = arith.constant 0 : index
    %1 = vector.load %arg2[%c0_3, %c0_4, %c0_5] : memref<2x4x4xf32, #tpu.memory_space<vmem>>, vector<2x4x4xf32>
    %c0_6 = arith.constant 0 : index
    %c0_7 = arith.constant 0 : index
    %2 = vector.load %arg3[%c0_6, %c0_7] : memref<32x32xbf16, #tpu.memory_space<vmem>>, vector<32x32xbf16>
    %c0_8 = arith.constant 0 : index
    %c0_9 = arith.constant 0 : index
    %3 = vector.load %arg4[%c0_8, %c0_9] : memref<1x32xf32, #tpu.memory_space<vmem>>, vector<1x32xf32>
    %cst = arith.constant 0.000000e+00 : f32
    %4 = vector.broadcast %cst : f32 to vector<32x32xf32>
    %5 = vector.broadcast %3 : vector<1x32xf32> to vector<32x32xf32>
    %6 = arith.addf %4, %5 : vector<32x32xf32>
    %7 = vector.extract_strided_slice %0 {offsets = [0, 0, 0, 0], sizes = [4, 2, 4, 16], strides = [1, 1, 1, 1]} : vector<4x2x4x96xbf16> to vector<4x2x4x16xbf16>
    %8 = vector.shape_cast %7 : vector<4x2x4x16xbf16> to vector<8x4x16xbf16>
    %9 = vector.extract_strided_slice %0 {offsets = [0, 0, 0, 32], sizes = [4, 2, 4, 16], strides = [1, 1, 1, 1]} : vector<4x2x4x96xbf16> to vector<4x2x4x16xbf16>
    %10 = vector.shape_cast %9 : vector<4x2x4x16xbf16> to vector<8x4x16xbf16>
    %11 = vector.extract_strided_slice %0 {offsets = [0, 0, 0, 64], sizes = [4, 2, 4, 16], strides = [1, 1, 1, 1]} : vector<4x2x4x96xbf16> to vector<4x2x4x16xbf16>
    %12 = vector.shape_cast %11 : vector<4x2x4x16xbf16> to vector<8x4x16xbf16>
    "tpu.trace_start"() <{level = 10 : i32, message = "bnd,bmd->bnm"}> : () -> ()
    %cst_10 = arith.constant dense<0.000000e+00> : vector<8x4x4xf32>
    %13 = tpu.matmul %8, %10, %cst_10 {dimension_numbers = #tpu.dot_dimension_numbers<[2], [2], [1], [1], [0, 0, 0, 1, 1, 1], [0], [0]>} : vector<8x4x16xbf16>, vector<8x4x16xbf16>, vector<8x4x4xf32> -> vector<8x4x4xf32>
    "tpu.trace_stop"() : () -> ()
    %cst_11 = arith.constant 2.500000e-01 : f32
    %14 = vector.broadcast %cst_11 : f32 to vector<8x4x4xf32>
    %15 = arith.mulf %13, %14 : vector<8x4x4xf32>
    %16 = vector.shape_cast %15 : vector<8x4x4xf32> to vector<4x2x4x4xf32>
    %17 = vector.extract_strided_slice %1 {offsets = [0, 0, 0], sizes = [1, 4, 4], strides = [1, 1, 1]} : vector<2x4x4xf32> to vector<1x4x4xf32>
    %18 = vector.shape_cast %17 : vector<1x4x4xf32> to vector<4x4xf32>
    %19 = vector.shape_cast %18 : vector<4x4xf32> to vector<1x1x4x4xf32>
    %20 = vector.broadcast %19 : vector<1x1x4x4xf32> to vector<4x2x4x4xf32>
    %21 = arith.addf %16, %20 : vector<4x2x4x4xf32>
    %cst_12 = arith.constant dense<0xFF800000> : vector<4x2x4xf32>
    %22 = vector.multi_reduction <maximumf>, %21, %cst_12 [3] : vector<4x2x4x4xf32> to vector<4x2x4xf32>
    %23 = vector.shape_cast %22 : vector<4x2x4xf32> to vector<4x2x4x1xf32>
    %24 = vector.broadcast %23 : vector<4x2x4x1xf32> to vector<4x2x4x4xf32>
    %25 = arith.subf %21, %24 : vector<4x2x4x4xf32>
    %26 = math.exp %25 : vector<4x2x4x4xf32>
    %cst_13 = arith.constant dense<0.000000e+00> : vector<4x2x4xf32>
    %27 = vector.multi_reduction <add>, %26, %cst_13 [3] : vector<4x2x4x4xf32> to vector<4x2x4xf32>
    %28 = vector.shape_cast %27 : vector<4x2x4xf32> to vector<4x2x4x1xf32>
    %29 = tpu.reciprocal %28 {approx = true} : vector<4x2x4x1xf32> -> vector<4x2x4x1xf32>
    %30 = vector.broadcast %29 : vector<4x2x4x1xf32> to vector<4x2x4x4xf32>
    %31 = arith.mulf %26, %30 : vector<4x2x4x4xf32>
    %32 = vector.shape_cast %31 : vector<4x2x4x4xf32> to vector<8x4x4xf32>
    %33 = arith.truncf %32 : vector<8x4x4xf32> to vector<8x4x4xbf16>
    "tpu.trace_start"() <{level = 10 : i32, message = "bnm,bmd->bnd"}> : () -> ()
    %cst_14 = arith.constant dense<0.000000e+00> : vector<8x4x16xf32>
    %34 = tpu.matmul %33, %12, %cst_14 {dimension_numbers = #tpu.dot_dimension_numbers<[2], [1], [1], [2], [0, 0, 0, 1, 1, 2], [0], [0]>} : vector<8x4x4xbf16>, vector<8x4x16xbf16>, vector<8x4x16xf32> -> vector<8x4x16xf32>
    "tpu.trace_stop"() : () -> ()
    %35 = vector.shape_cast %34 : vector<8x4x16xf32> to vector<32x16xf32>
    %36 = arith.truncf %35 : vector<32x16xf32> to vector<32x16xbf16>
    %37 = vector.extract_strided_slice %2 {offsets = [0, 0], sizes = [16, 32], strides = [1, 1]} : vector<32x32xbf16> to vector<16x32xbf16>
    %cst_15 = arith.constant dense<0.000000e+00> : vector<32x32xf32>
    %38 = tpu.matmul %36, %37, %cst_15 {dimension_numbers = #tpu.dot_dimension_numbers<[1], [0], [0], [1], [0, 0, 1, 1], [], []>} : vector<32x16xbf16>, vector<16x32xbf16>, vector<32x32xf32> -> vector<32x32xf32>
    %39 = arith.addf %6, %38 : vector<32x32xf32>
    %40 = vector.extract_strided_slice %0 {offsets = [0, 0, 0, 16], sizes = [4, 2, 4, 16], strides = [1, 1, 1, 1]} : vector<4x2x4x96xbf16> to vector<4x2x4x16xbf16>
    %41 = vector.shape_cast %40 : vector<4x2x4x16xbf16> to vector<8x4x16xbf16>
    %42 = vector.extract_strided_slice %0 {offsets = [0, 0, 0, 48], sizes = [4, 2, 4, 16], strides = [1, 1, 1, 1]} : vector<4x2x4x96xbf16> to vector<4x2x4x16xbf16>
    %43 = vector.shape_cast %42 : vector<4x2x4x16xbf16> to vector<8x4x16xbf16>
    %44 = vector.extract_strided_slice %0 {offsets = [0, 0, 0, 80], sizes = [4, 2, 4, 16], strides = [1, 1, 1, 1]} : vector<4x2x4x96xbf16> to vector<4x2x4x16xbf16>
    %45 = vector.shape_cast %44 : vector<4x2x4x16xbf16> to vector<8x4x16xbf16>
    "tpu.trace_start"() <{level = 10 : i32, message = "bnd,bmd->bnm"}> : () -> ()
    %cst_16 = arith.constant dense<0.000000e+00> : vector<8x4x4xf32>
    %46 = tpu.matmul %41, %43, %cst_16 {dimension_numbers = #tpu.dot_dimension_numbers<[2], [2], [1], [1], [0, 0, 0, 1, 1, 1], [0], [0]>} : vector<8x4x16xbf16>, vector<8x4x16xbf16>, vector<8x4x4xf32> -> vector<8x4x4xf32>
    "tpu.trace_stop"() : () -> ()
    %cst_17 = arith.constant 2.500000e-01 : f32
    %47 = vector.broadcast %cst_17 : f32 to vector<8x4x4xf32>
    %48 = arith.mulf %46, %47 : vector<8x4x4xf32>
    %49 = vector.shape_cast %48 : vector<8x4x4xf32> to vector<4x2x4x4xf32>
    %50 = vector.extract_strided_slice %1 {offsets = [1, 0, 0], sizes = [1, 4, 4], strides = [1, 1, 1]} : vector<2x4x4xf32> to vector<1x4x4xf32>
    %51 = vector.shape_cast %50 : vector<1x4x4xf32> to vector<4x4xf32>
    %52 = vector.shape_cast %51 : vector<4x4xf32> to vector<1x1x4x4xf32>
    %53 = vector.broadcast %52 : vector<1x1x4x4xf32> to vector<4x2x4x4xf32>
    %54 = arith.addf %49, %53 : vector<4x2x4x4xf32>
    %cst_18 = arith.constant dense<0xFF800000> : vector<4x2x4xf32>
    %55 = vector.multi_reduction <maximumf>, %54, %cst_18 [3] : vector<4x2x4x4xf32> to vector<4x2x4xf32>
    %56 = vector.shape_cast %55 : vector<4x2x4xf32> to vector<4x2x4x1xf32>
    %57 = vector.broadcast %56 : vector<4x2x4x1xf32> to vector<4x2x4x4xf32>
    %58 = arith.subf %54, %57 : vector<4x2x4x4xf32>
    %59 = math.exp %58 : vector<4x2x4x4xf32>
    %cst_19 = arith.constant dense<0.000000e+00> : vector<4x2x4xf32>
    %60 = vector.multi_reduction <add>, %59, %cst_19 [3] : vector<4x2x4x4xf32> to vector<4x2x4xf32>
    %61 = vector.shape_cast %60 : vector<4x2x4xf32> to vector<4x2x4x1xf32>
    %62 = tpu.reciprocal %61 {approx = true} : vector<4x2x4x1xf32> -> vector<4x2x4x1xf32>
    %63 = vector.broadcast %62 : vector<4x2x4x1xf32> to vector<4x2x4x4xf32>
    %64 = arith.mulf %59, %63 : vector<4x2x4x4xf32>
    %65 = vector.shape_cast %64 : vector<4x2x4x4xf32> to vector<8x4x4xf32>
    %66 = arith.truncf %65 : vector<8x4x4xf32> to vector<8x4x4xbf16>
    "tpu.trace_start"() <{level = 10 : i32, message = "bnm,bmd->bnd"}> : () -> ()
    %cst_20 = arith.constant dense<0.000000e+00> : vector<8x4x16xf32>
    %67 = tpu.matmul %66, %45, %cst_20 {dimension_numbers = #tpu.dot_dimension_numbers<[2], [1], [1], [2], [0, 0, 0, 1, 1, 2], [0], [0]>} : vector<8x4x4xbf16>, vector<8x4x16xbf16>, vector<8x4x16xf32> -> vector<8x4x16xf32>
    "tpu.trace_stop"() : () -> ()
    %68 = vector.shape_cast %67 : vector<8x4x16xf32> to vector<32x16xf32>
    %69 = arith.truncf %68 : vector<32x16xf32> to vector<32x16xbf16>
    %70 = vector.extract_strided_slice %2 {offsets = [16, 0], sizes = [16, 32], strides = [1, 1]} : vector<32x32xbf16> to vector<16x32xbf16>
    %cst_21 = arith.constant dense<0.000000e+00> : vector<32x32xf32>
    %71 = tpu.matmul %69, %70, %cst_21 {dimension_numbers = #tpu.dot_dimension_numbers<[1], [0], [0], [1], [0, 0, 1, 1], [], []>} : vector<32x16xbf16>, vector<16x32xbf16>, vector<32x32xf32> -> vector<32x32xf32>
    %72 = arith.addf %39, %71 : vector<32x32xf32>
    %73 = vector.shape_cast %72 : vector<32x32xf32> to vector<4x2x4x32xf32>
    %74 = arith.truncf %73 : vector<4x2x4x32xf32> to vector<4x2x4x32xbf16>
    %c0_22 = arith.constant 0 : index
    %c0_23 = arith.constant 0 : index
    %c0_24 = arith.constant 0 : index
    %c0_25 = arith.constant 0 : index
    %75 = vector.load %arg5[%c0_22, %c0_23, %c0_24, %c0_25] : memref<4x2x4x32xbf16, #tpu.memory_space<vmem>>, vector<4x2x4x32xbf16>
    tpu.vector_store %arg5[%c0_22, %c0_23, %c0_24, %c0_25], %74 {strides = array<i32>} : memref<4x2x4x32xbf16, #tpu.memory_space<vmem>>, vector<4x2x4x32xbf16>,
    return
  }
  func.func @transform_0(%arg0: i32) -> (i32, i32, i32, i32) {
    %c0_i32 = arith.constant 0 : i32
    %c0_i32_0 = arith.constant 0 : i32
    %c0_i32_1 = arith.constant 0 : i32
    %c0_i32_2 = arith.constant 0 : i32
    return %arg0, %c0_i32, %c0_i32_0, %c0_i32_1 : i32, i32, i32, i32
  }
  func.func @transform_1(%arg0: i32) -> (i32, i32, i32) {
    %c0_i32 = arith.constant 0 : i32
    %c0_i32_0 = arith.constant 0 : i32
    %c0_i32_1 = arith.constant 0 : i32
    %c0_i32_2 = arith.constant 0 : i32
    return %c0_i32, %c0_i32_0, %c0_i32_1 : i32, i32, i32
  }
  func.func @transform_2(%arg0: i32) -> (i32, i32) {
    %c0_i32 = arith.constant 0 : i32
    %c0_i32_0 = arith.constant 0 : i32
    %c0_i32_1 = arith.constant 0 : i32
    return %c0_i32, %c0_i32_0 : i32, i32
  }
  func.func @transform_3(%arg0: i32) -> (i32, i32) {
    %c0_i32 = arith.constant 0 : i32
    %c0_i32_0 = arith.constant 0 : i32
    %c0_i32_1 = arith.constant 0 : i32
    return %c0_i32, %c0_i32_0 : i32, i32
  }
  func.func @transform_4(%arg0: i32) -> (i32, i32, i32, i32) {
    %c0_i32 = arith.constant 0 : i32
    %c0_i32_0 = arith.constant 0 : i32
    %c0_i32_1 = arith.constant 0 : i32
    %c0_i32_2 = arith.constant 0 : i32
    return %arg0, %c0_i32, %c0_i32_0, %c0_i32_1 : i32, i32, i32, i32
  }
}

module attributes {stable_mosaic.version = 11 : i64} {
  func.func @_add_ln_mlp_kernel(%arg0: i32, %arg1: memref<32x32xbf16, #tpu.memory_space<vmem>>, %arg2: memref<32x32xbf16, #tpu.memory_space<vmem>>, %arg3: memref<1x32xf32, #tpu.memory_space<vmem>>, %arg4: memref<1x32xf32, #tpu.memory_space<vmem>>, %arg5: memref<32x128xbf16, #tpu.memory_space<vmem>>, %arg6: memref<1x128xf32, #tpu.memory_space<vmem>>, %arg7: memref<128x32xbf16, #tpu.memory_space<vmem>>, %arg8: memref<1x32xf32, #tpu.memory_space<vmem>>, %arg9: memref<32x32xbf16, #tpu.memory_space<vmem>>) attributes {dimension_semantics = [#tpu.dimension_semantics<parallel>], iteration_bounds = array<i64: 1>, scalar_prefetch = 0 : i64, scratch_operands = 0 : i64, tpu.core_type = #tpu.core_type<tc>, window_params = [{transform_indices = @transform_0, window_bounds = array<i64: 32, 32>}, {transform_indices = @transform_1, window_bounds = array<i64: 32, 32>}, {pipeline_mode = #tpu.pipeline_mode<synchronous>, transform_indices = @transform_2, window_bounds = array<i64: 1, 32>}, {pipeline_mode = #tpu.pipeline_mode<synchronous>, transform_indices = @transform_3, window_bounds = array<i64: 1, 32>}, {pipeline_mode = #tpu.pipeline_mode<synchronous>, transform_indices = @transform_4, window_bounds = array<i64: 32, 128>}, {pipeline_mode = #tpu.pipeline_mode<synchronous>, transform_indices = @transform_5, window_bounds = array<i64: 1, 128>}, {pipeline_mode = #tpu.pipeline_mode<synchronous>, transform_indices = @transform_6, window_bounds = array<i64: 128, 32>}, {pipeline_mode = #tpu.pipeline_mode<synchronous>, transform_indices = @transform_7, window_bounds = array<i64: 1, 32>}, {transform_indices = @transform_8, window_bounds = array<i64: 32, 32>}]} {
    %c0 = arith.constant 0 : index
    %c0_0 = arith.constant 0 : index
    %0 = vector.load %arg1[%c0, %c0_0] : memref<32x32xbf16, #tpu.memory_space<vmem>>, vector<32x32xbf16>
    %1 = arith.extf %0 : vector<32x32xbf16> to vector<32x32xf32>
    %c0_1 = arith.constant 0 : index
    %c0_2 = arith.constant 0 : index
    %2 = vector.load %arg2[%c0_1, %c0_2] : memref<32x32xbf16, #tpu.memory_space<vmem>>, vector<32x32xbf16>
    %3 = arith.extf %2 : vector<32x32xbf16> to vector<32x32xf32>
    %4 = arith.addf %1, %3 : vector<32x32xf32>
    %c0_3 = arith.constant 0 : index
    %c0_4 = arith.constant 0 : index
    %5 = vector.load %arg3[%c0_3, %c0_4] : memref<1x32xf32, #tpu.memory_space<vmem>>, vector<1x32xf32>
    %c0_5 = arith.constant 0 : index
    %c0_6 = arith.constant 0 : index
    %6 = vector.load %arg4[%c0_5, %c0_6] : memref<1x32xf32, #tpu.memory_space<vmem>>, vector<1x32xf32>
    %cst = arith.constant dense<0.000000e+00> : vector<32xf32>
    %7 = vector.multi_reduction <add>, %4, %cst [1] : vector<32x32xf32> to vector<32xf32>
    %8 = vector.shape_cast %7 : vector<32xf32> to vector<32x1xf32>
    %cst_7 = arith.constant 3.200000e+01 : f32
    %9 = vector.broadcast %cst_7 : f32 to vector<32x1xf32>
    %10 = arith.divf %8, %9 : vector<32x1xf32>
    %11 = vector.broadcast %10 : vector<32x1xf32> to vector<32x32xf32>
    %12 = arith.subf %4, %11 : vector<32x32xf32>
    %13 = arith.mulf %12, %12 : vector<32x32xf32>
    %cst_8 = arith.constant dense<0.000000e+00> : vector<32xf32>
    %14 = vector.multi_reduction <add>, %13, %cst_8 [1] : vector<32x32xf32> to vector<32xf32>
    %15 = vector.shape_cast %14 : vector<32xf32> to vector<32x1xf32>
    %cst_9 = arith.constant 3.200000e+01 : f32
    %16 = vector.broadcast %cst_9 : f32 to vector<32x1xf32>
    %17 = arith.divf %15, %16 : vector<32x1xf32>
    %18 = vector.broadcast %10 : vector<32x1xf32> to vector<32x32xf32>
    %19 = arith.subf %4, %18 : vector<32x32xf32>
    %cst_10 = arith.constant 9.99999974E-6 : f32
    %20 = vector.broadcast %cst_10 : f32 to vector<32x1xf32>
    %21 = arith.addf %17, %20 : vector<32x1xf32>
    %22 = math.rsqrt %21 : vector<32x1xf32>
    %23 = vector.broadcast %22 : vector<32x1xf32> to vector<32x32xf32>
    %24 = arith.mulf %19, %23 : vector<32x32xf32>
    %25 = vector.broadcast %5 : vector<1x32xf32> to vector<32x32xf32>
    %26 = arith.mulf %24, %25 : vector<32x32xf32>
    %27 = vector.broadcast %6 : vector<1x32xf32> to vector<32x32xf32>
    %28 = arith.addf %26, %27 : vector<32x32xf32>
    %29 = arith.truncf %28 : vector<32x32xf32> to vector<32x32xbf16>
    %c0_11 = arith.constant 0 : index
    %c0_12 = arith.constant 0 : index
    %30 = vector.load %arg5[%c0_11, %c0_12] : memref<32x128xbf16, #tpu.memory_space<vmem>>, vector<32x128xbf16>
    %cst_13 = arith.constant dense<0.000000e+00> : vector<32x128xf32>
    %31 = tpu.matmul %29, %30, %cst_13 {dimension_numbers = #tpu.dot_dimension_numbers<[1], [0], [0], [1], [0, 0, 1, 1], [], []>} : vector<32x32xbf16>, vector<32x128xbf16>, vector<32x128xf32> -> vector<32x128xf32>
    %c0_14 = arith.constant 0 : index
    %c0_15 = arith.constant 0 : index
    %32 = vector.load %arg6[%c0_14, %c0_15] : memref<1x128xf32, #tpu.memory_space<vmem>>, vector<1x128xf32>
    %33 = vector.broadcast %32 : vector<1x128xf32> to vector<32x128xf32>
    %34 = arith.addf %31, %33 : vector<32x128xf32>
    %cst_16 = arith.constant 5.000000e-01 : f32
    %35 = vector.broadcast %cst_16 : f32 to vector<32x128xf32>
    %36 = arith.mulf %35, %34 : vector<32x128xf32>
    %cst_17 = arith.constant 4.471500e-02 : f32
    %37 = vector.broadcast %cst_17 : f32 to vector<32x128xf32>
    %38 = arith.mulf %37, %34 : vector<32x128xf32>
    %39 = arith.mulf %38, %34 : vector<32x128xf32>
    %40 = arith.mulf %39, %34 : vector<32x128xf32>
    %41 = arith.addf %34, %40 : vector<32x128xf32>
    %cst_18 = arith.constant 0.797884583 : f32
    %42 = vector.broadcast %cst_18 : f32 to vector<32x128xf32>
    %43 = arith.mulf %42, %41 : vector<32x128xf32>
    %44 = math.tanh %43 : vector<32x128xf32>
    %cst_19 = arith.constant 1.000000e+00 : f32
    %45 = vector.broadcast %cst_19 : f32 to vector<32x128xf32>
    %46 = arith.addf %45, %44 : vector<32x128xf32>
    %47 = arith.mulf %36, %46 : vector<32x128xf32>
    %48 = arith.truncf %47 : vector<32x128xf32> to vector<32x128xbf16>
    %c0_20 = arith.constant 0 : index
    %c0_21 = arith.constant 0 : index
    %49 = vector.load %arg7[%c0_20, %c0_21] : memref<128x32xbf16, #tpu.memory_space<vmem>>, vector<128x32xbf16>
    %cst_22 = arith.constant dense<0.000000e+00> : vector<32x32xf32>
    %50 = tpu.matmul %48, %49, %cst_22 {dimension_numbers = #tpu.dot_dimension_numbers<[1], [0], [0], [1], [0, 0, 1, 1], [], []>} : vector<32x128xbf16>, vector<128x32xbf16>, vector<32x32xf32> -> vector<32x32xf32>
    %c0_23 = arith.constant 0 : index
    %c0_24 = arith.constant 0 : index
    %51 = vector.load %arg8[%c0_23, %c0_24] : memref<1x32xf32, #tpu.memory_space<vmem>>, vector<1x32xf32>
    %52 = vector.broadcast %51 : vector<1x32xf32> to vector<32x32xf32>
    %53 = arith.addf %50, %52 : vector<32x32xf32>
    %54 = arith.addf %4, %53 : vector<32x32xf32>
    %55 = arith.truncf %54 : vector<32x32xf32> to vector<32x32xbf16>
    %c0_25 = arith.constant 0 : index
    %c0_26 = arith.constant 0 : index
    %56 = vector.load %arg9[%c0_25, %c0_26] : memref<32x32xbf16, #tpu.memory_space<vmem>>, vector<32x32xbf16>
    tpu.vector_store %arg9[%c0_25, %c0_26], %55 {strides = array<i32>} : memref<32x32xbf16, #tpu.memory_space<vmem>>, vector<32x32xbf16>,
    return
  }
  func.func @transform_0(%arg0: i32) -> (i32, i32) {
    %c0_i32 = arith.constant 0 : i32
    %c0_i32_0 = arith.constant 0 : i32
    return %arg0, %c0_i32 : i32, i32
  }
  func.func @transform_1(%arg0: i32) -> (i32, i32) {
    %c0_i32 = arith.constant 0 : i32
    %c0_i32_0 = arith.constant 0 : i32
    return %arg0, %c0_i32 : i32, i32
  }
  func.func @transform_2(%arg0: i32) -> (i32, i32) {
    %c0_i32 = arith.constant 0 : i32
    %c0_i32_0 = arith.constant 0 : i32
    %c0_i32_1 = arith.constant 0 : i32
    return %c0_i32, %c0_i32_0 : i32, i32
  }
  func.func @transform_3(%arg0: i32) -> (i32, i32) {
    %c0_i32 = arith.constant 0 : i32
    %c0_i32_0 = arith.constant 0 : i32
    %c0_i32_1 = arith.constant 0 : i32
    return %c0_i32, %c0_i32_0 : i32, i32
  }
  func.func @transform_4(%arg0: i32) -> (i32, i32) {
    %c0_i32 = arith.constant 0 : i32
    %c0_i32_0 = arith.constant 0 : i32
    %c0_i32_1 = arith.constant 0 : i32
    return %c0_i32, %c0_i32_0 : i32, i32
  }
  func.func @transform_5(%arg0: i32) -> (i32, i32) {
    %c0_i32 = arith.constant 0 : i32
    %c0_i32_0 = arith.constant 0 : i32
    %c0_i32_1 = arith.constant 0 : i32
    return %c0_i32, %c0_i32_0 : i32, i32
  }
  func.func @transform_6(%arg0: i32) -> (i32, i32) {
    %c0_i32 = arith.constant 0 : i32
    %c0_i32_0 = arith.constant 0 : i32
    %c0_i32_1 = arith.constant 0 : i32
    return %c0_i32, %c0_i32_0 : i32, i32
  }
  func.func @transform_7(%arg0: i32) -> (i32, i32) {
    %c0_i32 = arith.constant 0 : i32
    %c0_i32_0 = arith.constant 0 : i32
    %c0_i32_1 = arith.constant 0 : i32
    return %c0_i32, %c0_i32_0 : i32, i32
  }
  func.func @transform_8(%arg0: i32) -> (i32, i32) {
    %c0_i32 = arith.constant 0 : i32
    %c0_i32_0 = arith.constant 0 : i32
    return %arg0, %c0_i32 : i32, i32
  }
}

module attributes {stable_mosaic.version = 11 : i64} {
  func.func @_wattn_proj_kernel(%arg0: i32, %arg1: memref<4x2x4x96xbf16, #tpu.memory_space<vmem>>, %arg2: memref<2x4x4xf32, #tpu.memory_space<vmem>>, %arg3: memref<4x4x4xf32, #tpu.memory_space<vmem>>, %arg4: memref<32x32xbf16, #tpu.memory_space<vmem>>, %arg5: memref<1x32xf32, #tpu.memory_space<vmem>>, %arg6: memref<4x2x4x32xbf16, #tpu.memory_space<vmem>>) attributes {dimension_semantics = [#tpu.dimension_semantics<parallel>], iteration_bounds = array<i64: 1>, scalar_prefetch = 0 : i64, scratch_operands = 0 : i64, tpu.core_type = #tpu.core_type<tc>, window_params = [{transform_indices = @transform_0, window_bounds = array<i64: 4, 2, 4, 96>}, {pipeline_mode = #tpu.pipeline_mode<synchronous>, transform_indices = @transform_1, window_bounds = array<i64: 2, 4, 4>}, {transform_indices = @transform_2, window_bounds = array<i64: 4, 4, 4>}, {pipeline_mode = #tpu.pipeline_mode<synchronous>, transform_indices = @transform_3, window_bounds = array<i64: 32, 32>}, {pipeline_mode = #tpu.pipeline_mode<synchronous>, transform_indices = @transform_4, window_bounds = array<i64: 1, 32>}, {transform_indices = @transform_5, window_bounds = array<i64: 4, 2, 4, 32>}]} {
    %c0 = arith.constant 0 : index
    %c0_0 = arith.constant 0 : index
    %c0_1 = arith.constant 0 : index
    %c0_2 = arith.constant 0 : index
    %0 = vector.load %arg1[%c0, %c0_0, %c0_1, %c0_2] : memref<4x2x4x96xbf16, #tpu.memory_space<vmem>>, vector<4x2x4x96xbf16>
    %c0_3 = arith.constant 0 : index
    %c0_4 = arith.constant 0 : index
    %c0_5 = arith.constant 0 : index
    %1 = vector.load %arg2[%c0_3, %c0_4, %c0_5] : memref<2x4x4xf32, #tpu.memory_space<vmem>>, vector<2x4x4xf32>
    %c0_6 = arith.constant 0 : index
    %c0_7 = arith.constant 0 : index
    %c0_8 = arith.constant 0 : index
    %2 = vector.load %arg3[%c0_6, %c0_7, %c0_8] : memref<4x4x4xf32, #tpu.memory_space<vmem>>, vector<4x4x4xf32>
    %c0_9 = arith.constant 0 : index
    %c0_10 = arith.constant 0 : index
    %3 = vector.load %arg4[%c0_9, %c0_10] : memref<32x32xbf16, #tpu.memory_space<vmem>>, vector<32x32xbf16>
    %c0_11 = arith.constant 0 : index
    %c0_12 = arith.constant 0 : index
    %4 = vector.load %arg5[%c0_11, %c0_12] : memref<1x32xf32, #tpu.memory_space<vmem>>, vector<1x32xf32>
    %cst = arith.constant 0.000000e+00 : f32
    %5 = vector.broadcast %cst : f32 to vector<32x32xf32>
    %6 = vector.broadcast %4 : vector<1x32xf32> to vector<32x32xf32>
    %7 = arith.addf %5, %6 : vector<32x32xf32>
    %8 = vector.extract_strided_slice %0 {offsets = [0, 0, 0, 0], sizes = [4, 2, 4, 16], strides = [1, 1, 1, 1]} : vector<4x2x4x96xbf16> to vector<4x2x4x16xbf16>
    %9 = vector.shape_cast %8 : vector<4x2x4x16xbf16> to vector<8x4x16xbf16>
    %10 = vector.extract_strided_slice %0 {offsets = [0, 0, 0, 32], sizes = [4, 2, 4, 16], strides = [1, 1, 1, 1]} : vector<4x2x4x96xbf16> to vector<4x2x4x16xbf16>
    %11 = vector.shape_cast %10 : vector<4x2x4x16xbf16> to vector<8x4x16xbf16>
    %12 = vector.extract_strided_slice %0 {offsets = [0, 0, 0, 64], sizes = [4, 2, 4, 16], strides = [1, 1, 1, 1]} : vector<4x2x4x96xbf16> to vector<4x2x4x16xbf16>
    %13 = vector.shape_cast %12 : vector<4x2x4x16xbf16> to vector<8x4x16xbf16>
    "tpu.trace_start"() <{level = 10 : i32, message = "bnd,bmd->bnm"}> : () -> ()
    %cst_13 = arith.constant dense<0.000000e+00> : vector<8x4x4xf32>
    %14 = tpu.matmul %9, %11, %cst_13 {dimension_numbers = #tpu.dot_dimension_numbers<[2], [2], [1], [1], [0, 0, 0, 1, 1, 1], [0], [0]>} : vector<8x4x16xbf16>, vector<8x4x16xbf16>, vector<8x4x4xf32> -> vector<8x4x4xf32>
    "tpu.trace_stop"() : () -> ()
    %cst_14 = arith.constant 2.500000e-01 : f32
    %15 = vector.broadcast %cst_14 : f32 to vector<8x4x4xf32>
    %16 = arith.mulf %14, %15 : vector<8x4x4xf32>
    %17 = vector.shape_cast %16 : vector<8x4x4xf32> to vector<4x2x4x4xf32>
    %18 = vector.extract_strided_slice %1 {offsets = [0, 0, 0], sizes = [1, 4, 4], strides = [1, 1, 1]} : vector<2x4x4xf32> to vector<1x4x4xf32>
    %19 = vector.shape_cast %18 : vector<1x4x4xf32> to vector<4x4xf32>
    %20 = vector.shape_cast %19 : vector<4x4xf32> to vector<1x1x4x4xf32>
    %21 = vector.broadcast %20 : vector<1x1x4x4xf32> to vector<4x2x4x4xf32>
    %22 = arith.addf %17, %21 : vector<4x2x4x4xf32>
    %23 = vector.shape_cast %2 : vector<4x4x4xf32> to vector<4x1x4x4xf32>
    %24 = vector.broadcast %23 : vector<4x1x4x4xf32> to vector<4x2x4x4xf32>
    %25 = arith.addf %22, %24 : vector<4x2x4x4xf32>
    %cst_15 = arith.constant dense<0xFF800000> : vector<4x2x4xf32>
    %26 = vector.multi_reduction <maximumf>, %25, %cst_15 [3] : vector<4x2x4x4xf32> to vector<4x2x4xf32>
    %27 = vector.shape_cast %26 : vector<4x2x4xf32> to vector<4x2x4x1xf32>
    %28 = vector.broadcast %27 : vector<4x2x4x1xf32> to vector<4x2x4x4xf32>
    %29 = arith.subf %25, %28 : vector<4x2x4x4xf32>
    %30 = math.exp %29 : vector<4x2x4x4xf32>
    %cst_16 = arith.constant dense<0.000000e+00> : vector<4x2x4xf32>
    %31 = vector.multi_reduction <add>, %30, %cst_16 [3] : vector<4x2x4x4xf32> to vector<4x2x4xf32>
    %32 = vector.shape_cast %31 : vector<4x2x4xf32> to vector<4x2x4x1xf32>
    %33 = tpu.reciprocal %32 {approx = true} : vector<4x2x4x1xf32> -> vector<4x2x4x1xf32>
    %34 = vector.broadcast %33 : vector<4x2x4x1xf32> to vector<4x2x4x4xf32>
    %35 = arith.mulf %30, %34 : vector<4x2x4x4xf32>
    %36 = vector.shape_cast %35 : vector<4x2x4x4xf32> to vector<8x4x4xf32>
    %37 = arith.truncf %36 : vector<8x4x4xf32> to vector<8x4x4xbf16>
    "tpu.trace_start"() <{level = 10 : i32, message = "bnm,bmd->bnd"}> : () -> ()
    %cst_17 = arith.constant dense<0.000000e+00> : vector<8x4x16xf32>
    %38 = tpu.matmul %37, %13, %cst_17 {dimension_numbers = #tpu.dot_dimension_numbers<[2], [1], [1], [2], [0, 0, 0, 1, 1, 2], [0], [0]>} : vector<8x4x4xbf16>, vector<8x4x16xbf16>, vector<8x4x16xf32> -> vector<8x4x16xf32>
    "tpu.trace_stop"() : () -> ()
    %39 = vector.shape_cast %38 : vector<8x4x16xf32> to vector<32x16xf32>
    %40 = arith.truncf %39 : vector<32x16xf32> to vector<32x16xbf16>
    %41 = vector.extract_strided_slice %3 {offsets = [0, 0], sizes = [16, 32], strides = [1, 1]} : vector<32x32xbf16> to vector<16x32xbf16>
    %cst_18 = arith.constant dense<0.000000e+00> : vector<32x32xf32>
    %42 = tpu.matmul %40, %41, %cst_18 {dimension_numbers = #tpu.dot_dimension_numbers<[1], [0], [0], [1], [0, 0, 1, 1], [], []>} : vector<32x16xbf16>, vector<16x32xbf16>, vector<32x32xf32> -> vector<32x32xf32>
    %43 = arith.addf %7, %42 : vector<32x32xf32>
    %44 = vector.extract_strided_slice %0 {offsets = [0, 0, 0, 16], sizes = [4, 2, 4, 16], strides = [1, 1, 1, 1]} : vector<4x2x4x96xbf16> to vector<4x2x4x16xbf16>
    %45 = vector.shape_cast %44 : vector<4x2x4x16xbf16> to vector<8x4x16xbf16>
    %46 = vector.extract_strided_slice %0 {offsets = [0, 0, 0, 48], sizes = [4, 2, 4, 16], strides = [1, 1, 1, 1]} : vector<4x2x4x96xbf16> to vector<4x2x4x16xbf16>
    %47 = vector.shape_cast %46 : vector<4x2x4x16xbf16> to vector<8x4x16xbf16>
    %48 = vector.extract_strided_slice %0 {offsets = [0, 0, 0, 80], sizes = [4, 2, 4, 16], strides = [1, 1, 1, 1]} : vector<4x2x4x96xbf16> to vector<4x2x4x16xbf16>
    %49 = vector.shape_cast %48 : vector<4x2x4x16xbf16> to vector<8x4x16xbf16>
    "tpu.trace_start"() <{level = 10 : i32, message = "bnd,bmd->bnm"}> : () -> ()
    %cst_19 = arith.constant dense<0.000000e+00> : vector<8x4x4xf32>
    %50 = tpu.matmul %45, %47, %cst_19 {dimension_numbers = #tpu.dot_dimension_numbers<[2], [2], [1], [1], [0, 0, 0, 1, 1, 1], [0], [0]>} : vector<8x4x16xbf16>, vector<8x4x16xbf16>, vector<8x4x4xf32> -> vector<8x4x4xf32>
    "tpu.trace_stop"() : () -> ()
    %cst_20 = arith.constant 2.500000e-01 : f32
    %51 = vector.broadcast %cst_20 : f32 to vector<8x4x4xf32>
    %52 = arith.mulf %50, %51 : vector<8x4x4xf32>
    %53 = vector.shape_cast %52 : vector<8x4x4xf32> to vector<4x2x4x4xf32>
    %54 = vector.extract_strided_slice %1 {offsets = [1, 0, 0], sizes = [1, 4, 4], strides = [1, 1, 1]} : vector<2x4x4xf32> to vector<1x4x4xf32>
    %55 = vector.shape_cast %54 : vector<1x4x4xf32> to vector<4x4xf32>
    %56 = vector.shape_cast %55 : vector<4x4xf32> to vector<1x1x4x4xf32>
    %57 = vector.broadcast %56 : vector<1x1x4x4xf32> to vector<4x2x4x4xf32>
    %58 = arith.addf %53, %57 : vector<4x2x4x4xf32>
    %59 = vector.shape_cast %2 : vector<4x4x4xf32> to vector<4x1x4x4xf32>
    %60 = vector.broadcast %59 : vector<4x1x4x4xf32> to vector<4x2x4x4xf32>
    %61 = arith.addf %58, %60 : vector<4x2x4x4xf32>
    %cst_21 = arith.constant dense<0xFF800000> : vector<4x2x4xf32>
    %62 = vector.multi_reduction <maximumf>, %61, %cst_21 [3] : vector<4x2x4x4xf32> to vector<4x2x4xf32>
    %63 = vector.shape_cast %62 : vector<4x2x4xf32> to vector<4x2x4x1xf32>
    %64 = vector.broadcast %63 : vector<4x2x4x1xf32> to vector<4x2x4x4xf32>
    %65 = arith.subf %61, %64 : vector<4x2x4x4xf32>
    %66 = math.exp %65 : vector<4x2x4x4xf32>
    %cst_22 = arith.constant dense<0.000000e+00> : vector<4x2x4xf32>
    %67 = vector.multi_reduction <add>, %66, %cst_22 [3] : vector<4x2x4x4xf32> to vector<4x2x4xf32>
    %68 = vector.shape_cast %67 : vector<4x2x4xf32> to vector<4x2x4x1xf32>
    %69 = tpu.reciprocal %68 {approx = true} : vector<4x2x4x1xf32> -> vector<4x2x4x1xf32>
    %70 = vector.broadcast %69 : vector<4x2x4x1xf32> to vector<4x2x4x4xf32>
    %71 = arith.mulf %66, %70 : vector<4x2x4x4xf32>
    %72 = vector.shape_cast %71 : vector<4x2x4x4xf32> to vector<8x4x4xf32>
    %73 = arith.truncf %72 : vector<8x4x4xf32> to vector<8x4x4xbf16>
    "tpu.trace_start"() <{level = 10 : i32, message = "bnm,bmd->bnd"}> : () -> ()
    %cst_23 = arith.constant dense<0.000000e+00> : vector<8x4x16xf32>
    %74 = tpu.matmul %73, %49, %cst_23 {dimension_numbers = #tpu.dot_dimension_numbers<[2], [1], [1], [2], [0, 0, 0, 1, 1, 2], [0], [0]>} : vector<8x4x4xbf16>, vector<8x4x16xbf16>, vector<8x4x16xf32> -> vector<8x4x16xf32>
    "tpu.trace_stop"() : () -> ()
    %75 = vector.shape_cast %74 : vector<8x4x16xf32> to vector<32x16xf32>
    %76 = arith.truncf %75 : vector<32x16xf32> to vector<32x16xbf16>
    %77 = vector.extract_strided_slice %3 {offsets = [16, 0], sizes = [16, 32], strides = [1, 1]} : vector<32x32xbf16> to vector<16x32xbf16>
    %cst_24 = arith.constant dense<0.000000e+00> : vector<32x32xf32>
    %78 = tpu.matmul %76, %77, %cst_24 {dimension_numbers = #tpu.dot_dimension_numbers<[1], [0], [0], [1], [0, 0, 1, 1], [], []>} : vector<32x16xbf16>, vector<16x32xbf16>, vector<32x32xf32> -> vector<32x32xf32>
    %79 = arith.addf %43, %78 : vector<32x32xf32>
    %80 = vector.shape_cast %79 : vector<32x32xf32> to vector<4x2x4x32xf32>
    %81 = arith.truncf %80 : vector<4x2x4x32xf32> to vector<4x2x4x32xbf16>
    %c0_25 = arith.constant 0 : index
    %c0_26 = arith.constant 0 : index
    %c0_27 = arith.constant 0 : index
    %c0_28 = arith.constant 0 : index
    %82 = vector.load %arg6[%c0_25, %c0_26, %c0_27, %c0_28] : memref<4x2x4x32xbf16, #tpu.memory_space<vmem>>, vector<4x2x4x32xbf16>
    tpu.vector_store %arg6[%c0_25, %c0_26, %c0_27, %c0_28], %81 {strides = array<i32>} : memref<4x2x4x32xbf16, #tpu.memory_space<vmem>>, vector<4x2x4x32xbf16>,
    return
  }
  func.func @transform_0(%arg0: i32) -> (i32, i32, i32, i32) {
    %c0_i32 = arith.constant 0 : i32
    %c0_i32_0 = arith.constant 0 : i32
    %c0_i32_1 = arith.constant 0 : i32
    %c0_i32_2 = arith.constant 0 : i32
    return %arg0, %c0_i32, %c0_i32_0, %c0_i32_1 : i32, i32, i32, i32
  }
  func.func @transform_1(%arg0: i32) -> (i32, i32, i32) {
    %c0_i32 = arith.constant 0 : i32
    %c0_i32_0 = arith.constant 0 : i32
    %c0_i32_1 = arith.constant 0 : i32
    %c0_i32_2 = arith.constant 0 : i32
    return %c0_i32, %c0_i32_0, %c0_i32_1 : i32, i32, i32
  }
  func.func @transform_2(%arg0: i32) -> (i32, i32, i32) {
    %c0_i32 = arith.constant 0 : i32
    %c0_i32_0 = arith.constant 0 : i32
    %c0_i32_1 = arith.constant 0 : i32
    return %arg0, %c0_i32, %c0_i32_0 : i32, i32, i32
  }
  func.func @transform_3(%arg0: i32) -> (i32, i32) {
    %c0_i32 = arith.constant 0 : i32
    %c0_i32_0 = arith.constant 0 : i32
    %c0_i32_1 = arith.constant 0 : i32
    return %c0_i32, %c0_i32_0 : i32, i32
  }
  func.func @transform_4(%arg0: i32) -> (i32, i32) {
    %c0_i32 = arith.constant 0 : i32
    %c0_i32_0 = arith.constant 0 : i32
    %c0_i32_1 = arith.constant 0 : i32
    return %c0_i32, %c0_i32_0 : i32, i32
  }
  func.func @transform_5(%arg0: i32) -> (i32, i32, i32, i32) {
    %c0_i32 = arith.constant 0 : i32
    %c0_i32_0 = arith.constant 0 : i32
    %c0_i32_1 = arith.constant 0 : i32
    %c0_i32_2 = arith.constant 0 : i32
    return %arg0, %c0_i32, %c0_i32_0, %c0_i32_1 : i32, i32, i32, i32
  }
}

module attributes {stable_mosaic.version = 11 : i64} {
  func.func @_ln_linear_kernel(%arg0: i32, %arg1: memref<8x128xbf16, #tpu.memory_space<vmem>>, %arg2: memref<1x128xf32, #tpu.memory_space<vmem>>, %arg3: memref<1x128xf32, #tpu.memory_space<vmem>>, %arg4: memref<128x64xbf16, #tpu.memory_space<vmem>>, %arg5: memref<1x64xf32, #tpu.memory_space<vmem>>, %arg6: memref<8x64xbf16, #tpu.memory_space<vmem>>) attributes {dimension_semantics = [#tpu.dimension_semantics<parallel>], iteration_bounds = array<i64: 1>, scalar_prefetch = 0 : i64, scratch_operands = 0 : i64, tpu.core_type = #tpu.core_type<tc>, window_params = [{transform_indices = @transform_0, window_bounds = array<i64: 8, 128>}, {pipeline_mode = #tpu.pipeline_mode<synchronous>, transform_indices = @transform_1, window_bounds = array<i64: 1, 128>}, {pipeline_mode = #tpu.pipeline_mode<synchronous>, transform_indices = @transform_2, window_bounds = array<i64: 1, 128>}, {pipeline_mode = #tpu.pipeline_mode<synchronous>, transform_indices = @transform_3, window_bounds = array<i64: 128, 64>}, {pipeline_mode = #tpu.pipeline_mode<synchronous>, transform_indices = @transform_4, window_bounds = array<i64: 1, 64>}, {transform_indices = @transform_5, window_bounds = array<i64: 8, 64>}]} {
    %c0 = arith.constant 0 : index
    %c0_0 = arith.constant 0 : index
    %0 = vector.load %arg1[%c0, %c0_0] : memref<8x128xbf16, #tpu.memory_space<vmem>>, vector<8x128xbf16>
    %1 = arith.extf %0 : vector<8x128xbf16> to vector<8x128xf32>
    %c0_1 = arith.constant 0 : index
    %c0_2 = arith.constant 0 : index
    %2 = vector.load %arg2[%c0_1, %c0_2] : memref<1x128xf32, #tpu.memory_space<vmem>>, vector<1x128xf32>
    %c0_3 = arith.constant 0 : index
    %c0_4 = arith.constant 0 : index
    %3 = vector.load %arg3[%c0_3, %c0_4] : memref<1x128xf32, #tpu.memory_space<vmem>>, vector<1x128xf32>
    %cst = arith.constant dense<0.000000e+00> : vector<8xf32>
    %4 = vector.multi_reduction <add>, %1, %cst [1] : vector<8x128xf32> to vector<8xf32>
    %5 = vector.shape_cast %4 : vector<8xf32> to vector<8x1xf32>
    %cst_5 = arith.constant 1.280000e+02 : f32
    %6 = vector.broadcast %cst_5 : f32 to vector<8x1xf32>
    %7 = arith.divf %5, %6 : vector<8x1xf32>
    %8 = vector.broadcast %7 : vector<8x1xf32> to vector<8x128xf32>
    %9 = arith.subf %1, %8 : vector<8x128xf32>
    %10 = arith.mulf %9, %9 : vector<8x128xf32>
    %cst_6 = arith.constant dense<0.000000e+00> : vector<8xf32>
    %11 = vector.multi_reduction <add>, %10, %cst_6 [1] : vector<8x128xf32> to vector<8xf32>
    %12 = vector.shape_cast %11 : vector<8xf32> to vector<8x1xf32>
    %cst_7 = arith.constant 1.280000e+02 : f32
    %13 = vector.broadcast %cst_7 : f32 to vector<8x1xf32>
    %14 = arith.divf %12, %13 : vector<8x1xf32>
    %15 = vector.broadcast %7 : vector<8x1xf32> to vector<8x128xf32>
    %16 = arith.subf %1, %15 : vector<8x128xf32>
    %cst_8 = arith.constant 9.99999974E-6 : f32
    %17 = vector.broadcast %cst_8 : f32 to vector<8x1xf32>
    %18 = arith.addf %14, %17 : vector<8x1xf32>
    %19 = math.rsqrt %18 : vector<8x1xf32>
    %20 = vector.broadcast %19 : vector<8x1xf32> to vector<8x128xf32>
    %21 = arith.mulf %16, %20 : vector<8x128xf32>
    %22 = vector.broadcast %2 : vector<1x128xf32> to vector<8x128xf32>
    %23 = arith.mulf %21, %22 : vector<8x128xf32>
    %24 = vector.broadcast %3 : vector<1x128xf32> to vector<8x128xf32>
    %25 = arith.addf %23, %24 : vector<8x128xf32>
    %26 = arith.truncf %25 : vector<8x128xf32> to vector<8x128xbf16>
    %c0_9 = arith.constant 0 : index
    %c0_10 = arith.constant 0 : index
    %27 = vector.load %arg4[%c0_9, %c0_10] : memref<128x64xbf16, #tpu.memory_space<vmem>>, vector<128x64xbf16>
    %cst_11 = arith.constant dense<0.000000e+00> : vector<8x64xf32>
    %28 = tpu.matmul %26, %27, %cst_11 {dimension_numbers = #tpu.dot_dimension_numbers<[1], [0], [0], [1], [0, 0, 1, 1], [], []>} : vector<8x128xbf16>, vector<128x64xbf16>, vector<8x64xf32> -> vector<8x64xf32>
    %c0_12 = arith.constant 0 : index
    %c0_13 = arith.constant 0 : index
    %29 = vector.load %arg5[%c0_12, %c0_13] : memref<1x64xf32, #tpu.memory_space<vmem>>, vector<1x64xf32>
    %30 = vector.broadcast %29 : vector<1x64xf32> to vector<8x64xf32>
    %31 = arith.addf %28, %30 : vector<8x64xf32>
    %32 = arith.truncf %31 : vector<8x64xf32> to vector<8x64xbf16>
    %c0_14 = arith.constant 0 : index
    %c0_15 = arith.constant 0 : index
    %33 = vector.load %arg6[%c0_14, %c0_15] : memref<8x64xbf16, #tpu.memory_space<vmem>>, vector<8x64xbf16>
    tpu.vector_store %arg6[%c0_14, %c0_15], %32 {strides = array<i32>} : memref<8x64xbf16, #tpu.memory_space<vmem>>, vector<8x64xbf16>,
    return
  }
  func.func @transform_0(%arg0: i32) -> (i32, i32) {
    %c0_i32 = arith.constant 0 : i32
    %c0_i32_0 = arith.constant 0 : i32
    return %arg0, %c0_i32 : i32, i32
  }
  func.func @transform_1(%arg0: i32) -> (i32, i32) {
    %c0_i32 = arith.constant 0 : i32
    %c0_i32_0 = arith.constant 0 : i32
    %c0_i32_1 = arith.constant 0 : i32
    return %c0_i32, %c0_i32_0 : i32, i32
  }
  func.func @transform_2(%arg0: i32) -> (i32, i32) {
    %c0_i32 = arith.constant 0 : i32
    %c0_i32_0 = arith.constant 0 : i32
    %c0_i32_1 = arith.constant 0 : i32
    return %c0_i32, %c0_i32_0 : i32, i32
  }
  func.func @transform_3(%arg0: i32) -> (i32, i32) {
    %c0_i32 = arith.constant 0 : i32
    %c0_i32_0 = arith.constant 0 : i32
    %c0_i32_1 = arith.constant 0 : i32
    return %c0_i32, %c0_i32_0 : i32, i32
  }
  func.func @transform_4(%arg0: i32) -> (i32, i32) {
    %c0_i32 = arith.constant 0 : i32
    %c0_i32_0 = arith.constant 0 : i32
    %c0_i32_1 = arith.constant 0 : i32
    return %c0_i32, %c0_i32_0 : i32, i32
  }
  func.func @transform_5(%arg0: i32) -> (i32, i32) {
    %c0_i32 = arith.constant 0 : i32
    %c0_i32_0 = arith.constant 0 : i32
    return %arg0, %c0_i32 : i32, i32
  }
}

module attributes {stable_mosaic.version = 11 : i64} {
  func.func @_wattn_proj_kernel(%arg0: i32, %arg1: memref<1x2x4x192xbf16, #tpu.memory_space<vmem>>, %arg2: memref<4x4x4xf32, #tpu.memory_space<vmem>>, %arg3: memref<64x64xbf16, #tpu.memory_space<vmem>>, %arg4: memref<1x64xf32, #tpu.memory_space<vmem>>, %arg5: memref<1x2x4x64xbf16, #tpu.memory_space<vmem>>) attributes {dimension_semantics = [#tpu.dimension_semantics<parallel>], iteration_bounds = array<i64: 1>, scalar_prefetch = 0 : i64, scratch_operands = 0 : i64, tpu.core_type = #tpu.core_type<tc>, window_params = [{transform_indices = @transform_0, window_bounds = array<i64: 1, 2, 4, 192>}, {pipeline_mode = #tpu.pipeline_mode<synchronous>, transform_indices = @transform_1, window_bounds = array<i64: 4, 4, 4>}, {pipeline_mode = #tpu.pipeline_mode<synchronous>, transform_indices = @transform_2, window_bounds = array<i64: 64, 64>}, {pipeline_mode = #tpu.pipeline_mode<synchronous>, transform_indices = @transform_3, window_bounds = array<i64: 1, 64>}, {transform_indices = @transform_4, window_bounds = array<i64: 1, 2, 4, 64>}]} {
    %c0 = arith.constant 0 : index
    %c0_0 = arith.constant 0 : index
    %c0_1 = arith.constant 0 : index
    %c0_2 = arith.constant 0 : index
    %0 = vector.load %arg1[%c0, %c0_0, %c0_1, %c0_2] : memref<1x2x4x192xbf16, #tpu.memory_space<vmem>>, vector<1x2x4x192xbf16>
    %c0_3 = arith.constant 0 : index
    %c0_4 = arith.constant 0 : index
    %c0_5 = arith.constant 0 : index
    %1 = vector.load %arg2[%c0_3, %c0_4, %c0_5] : memref<4x4x4xf32, #tpu.memory_space<vmem>>, vector<4x4x4xf32>
    %c0_6 = arith.constant 0 : index
    %c0_7 = arith.constant 0 : index
    %2 = vector.load %arg3[%c0_6, %c0_7] : memref<64x64xbf16, #tpu.memory_space<vmem>>, vector<64x64xbf16>
    %c0_8 = arith.constant 0 : index
    %c0_9 = arith.constant 0 : index
    %3 = vector.load %arg4[%c0_8, %c0_9] : memref<1x64xf32, #tpu.memory_space<vmem>>, vector<1x64xf32>
    %cst = arith.constant 0.000000e+00 : f32
    %4 = vector.broadcast %cst : f32 to vector<8x64xf32>
    %5 = vector.broadcast %3 : vector<1x64xf32> to vector<8x64xf32>
    %6 = arith.addf %4, %5 : vector<8x64xf32>
    %7 = vector.extract_strided_slice %0 {offsets = [0, 0, 0, 0], sizes = [1, 2, 4, 16], strides = [1, 1, 1, 1]} : vector<1x2x4x192xbf16> to vector<1x2x4x16xbf16>
    %8 = vector.shape_cast %7 : vector<1x2x4x16xbf16> to vector<2x4x16xbf16>
    %9 = vector.extract_strided_slice %0 {offsets = [0, 0, 0, 64], sizes = [1, 2, 4, 16], strides = [1, 1, 1, 1]} : vector<1x2x4x192xbf16> to vector<1x2x4x16xbf16>
    %10 = vector.shape_cast %9 : vector<1x2x4x16xbf16> to vector<2x4x16xbf16>
    %11 = vector.extract_strided_slice %0 {offsets = [0, 0, 0, 128], sizes = [1, 2, 4, 16], strides = [1, 1, 1, 1]} : vector<1x2x4x192xbf16> to vector<1x2x4x16xbf16>
    %12 = vector.shape_cast %11 : vector<1x2x4x16xbf16> to vector<2x4x16xbf16>
    "tpu.trace_start"() <{level = 10 : i32, message = "bnd,bmd->bnm"}> : () -> ()
    %cst_10 = arith.constant dense<0.000000e+00> : vector<2x4x4xf32>
    %13 = tpu.matmul %8, %10, %cst_10 {dimension_numbers = #tpu.dot_dimension_numbers<[2], [2], [1], [1], [0, 0, 0, 1, 1, 1], [0], [0]>} : vector<2x4x16xbf16>, vector<2x4x16xbf16>, vector<2x4x4xf32> -> vector<2x4x4xf32>
    "tpu.trace_stop"() : () -> ()
    %cst_11 = arith.constant 2.500000e-01 : f32
    %14 = vector.broadcast %cst_11 : f32 to vector<2x4x4xf32>
    %15 = arith.mulf %13, %14 : vector<2x4x4xf32>
    %16 = vector.shape_cast %15 : vector<2x4x4xf32> to vector<1x2x4x4xf32>
    %17 = vector.extract_strided_slice %1 {offsets = [0, 0, 0], sizes = [1, 4, 4], strides = [1, 1, 1]} : vector<4x4x4xf32> to vector<1x4x4xf32>
    %18 = vector.shape_cast %17 : vector<1x4x4xf32> to vector<4x4xf32>
    %19 = vector.shape_cast %18 : vector<4x4xf32> to vector<1x1x4x4xf32>
    %20 = vector.broadcast %19 : vector<1x1x4x4xf32> to vector<1x2x4x4xf32>
    %21 = arith.addf %16, %20 : vector<1x2x4x4xf32>
    %cst_12 = arith.constant dense<0xFF800000> : vector<1x2x4xf32>
    %22 = vector.multi_reduction <maximumf>, %21, %cst_12 [3] : vector<1x2x4x4xf32> to vector<1x2x4xf32>
    %23 = vector.shape_cast %22 : vector<1x2x4xf32> to vector<1x2x4x1xf32>
    %24 = vector.broadcast %23 : vector<1x2x4x1xf32> to vector<1x2x4x4xf32>
    %25 = arith.subf %21, %24 : vector<1x2x4x4xf32>
    %26 = math.exp %25 : vector<1x2x4x4xf32>
    %cst_13 = arith.constant dense<0.000000e+00> : vector<1x2x4xf32>
    %27 = vector.multi_reduction <add>, %26, %cst_13 [3] : vector<1x2x4x4xf32> to vector<1x2x4xf32>
    %28 = vector.shape_cast %27 : vector<1x2x4xf32> to vector<1x2x4x1xf32>
    %29 = tpu.reciprocal %28 {approx = true} : vector<1x2x4x1xf32> -> vector<1x2x4x1xf32>
    %30 = vector.broadcast %29 : vector<1x2x4x1xf32> to vector<1x2x4x4xf32>
    %31 = arith.mulf %26, %30 : vector<1x2x4x4xf32>
    %32 = vector.shape_cast %31 : vector<1x2x4x4xf32> to vector<2x4x4xf32>
    %33 = arith.truncf %32 : vector<2x4x4xf32> to vector<2x4x4xbf16>
    "tpu.trace_start"() <{level = 10 : i32, message = "bnm,bmd->bnd"}> : () -> ()
    %cst_14 = arith.constant dense<0.000000e+00> : vector<2x4x16xf32>
    %34 = tpu.matmul %33, %12, %cst_14 {dimension_numbers = #tpu.dot_dimension_numbers<[2], [1], [1], [2], [0, 0, 0, 1, 1, 2], [0], [0]>} : vector<2x4x4xbf16>, vector<2x4x16xbf16>, vector<2x4x16xf32> -> vector<2x4x16xf32>
    "tpu.trace_stop"() : () -> ()
    %35 = vector.shape_cast %34 : vector<2x4x16xf32> to vector<8x16xf32>
    %36 = arith.truncf %35 : vector<8x16xf32> to vector<8x16xbf16>
    %37 = vector.extract_strided_slice %2 {offsets = [0, 0], sizes = [16, 64], strides = [1, 1]} : vector<64x64xbf16> to vector<16x64xbf16>
    %cst_15 = arith.constant dense<0.000000e+00> : vector<8x64xf32>
    %38 = tpu.matmul %36, %37, %cst_15 {dimension_numbers = #tpu.dot_dimension_numbers<[1], [0], [0], [1], [0, 0, 1, 1], [], []>} : vector<8x16xbf16>, vector<16x64xbf16>, vector<8x64xf32> -> vector<8x64xf32>
    %39 = arith.addf %6, %38 : vector<8x64xf32>
    %40 = vector.extract_strided_slice %0 {offsets = [0, 0, 0, 16], sizes = [1, 2, 4, 16], strides = [1, 1, 1, 1]} : vector<1x2x4x192xbf16> to vector<1x2x4x16xbf16>
    %41 = vector.shape_cast %40 : vector<1x2x4x16xbf16> to vector<2x4x16xbf16>
    %42 = vector.extract_strided_slice %0 {offsets = [0, 0, 0, 80], sizes = [1, 2, 4, 16], strides = [1, 1, 1, 1]} : vector<1x2x4x192xbf16> to vector<1x2x4x16xbf16>
    %43 = vector.shape_cast %42 : vector<1x2x4x16xbf16> to vector<2x4x16xbf16>
    %44 = vector.extract_strided_slice %0 {offsets = [0, 0, 0, 144], sizes = [1, 2, 4, 16], strides = [1, 1, 1, 1]} : vector<1x2x4x192xbf16> to vector<1x2x4x16xbf16>
    %45 = vector.shape_cast %44 : vector<1x2x4x16xbf16> to vector<2x4x16xbf16>
    "tpu.trace_start"() <{level = 10 : i32, message = "bnd,bmd->bnm"}> : () -> ()
    %cst_16 = arith.constant dense<0.000000e+00> : vector<2x4x4xf32>
    %46 = tpu.matmul %41, %43, %cst_16 {dimension_numbers = #tpu.dot_dimension_numbers<[2], [2], [1], [1], [0, 0, 0, 1, 1, 1], [0], [0]>} : vector<2x4x16xbf16>, vector<2x4x16xbf16>, vector<2x4x4xf32> -> vector<2x4x4xf32>
    "tpu.trace_stop"() : () -> ()
    %cst_17 = arith.constant 2.500000e-01 : f32
    %47 = vector.broadcast %cst_17 : f32 to vector<2x4x4xf32>
    %48 = arith.mulf %46, %47 : vector<2x4x4xf32>
    %49 = vector.shape_cast %48 : vector<2x4x4xf32> to vector<1x2x4x4xf32>
    %50 = vector.extract_strided_slice %1 {offsets = [1, 0, 0], sizes = [1, 4, 4], strides = [1, 1, 1]} : vector<4x4x4xf32> to vector<1x4x4xf32>
    %51 = vector.shape_cast %50 : vector<1x4x4xf32> to vector<4x4xf32>
    %52 = vector.shape_cast %51 : vector<4x4xf32> to vector<1x1x4x4xf32>
    %53 = vector.broadcast %52 : vector<1x1x4x4xf32> to vector<1x2x4x4xf32>
    %54 = arith.addf %49, %53 : vector<1x2x4x4xf32>
    %cst_18 = arith.constant dense<0xFF800000> : vector<1x2x4xf32>
    %55 = vector.multi_reduction <maximumf>, %54, %cst_18 [3] : vector<1x2x4x4xf32> to vector<1x2x4xf32>
    %56 = vector.shape_cast %55 : vector<1x2x4xf32> to vector<1x2x4x1xf32>
    %57 = vector.broadcast %56 : vector<1x2x4x1xf32> to vector<1x2x4x4xf32>
    %58 = arith.subf %54, %57 : vector<1x2x4x4xf32>
    %59 = math.exp %58 : vector<1x2x4x4xf32>
    %cst_19 = arith.constant dense<0.000000e+00> : vector<1x2x4xf32>
    %60 = vector.multi_reduction <add>, %59, %cst_19 [3] : vector<1x2x4x4xf32> to vector<1x2x4xf32>
    %61 = vector.shape_cast %60 : vector<1x2x4xf32> to vector<1x2x4x1xf32>
    %62 = tpu.reciprocal %61 {approx = true} : vector<1x2x4x1xf32> -> vector<1x2x4x1xf32>
    %63 = vector.broadcast %62 : vector<1x2x4x1xf32> to vector<1x2x4x4xf32>
    %64 = arith.mulf %59, %63 : vector<1x2x4x4xf32>
    %65 = vector.shape_cast %64 : vector<1x2x4x4xf32> to vector<2x4x4xf32>
    %66 = arith.truncf %65 : vector<2x4x4xf32> to vector<2x4x4xbf16>
    "tpu.trace_start"() <{level = 10 : i32, message = "bnm,bmd->bnd"}> : () -> ()
    %cst_20 = arith.constant dense<0.000000e+00> : vector<2x4x16xf32>
    %67 = tpu.matmul %66, %45, %cst_20 {dimension_numbers = #tpu.dot_dimension_numbers<[2], [1], [1], [2], [0, 0, 0, 1, 1, 2], [0], [0]>} : vector<2x4x4xbf16>, vector<2x4x16xbf16>, vector<2x4x16xf32> -> vector<2x4x16xf32>
    "tpu.trace_stop"() : () -> ()
    %68 = vector.shape_cast %67 : vector<2x4x16xf32> to vector<8x16xf32>
    %69 = arith.truncf %68 : vector<8x16xf32> to vector<8x16xbf16>
    %70 = vector.extract_strided_slice %2 {offsets = [16, 0], sizes = [16, 64], strides = [1, 1]} : vector<64x64xbf16> to vector<16x64xbf16>
    %cst_21 = arith.constant dense<0.000000e+00> : vector<8x64xf32>
    %71 = tpu.matmul %69, %70, %cst_21 {dimension_numbers = #tpu.dot_dimension_numbers<[1], [0], [0], [1], [0, 0, 1, 1], [], []>} : vector<8x16xbf16>, vector<16x64xbf16>, vector<8x64xf32> -> vector<8x64xf32>
    %72 = arith.addf %39, %71 : vector<8x64xf32>
    %73 = vector.extract_strided_slice %0 {offsets = [0, 0, 0, 32], sizes = [1, 2, 4, 16], strides = [1, 1, 1, 1]} : vector<1x2x4x192xbf16> to vector<1x2x4x16xbf16>
    %74 = vector.shape_cast %73 : vector<1x2x4x16xbf16> to vector<2x4x16xbf16>
    %75 = vector.extract_strided_slice %0 {offsets = [0, 0, 0, 96], sizes = [1, 2, 4, 16], strides = [1, 1, 1, 1]} : vector<1x2x4x192xbf16> to vector<1x2x4x16xbf16>
    %76 = vector.shape_cast %75 : vector<1x2x4x16xbf16> to vector<2x4x16xbf16>
    %77 = vector.extract_strided_slice %0 {offsets = [0, 0, 0, 160], sizes = [1, 2, 4, 16], strides = [1, 1, 1, 1]} : vector<1x2x4x192xbf16> to vector<1x2x4x16xbf16>
    %78 = vector.shape_cast %77 : vector<1x2x4x16xbf16> to vector<2x4x16xbf16>
    "tpu.trace_start"() <{level = 10 : i32, message = "bnd,bmd->bnm"}> : () -> ()
    %cst_22 = arith.constant dense<0.000000e+00> : vector<2x4x4xf32>
    %79 = tpu.matmul %74, %76, %cst_22 {dimension_numbers = #tpu.dot_dimension_numbers<[2], [2], [1], [1], [0, 0, 0, 1, 1, 1], [0], [0]>} : vector<2x4x16xbf16>, vector<2x4x16xbf16>, vector<2x4x4xf32> -> vector<2x4x4xf32>
    "tpu.trace_stop"() : () -> ()
    %cst_23 = arith.constant 2.500000e-01 : f32
    %80 = vector.broadcast %cst_23 : f32 to vector<2x4x4xf32>
    %81 = arith.mulf %79, %80 : vector<2x4x4xf32>
    %82 = vector.shape_cast %81 : vector<2x4x4xf32> to vector<1x2x4x4xf32>
    %83 = vector.extract_strided_slice %1 {offsets = [2, 0, 0], sizes = [1, 4, 4], strides = [1, 1, 1]} : vector<4x4x4xf32> to vector<1x4x4xf32>
    %84 = vector.shape_cast %83 : vector<1x4x4xf32> to vector<4x4xf32>
    %85 = vector.shape_cast %84 : vector<4x4xf32> to vector<1x1x4x4xf32>
    %86 = vector.broadcast %85 : vector<1x1x4x4xf32> to vector<1x2x4x4xf32>
    %87 = arith.addf %82, %86 : vector<1x2x4x4xf32>
    %cst_24 = arith.constant dense<0xFF800000> : vector<1x2x4xf32>
    %88 = vector.multi_reduction <maximumf>, %87, %cst_24 [3] : vector<1x2x4x4xf32> to vector<1x2x4xf32>
    %89 = vector.shape_cast %88 : vector<1x2x4xf32> to vector<1x2x4x1xf32>
    %90 = vector.broadcast %89 : vector<1x2x4x1xf32> to vector<1x2x4x4xf32>
    %91 = arith.subf %87, %90 : vector<1x2x4x4xf32>
    %92 = math.exp %91 : vector<1x2x4x4xf32>
    %cst_25 = arith.constant dense<0.000000e+00> : vector<1x2x4xf32>
    %93 = vector.multi_reduction <add>, %92, %cst_25 [3] : vector<1x2x4x4xf32> to vector<1x2x4xf32>
    %94 = vector.shape_cast %93 : vector<1x2x4xf32> to vector<1x2x4x1xf32>
    %95 = tpu.reciprocal %94 {approx = true} : vector<1x2x4x1xf32> -> vector<1x2x4x1xf32>
    %96 = vector.broadcast %95 : vector<1x2x4x1xf32> to vector<1x2x4x4xf32>
    %97 = arith.mulf %92, %96 : vector<1x2x4x4xf32>
    %98 = vector.shape_cast %97 : vector<1x2x4x4xf32> to vector<2x4x4xf32>
    %99 = arith.truncf %98 : vector<2x4x4xf32> to vector<2x4x4xbf16>
    "tpu.trace_start"() <{level = 10 : i32, message = "bnm,bmd->bnd"}> : () -> ()
    %cst_26 = arith.constant dense<0.000000e+00> : vector<2x4x16xf32>
    %100 = tpu.matmul %99, %78, %cst_26 {dimension_numbers = #tpu.dot_dimension_numbers<[2], [1], [1], [2], [0, 0, 0, 1, 1, 2], [0], [0]>} : vector<2x4x4xbf16>, vector<2x4x16xbf16>, vector<2x4x16xf32> -> vector<2x4x16xf32>
    "tpu.trace_stop"() : () -> ()
    %101 = vector.shape_cast %100 : vector<2x4x16xf32> to vector<8x16xf32>
    %102 = arith.truncf %101 : vector<8x16xf32> to vector<8x16xbf16>
    %103 = vector.extract_strided_slice %2 {offsets = [32, 0], sizes = [16, 64], strides = [1, 1]} : vector<64x64xbf16> to vector<16x64xbf16>
    %cst_27 = arith.constant dense<0.000000e+00> : vector<8x64xf32>
    %104 = tpu.matmul %102, %103, %cst_27 {dimension_numbers = #tpu.dot_dimension_numbers<[1], [0], [0], [1], [0, 0, 1, 1], [], []>} : vector<8x16xbf16>, vector<16x64xbf16>, vector<8x64xf32> -> vector<8x64xf32>
    %105 = arith.addf %72, %104 : vector<8x64xf32>
    %106 = vector.extract_strided_slice %0 {offsets = [0, 0, 0, 48], sizes = [1, 2, 4, 16], strides = [1, 1, 1, 1]} : vector<1x2x4x192xbf16> to vector<1x2x4x16xbf16>
    %107 = vector.shape_cast %106 : vector<1x2x4x16xbf16> to vector<2x4x16xbf16>
    %108 = vector.extract_strided_slice %0 {offsets = [0, 0, 0, 112], sizes = [1, 2, 4, 16], strides = [1, 1, 1, 1]} : vector<1x2x4x192xbf16> to vector<1x2x4x16xbf16>
    %109 = vector.shape_cast %108 : vector<1x2x4x16xbf16> to vector<2x4x16xbf16>
    %110 = vector.extract_strided_slice %0 {offsets = [0, 0, 0, 176], sizes = [1, 2, 4, 16], strides = [1, 1, 1, 1]} : vector<1x2x4x192xbf16> to vector<1x2x4x16xbf16>
    %111 = vector.shape_cast %110 : vector<1x2x4x16xbf16> to vector<2x4x16xbf16>
    "tpu.trace_start"() <{level = 10 : i32, message = "bnd,bmd->bnm"}> : () -> ()
    %cst_28 = arith.constant dense<0.000000e+00> : vector<2x4x4xf32>
    %112 = tpu.matmul %107, %109, %cst_28 {dimension_numbers = #tpu.dot_dimension_numbers<[2], [2], [1], [1], [0, 0, 0, 1, 1, 1], [0], [0]>} : vector<2x4x16xbf16>, vector<2x4x16xbf16>, vector<2x4x4xf32> -> vector<2x4x4xf32>
    "tpu.trace_stop"() : () -> ()
    %cst_29 = arith.constant 2.500000e-01 : f32
    %113 = vector.broadcast %cst_29 : f32 to vector<2x4x4xf32>
    %114 = arith.mulf %112, %113 : vector<2x4x4xf32>
    %115 = vector.shape_cast %114 : vector<2x4x4xf32> to vector<1x2x4x4xf32>
    %116 = vector.extract_strided_slice %1 {offsets = [3, 0, 0], sizes = [1, 4, 4], strides = [1, 1, 1]} : vector<4x4x4xf32> to vector<1x4x4xf32>
    %117 = vector.shape_cast %116 : vector<1x4x4xf32> to vector<4x4xf32>
    %118 = vector.shape_cast %117 : vector<4x4xf32> to vector<1x1x4x4xf32>
    %119 = vector.broadcast %118 : vector<1x1x4x4xf32> to vector<1x2x4x4xf32>
    %120 = arith.addf %115, %119 : vector<1x2x4x4xf32>
    %cst_30 = arith.constant dense<0xFF800000> : vector<1x2x4xf32>
    %121 = vector.multi_reduction <maximumf>, %120, %cst_30 [3] : vector<1x2x4x4xf32> to vector<1x2x4xf32>
    %122 = vector.shape_cast %121 : vector<1x2x4xf32> to vector<1x2x4x1xf32>
    %123 = vector.broadcast %122 : vector<1x2x4x1xf32> to vector<1x2x4x4xf32>
    %124 = arith.subf %120, %123 : vector<1x2x4x4xf32>
    %125 = math.exp %124 : vector<1x2x4x4xf32>
    %cst_31 = arith.constant dense<0.000000e+00> : vector<1x2x4xf32>
    %126 = vector.multi_reduction <add>, %125, %cst_31 [3] : vector<1x2x4x4xf32> to vector<1x2x4xf32>
    %127 = vector.shape_cast %126 : vector<1x2x4xf32> to vector<1x2x4x1xf32>
    %128 = tpu.reciprocal %127 {approx = true} : vector<1x2x4x1xf32> -> vector<1x2x4x1xf32>
    %129 = vector.broadcast %128 : vector<1x2x4x1xf32> to vector<1x2x4x4xf32>
    %130 = arith.mulf %125, %129 : vector<1x2x4x4xf32>
    %131 = vector.shape_cast %130 : vector<1x2x4x4xf32> to vector<2x4x4xf32>
    %132 = arith.truncf %131 : vector<2x4x4xf32> to vector<2x4x4xbf16>
    "tpu.trace_start"() <{level = 10 : i32, message = "bnm,bmd->bnd"}> : () -> ()
    %cst_32 = arith.constant dense<0.000000e+00> : vector<2x4x16xf32>
    %133 = tpu.matmul %132, %111, %cst_32 {dimension_numbers = #tpu.dot_dimension_numbers<[2], [1], [1], [2], [0, 0, 0, 1, 1, 2], [0], [0]>} : vector<2x4x4xbf16>, vector<2x4x16xbf16>, vector<2x4x16xf32> -> vector<2x4x16xf32>
    "tpu.trace_stop"() : () -> ()
    %134 = vector.shape_cast %133 : vector<2x4x16xf32> to vector<8x16xf32>
    %135 = arith.truncf %134 : vector<8x16xf32> to vector<8x16xbf16>
    %136 = vector.extract_strided_slice %2 {offsets = [48, 0], sizes = [16, 64], strides = [1, 1]} : vector<64x64xbf16> to vector<16x64xbf16>
    %cst_33 = arith.constant dense<0.000000e+00> : vector<8x64xf32>
    %137 = tpu.matmul %135, %136, %cst_33 {dimension_numbers = #tpu.dot_dimension_numbers<[1], [0], [0], [1], [0, 0, 1, 1], [], []>} : vector<8x16xbf16>, vector<16x64xbf16>, vector<8x64xf32> -> vector<8x64xf32>
    %138 = arith.addf %105, %137 : vector<8x64xf32>
    %139 = vector.shape_cast %138 : vector<8x64xf32> to vector<1x2x4x64xf32>
    %140 = arith.truncf %139 : vector<1x2x4x64xf32> to vector<1x2x4x64xbf16>
    %c0_34 = arith.constant 0 : index
    %c0_35 = arith.constant 0 : index
    %c0_36 = arith.constant 0 : index
    %c0_37 = arith.constant 0 : index
    %141 = vector.load %arg5[%c0_34, %c0_35, %c0_36, %c0_37] : memref<1x2x4x64xbf16, #tpu.memory_space<vmem>>, vector<1x2x4x64xbf16>
    tpu.vector_store %arg5[%c0_34, %c0_35, %c0_36, %c0_37], %140 {strides = array<i32>} : memref<1x2x4x64xbf16, #tpu.memory_space<vmem>>, vector<1x2x4x64xbf16>,
    return
  }
  func.func @transform_0(%arg0: i32) -> (i32, i32, i32, i32) {
    %c0_i32 = arith.constant 0 : i32
    %c0_i32_0 = arith.constant 0 : i32
    %c0_i32_1 = arith.constant 0 : i32
    %c0_i32_2 = arith.constant 0 : i32
    return %arg0, %c0_i32, %c0_i32_0, %c0_i32_1 : i32, i32, i32, i32
  }
  func.func @transform_1(%arg0: i32) -> (i32, i32, i32) {
    %c0_i32 = arith.constant 0 : i32
    %c0_i32_0 = arith.constant 0 : i32
    %c0_i32_1 = arith.constant 0 : i32
    %c0_i32_2 = arith.constant 0 : i32
    return %c0_i32, %c0_i32_0, %c0_i32_1 : i32, i32, i32
  }
  func.func @transform_2(%arg0: i32) -> (i32, i32) {
    %c0_i32 = arith.constant 0 : i32
    %c0_i32_0 = arith.constant 0 : i32
    %c0_i32_1 = arith.constant 0 : i32
    return %c0_i32, %c0_i32_0 : i32, i32
  }
  func.func @transform_3(%arg0: i32) -> (i32, i32) {
    %c0_i32 = arith.constant 0 : i32
    %c0_i32_0 = arith.constant 0 : i32
    %c0_i32_1 = arith.constant 0 : i32
    return %c0_i32, %c0_i32_0 : i32, i32
  }
  func.func @transform_4(%arg0: i32) -> (i32, i32, i32, i32) {
    %c0_i32 = arith.constant 0 : i32
    %c0_i32_0 = arith.constant 0 : i32
    %c0_i32_1 = arith.constant 0 : i32
    %c0_i32_2 = arith.constant 0 : i32
    return %arg0, %c0_i32, %c0_i32_0, %c0_i32_1 : i32, i32, i32, i32
  }
}

module attributes {stable_mosaic.version = 11 : i64} {
  func.func @_ln_linear_kernel(%arg0: i32, %arg1: memref<8x64xbf16, #tpu.memory_space<vmem>>, %arg2: memref<1x64xf32, #tpu.memory_space<vmem>>, %arg3: memref<1x64xf32, #tpu.memory_space<vmem>>, %arg4: memref<64x192xbf16, #tpu.memory_space<vmem>>, %arg5: memref<1x192xf32, #tpu.memory_space<vmem>>, %arg6: memref<8x192xbf16, #tpu.memory_space<vmem>>) attributes {dimension_semantics = [#tpu.dimension_semantics<parallel>], iteration_bounds = array<i64: 1>, scalar_prefetch = 0 : i64, scratch_operands = 0 : i64, tpu.core_type = #tpu.core_type<tc>, window_params = [{transform_indices = @transform_0, window_bounds = array<i64: 8, 64>}, {pipeline_mode = #tpu.pipeline_mode<synchronous>, transform_indices = @transform_1, window_bounds = array<i64: 1, 64>}, {pipeline_mode = #tpu.pipeline_mode<synchronous>, transform_indices = @transform_2, window_bounds = array<i64: 1, 64>}, {pipeline_mode = #tpu.pipeline_mode<synchronous>, transform_indices = @transform_3, window_bounds = array<i64: 64, 192>}, {pipeline_mode = #tpu.pipeline_mode<synchronous>, transform_indices = @transform_4, window_bounds = array<i64: 1, 192>}, {transform_indices = @transform_5, window_bounds = array<i64: 8, 192>}]} {
    %c0 = arith.constant 0 : index
    %c0_0 = arith.constant 0 : index
    %0 = vector.load %arg1[%c0, %c0_0] : memref<8x64xbf16, #tpu.memory_space<vmem>>, vector<8x64xbf16>
    %1 = arith.extf %0 : vector<8x64xbf16> to vector<8x64xf32>
    %c0_1 = arith.constant 0 : index
    %c0_2 = arith.constant 0 : index
    %2 = vector.load %arg2[%c0_1, %c0_2] : memref<1x64xf32, #tpu.memory_space<vmem>>, vector<1x64xf32>
    %c0_3 = arith.constant 0 : index
    %c0_4 = arith.constant 0 : index
    %3 = vector.load %arg3[%c0_3, %c0_4] : memref<1x64xf32, #tpu.memory_space<vmem>>, vector<1x64xf32>
    %cst = arith.constant dense<0.000000e+00> : vector<8xf32>
    %4 = vector.multi_reduction <add>, %1, %cst [1] : vector<8x64xf32> to vector<8xf32>
    %5 = vector.shape_cast %4 : vector<8xf32> to vector<8x1xf32>
    %cst_5 = arith.constant 6.400000e+01 : f32
    %6 = vector.broadcast %cst_5 : f32 to vector<8x1xf32>
    %7 = arith.divf %5, %6 : vector<8x1xf32>
    %8 = vector.broadcast %7 : vector<8x1xf32> to vector<8x64xf32>
    %9 = arith.subf %1, %8 : vector<8x64xf32>
    %10 = arith.mulf %9, %9 : vector<8x64xf32>
    %cst_6 = arith.constant dense<0.000000e+00> : vector<8xf32>
    %11 = vector.multi_reduction <add>, %10, %cst_6 [1] : vector<8x64xf32> to vector<8xf32>
    %12 = vector.shape_cast %11 : vector<8xf32> to vector<8x1xf32>
    %cst_7 = arith.constant 6.400000e+01 : f32
    %13 = vector.broadcast %cst_7 : f32 to vector<8x1xf32>
    %14 = arith.divf %12, %13 : vector<8x1xf32>
    %15 = vector.broadcast %7 : vector<8x1xf32> to vector<8x64xf32>
    %16 = arith.subf %1, %15 : vector<8x64xf32>
    %cst_8 = arith.constant 9.99999974E-6 : f32
    %17 = vector.broadcast %cst_8 : f32 to vector<8x1xf32>
    %18 = arith.addf %14, %17 : vector<8x1xf32>
    %19 = math.rsqrt %18 : vector<8x1xf32>
    %20 = vector.broadcast %19 : vector<8x1xf32> to vector<8x64xf32>
    %21 = arith.mulf %16, %20 : vector<8x64xf32>
    %22 = vector.broadcast %2 : vector<1x64xf32> to vector<8x64xf32>
    %23 = arith.mulf %21, %22 : vector<8x64xf32>
    %24 = vector.broadcast %3 : vector<1x64xf32> to vector<8x64xf32>
    %25 = arith.addf %23, %24 : vector<8x64xf32>
    %26 = arith.truncf %25 : vector<8x64xf32> to vector<8x64xbf16>
    %c0_9 = arith.constant 0 : index
    %c0_10 = arith.constant 0 : index
    %27 = vector.load %arg4[%c0_9, %c0_10] : memref<64x192xbf16, #tpu.memory_space<vmem>>, vector<64x192xbf16>
    %cst_11 = arith.constant dense<0.000000e+00> : vector<8x192xf32>
    %28 = tpu.matmul %26, %27, %cst_11 {dimension_numbers = #tpu.dot_dimension_numbers<[1], [0], [0], [1], [0, 0, 1, 1], [], []>} : vector<8x64xbf16>, vector<64x192xbf16>, vector<8x192xf32> -> vector<8x192xf32>
    %c0_12 = arith.constant 0 : index
    %c0_13 = arith.constant 0 : index
    %29 = vector.load %arg5[%c0_12, %c0_13] : memref<1x192xf32, #tpu.memory_space<vmem>>, vector<1x192xf32>
    %30 = vector.broadcast %29 : vector<1x192xf32> to vector<8x192xf32>
    %31 = arith.addf %28, %30 : vector<8x192xf32>
    %32 = arith.truncf %31 : vector<8x192xf32> to vector<8x192xbf16>
    %c0_14 = arith.constant 0 : index
    %c0_15 = arith.constant 0 : index
    %33 = vector.load %arg6[%c0_14, %c0_15] : memref<8x192xbf16, #tpu.memory_space<vmem>>, vector<8x192xbf16>
    tpu.vector_store %arg6[%c0_14, %c0_15], %32 {strides = array<i32>} : memref<8x192xbf16, #tpu.memory_space<vmem>>, vector<8x192xbf16>,
    return
  }
  func.func @transform_0(%arg0: i32) -> (i32, i32) {
    %c0_i32 = arith.constant 0 : i32
    %c0_i32_0 = arith.constant 0 : i32
    return %arg0, %c0_i32 : i32, i32
  }
  func.func @transform_1(%arg0: i32) -> (i32, i32) {
    %c0_i32 = arith.constant 0 : i32
    %c0_i32_0 = arith.constant 0 : i32
    %c0_i32_1 = arith.constant 0 : i32
    return %c0_i32, %c0_i32_0 : i32, i32
  }
  func.func @transform_2(%arg0: i32) -> (i32, i32) {
    %c0_i32 = arith.constant 0 : i32
    %c0_i32_0 = arith.constant 0 : i32
    %c0_i32_1 = arith.constant 0 : i32
    return %c0_i32, %c0_i32_0 : i32, i32
  }
  func.func @transform_3(%arg0: i32) -> (i32, i32) {
    %c0_i32 = arith.constant 0 : i32
    %c0_i32_0 = arith.constant 0 : i32
    %c0_i32_1 = arith.constant 0 : i32
    return %c0_i32, %c0_i32_0 : i32, i32
  }
  func.func @transform_4(%arg0: i32) -> (i32, i32) {
    %c0_i32 = arith.constant 0 : i32
    %c0_i32_0 = arith.constant 0 : i32
    %c0_i32_1 = arith.constant 0 : i32
    return %c0_i32, %c0_i32_0 : i32, i32
  }
  func.func @transform_5(%arg0: i32) -> (i32, i32) {
    %c0_i32 = arith.constant 0 : i32
    %c0_i32_0 = arith.constant 0 : i32
    return %arg0, %c0_i32 : i32, i32
  }
}

module attributes {stable_mosaic.version = 11 : i64} {
  func.func @_add_ln_mlp_kernel(%arg0: i32, %arg1: memref<8x64xbf16, #tpu.memory_space<vmem>>, %arg2: memref<8x64xbf16, #tpu.memory_space<vmem>>, %arg3: memref<1x64xf32, #tpu.memory_space<vmem>>, %arg4: memref<1x64xf32, #tpu.memory_space<vmem>>, %arg5: memref<64x256xbf16, #tpu.memory_space<vmem>>, %arg6: memref<1x256xf32, #tpu.memory_space<vmem>>, %arg7: memref<256x64xbf16, #tpu.memory_space<vmem>>, %arg8: memref<1x64xf32, #tpu.memory_space<vmem>>, %arg9: memref<8x64xbf16, #tpu.memory_space<vmem>>) attributes {dimension_semantics = [#tpu.dimension_semantics<parallel>], iteration_bounds = array<i64: 1>, scalar_prefetch = 0 : i64, scratch_operands = 0 : i64, tpu.core_type = #tpu.core_type<tc>, window_params = [{transform_indices = @transform_0, window_bounds = array<i64: 8, 64>}, {transform_indices = @transform_1, window_bounds = array<i64: 8, 64>}, {pipeline_mode = #tpu.pipeline_mode<synchronous>, transform_indices = @transform_2, window_bounds = array<i64: 1, 64>}, {pipeline_mode = #tpu.pipeline_mode<synchronous>, transform_indices = @transform_3, window_bounds = array<i64: 1, 64>}, {pipeline_mode = #tpu.pipeline_mode<synchronous>, transform_indices = @transform_4, window_bounds = array<i64: 64, 256>}, {pipeline_mode = #tpu.pipeline_mode<synchronous>, transform_indices = @transform_5, window_bounds = array<i64: 1, 256>}, {pipeline_mode = #tpu.pipeline_mode<synchronous>, transform_indices = @transform_6, window_bounds = array<i64: 256, 64>}, {pipeline_mode = #tpu.pipeline_mode<synchronous>, transform_indices = @transform_7, window_bounds = array<i64: 1, 64>}, {transform_indices = @transform_8, window_bounds = array<i64: 8, 64>}]} {
    %c0 = arith.constant 0 : index
    %c0_0 = arith.constant 0 : index
    %0 = vector.load %arg1[%c0, %c0_0] : memref<8x64xbf16, #tpu.memory_space<vmem>>, vector<8x64xbf16>
    %1 = arith.extf %0 : vector<8x64xbf16> to vector<8x64xf32>
    %c0_1 = arith.constant 0 : index
    %c0_2 = arith.constant 0 : index
    %2 = vector.load %arg2[%c0_1, %c0_2] : memref<8x64xbf16, #tpu.memory_space<vmem>>, vector<8x64xbf16>
    %3 = arith.extf %2 : vector<8x64xbf16> to vector<8x64xf32>
    %4 = arith.addf %1, %3 : vector<8x64xf32>
    %c0_3 = arith.constant 0 : index
    %c0_4 = arith.constant 0 : index
    %5 = vector.load %arg3[%c0_3, %c0_4] : memref<1x64xf32, #tpu.memory_space<vmem>>, vector<1x64xf32>
    %c0_5 = arith.constant 0 : index
    %c0_6 = arith.constant 0 : index
    %6 = vector.load %arg4[%c0_5, %c0_6] : memref<1x64xf32, #tpu.memory_space<vmem>>, vector<1x64xf32>
    %cst = arith.constant dense<0.000000e+00> : vector<8xf32>
    %7 = vector.multi_reduction <add>, %4, %cst [1] : vector<8x64xf32> to vector<8xf32>
    %8 = vector.shape_cast %7 : vector<8xf32> to vector<8x1xf32>
    %cst_7 = arith.constant 6.400000e+01 : f32
    %9 = vector.broadcast %cst_7 : f32 to vector<8x1xf32>
    %10 = arith.divf %8, %9 : vector<8x1xf32>
    %11 = vector.broadcast %10 : vector<8x1xf32> to vector<8x64xf32>
    %12 = arith.subf %4, %11 : vector<8x64xf32>
    %13 = arith.mulf %12, %12 : vector<8x64xf32>
    %cst_8 = arith.constant dense<0.000000e+00> : vector<8xf32>
    %14 = vector.multi_reduction <add>, %13, %cst_8 [1] : vector<8x64xf32> to vector<8xf32>
    %15 = vector.shape_cast %14 : vector<8xf32> to vector<8x1xf32>
    %cst_9 = arith.constant 6.400000e+01 : f32
    %16 = vector.broadcast %cst_9 : f32 to vector<8x1xf32>
    %17 = arith.divf %15, %16 : vector<8x1xf32>
    %18 = vector.broadcast %10 : vector<8x1xf32> to vector<8x64xf32>
    %19 = arith.subf %4, %18 : vector<8x64xf32>
    %cst_10 = arith.constant 9.99999974E-6 : f32
    %20 = vector.broadcast %cst_10 : f32 to vector<8x1xf32>
    %21 = arith.addf %17, %20 : vector<8x1xf32>
    %22 = math.rsqrt %21 : vector<8x1xf32>
    %23 = vector.broadcast %22 : vector<8x1xf32> to vector<8x64xf32>
    %24 = arith.mulf %19, %23 : vector<8x64xf32>
    %25 = vector.broadcast %5 : vector<1x64xf32> to vector<8x64xf32>
    %26 = arith.mulf %24, %25 : vector<8x64xf32>
    %27 = vector.broadcast %6 : vector<1x64xf32> to vector<8x64xf32>
    %28 = arith.addf %26, %27 : vector<8x64xf32>
    %29 = arith.truncf %28 : vector<8x64xf32> to vector<8x64xbf16>
    %c0_11 = arith.constant 0 : index
    %c0_12 = arith.constant 0 : index
    %30 = vector.load %arg5[%c0_11, %c0_12] : memref<64x256xbf16, #tpu.memory_space<vmem>>, vector<64x256xbf16>
    %cst_13 = arith.constant dense<0.000000e+00> : vector<8x256xf32>
    %31 = tpu.matmul %29, %30, %cst_13 {dimension_numbers = #tpu.dot_dimension_numbers<[1], [0], [0], [1], [0, 0, 1, 1], [], []>} : vector<8x64xbf16>, vector<64x256xbf16>, vector<8x256xf32> -> vector<8x256xf32>
    %c0_14 = arith.constant 0 : index
    %c0_15 = arith.constant 0 : index
    %32 = vector.load %arg6[%c0_14, %c0_15] : memref<1x256xf32, #tpu.memory_space<vmem>>, vector<1x256xf32>
    %33 = vector.broadcast %32 : vector<1x256xf32> to vector<8x256xf32>
    %34 = arith.addf %31, %33 : vector<8x256xf32>
    %cst_16 = arith.constant 5.000000e-01 : f32
    %35 = vector.broadcast %cst_16 : f32 to vector<8x256xf32>
    %36 = arith.mulf %35, %34 : vector<8x256xf32>
    %cst_17 = arith.constant 4.471500e-02 : f32
    %37 = vector.broadcast %cst_17 : f32 to vector<8x256xf32>
    %38 = arith.mulf %37, %34 : vector<8x256xf32>
    %39 = arith.mulf %38, %34 : vector<8x256xf32>
    %40 = arith.mulf %39, %34 : vector<8x256xf32>
    %41 = arith.addf %34, %40 : vector<8x256xf32>
    %cst_18 = arith.constant 0.797884583 : f32
    %42 = vector.broadcast %cst_18 : f32 to vector<8x256xf32>
    %43 = arith.mulf %42, %41 : vector<8x256xf32>
    %44 = math.tanh %43 : vector<8x256xf32>
    %cst_19 = arith.constant 1.000000e+00 : f32
    %45 = vector.broadcast %cst_19 : f32 to vector<8x256xf32>
    %46 = arith.addf %45, %44 : vector<8x256xf32>
    %47 = arith.mulf %36, %46 : vector<8x256xf32>
    %48 = arith.truncf %47 : vector<8x256xf32> to vector<8x256xbf16>
    %c0_20 = arith.constant 0 : index
    %c0_21 = arith.constant 0 : index
    %49 = vector.load %arg7[%c0_20, %c0_21] : memref<256x64xbf16, #tpu.memory_space<vmem>>, vector<256x64xbf16>
    %cst_22 = arith.constant dense<0.000000e+00> : vector<8x64xf32>
    %50 = tpu.matmul %48, %49, %cst_22 {dimension_numbers = #tpu.dot_dimension_numbers<[1], [0], [0], [1], [0, 0, 1, 1], [], []>} : vector<8x256xbf16>, vector<256x64xbf16>, vector<8x64xf32> -> vector<8x64xf32>
    %c0_23 = arith.constant 0 : index
    %c0_24 = arith.constant 0 : index
    %51 = vector.load %arg8[%c0_23, %c0_24] : memref<1x64xf32, #tpu.memory_space<vmem>>, vector<1x64xf32>
    %52 = vector.broadcast %51 : vector<1x64xf32> to vector<8x64xf32>
    %53 = arith.addf %50, %52 : vector<8x64xf32>
    %54 = arith.addf %4, %53 : vector<8x64xf32>
    %55 = arith.truncf %54 : vector<8x64xf32> to vector<8x64xbf16>
    %c0_25 = arith.constant 0 : index
    %c0_26 = arith.constant 0 : index
    %56 = vector.load %arg9[%c0_25, %c0_26] : memref<8x64xbf16, #tpu.memory_space<vmem>>, vector<8x64xbf16>
    tpu.vector_store %arg9[%c0_25, %c0_26], %55 {strides = array<i32>} : memref<8x64xbf16, #tpu.memory_space<vmem>>, vector<8x64xbf16>,
    return
  }
  func.func @transform_0(%arg0: i32) -> (i32, i32) {
    %c0_i32 = arith.constant 0 : i32
    %c0_i32_0 = arith.constant 0 : i32
    return %arg0, %c0_i32 : i32, i32
  }
  func.func @transform_1(%arg0: i32) -> (i32, i32) {
    %c0_i32 = arith.constant 0 : i32
    %c0_i32_0 = arith.constant 0 : i32
    return %arg0, %c0_i32 : i32, i32
  }
  func.func @transform_2(%arg0: i32) -> (i32, i32) {
    %c0_i32 = arith.constant 0 : i32
    %c0_i32_0 = arith.constant 0 : i32
    %c0_i32_1 = arith.constant 0 : i32
    return %c0_i32, %c0_i32_0 : i32, i32
  }
  func.func @transform_3(%arg0: i32) -> (i32, i32) {
    %c0_i32 = arith.constant 0 : i32
    %c0_i32_0 = arith.constant 0 : i32
    %c0_i32_1 = arith.constant 0 : i32
    return %c0_i32, %c0_i32_0 : i32, i32
  }
  func.func @transform_4(%arg0: i32) -> (i32, i32) {
    %c0_i32 = arith.constant 0 : i32
    %c0_i32_0 = arith.constant 0 : i32
    %c0_i32_1 = arith.constant 0 : i32
    return %c0_i32, %c0_i32_0 : i32, i32
  }
  func.func @transform_5(%arg0: i32) -> (i32, i32) {
    %c0_i32 = arith.constant 0 : i32
    %c0_i32_0 = arith.constant 0 : i32
    %c0_i32_1 = arith.constant 0 : i32
    return %c0_i32, %c0_i32_0 : i32, i32
  }
  func.func @transform_6(%arg0: i32) -> (i32, i32) {
    %c0_i32 = arith.constant 0 : i32
    %c0_i32_0 = arith.constant 0 : i32
    %c0_i32_1 = arith.constant 0 : i32
    return %c0_i32, %c0_i32_0 : i32, i32
  }
  func.func @transform_7(%arg0: i32) -> (i32, i32) {
    %c0_i32 = arith.constant 0 : i32
    %c0_i32_0 = arith.constant 0 : i32
    %c0_i32_1 = arith.constant 0 : i32
    return %c0_i32, %c0_i32_0 : i32, i32
  }
  func.func @transform_8(%arg0: i32) -> (i32, i32) {
    %c0_i32 = arith.constant 0 : i32
    %c0_i32_0 = arith.constant 0 : i32
    return %arg0, %c0_i32 : i32, i32
  }
}

module attributes {stable_mosaic.version = 11 : i64} {
  func.func @_layernorm_kernel(%arg0: i32, %arg1: memref<8x64xbf16, #tpu.memory_space<vmem>>, %arg2: memref<1x64xf32, #tpu.memory_space<vmem>>, %arg3: memref<1x64xf32, #tpu.memory_space<vmem>>, %arg4: memref<8x64xf32, #tpu.memory_space<vmem>>) attributes {dimension_semantics = [#tpu.dimension_semantics<parallel>], iteration_bounds = array<i64: 1>, scalar_prefetch = 0 : i64, scratch_operands = 0 : i64, tpu.core_type = #tpu.core_type<tc>, window_params = [{transform_indices = @transform_0, window_bounds = array<i64: 8, 64>}, {pipeline_mode = #tpu.pipeline_mode<synchronous>, transform_indices = @transform_1, window_bounds = array<i64: 1, 64>}, {pipeline_mode = #tpu.pipeline_mode<synchronous>, transform_indices = @transform_2, window_bounds = array<i64: 1, 64>}, {transform_indices = @transform_3, window_bounds = array<i64: 8, 64>}]} {
    %c0 = arith.constant 0 : index
    %c0_0 = arith.constant 0 : index
    %0 = vector.load %arg1[%c0, %c0_0] : memref<8x64xbf16, #tpu.memory_space<vmem>>, vector<8x64xbf16>
    %1 = arith.extf %0 : vector<8x64xbf16> to vector<8x64xf32>
    %c0_1 = arith.constant 0 : index
    %c0_2 = arith.constant 0 : index
    %2 = vector.load %arg2[%c0_1, %c0_2] : memref<1x64xf32, #tpu.memory_space<vmem>>, vector<1x64xf32>
    %c0_3 = arith.constant 0 : index
    %c0_4 = arith.constant 0 : index
    %3 = vector.load %arg3[%c0_3, %c0_4] : memref<1x64xf32, #tpu.memory_space<vmem>>, vector<1x64xf32>
    %cst = arith.constant dense<0.000000e+00> : vector<8xf32>
    %4 = vector.multi_reduction <add>, %1, %cst [1] : vector<8x64xf32> to vector<8xf32>
    %5 = vector.shape_cast %4 : vector<8xf32> to vector<8x1xf32>
    %cst_5 = arith.constant 6.400000e+01 : f32
    %6 = vector.broadcast %cst_5 : f32 to vector<8x1xf32>
    %7 = arith.divf %5, %6 : vector<8x1xf32>
    %8 = vector.broadcast %7 : vector<8x1xf32> to vector<8x64xf32>
    %9 = arith.subf %1, %8 : vector<8x64xf32>
    %10 = arith.mulf %9, %9 : vector<8x64xf32>
    %cst_6 = arith.constant dense<0.000000e+00> : vector<8xf32>
    %11 = vector.multi_reduction <add>, %10, %cst_6 [1] : vector<8x64xf32> to vector<8xf32>
    %12 = vector.shape_cast %11 : vector<8xf32> to vector<8x1xf32>
    %cst_7 = arith.constant 6.400000e+01 : f32
    %13 = vector.broadcast %cst_7 : f32 to vector<8x1xf32>
    %14 = arith.divf %12, %13 : vector<8x1xf32>
    %15 = vector.broadcast %7 : vector<8x1xf32> to vector<8x64xf32>
    %16 = arith.subf %1, %15 : vector<8x64xf32>
    %cst_8 = arith.constant 9.99999974E-6 : f32
    %17 = vector.broadcast %cst_8 : f32 to vector<8x1xf32>
    %18 = arith.addf %14, %17 : vector<8x1xf32>
    %19 = math.rsqrt %18 : vector<8x1xf32>
    %20 = vector.broadcast %19 : vector<8x1xf32> to vector<8x64xf32>
    %21 = arith.mulf %16, %20 : vector<8x64xf32>
    %22 = vector.broadcast %2 : vector<1x64xf32> to vector<8x64xf32>
    %23 = arith.mulf %21, %22 : vector<8x64xf32>
    %24 = vector.broadcast %3 : vector<1x64xf32> to vector<8x64xf32>
    %25 = arith.addf %23, %24 : vector<8x64xf32>
    %c0_9 = arith.constant 0 : index
    %c0_10 = arith.constant 0 : index
    %26 = vector.load %arg4[%c0_9, %c0_10] : memref<8x64xf32, #tpu.memory_space<vmem>>, vector<8x64xf32>
    tpu.vector_store %arg4[%c0_9, %c0_10], %25 {strides = array<i32>} : memref<8x64xf32, #tpu.memory_space<vmem>>, vector<8x64xf32>,
    return
  }
  func.func @transform_0(%arg0: i32) -> (i32, i32) {
    %c0_i32 = arith.constant 0 : i32
    %c0_i32_0 = arith.constant 0 : i32
    return %arg0, %c0_i32 : i32, i32
  }
  func.func @transform_1(%arg0: i32) -> (i32, i32) {
    %c0_i32 = arith.constant 0 : i32
    %c0_i32_0 = arith.constant 0 : i32
    %c0_i32_1 = arith.constant 0 : i32
    return %c0_i32, %c0_i32_0 : i32, i32
  }
  func.func @transform_2(%arg0: i32) -> (i32, i32) {
    %c0_i32 = arith.constant 0 : i32
    %c0_i32_0 = arith.constant 0 : i32
    %c0_i32_1 = arith.constant 0 : i32
    return %c0_i32, %c0_i32_0 : i32, i32
  }
  func.func @transform_3(%arg0: i32) -> (i32, i32) {
    %c0_i32 = arith.constant 0 : i32
    %c0_i32_0 = arith.constant 0 : i32
    return %arg0, %c0_i32 : i32, i32
  }
}

</mosaic_0001>

<llo_original>
// kernel: _lambda_.31
$region0: #{_lambda_.31}
  #allocation0 [shape = 'u32[]', space=smem, size = 0x4, offset = 0x4, fixed_abs, tag = 'smem constant byte address 0x4 - core index']
  #allocation1 [shape = 'u32[144,128]{1,0:T(1,128)}', space=vmem, size = 0x12000, scoped, tag = 'internal scratch']
  %s0 = inlined_call_operand.vmem [shape: bf16[32,32], index: 0, kind: input, shape index: {}]
  %s1 = inlined_call_operand.vmem [shape: f32[1,32], index: 1, kind: input, shape index: {}]
  %s2 = inlined_call_operand.vmem [shape: f32[1,32], index: 2, kind: input, shape index: {}]
  %s3 = inlined_call_operand.vmem [shape: bf16[32,96], index: 3, kind: input, shape index: {}]
  %s4 = inlined_call_operand.vmem [shape: f32[1,96], index: 4, kind: input, shape index: {}]
  %s5 = inlined_call_operand.vmem [shape: bf16[32,96], index: 5, kind: output, shape index: {}]
  %s6 = sld [smem:[#allocation0]]
  $region30: #{_lambda_.31} parent=0
    _
  %s8 = ssub.s32 1, %s6
  %s9 = scalar_select 0, %s8, %s6
  // Predicated region
  $region2: #{_lambda_.31} parent=0 // pred_check
    _
  $region3: #{_lambda_.31} parent=0 // pred_check_branch
    %11 = sbr.rel (0) target = $region5
  $region4: #{_lambda_.31} parent=0 // pred_region
    _
  $region5: #{_lambda_.31} parent=0 // pred_fallthru
    _
  // Predicated region
  $region6: #{_lambda_.31} parent=0 // pred_check
    _
  $region7: #{_lambda_.31} parent=0 // pred_check_branch
    %13 = sbr.rel (0) target = $region9
  $region8: #{_lambda_.31} parent=0 // pred_region
    _
  $region9: #{_lambda_.31} parent=0 // pred_fallthru
    _
  // Predicated region
  $region10: #{_lambda_.31} parent=0 // pred_check
    _
  $region11: #{_lambda_.31} parent=0 // pred_check_branch
    %15 = sbr.rel (0) target = $region13
  $region12: #{_lambda_.31} parent=0 // pred_region
    _
  $region13: #{_lambda_.31} parent=0 // pred_fallthru
    _
  // Predicated region
  $region14: #{_lambda_.31} parent=0 // pred_check
    _
  $region15: #{_lambda_.31} parent=0 // pred_check_branch
    %17 = sbr.rel (0) target = $region17
  $region16: #{_lambda_.31} parent=0 // pred_region
    _
  $region17: #{_lambda_.31} parent=0 // pred_fallthru
    _
  // Predicated region
  $region18: #{_lambda_.31} parent=0 // pred_check
    _
  $region19: #{_lambda_.31} parent=0 // pred_check_branch
    %19 = sbr.rel (0) target = $region21
  $region20: #{_lambda_.31} parent=0 // pred_region
    _
  $region21: #{_lambda_.31} parent=0 // pred_fallthru
    _
  %v21 = vld [vmem:[%s0] sm:$0xf]
  %v22 = vld [vmem:[%s0 + $0x4] sm:$0xf]
  %v23 = vld [vmem:[%s0 + $0x8] sm:$0xf]
  %v24 = vld [vmem:[%s0 + $0xc] sm:$0xf]
  %v25 = vunpack.c.l.bf16 %v21
  %v26 = vunpack.c.l.bf16 %v22
  %v27 = vunpack.c.l.bf16 %v23
  %v28 = vunpack.c.l.bf16 %v24
  %v29 = vld [vmem:[%s1] sm:$0x1]
  %v30 = vld [vmem:[%s2] sm:$0x1]
  %vm31 = vcmask 261120
  %v32 = vsel %vm31, %v25, 0.0
  %33 = vadd.xlane.f32.xlu0 %v32
  %v34 = vpop.xlane.xlu0 %33
  %v35 = vsel %vm31, %v26, 0.0
  %36 = vadd.xlane.f32.xlu0 %v35
  %v37 = vpop.xlane.xlu0 %36
  %v38 = vsel %vm31, %v27, 0.0
  %39 = vadd.xlane.f32.xlu0 %v38
  %v40 = vpop.xlane.xlu0 %39
  %v41 = vsel %vm31, %v28, 0.0
  %42 = vadd.xlane.f32.xlu0 %v41
  %v43 = vpop.xlane.xlu0 %42
  %v44 = vrcp.pop 32.0
  %v45 = vmul.f32 %v34, %v44
  %v46 = vmul.f32 %v37, %v44
  %v47 = vmul.f32 %v40, %v44
  %v48 = vmul.f32 %v43, %v44
  %v49 = vsub.f32 %v25, %v45
  %v50 = vsub.f32 %v26, %v46
  %v51 = vsub.f32 %v27, %v47
  %v52 = vsub.f32 %v28, %v48
  %v53 = vmul.f32 %v49, %v49
  %v54 = vmul.f32 %v50, %v50
  %v55 = vmul.f32 %v51, %v51
  %v56 = vmul.f32 %v52, %v52
  %v57 = vsel %vm31, %v53, 0.0
  %58 = vadd.xlane.f32.xlu0 %v57
  %v59 = vpop.xlane.xlu0 %58
  %v60 = vsel %vm31, %v54, 0.0
  %61 = vadd.xlane.f32.xlu0 %v60
  %v62 = vpop.xlane.xlu0 %61
  %v63 = vsel %vm31, %v55, 0.0
  %64 = vadd.xlane.f32.xlu0 %v63
  %v65 = vpop.xlane.xlu0 %64
  %v66 = vsel %vm31, %v56, 0.0
  %67 = vadd.xlane.f32.xlu0 %v66
  %v68 = vpop.xlane.xlu0 %67
  %v69 = vmul.f32 %v59, %v44
  %v70 = vmul.f32 %v62, %v44
  %v71 = vmul.f32 %v65, %v44
  %v72 = vmul.f32 %v68, %v44
  %v73 = vadd.f32 %v69, 1e-05
  %v74 = vadd.f32 %v70, 1e-05
  %v75 = vadd.f32 %v71, 1e-05
  %v76 = vadd.f32 %v72, 1e-05
  %v77 = vrsqrt.pop %v73
  %v78 = vrsqrt.pop %v74
  %v79 = vrsqrt.pop %v75
  %v80 = vrsqrt.pop %v76
  %v81 = vmul.f32 %v49, %v77
  %v82 = vmul.f32 %v50, %v78
  %v83 = vmul.f32 %v51, %v79
  %v84 = vmul.f32 %v52, %v80
  %v86 = vlaneseq
  %v87 = vshrl.u32 %v86, 7
  %v88 = vsub.s32 0, %v87
  %v89 = vrot.slane %v29, %v88
  %v91 = vmul.f32 %v81, %v89
  %v92 = vmul.f32 %v82, %v89
  %v93 = vmul.f32 %v83, %v89
  %v94 = vmul.f32 %v84, %v89
  %v96 = vlaneseq
  %v97 = vshrl.u32 %v96, 7
  %v98 = vsub.s32 0, %v97
  %v99 = vrot.slane %v30, %v98
  %v101 = vadd.f32 %v91, %v99
  %v102 = vadd.f32 %v92, %v99
  %v103 = vadd.f32 %v93, %v99
  %v104 = vadd.f32 %v94, %v99
  %v105 = vpack.c.bf16 %v102, %v101
  %v106 = vpack.c.bf16 %v104, %v103
  %v107 = vld [vmem:[%s3] sm:$0xf]
  %v108 = vld [vmem:[%s3 + $0x4] sm:$0xf]
  %v109 = vld [vmem:[%s3 + $0x8] sm:$0xf]
  %v110 = vld [vmem:[%s3 + $0xc] sm:$0xf]
  %v111 = vld [vmem:[%s4] sm:$0x1]
  %v113 = vlaneseq
  %v114 = vshrl.u32 %v113, 7
  %v115 = vsub.s32 0, %v114
  %v116 = vrot.slane %v111, %v115
  %v122 = vunpack.c.l.b16 %v107
  %v123 = vunpack.c.l.b16 %v108
  %v124 = vunpack.c.l.b16 %v109
  %v125 = vunpack.c.l.b16 %v110
  %v126 = vpack.c.b16 %v123, %v122
  %v127 = vpack.c.b16 %v125, %v124
  %v131 = vsel %vm31, %v105, 0
  %v134 = vsel %vm31, %v106, 0
  %136 = vmatprep.subr.bf16.mxu0 0
  %137 = vmatpush1.bf16.msra.mxu0 0
  %138 = vmatprep.subr.bf16.mxu0 0
  %139 = vmatpush1.bf16.msra.mxu0 0
  %140 = vmatprep.subr.bf16.mxu0 0
  %141 = vmatpush1.bf16.msra.mxu0 0
  %142 = vmatprep.subr.bf16.mxu0 0
  %143 = vmatpush1.bf16.msra.mxu0 0
  %144 = vmatprep.subr.bf16.mxu0 0
  %145 = vmatpush1.bf16.msra.mxu0 0
  %146 = vmatprep.subr.bf16.mxu0 0
  %147 = vmatpush1.bf16.msra.mxu0 0
  %148 = vmatprep.subr.bf16.mxu0 0
  %149 = vmatpush1.bf16.msra.mxu0 %v127
  %150 = vmatprep.subr.bf16.mxu0 0
  %151 = vmatpush1.bf16.msra.mxu0 %v126
  %152 = vmatprep.subr.bf16.mxu0 0
  %153 = vmatpush2.bf16.msra.mxu0 0
  %154 = vmatprep.subr.bf16.mxu0 0
  %155 = vmatpush2.bf16.msra.mxu0 0
  %156 = vmatprep.subr.bf16.mxu0 0
  %157 = vmatpush2.bf16.msra.mxu0 0
  %158 = vmatprep.subr.bf16.mxu0 0
  %159 = vmatpush2.bf16.msra.mxu0 0
  %160 = vmatprep.subr.bf16.mxu0 0
  %161 = vmatpush2.bf16.msra.mxu0 0
  %162 = vmatprep.subr.bf16.mxu0 0
  %163 = vmatpush2.bf16.msra.mxu0 0
  %164 = vmatprep.subr.bf16.mxu0 0
  %165 = vmatpush2.bf16.msra.mxu0 0
  %166 = vmatprep.subr.bf16.mxu0 0
  %167 = vmatpush2.bf16.msra.mxu0 0
  %168 = vmatprep.mubr.bf16.mxu0 0
  %169 = vmatmul.mubr.bf16.gmra.mxu0 %v131
  %v170 = vpop.f32.mrf.mxu0
  %v171 = vadd.f32 %v116, %v170
  %v172 = vpop.f32.mrf.mxu0
  %v173 = vpop.f32.mrf.mxu0
  %v174 = vadd.f32 %v116, %v173
  %v175 = vpop.f32.mrf.mxu0
  %176 = vmatprep.mubr.bf16.mxu0 0
  %177 = vmatmul.mubr.bf16.gmra.mxu0 %v134
  %v178 = vpop.f32.mrf.mxu0
  %v179 = vadd.f32 %v116, %v178
  %v180 = vpop.f32.mrf.mxu0
  %v181 = vpop.f32.mrf.mxu0
  %v182 = vadd.f32 %v116, %v181
  %v183 = vpop.f32.mrf.mxu0
  %184 = vdwg.mxu0
  %v185 = vpack.c.bf16 %v174, %v171
  %v186 = vpack.c.bf16 %v182, %v179
  %v189 = vunpack.c.l.b16 %v185
  %v190 = vunpack.c.h.b16 %v185
  %v191 = vunpack.c.l.b16 %v186
  %v192 = vunpack.c.h.b16 %v186
  %v193 = vpack.c.b16 %v189, %v189
  %v194 = vpack.c.b16 %v190, %v190
  %v195 = vpack.c.b16 %v191, %v191
  %v196 = vpack.c.b16 %v192, %v192
  %vm201 = vcmask 781312
  %202 = vst.msk [vmem:[%s5] sm:$0xf] %vm201, %v193
  %203 = vst.msk [vmem:[%s5 + $0x4] sm:$0xf] %vm201, %v194
  %204 = vst.msk [vmem:[%s5 + $0x8] sm:$0xf] %vm201, %v195
  %205 = vst.msk [vmem:[%s5 + $0xc] sm:$0xf] %vm201, %v196
  // Predicated region
  $region22: #{_lambda_.31} parent=0 // pred_check
    _
  $region23: #{_lambda_.31} parent=0 // pred_check_branch
    %207 = sbr.rel (0) target = $region25
  $region24: #{_lambda_.31} parent=0 // pred_region
    _
  $region25: #{_lambda_.31} parent=0 // pred_fallthru
    _
  // Predicated region
  $region26: #{_lambda_.31} parent=0 // pred_check
    _
  $region27: #{_lambda_.31} parent=0 // pred_check_branch
    %209 = sbr.rel (0) target = $region29
  $region28: #{_lambda_.31} parent=0 // pred_region
    _
  $region29: #{_lambda_.31} parent=0 // pred_fallthru
    _

// kernel: _lambda_.30
$region0: #{_lambda_.30}
  #allocation0 [shape = 'u32[]', space=smem, size = 0x4, offset = 0x4, fixed_abs, tag = 'smem constant byte address 0x4 - core index']
  #allocation1 [shape = 'u32[144,128]{1,0:T(1,128)}', space=vmem, size = 0x12000, scoped, tag = 'internal scratch']
  %s0 = inlined_call_operand.vmem [shape: f32[32,48], index: 0, kind: input, shape index: {}]
  %s1 = inlined_call_operand.vmem [shape: bf16[48,32], index: 1, kind: input, shape index: {}]
  %s2 = inlined_call_operand.vmem [shape: f32[1,32], index: 2, kind: input, shape index: {}, may-alias: {2,4}]
  %s3 = inlined_call_operand.vmem [shape: f32[1,32], index: 3, kind: input, shape index: {}]
  %s4 = inlined_call_operand.vmem [shape: f32[1,32], index: 4, kind: input, shape index: {}, may-alias: {2,4}]
  %s5 = inlined_call_operand.vmem [shape: bf16[32,32], index: 5, kind: output, shape index: {}]
  %s6 = sld [smem:[#allocation0]]
  $region30: #{_lambda_.30} parent=0
    _
  %s8 = ssub.s32 1, %s6
  %s9 = scalar_select 0, %s8, %s6
  // Predicated region
  $region2: #{_lambda_.30} parent=0 // pred_check
    _
  $region3: #{_lambda_.30} parent=0 // pred_check_branch
    %11 = sbr.rel (0) target = $region5
  $region4: #{_lambda_.30} parent=0 // pred_region
    _
  $region5: #{_lambda_.30} parent=0 // pred_fallthru
    _
  // Predicated region
  $region6: #{_lambda_.30} parent=0 // pred_check
    _
  $region7: #{_lambda_.30} parent=0 // pred_check_branch
    %13 = sbr.rel (0) target = $region9
  $region8: #{_lambda_.30} parent=0 // pred_region
    _
  $region9: #{_lambda_.30} parent=0 // pred_fallthru
    _
  // Predicated region
  $region10: #{_lambda_.30} parent=0 // pred_check
    _
  $region11: #{_lambda_.30} parent=0 // pred_check_branch
    %15 = sbr.rel (0) target = $region13
  $region12: #{_lambda_.30} parent=0 // pred_region
    _
  $region13: #{_lambda_.30} parent=0 // pred_fallthru
    _
  // Predicated region
  $region14: #{_lambda_.30} parent=0 // pred_check
    _
  $region15: #{_lambda_.30} parent=0 // pred_check_branch
    %17 = sbr.rel (0) target = $region17
  $region16: #{_lambda_.30} parent=0 // pred_region
    _
  $region17: #{_lambda_.30} parent=0 // pred_fallthru
    _
  // Predicated region
  $region18: #{_lambda_.30} parent=0 // pred_check
    _
  $region19: #{_lambda_.30} parent=0 // pred_check_branch
    %19 = sbr.rel (0) target = $region21
  $region20: #{_lambda_.30} parent=0 // pred_region
    _
  $region21: #{_lambda_.30} parent=0 // pred_fallthru
    _
  %v21 = vld [vmem:[%s0] sm:$0xff]
  %v22 = vld [vmem:[%s0 + $0x8] sm:$0xff]
  %v23 = vld [vmem:[%s0 + $0x10] sm:$0xff]
  %v24 = vld [vmem:[%s0 + $0x18] sm:$0xff]
  %v25 = vpack.c.bf16 %v22, %v21
  %v26 = vpack.c.bf16 %v24, %v23
  %v27 = vld [vmem:[%s1] sm:$0xf]
  %v28 = vld [vmem:[%s1 + $0x4] sm:$0xf]
  %v29 = vld [vmem:[%s1 + $0x8] sm:$0xf]
  %v30 = vld [vmem:[%s1 + $0xc] sm:$0xf]
  %v31 = vld [vmem:[%s1 + $0x10] sm:$0xf]
  %v32 = vld [vmem:[%s1 + $0x14] sm:$0xf]
  %v33 = vld [vmem:[%s2] sm:$0x1]
  %v35 = vlaneseq
  %v36 = vshrl.u32 %v35, 7
  %v37 = vsub.s32 0, %v36
  %v38 = vrot.slane %v33, %v37
  %v46 = vunpack.c.l.b16 %v27
  %v47 = vunpack.c.l.b16 %v28
  %v48 = vunpack.c.l.b16 %v29
  %v49 = vunpack.c.l.b16 %v30
  %v50 = vunpack.c.l.b16 %v31
  %v51 = vunpack.c.l.b16 %v32
  %v52 = vpack.c.b16 %v47, %v46
  %v53 = vpack.c.b16 %v49, %v48
  %v54 = vpack.c.b16 %v51, %v50
  %vm58 = vcmask 392192
  %v60 = vsel %vm58, %v25, 0
  %v63 = vsel %vm58, %v26, 0
  %65 = vmatprep.subr.bf16.mxu0 0
  %66 = vmatpush1.bf16.msra.mxu0 0
  %67 = vmatprep.subr.bf16.mxu0 0
  %68 = vmatpush1.bf16.msra.mxu0 0
  %69 = vmatprep.subr.bf16.mxu0 0
  %70 = vmatpush1.bf16.msra.mxu0 0
  %71 = vmatprep.subr.bf16.mxu0 0
  %72 = vmatpush1.bf16.msra.mxu0 0
  %73 = vmatprep.subr.bf16.mxu0 0
  %74 = vmatpush1.bf16.msra.mxu0 0
  %75 = vmatprep.subr.bf16.mxu0 0
  %76 = vmatpush1.bf16.msra.mxu0 %v54
  %77 = vmatprep.subr.bf16.mxu0 0
  %78 = vmatpush1.bf16.msra.mxu0 %v53
  %79 = vmatprep.subr.bf16.mxu0 0
  %80 = vmatpush1.bf16.msra.mxu0 %v52
  %81 = vmatprep.subr.bf16.mxu0 0
  %82 = vmatpush2.bf16.msra.mxu0 0
  %83 = vmatprep.subr.bf16.mxu0 0
  %84 = vmatpush2.bf16.msra.mxu0 0
  %85 = vmatprep.subr.bf16.mxu0 0
  %86 = vmatpush2.bf16.msra.mxu0 0
  %87 = vmatprep.subr.bf16.mxu0 0
  %88 = vmatpush2.bf16.msra.mxu0 0
  %89 = vmatprep.subr.bf16.mxu0 0
  %90 = vmatpush2.bf16.msra.mxu0 0
  %91 = vmatprep.subr.bf16.mxu0 0
  %92 = vmatpush2.bf16.msra.mxu0 0
  %93 = vmatprep.subr.bf16.mxu0 0
  %94 = vmatpush2.bf16.msra.mxu0 0
  %95 = vmatprep.subr.bf16.mxu0 0
  %96 = vmatpush2.bf16.msra.mxu0 0
  %97 = vmatprep.mubr.bf16.mxu0 0
  %98 = vmatmul.mubr.bf16.gmra.mxu0 %v60
  %v99 = vpop.f32.mrf.mxu0
  %v100 = vadd.f32 %v38, %v99
  %v101 = vpop.f32.mrf.mxu0
  %v102 = vpop.f32.mrf.mxu0
  %v103 = vadd.f32 %v38, %v102
  %v104 = vpop.f32.mrf.mxu0
  %105 = vmatprep.mubr.bf16.mxu0 0
  %106 = vmatmul.mubr.bf16.gmra.mxu0 %v63
  %v107 = vpop.f32.mrf.mxu0
  %v108 = vadd.f32 %v38, %v107
  %v109 = vpop.f32.mrf.mxu0
  %v110 = vpop.f32.mrf.mxu0
  %v111 = vadd.f32 %v38, %v110
  %v112 = vpop.f32.mrf.mxu0
  %113 = vdwg.mxu0
  %v114 = vld [vmem:[%s3] sm:$0x1]
  %v115 = vld [vmem:[%s4] sm:$0x1]
  %vm116 = vcmask 261120
  %v117 = vsel %vm116, %v100, 0.0
  %118 = vadd.xlane.f32.xlu0 %v117
  %v119 = vpop.xlane.xlu0 %118
  %v120 = vsel %vm116, %v103, 0.0
  %121 = vadd.xlane.f32.xlu0 %v120
  %v122 = vpop.xlane.xlu0 %121
  %v123 = vsel %vm116, %v108, 0.0
  %124 = vadd.xlane.f32.xlu0 %v123
  %v125 = vpop.xlane.xlu0 %124
  %v126 = vsel %vm116, %v111, 0.0
  %127 = vadd.xlane.f32.xlu0 %v126
  %v128 = vpop.xlane.xlu0 %127
  %v129 = vrcp.pop 32.0
  %v130 = vmul.f32 %v119, %v129
  %v131 = vmul.f32 %v122, %v129
  %v132 = vmul.f32 %v125, %v129
  %v133 = vmul.f32 %v128, %v129
  %v134 = vsub.f32 %v100, %v130
  %v135 = vsub.f32 %v103, %v131
  %v136 = vsub.f32 %v108, %v132
  %v137 = vsub.f32 %v111, %v133
  %v138 = vmul.f32 %v134, %v134
  %v139 = vmul.f32 %v135, %v135
  %v140 = vmul.f32 %v136, %v136
  %v141 = vmul.f32 %v137, %v137
  %v142 = vsel %vm116, %v138, 0.0
  %143 = vadd.xlane.f32.xlu0 %v142
  %v144 = vpop.xlane.xlu0 %143
  %v145 = vsel %vm116, %v139, 0.0
  %146 = vadd.xlane.f32.xlu0 %v145
  %v147 = vpop.xlane.xlu0 %146
  %v148 = vsel %vm116, %v140, 0.0
  %149 = vadd.xlane.f32.xlu0 %v148
  %v150 = vpop.xlane.xlu0 %149
  %v151 = vsel %vm116, %v141, 0.0
  %152 = vadd.xlane.f32.xlu0 %v151
  %v153 = vpop.xlane.xlu0 %152
  %v154 = vmul.f32 %v144, %v129
  %v155 = vmul.f32 %v147, %v129
  %v156 = vmul.f32 %v150, %v129
  %v157 = vmul.f32 %v153, %v129
  %v158 = vadd.f32 %v154, 1e-05
  %v159 = vadd.f32 %v155, 1e-05
  %v160 = vadd.f32 %v156, 1e-05
  %v161 = vadd.f32 %v157, 1e-05
  %v162 = vrsqrt.pop %v158
  %v163 = vrsqrt.pop %v159
  %v164 = vrsqrt.pop %v160
  %v165 = vrsqrt.pop %v161
  %v166 = vmul.f32 %v134, %v162
  %v167 = vmul.f32 %v135, %v163
  %v168 = vmul.f32 %v136, %v164
  %v169 = vmul.f32 %v137, %v165
  %v171 = vlaneseq
  %v172 = vshrl.u32 %v171, 7
  %v173 = vsub.s32 0, %v172
  %v174 = vrot.slane %v114, %v173
  %v176 = vmul.f32 %v166, %v174
  %v177 = vmul.f32 %v167, %v174
  %v178 = vmul.f32 %v168, %v174
  %v179 = vmul.f32 %v169, %v174
  %v181 = vlaneseq
  %v182 = vshrl.u32 %v181, 7
  %v183 = vsub.s32 0, %v182
  %v184 = vrot.slane %v115, %v183
  %v186 = vadd.f32 %v176, %v184
  %v187 = vadd.f32 %v177, %v184
  %v188 = vadd.f32 %v178, %v184
  %v189 = vadd.f32 %v179, %v184
  %v190 = vpack.c.bf16 %v187, %v186
  %v191 = vpack.c.bf16 %v189, %v188
  %v194 = vunpack.c.l.b16 %v190
  %v195 = vunpack.c.h.b16 %v190
  %v196 = vunpack.c.l.b16 %v191
  %v197 = vunpack.c.h.b16 %v191
  %v198 = vpack.c.b16 %v194, %v194
  %v199 = vpack.c.b16 %v195, %v195
  %v200 = vpack.c.b16 %v196, %v196
  %v201 = vpack.c.b16 %v197, %v197
  %vm206 = vcmask 257024
  %207 = vst.msk [vmem:[%s5] sm:$0xf] %vm206, %v198
  %208 = vst.msk [vmem:[%s5 + $0x4] sm:$0xf] %vm206, %v199
  %209 = vst.msk [vmem:[%s5 + $0x8] sm:$0xf] %vm206, %v200
  %210 = vst.msk [vmem:[%s5 + $0xc] sm:$0xf] %vm206, %v201
  // Predicated region
  $region22: #{_lambda_.30} parent=0 // pred_check
    _
  $region23: #{_lambda_.30} parent=0 // pred_check_branch
    %212 = sbr.rel (0) target = $region25
  $region24: #{_lambda_.30} parent=0 // pred_region
    _
  $region25: #{_lambda_.30} parent=0 // pred_fallthru
    _
  // Predicated region
  $region26: #{_lambda_.30} parent=0 // pred_check
    _
  $region27: #{_lambda_.30} parent=0 // pred_check_branch
    %214 = sbr.rel (0) target = $region29
  $region28: #{_lambda_.30} parent=0 // pred_region
    _
  $region29: #{_lambda_.30} parent=0 // pred_fallthru
    _

// kernel: _lambda_.33
$region0: #{_lambda_.33}
  #allocation0 [shape = 'u32[]', space=smem, size = 0x4, offset = 0x4, fixed_abs, tag = 'smem constant byte address 0x4 - core index']
  #allocation1 [shape = 'u32[144,128]{1,0:T(1,128)}', space=vmem, size = 0x12000, scoped, tag = 'internal scratch']
  %s0 = inlined_call_operand.vmem [shape: bf16[32,32], index: 0, kind: input, shape index: {}]
  %s1 = inlined_call_operand.vmem [shape: bf16[32,32], index: 1, kind: input, shape index: {}]
  %s2 = inlined_call_operand.vmem [shape: f32[1,32], index: 2, kind: input, shape index: {}]
  %s3 = inlined_call_operand.vmem [shape: f32[1,32], index: 3, kind: input, shape index: {}, may-alias: {3,7}]
  %s4 = inlined_call_operand.vmem [shape: bf16[32,128], index: 4, kind: input, shape index: {}]
  %s5 = inlined_call_operand.vmem [shape: f32[1,128], index: 5, kind: input, shape index: {}]
  %s6 = inlined_call_operand.vmem [shape: bf16[128,32], index: 6, kind: input, shape index: {}]
  %s7 = inlined_call_operand.vmem [shape: f32[1,32], index: 7, kind: input, shape index: {}, may-alias: {3,7}]
  %s8 = inlined_call_operand.vmem [shape: bf16[32,32], index: 8, kind: output, shape index: {}]
  %s9 = sld [smem:[#allocation0]]
  $region42: #{_lambda_.33} parent=0
    _
  %s11 = ssub.s32 1, %s9
  %s12 = scalar_select 0, %s11, %s9
  // Predicated region
  $region2: #{_lambda_.33} parent=0 // pred_check
    _
  $region3: #{_lambda_.33} parent=0 // pred_check_branch
    %14 = sbr.rel (0) target = $region5
  $region4: #{_lambda_.33} parent=0 // pred_region
    _
  $region5: #{_lambda_.33} parent=0 // pred_fallthru
    _
  // Predicated region
  $region6: #{_lambda_.33} parent=0 // pred_check
    _
  $region7: #{_lambda_.33} parent=0 // pred_check_branch
    %16 = sbr.rel (0) target = $region9
  $region8: #{_lambda_.33} parent=0 // pred_region
    _
  $region9: #{_lambda_.33} parent=0 // pred_fallthru
    _
  // Predicated region
  $region10: #{_lambda_.33} parent=0 // pred_check
    _
  $region11: #{_lambda_.33} parent=0 // pred_check_branch
    %18 = sbr.rel (0) target = $region13
  $region12: #{_lambda_.33} parent=0 // pred_region
    _
  $region13: #{_lambda_.33} parent=0 // pred_fallthru
    _
  // Predicated region
  $region14: #{_lambda_.33} parent=0 // pred_check
    _
  $region15: #{_lambda_.33} parent=0 // pred_check_branch
    %20 = sbr.rel (0) target = $region17
  $region16: #{_lambda_.33} parent=0 // pred_region
    _
  $region17: #{_lambda_.33} parent=0 // pred_fallthru
    _
  // Predicated region
  $region18: #{_lambda_.33} parent=0 // pred_check
    _
  $region19: #{_lambda_.33} parent=0 // pred_check_branch
    %22 = sbr.rel (0) target = $region21
  $region20: #{_lambda_.33} parent=0 // pred_region
    _
  $region21: #{_lambda_.33} parent=0 // pred_fallthru
    _
  // Predicated region
  $region22: #{_lambda_.33} parent=0 // pred_check
    _
  $region23: #{_lambda_.33} parent=0 // pred_check_branch
    %24 = sbr.rel (0) target = $region25
  $region24: #{_lambda_.33} parent=0 // pred_region
    _
  $region25: #{_lambda_.33} parent=0 // pred_fallthru
    _
  // Predicated region
  $region26: #{_lambda_.33} parent=0 // pred_check
    _
  $region27: #{_lambda_.33} parent=0 // pred_check_branch
    %26 = sbr.rel (0) target = $region29
  $region28: #{_lambda_.33} parent=0 // pred_region
    _
  $region29: #{_lambda_.33} parent=0 // pred_fallthru
    _
  // Predicated region
  $region30: #{_lambda_.33} parent=0 // pred_check
    _
  $region31: #{_lambda_.33} parent=0 // pred_check_branch
    %28 = sbr.rel (0) target = $region33
  $region32: #{_lambda_.33} parent=0 // pred_region
    _
  $region33: #{_lambda_.33} parent=0 // pred_fallthru
    _
  %v30 = vld [vmem:[%s0] sm:$0xf]
  %v31 = vld [vmem:[%s0 + $0x4] sm:$0xf]
  %v32 = vld [vmem:[%s0 + $0x8] sm:$0xf]
  %v33 = vld [vmem:[%s0 + $0xc] sm:$0xf]
  %v34 = vunpack.c.l.bf16 %v30
  %v35 = vunpack.c.l.bf16 %v31
  %v36 = vunpack.c.l.bf16 %v32
  %v37 = vunpack.c.l.bf16 %v33
  %v38 = vld [vmem:[%s1] sm:$0xf]
  %v39 = vld [vmem:[%s1 + $0x4] sm:$0xf]
  %v40 = vld [vmem:[%s1 + $0x8] sm:$0xf]
  %v41 = vld [vmem:[%s1 + $0xc] sm:$0xf]
  %v42 = vunpack.c.l.bf16 %v38
  %v43 = vunpack.c.l.bf16 %v39
  %v44 = vunpack.c.l.bf16 %v40
  %v45 = vunpack.c.l.bf16 %v41
  %v46 = vadd.f32 %v34, %v42
  %v47 = vadd.f32 %v35, %v43
  %v48 = vadd.f32 %v36, %v44
  %v49 = vadd.f32 %v37, %v45
  %v50 = vld [vmem:[%s2] sm:$0x1]
  %v51 = vld [vmem:[%s3] sm:$0x1]
  %vm52 = vcmask 261120
  %v53 = vsel %vm52, %v46, 0.0
  %54 = vadd.xlane.f32.xlu0 %v53
  %v55 = vpop.xlane.xlu0 %54
  %v56 = vsel %vm52, %v47, 0.0
  %57 = vadd.xlane.f32.xlu0 %v56
  %v58 = vpop.xlane.xlu0 %57
  %v59 = vsel %vm52, %v48, 0.0
  %60 = vadd.xlane.f32.xlu0 %v59
  %v61 = vpop.xlane.xlu0 %60
  %v62 = vsel %vm52, %v49, 0.0
  %63 = vadd.xlane.f32.xlu0 %v62
  %v64 = vpop.xlane.xlu0 %63
  %v65 = vrcp.pop 32.0
  %v66 = vmul.f32 %v55, %v65
  %v67 = vmul.f32 %v58, %v65
  %v68 = vmul.f32 %v61, %v65
  %v69 = vmul.f32 %v64, %v65
  %v70 = vsub.f32 %v46, %v66
  %v71 = vsub.f32 %v47, %v67
  %v72 = vsub.f32 %v48, %v68
  %v73 = vsub.f32 %v49, %v69
  %v74 = vmul.f32 %v70, %v70
  %v75 = vmul.f32 %v71, %v71
  %v76 = vmul.f32 %v72, %v72
  %v77 = vmul.f32 %v73, %v73
  %v78 = vsel %vm52, %v74, 0.0
  %79 = vadd.xlane.f32.xlu0 %v78
  %v80 = vpop.xlane.xlu0 %79
  %v81 = vsel %vm52, %v75, 0.0
  %82 = vadd.xlane.f32.xlu0 %v81
  %v83 = vpop.xlane.xlu0 %82
  %v84 = vsel %vm52, %v76, 0.0
  %85 = vadd.xlane.f32.xlu0 %v84
  %v86 = vpop.xlane.xlu0 %85
  %v87 = vsel %vm52, %v77, 0.0
  %88 = vadd.xlane.f32.xlu0 %v87
  %v89 = vpop.xlane.xlu0 %88
  %v90 = vmul.f32 %v80, %v65
  %v91 = vmul.f32 %v83, %v65
  %v92 = vmul.f32 %v86, %v65
  %v93 = vmul.f32 %v89, %v65
  %v94 = vadd.f32 %v90, 1e-05
  %v95 = vadd.f32 %v91, 1e-05
  %v96 = vadd.f32 %v92, 1e-05
  %v97 = vadd.f32 %v93, 1e-05
  %v98 = vrsqrt.pop %v94
  %v99 = vrsqrt.pop %v95
  %v100 = vrsqrt.pop %v96
  %v101 = vrsqrt.pop %v97
  %v102 = vmul.f32 %v70, %v98
  %v103 = vmul.f32 %v71, %v99
  %v104 = vmul.f32 %v72, %v100
  %v105 = vmul.f32 %v73, %v101
  %v107 = vlaneseq
  %v108 = vshrl.u32 %v107, 7
  %v109 = vsub.s32 0, %v108
  %v110 = vrot.slane %v50, %v109
  %v112 = vmul.f32 %v102, %v110
  %v113 = vmul.f32 %v103, %v110
  %v114 = vmul.f32 %v104, %v110
  %v115 = vmul.f32 %v105, %v110
  %v117 = vlaneseq
  %v118 = vshrl.u32 %v117, 7
  %v119 = vsub.s32 0, %v118
  %v120 = vrot.slane %v51, %v119
  %v122 = vadd.f32 %v112, %v120
  %v123 = vadd.f32 %v113, %v120
  %v124 = vadd.f32 %v114, %v120
  %v125 = vadd.f32 %v115, %v120
  %v126 = vpack.c.bf16 %v123, %v122
  %v127 = vpack.c.bf16 %v125, %v124
  %v128 = vld [vmem:[%s4] sm:$0xf]
  %v129 = vld [vmem:[%s4 + $0x4] sm:$0xf]
  %v130 = vld [vmem:[%s4 + $0x8] sm:$0xf]
  %v131 = vld [vmem:[%s4 + $0xc] sm:$0xf]
  %v132 = vld [vmem:[%s5] sm:$0x1]
  %v134 = vlaneseq
  %v135 = vshrl.u32 %v134, 7
  %v136 = vsub.s32 0, %v135
  %v137 = vrot.slane %v132, %v136
  %v143 = vunpack.c.l.b16 %v128
  %v144 = vunpack.c.l.b16 %v129
  %v145 = vunpack.c.l.b16 %v130
  %v146 = vunpack.c.l.b16 %v131
  %v147 = vpack.c.b16 %v144, %v143
  %v148 = vpack.c.b16 %v146, %v145
  %v152 = vsel %vm52, %v126, 0
  %v155 = vsel %vm52, %v127, 0
  %157 = vmatprep.subr.bf16.mxu0 0
  %158 = vmatpush1.bf16.msra.mxu0 0
  %159 = vmatprep.subr.bf16.mxu0 0
  %160 = vmatpush1.bf16.msra.mxu0 0
  %161 = vmatprep.subr.bf16.mxu0 0
  %162 = vmatpush1.bf16.msra.mxu0 0
  %163 = vmatprep.subr.bf16.mxu0 0
  %164 = vmatpush1.bf16.msra.mxu0 0
  %165 = vmatprep.subr.bf16.mxu0 0
  %166 = vmatpush1.bf16.msra.mxu0 0
  %167 = vmatprep.subr.bf16.mxu0 0
  %168 = vmatpush1.bf16.msra.mxu0 0
  %169 = vmatprep.subr.bf16.mxu0 0
  %170 = vmatpush1.bf16.msra.mxu0 %v148
  %171 = vmatprep.subr.bf16.mxu0 0
  %172 = vmatpush1.bf16.msra.mxu0 %v147
  %173 = vmatprep.subr.bf16.mxu0 0
  %174 = vmatpush2.bf16.msra.mxu0 0
  %175 = vmatprep.subr.bf16.mxu0 0
  %176 = vmatpush2.bf16.msra.mxu0 0
  %177 = vmatprep.subr.bf16.mxu0 0
  %178 = vmatpush2.bf16.msra.mxu0 0
  %179 = vmatprep.subr.bf16.mxu0 0
  %180 = vmatpush2.bf16.msra.mxu0 0
  %181 = vmatprep.subr.bf16.mxu0 0
  %182 = vmatpush2.bf16.msra.mxu0 0
  %183 = vmatprep.subr.bf16.mxu0 0
  %184 = vmatpush2.bf16.msra.mxu0 0
  %185 = vmatprep.subr.bf16.mxu0 0
  %186 = vmatpush2.bf16.msra.mxu0 0
  %187 = vmatprep.subr.bf16.mxu0 0
  %188 = vmatpush2.bf16.msra.mxu0 0
  %189 = vmatprep.mubr.bf16.mxu0 0
  %190 = vmatmul.mubr.bf16.gmra.mxu0 %v152
  %v191 = vpop.f32.mrf.mxu0
  %v192 = vadd.f32 %v137, %v191
  %v193 = vpop.f32.mrf.mxu0
  %v194 = vpop.f32.mrf.mxu0
  %v195 = vadd.f32 %v137, %v194
  %v196 = vpop.f32.mrf.mxu0
  %197 = vmatprep.mubr.bf16.mxu0 0
  %198 = vmatmul.mubr.bf16.gmra.mxu0 %v155
  %v199 = vpop.f32.mrf.mxu0
  %v200 = vadd.f32 %v137, %v199
  %v201 = vpop.f32.mrf.mxu0
  %v202 = vpop.f32.mrf.mxu0
  %v203 = vadd.f32 %v137, %v202
  %v204 = vpop.f32.mrf.mxu0
  %205 = vdwg.mxu0
  %v206 = vmul.f32 %v192, 0.5
  %v207 = vmul.f32 %v195, 0.5
  %v208 = vmul.f32 %v200, 0.5
  %v209 = vmul.f32 %v203, 0.5
  %v210 = vmul.f32 %v192, 0.044715
  %v211 = vmul.f32 %v195, 0.044715
  %v212 = vmul.f32 %v200, 0.044715
  %v213 = vmul.f32 %v203, 0.044715
  %v214 = vmul.f32 %v210, %v192
  %v215 = vmul.f32 %v211, %v195
  %v216 = vmul.f32 %v212, %v200
  %v217 = vmul.f32 %v213, %v203
  %v218 = vmul.f32 %v214, %v192
  %v219 = vmul.f32 %v215, %v195
  %v220 = vmul.f32 %v216, %v200
  %v221 = vmul.f32 %v217, %v203
  %v222 = vadd.f32 %v192, %v218
  %v223 = vadd.f32 %v195, %v219
  %v224 = vadd.f32 %v200, %v220
  %v225 = vadd.f32 %v203, %v221
  %v226 = vmul.f32 %v222, 0.7978846
  %v227 = vmul.f32 %v223, 0.7978846
  %v228 = vmul.f32 %v224, 0.7978846
  %v229 = vmul.f32 %v225, 0.7978846
  %v230 = vtanh.pop %v226
  %v231 = vtanh.pop %v227
  %v232 = vtanh.pop %v228
  %v233 = vtanh.pop %v229
  %v234 = vadd.f32 %v230, 1.0
  %v235 = vadd.f32 %v231, 1.0
  %v236 = vadd.f32 %v232, 1.0
  %v237 = vadd.f32 %v233, 1.0
  %v238 = vmul.f32 %v206, %v234
  %v239 = vmul.f32 %v207, %v235
  %v240 = vmul.f32 %v208, %v236
  %v241 = vmul.f32 %v209, %v237
  %v242 = vpack.c.bf16 %v239, %v238
  %v243 = vpack.c.bf16 %v241, %v240
  %v244 = vld [vmem:[%s6] sm:$0xf]
  %v245 = vld [vmem:[%s6 + $0x4] sm:$0xf]
  %v246 = vld [vmem:[%s6 + $0x8] sm:$0xf]
  %v247 = vld [vmem:[%s6 + $0xc] sm:$0xf]
  %v248 = vld [vmem:[%s6 + $0x10] sm:$0xf]
  %v249 = vld [vmem:[%s6 + $0x14] sm:$0xf]
  %v250 = vld [vmem:[%s6 + $0x18] sm:$0xf]
  %v251 = vld [vmem:[%s6 + $0x1c] sm:$0xf]
  %v252 = vld [vmem:[%s6 + $0x20] sm:$0xf]
  %v253 = vld [vmem:[%s6 + $0x24] sm:$0xf]
  %v254 = vld [vmem:[%s6 + $0x28] sm:$0xf]
  %v255 = vld [vmem:[%s6 + $0x2c] sm:$0xf]
  %v256 = vld [vmem:[%s6 + $0x30] sm:$0xf]
  %v257 = vld [vmem:[%s6 + $0x34] sm:$0xf]
  %v258 = vld [vmem:[%s6 + $0x38] sm:$0xf]
  %v259 = vld [vmem:[%s6 + $0x3c] sm:$0xf]
  %v260 = vld [vmem:[%s7] sm:$0x1]
  %v262 = vlaneseq
  %v263 = vshrl.u32 %v262, 7
  %v264 = vsub.s32 0, %v263
  %v265 = vrot.slane %v260, %v264
  %v283 = vunpack.c.l.b16 %v244
  %v284 = vunpack.c.l.b16 %v245
  %v285 = vunpack.c.l.b16 %v246
  %v286 = vunpack.c.l.b16 %v247
  %v287 = vunpack.c.l.b16 %v248
  %v288 = vunpack.c.l.b16 %v249
  %v289 = vunpack.c.l.b16 %v250
  %v290 = vunpack.c.l.b16 %v251
  %v291 = vunpack.c.l.b16 %v252
  %v292 = vunpack.c.l.b16 %v253
  %v293 = vunpack.c.l.b16 %v254
  %v294 = vunpack.c.l.b16 %v255
  %v295 = vunpack.c.l.b16 %v256
  %v296 = vunpack.c.l.b16 %v257
  %v297 = vunpack.c.l.b16 %v258
  %v298 = vunpack.c.l.b16 %v259
  %v299 = vpack.c.b16 %v284, %v283
  %v300 = vpack.c.b16 %v286, %v285
  %v301 = vpack.c.b16 %v288, %v287
  %v302 = vpack.c.b16 %v290, %v289
  %v303 = vpack.c.b16 %v292, %v291
  %v304 = vpack.c.b16 %v294, %v293
  %v305 = vpack.c.b16 %v296, %v295
  %v306 = vpack.c.b16 %v298, %v297
  %315 = vmatprep.subr.bf16.mxu0 0
  %316 = vmatpush1.bf16.msra.mxu0 %v306
  %317 = vmatprep.subr.bf16.mxu0 0
  %318 = vmatpush1.bf16.msra.mxu0 %v305
  %319 = vmatprep.subr.bf16.mxu0 0
  %320 = vmatpush1.bf16.msra.mxu0 %v304
  %321 = vmatprep.subr.bf16.mxu0 0
  %322 = vmatpush1.bf16.msra.mxu0 %v303
  %323 = vmatprep.subr.bf16.mxu0 0
  %324 = vmatpush1.bf16.msra.mxu0 %v302
  %325 = vmatprep.subr.bf16.mxu0 0
  %326 = vmatpush1.bf16.msra.mxu0 %v301
  %327 = vmatprep.subr.bf16.mxu0 0
  %328 = vmatpush1.bf16.msra.mxu0 %v300
  %329 = vmatprep.subr.bf16.mxu0 0
  %330 = vmatpush1.bf16.msra.mxu0 %v299
  %331 = vmatprep.subr.bf16.mxu0 0
  %332 = vmatpush2.bf16.msra.mxu0 0
  %333 = vmatprep.subr.bf16.mxu0 0
  %334 = vmatpush2.bf16.msra.mxu0 0
  %335 = vmatprep.subr.bf16.mxu0 0
  %336 = vmatpush2.bf16.msra.mxu0 0
  %337 = vmatprep.subr.bf16.mxu0 0
  %338 = vmatpush2.bf16.msra.mxu0 0
  %339 = vmatprep.subr.bf16.mxu0 0
  %340 = vmatpush2.bf16.msra.mxu0 0
  %341 = vmatprep.subr.bf16.mxu0 0
  %342 = vmatpush2.bf16.msra.mxu0 0
  %343 = vmatprep.subr.bf16.mxu0 0
  %344 = vmatpush2.bf16.msra.mxu0 0
  %345 = vmatprep.subr.bf16.mxu0 0
  %346 = vmatpush2.bf16.msra.mxu0 0
  %347 = vmatprep.mubr.bf16.mxu0 0
  %348 = vmatmul.mubr.bf16.gmra.mxu0 %v242
  %v349 = vpop.f32.mrf.mxu0
  %v350 = vadd.f32 %v265, %v349
  %v351 = vpop.f32.mrf.mxu0
  %v352 = vpop.f32.mrf.mxu0
  %v353 = vadd.f32 %v265, %v352
  %v354 = vpop.f32.mrf.mxu0
  %355 = vmatprep.mubr.bf16.mxu0 0
  %356 = vmatmul.mubr.bf16.gmra.mxu0 %v243
  %v357 = vpop.f32.mrf.mxu0
  %v358 = vadd.f32 %v265, %v357
  %v359 = vpop.f32.mrf.mxu0
  %v360 = vpop.f32.mrf.mxu0
  %v361 = vadd.f32 %v265, %v360
  %v362 = vpop.f32.mrf.mxu0
  %363 = vdwg.mxu0
  %v364 = vadd.f32 %v46, %v350
  %v365 = vadd.f32 %v47, %v353
  %v366 = vadd.f32 %v48, %v358
  %v367 = vadd.f32 %v49, %v361
  %v368 = vpack.c.bf16 %v365, %v364
  %v369 = vpack.c.bf16 %v367, %v366
  %v372 = vunpack.c.l.b16 %v368
  %v373 = vunpack.c.h.b16 %v368
  %v374 = vunpack.c.l.b16 %v369
  %v375 = vunpack.c.h.b16 %v369
  %v376 = vpack.c.b16 %v372, %v372
  %v377 = vpack.c.b16 %v373, %v373
  %v378 = vpack.c.b16 %v374, %v374
  %v379 = vpack.c.b16 %v375, %v375
  %vm384 = vcmask 257024
  %385 = vst.msk [vmem:[%s8] sm:$0xf] %vm384, %v376
  %386 = vst.msk [vmem:[%s8 + $0x4] sm:$0xf] %vm384, %v377
  %387 = vst.msk [vmem:[%s8 + $0x8] sm:$0xf] %vm384, %v378
  %388 = vst.msk [vmem:[%s8 + $0xc] sm:$0xf] %vm384, %v379
  // Predicated region
  $region34: #{_lambda_.33} parent=0 // pred_check
    _
  $region35: #{_lambda_.33} parent=0 // pred_check_branch
    %390 = sbr.rel (0) target = $region37
  $region36: #{_lambda_.33} parent=0 // pred_region
    _
  $region37: #{_lambda_.33} parent=0 // pred_fallthru
    _
  // Predicated region
  $region38: #{_lambda_.33} parent=0 // pred_check
    _
  $region39: #{_lambda_.33} parent=0 // pred_check_branch
    %392 = sbr.rel (0) target = $region41
  $region40: #{_lambda_.33} parent=0 // pred_region
    _
  $region41: #{_lambda_.33} parent=0 // pred_fallthru
    _

// kernel: _lambda_.32
$region0: #{_lambda_.32}
  #allocation0 [shape = 'u32[]', space=smem, size = 0x4, offset = 0x4, fixed_abs, tag = 'smem constant byte address 0x4 - core index']
  #allocation1 [shape = 'u32[144,128]{1,0:T(1,128)}', space=vmem, size = 0x12000, scoped, tag = 'internal scratch']
  %s0 = inlined_call_operand.vmem [shape: bf16[4,2,4,96], index: 0, kind: input, shape index: {}]
  %s1 = inlined_call_operand.vmem [shape: f32[2,4,4], index: 1, kind: input, shape index: {}]
  %s2 = inlined_call_operand.vmem [shape: bf16[32,32], index: 2, kind: input, shape index: {}]
  %s3 = inlined_call_operand.vmem [shape: f32[1,32], index: 3, kind: input, shape index: {}]
  %s4 = inlined_call_operand.vmem [shape: bf16[4,2,4,32], index: 4, kind: output, shape index: {}]
  %s5 = sld [smem:[#allocation0]]
  $region26: #{_lambda_.32} parent=0
    _
  %s7 = ssub.s32 1, %s5
  %s8 = scalar_select 0, %s7, %s5
  // Predicated region
  $region2: #{_lambda_.32} parent=0 // pred_check
    _
  $region3: #{_lambda_.32} parent=0 // pred_check_branch
    %10 = sbr.rel (0) target = $region5
  $region4: #{_lambda_.32} parent=0 // pred_region
    _
  $region5: #{_lambda_.32} parent=0 // pred_fallthru
    _
  // Predicated region
  $region6: #{_lambda_.32} parent=0 // pred_check
    _
  $region7: #{_lambda_.32} parent=0 // pred_check_branch
    %12 = sbr.rel (0) target = $region9
  $region8: #{_lambda_.32} parent=0 // pred_region
    _
  $region9: #{_lambda_.32} parent=0 // pred_fallthru
    _
  // Predicated region
  $region10: #{_lambda_.32} parent=0 // pred_check
    _
  $region11: #{_lambda_.32} parent=0 // pred_check_branch
    %14 = sbr.rel (0) target = $region13
  $region12: #{_lambda_.32} parent=0 // pred_region
    _
  $region13: #{_lambda_.32} parent=0 // pred_fallthru
    _
  // Predicated region
  $region14: #{_lambda_.32} parent=0 // pred_check
    _
  $region15: #{_lambda_.32} parent=0 // pred_check_branch
    %16 = sbr.rel (0) target = $region17
  $region16: #{_lambda_.32} parent=0 // pred_region
    _
  $region17: #{_lambda_.32} parent=0 // pred_fallthru
    _
  %v18 = vld [vmem:[%s0] sm:$0x3]
  %v19 = vld [vmem:[%s0 + $0x2] sm:$0x3]
  %v20 = vld [vmem:[%s0 + $0x4] sm:$0x3]
  %v21 = vld [vmem:[%s0 + $0x6] sm:$0x3]
  %v22 = vld [vmem:[%s0 + $0x8] sm:$0x3]
  %v23 = vld [vmem:[%s0 + $0xa] sm:$0x3]
  %v24 = vld [vmem:[%s0 + $0xc] sm:$0x3]
  %v25 = vld [vmem:[%s0 + $0xe] sm:$0x3]
  %v26 = vld [vmem:[%s1] sm:$0xf]
  %v27 = vld [vmem:[%s1 + $0x4] sm:$0xf]
  %v28 = vld [vmem:[%s2] sm:$0xf]
  %v29 = vld [vmem:[%s2 + $0x4] sm:$0xf]
  %v30 = vld [vmem:[%s2 + $0x8] sm:$0xf]
  %v31 = vld [vmem:[%s2 + $0xc] sm:$0xf]
  %v32 = vld [vmem:[%s3] sm:$0x1]
  %v34 = vlaneseq
  %v35 = vshrl.u32 %v34, 7
  %v36 = vsub.s32 0, %v35
  %v37 = vrot.slane %v32, %v36
  %v39 = vadd.f32 %v37, 0.0
  %v42 = vunpack.c.l.s4 1983009808
  %v43 = vunpack.c.0.s8 %v42
  %v44 = vlaneseq
  %v45 = vshrl.u32 %v44, 7
  %v46 = vsub.s32 %v43, %v45
  %v47 = vrot.slane %v18, %v46
  %48 = vrot.lane.b32.xlu0 %v47, 96
  %v49 = vpop.permute.xlu0 %48
  %vm50 = vcmask 130048
  %v52 = vsel %vm50, %v18, 0
  %v55 = vsel %vm50, %v49, 0
  %57 = vmatprep.subr.bf16.mxu0 0
  %58 = vmatpush1.bf16.xpose.msra.mxu0 0
  %59 = vmatprep.subr.bf16.mxu0 0
  %60 = vmatpush1.bf16.xpose.msra.mxu0 0
  %61 = vmatprep.subr.bf16.mxu0 0
  %62 = vmatpush1.bf16.xpose.msra.mxu0 0
  %63 = vmatprep.subr.bf16.mxu0 0
  %64 = vmatpush1.bf16.xpose.msra.mxu0 0
  %65 = vmatprep.subr.bf16.mxu0 0
  %66 = vmatpush1.bf16.xpose.msra.mxu0 0
  %67 = vmatprep.subr.bf16.mxu0 0
  %68 = vmatpush1.bf16.xpose.msra.mxu0 0
  %69 = vmatprep.subr.bf16.mxu0 0
  %70 = vmatpush1.bf16.xpose.msra.mxu0 0
  %71 = vmatprep.subr.bf16.mxu0 0
  %72 = vmatpush1.bf16.xpose.msra.mxu0 %v55
  %73 = vmatprep.subr.bf16.mxu0 0
  %74 = vmatpush2.bf16.xpose.msra.mxu0 0
  %75 = vmatprep.subr.bf16.mxu0 0
  %76 = vmatpush2.bf16.xpose.msra.mxu0 0
  %77 = vmatprep.subr.bf16.mxu0 0
  %78 = vmatpush2.bf16.xpose.msra.mxu0 0
  %79 = vmatprep.subr.bf16.mxu0 0
  %80 = vmatpush2.bf16.xpose.msra.mxu0 0
  %81 = vmatprep.subr.bf16.mxu0 0
  %82 = vmatpush2.bf16.xpose.msra.mxu0 0
  %83 = vmatprep.subr.bf16.mxu0 0
  %84 = vmatpush2.bf16.xpose.msra.mxu0 0
  %85 = vmatprep.subr.bf16.mxu0 0
  %86 = vmatpush2.bf16.xpose.msra.mxu0 0
  %87 = vmatprep.subr.bf16.mxu0 0
  %88 = vmatpush2.bf16.xpose.msra.mxu0 0
  %89 = vmatprep.mubr.bf16.mxu0 0
  %90 = vmatmul.mubr.bf16.gmra.mxu0 %v52
  %v91 = vpop.f32.mrf.mxu0
  %v92 = vadd.f32 0.0, %v91
  %v93 = vpop.f32.mrf.mxu0
  %v94 = vpop.f32.mrf.mxu0
  %v95 = vpop.f32.mrf.mxu0
  %96 = vdwg.mxu0
  %v99 = vunpack.c.l.s4 1983009808
  %v100 = vunpack.c.0.s8 %v99
  %v101 = vlaneseq
  %v102 = vshrl.u32 %v101, 7
  %v103 = vsub.s32 %v100, %v102
  %v104 = vrot.slane %v19, %v103
  %105 = vrot.lane.b32.xlu0 %v104, 96
  %v106 = vpop.permute.xlu0 %105
  %v108 = vsel %vm50, %v19, 0
  %v111 = vsel %vm50, %v106, 0
  %113 = vmatprep.subr.bf16.mxu0 0
  %114 = vmatpush1.bf16.xpose.msra.mxu0 0
  %115 = vmatprep.subr.bf16.mxu0 0
  %116 = vmatpush1.bf16.xpose.msra.mxu0 0
  %117 = vmatprep.subr.bf16.mxu0 0
  %118 = vmatpush1.bf16.xpose.msra.mxu0 0
  %119 = vmatprep.subr.bf16.mxu0 0
  %120 = vmatpush1.bf16.xpose.msra.mxu0 0
  %121 = vmatprep.subr.bf16.mxu0 0
  %122 = vmatpush1.bf16.xpose.msra.mxu0 0
  %123 = vmatprep.subr.bf16.mxu0 0
  %124 = vmatpush1.bf16.xpose.msra.mxu0 0
  %125 = vmatprep.subr.bf16.mxu0 0
  %126 = vmatpush1.bf16.xpose.msra.mxu0 0
  %127 = vmatprep.subr.bf16.mxu0 0
  %128 = vmatpush1.bf16.xpose.msra.mxu0 %v111
  %129 = vmatprep.subr.bf16.mxu0 0
  %130 = vmatpush2.bf16.xpose.msra.mxu0 0
  %131 = vmatprep.subr.bf16.mxu0 0
  %132 = vmatpush2.bf16.xpose.msra.mxu0 0
  %133 = vmatprep.subr.bf16.mxu0 0
  %134 = vmatpush2.bf16.xpose.msra.mxu0 0
  %135 = vmatprep.subr.bf16.mxu0 0
  %136 = vmatpush2.bf16.xpose.msra.mxu0 0
  %137 = vmatprep.subr.bf16.mxu0 0
  %138 = vmatpush2.bf16.xpose.msra.mxu0 0
  %139 = vmatprep.subr.bf16.mxu0 0
  %140 = vmatpush2.bf16.xpose.msra.mxu0 0
  %141 = vmatprep.subr.bf16.mxu0 0
  %142 = vmatpush2.bf16.xpose.msra.mxu0 0
  %143 = vmatprep.subr.bf16.mxu0 0
  %144 = vmatpush2.bf16.xpose.msra.mxu0 0
  %145 = vmatprep.mubr.bf16.mxu0 0
  %146 = vmatmul.mubr.bf16.gmra.mxu0 %v108
  %v147 = vpop.f32.mrf.mxu0
  %v148 = vadd.f32 0.0, %v147
  %v149 = vpop.f32.mrf.mxu0
  %v150 = vpop.f32.mrf.mxu0
  %v151 = vpop.f32.mrf.mxu0
  %152 = vdwg.mxu0
  %v155 = vunpack.c.l.s4 1983009808
  %v156 = vunpack.c.0.s8 %v155
  %v157 = vlaneseq
  %v158 = vshrl.u32 %v157, 7
  %v159 = vsub.s32 %v156, %v158
  %v160 = vrot.slane %v20, %v159
  %161 = vrot.lane.b32.xlu0 %v160, 96
  %v162 = vpop.permute.xlu0 %161
  %v164 = vsel %vm50, %v20, 0
  %v167 = vsel %vm50, %v162, 0
  %169 = vmatprep.subr.bf16.mxu0 0
  %170 = vmatpush1.bf16.xpose.msra.mxu0 0
  %171 = vmatprep.subr.bf16.mxu0 0
  %172 = vmatpush1.bf16.xpose.msra.mxu0 0
  %173 = vmatprep.subr.bf16.mxu0 0
  %174 = vmatpush1.bf16.xpose.msra.mxu0 0
  %175 = vmatprep.subr.bf16.mxu0 0
  %176 = vmatpush1.bf16.xpose.msra.mxu0 0
  %177 = vmatprep.subr.bf16.mxu0 0
  %178 = vmatpush1.bf16.xpose.msra.mxu0 0
  %179 = vmatprep.subr.bf16.mxu0 0
  %180 = vmatpush1.bf16.xpose.msra.mxu0 0
  %181 = vmatprep.subr.bf16.mxu0 0
  %182 = vmatpush1.bf16.xpose.msra.mxu0 0
  %183 = vmatprep.subr.bf16.mxu0 0
  %184 = vmatpush1.bf16.xpose.msra.mxu0 %v167
  %185 = vmatprep.subr.bf16.mxu0 0
  %186 = vmatpush2.bf16.xpose.msra.mxu0 0
  %187 = vmatprep.subr.bf16.mxu0 0
  %188 = vmatpush2.bf16.xpose.msra.mxu0 0
  %189 = vmatprep.subr.bf16.mxu0 0
  %190 = vmatpush2.bf16.xpose.msra.mxu0 0
  %191 = vmatprep.subr.bf16.mxu0 0
  %192 = vmatpush2.bf16.xpose.msra.mxu0 0
  %193 = vmatprep.subr.bf16.mxu0 0
  %194 = vmatpush2.bf16.xpose.msra.mxu0 0
  %195 = vmatprep.subr.bf16.mxu0 0
  %196 = vmatpush2.bf16.xpose.msra.mxu0 0
  %197 = vmatprep.subr.bf16.mxu0 0
  %198 = vmatpush2.bf16.xpose.msra.mxu0 0
  %199 = vmatprep.subr.bf16.mxu0 0
  %200 = vmatpush2.bf16.xpose.msra.mxu0 0
  %201 = vmatprep.mubr.bf16.mxu0 0
  %202 = vmatmul.mubr.bf16.gmra.mxu0 %v164
  %v203 = vpop.f32.mrf.mxu0
  %v204 = vadd.f32 0.0, %v203
  %v205 = vpop.f32.mrf.mxu0
  %v206 = vpop.f32.mrf.mxu0
  %v207 = vpop.f32.mrf.mxu0
  %208 = vdwg.mxu0
  %v211 = vunpack.c.l.s4 1983009808
  %v212 = vunpack.c.0.s8 %v211
  %v213 = vlaneseq
  %v214 = vshrl.u32 %v213, 7
  %v215 = vsub.s32 %v212, %v214
  %v216 = vrot.slane %v21, %v215
  %217 = vrot.lane.b32.xlu0 %v216, 96
  %v218 = vpop.permute.xlu0 %217
  %v220 = vsel %vm50, %v21, 0
  %v223 = vsel %vm50, %v218, 0
  %225 = vmatprep.subr.bf16.mxu0 0
  %226 = vmatpush1.bf16.xpose.msra.mxu0 0
  %227 = vmatprep.subr.bf16.mxu0 0
  %228 = vmatpush1.bf16.xpose.msra.mxu0 0
  %229 = vmatprep.subr.bf16.mxu0 0
  %230 = vmatpush1.bf16.xpose.msra.mxu0 0
  %231 = vmatprep.subr.bf16.mxu0 0
  %232 = vmatpush1.bf16.xpose.msra.mxu0 0
  %233 = vmatprep.subr.bf16.mxu0 0
  %234 = vmatpush1.bf16.xpose.msra.mxu0 0
  %235 = vmatprep.subr.bf16.mxu0 0
  %236 = vmatpush1.bf16.xpose.msra.mxu0 0
  %237 = vmatprep.subr.bf16.mxu0 0
  %238 = vmatpush1.bf16.xpose.msra.mxu0 0
  %239 = vmatprep.subr.bf16.mxu0 0
  %240 = vmatpush1.bf16.xpose.msra.mxu0 %v223
  %241 = vmatprep.subr.bf16.mxu0 0
  %242 = vmatpush2.bf16.xpose.msra.mxu0 0
  %243 = vmatprep.subr.bf16.mxu0 0
  %244 = vmatpush2.bf16.xpose.msra.mxu0 0
  %245 = vmatprep.subr.bf16.mxu0 0
  %246 = vmatpush2.bf16.xpose.msra.mxu0 0
  %247 = vmatprep.subr.bf16.mxu0 0
  %248 = vmatpush2.bf16.xpose.msra.mxu0 0
  %249 = vmatprep.subr.bf16.mxu0 0
  %250 = vmatpush2.bf16.xpose.msra.mxu0 0
  %251 = vmatprep.subr.bf16.mxu0 0
  %252 = vmatpush2.bf16.xpose.msra.mxu0 0
  %253 = vmatprep.subr.bf16.mxu0 0
  %254 = vmatpush2.bf16.xpose.msra.mxu0 0
  %255 = vmatprep.subr.bf16.mxu0 0
  %256 = vmatpush2.bf16.xpose.msra.mxu0 0
  %257 = vmatprep.mubr.bf16.mxu0 0
  %258 = vmatmul.mubr.bf16.gmra.mxu0 %v220
  %v259 = vpop.f32.mrf.mxu0
  %v260 = vadd.f32 0.0, %v259
  %v261 = vpop.f32.mrf.mxu0
  %v262 = vpop.f32.mrf.mxu0
  %v263 = vpop.f32.mrf.mxu0
  %264 = vdwg.mxu0
  %v267 = vunpack.c.l.s4 1983009808
  %v268 = vunpack.c.0.s8 %v267
  %v269 = vlaneseq
  %v270 = vshrl.u32 %v269, 7
  %v271 = vsub.s32 %v268, %v270
  %v272 = vrot.slane %v22, %v271
  %273 = vrot.lane.b32.xlu0 %v272, 96
  %v274 = vpop.permute.xlu0 %273
  %v276 = vsel %vm50, %v22, 0
  %v279 = vsel %vm50, %v274, 0
  %281 = vmatprep.subr.bf16.mxu0 0
  %282 = vmatpush1.bf16.xpose.msra.mxu0 0
  %283 = vmatprep.subr.bf16.mxu0 0
  %284 = vmatpush1.bf16.xpose.msra.mxu0 0
  %285 = vmatprep.subr.bf16.mxu0 0
  %286 = vmatpush1.bf16.xpose.msra.mxu0 0
  %287 = vmatprep.subr.bf16.mxu0 0
  %288 = vmatpush1.bf16.xpose.msra.mxu0 0
  %289 = vmatprep.subr.bf16.mxu0 0
  %290 = vmatpush1.bf16.xpose.msra.mxu0 0
  %291 = vmatprep.subr.bf16.mxu0 0
  %292 = vmatpush1.bf16.xpose.msra.mxu0 0
  %293 = vmatprep.subr.bf16.mxu0 0
  %294 = vmatpush1.bf16.xpose.msra.mxu0 0
  %295 = vmatprep.subr.bf16.mxu0 0
  %296 = vmatpush1.bf16.xpose.msra.mxu0 %v279
  %297 = vmatprep.subr.bf16.mxu0 0
  %298 = vmatpush2.bf16.xpose.msra.mxu0 0
  %299 = vmatprep.subr.bf16.mxu0 0
  %300 = vmatpush2.bf16.xpose.msra.mxu0 0
  %301 = vmatprep.subr.bf16.mxu0 0
  %302 = vmatpush2.bf16.xpose.msra.mxu0 0
  %303 = vmatprep.subr.bf16.mxu0 0
  %304 = vmatpush2.bf16.xpose.msra.mxu0 0
  %305 = vmatprep.subr.bf16.mxu0 0
  %306 = vmatpush2.bf16.xpose.msra.mxu0 0
  %307 = vmatprep.subr.bf16.mxu0 0
  %308 = vmatpush2.bf16.xpose.msra.mxu0 0
  %309 = vmatprep.subr.bf16.mxu0 0
  %310 = vmatpush2.bf16.xpose.msra.mxu0 0
  %311 = vmatprep.subr.bf16.mxu0 0
  %312 = vmatpush2.bf16.xpose.msra.mxu0 0
  %313 = vmatprep.mubr.bf16.mxu0 0
  %314 = vmatmul.mubr.bf16.gmra.mxu0 %v276
  %v315 = vpop.f32.mrf.mxu0
  %v316 = vadd.f32 0.0, %v315
  %v317 = vpop.f32.mrf.mxu0
  %v318 = vpop.f32.mrf.mxu0
  %v319 = vpop.f32.mrf.mxu0
  %320 = vdwg.mxu0
  %v323 = vunpack.c.l.s4 1983009808
  %v324 = vunpack.c.0.s8 %v323
  %v325 = vlaneseq
  %v326 = vshrl.u32 %v325, 7
  %v327 = vsub.s32 %v324, %v326
  %v328 = vrot.slane %v23, %v327
  %329 = vrot.lane.b32.xlu0 %v328, 96
  %v330 = vpop.permute.xlu0 %329
  %v332 = vsel %vm50, %v23, 0
  %v335 = vsel %vm50, %v330, 0
  %337 = vmatprep.subr.bf16.mxu0 0
  %338 = vmatpush1.bf16.xpose.msra.mxu0 0
  %339 = vmatprep.subr.bf16.mxu0 0
  %340 = vmatpush1.bf16.xpose.msra.mxu0 0
  %341 = vmatprep.subr.bf16.mxu0 0
  %342 = vmatpush1.bf16.xpose.msra.mxu0 0
  %343 = vmatprep.subr.bf16.mxu0 0
  %344 = vmatpush1.bf16.xpose.msra.mxu0 0
  %345 = vmatprep.subr.bf16.mxu0 0
  %346 = vmatpush1.bf16.xpose.msra.mxu0 0
  %347 = vmatprep.subr.bf16.mxu0 0
  %348 = vmatpush1.bf16.xpose.msra.mxu0 0
  %349 = vmatprep.subr.bf16.mxu0 0
  %350 = vmatpush1.bf16.xpose.msra.mxu0 0
  %351 = vmatprep.subr.bf16.mxu0 0
  %352 = vmatpush1.bf16.xpose.msra.mxu0 %v335
  %353 = vmatprep.subr.bf16.mxu0 0
  %354 = vmatpush2.bf16.xpose.msra.mxu0 0
  %355 = vmatprep.subr.bf16.mxu0 0
  %356 = vmatpush2.bf16.xpose.msra.mxu0 0
  %357 = vmatprep.subr.bf16.mxu0 0
  %358 = vmatpush2.bf16.xpose.msra.mxu0 0
  %359 = vmatprep.subr.bf16.mxu0 0
  %360 = vmatpush2.bf16.xpose.msra.mxu0 0
  %361 = vmatprep.subr.bf16.mxu0 0
  %362 = vmatpush2.bf16.xpose.msra.mxu0 0
  %363 = vmatprep.subr.bf16.mxu0 0
  %364 = vmatpush2.bf16.xpose.msra.mxu0 0
  %365 = vmatprep.subr.bf16.mxu0 0
  %366 = vmatpush2.bf16.xpose.msra.mxu0 0
  %367 = vmatprep.subr.bf16.mxu0 0
  %368 = vmatpush2.bf16.xpose.msra.mxu0 0
  %369 = vmatprep.mubr.bf16.mxu0 0
  %370 = vmatmul.mubr.bf16.gmra.mxu0 %v332
  %v371 = vpop.f32.mrf.mxu0
  %v372 = vadd.f32 0.0, %v371
  %v373 = vpop.f32.mrf.mxu0
  %v374 = vpop.f32.mrf.mxu0
  %v375 = vpop.f32.mrf.mxu0
  %376 = vdwg.mxu0
  %v379 = vunpack.c.l.s4 1983009808
  %v380 = vunpack.c.0.s8 %v379
  %v381 = vlaneseq
  %v382 = vshrl.u32 %v381, 7
  %v383 = vsub.s32 %v380, %v382
  %v384 = vrot.slane %v24, %v383
  %385 = vrot.lane.b32.xlu0 %v384, 96
  %v386 = vpop.permute.xlu0 %385
  %v388 = vsel %vm50, %v24, 0
  %v391 = vsel %vm50, %v386, 0
  %393 = vmatprep.subr.bf16.mxu0 0
  %394 = vmatpush1.bf16.xpose.msra.mxu0 0
  %395 = vmatprep.subr.bf16.mxu0 0
  %396 = vmatpush1.bf16.xpose.msra.mxu0 0
  %397 = vmatprep.subr.bf16.mxu0 0
  %398 = vmatpush1.bf16.xpose.msra.mxu0 0
  %399 = vmatprep.subr.bf16.mxu0 0
  %400 = vmatpush1.bf16.xpose.msra.mxu0 0
  %401 = vmatprep.subr.bf16.mxu0 0
  %402 = vmatpush1.bf16.xpose.msra.mxu0 0
  %403 = vmatprep.subr.bf16.mxu0 0
  %404 = vmatpush1.bf16.xpose.msra.mxu0 0
  %405 = vmatprep.subr.bf16.mxu0 0
  %406 = vmatpush1.bf16.xpose.msra.mxu0 0
  %407 = vmatprep.subr.bf16.mxu0 0
  %408 = vmatpush1.bf16.xpose.msra.mxu0 %v391
  %409 = vmatprep.subr.bf16.mxu0 0
  %410 = vmatpush2.bf16.xpose.msra.mxu0 0
  %411 = vmatprep.subr.bf16.mxu0 0
  %412 = vmatpush2.bf16.xpose.msra.mxu0 0
  %413 = vmatprep.subr.bf16.mxu0 0
  %414 = vmatpush2.bf16.xpose.msra.mxu0 0
  %415 = vmatprep.subr.bf16.mxu0 0
  %416 = vmatpush2.bf16.xpose.msra.mxu0 0
  %417 = vmatprep.subr.bf16.mxu0 0
  %418 = vmatpush2.bf16.xpose.msra.mxu0 0
  %419 = vmatprep.subr.bf16.mxu0 0
  %420 = vmatpush2.bf16.xpose.msra.mxu0 0
  %421 = vmatprep.subr.bf16.mxu0 0
  %422 = vmatpush2.bf16.xpose.msra.mxu0 0
  %423 = vmatprep.subr.bf16.mxu0 0
  %424 = vmatpush2.bf16.xpose.msra.mxu0 0
  %425 = vmatprep.mubr.bf16.mxu0 0
  %426 = vmatmul.mubr.bf16.gmra.mxu0 %v388
  %v427 = vpop.f32.mrf.mxu0
  %v428 = vadd.f32 0.0, %v427
  %v429 = vpop.f32.mrf.mxu0
  %v430 = vpop.f32.mrf.mxu0
  %v431 = vpop.f32.mrf.mxu0
  %432 = vdwg.mxu0
  %v435 = vunpack.c.l.s4 1983009808
  %v436 = vunpack.c.0.s8 %v435
  %v437 = vlaneseq
  %v438 = vshrl.u32 %v437, 7
  %v439 = vsub.s32 %v436, %v438
  %v440 = vrot.slane %v25, %v439
  %441 = vrot.lane.b32.xlu0 %v440, 96
  %v442 = vpop.permute.xlu0 %441
  %v444 = vsel %vm50, %v25, 0
  %v447 = vsel %vm50, %v442, 0
  %449 = vmatprep.subr.bf16.mxu0 0
  %450 = vmatpush1.bf16.xpose.msra.mxu0 0
  %451 = vmatprep.subr.bf16.mxu0 0
  %452 = vmatpush1.bf16.xpose.msra.mxu0 0
  %453 = vmatprep.subr.bf16.mxu0 0
  %454 = vmatpush1.bf16.xpose.msra.mxu0 0
  %455 = vmatprep.subr.bf16.mxu0 0
  %456 = vmatpush1.bf16.xpose.msra.mxu0 0
  %457 = vmatprep.subr.bf16.mxu0 0
  %458 = vmatpush1.bf16.xpose.msra.mxu0 0
  %459 = vmatprep.subr.bf16.mxu0 0
  %460 = vmatpush1.bf16.xpose.msra.mxu0 0
  %461 = vmatprep.subr.bf16.mxu0 0
  %462 = vmatpush1.bf16.xpose.msra.mxu0 0
  %463 = vmatprep.subr.bf16.mxu0 0
  %464 = vmatpush1.bf16.xpose.msra.mxu0 %v447
  %465 = vmatprep.subr.bf16.mxu0 0
  %466 = vmatpush2.bf16.xpose.msra.mxu0 0
  %467 = vmatprep.subr.bf16.mxu0 0
  %468 = vmatpush2.bf16.xpose.msra.mxu0 0
  %469 = vmatprep.subr.bf16.mxu0 0
  %470 = vmatpush2.bf16.xpose.msra.mxu0 0
  %471 = vmatprep.subr.bf16.mxu0 0
  %472 = vmatpush2.bf16.xpose.msra.mxu0 0
  %473 = vmatprep.subr.bf16.mxu0 0
  %474 = vmatpush2.bf16.xpose.msra.mxu0 0
  %475 = vmatprep.subr.bf16.mxu0 0
  %476 = vmatpush2.bf16.xpose.msra.mxu0 0
  %477 = vmatprep.subr.bf16.mxu0 0
  %478 = vmatpush2.bf16.xpose.msra.mxu0 0
  %479 = vmatprep.subr.bf16.mxu0 0
  %480 = vmatpush2.bf16.xpose.msra.mxu0 0
  %481 = vmatprep.mubr.bf16.mxu0 0
  %482 = vmatmul.mubr.bf16.gmra.mxu0 %v444
  %v483 = vpop.f32.mrf.mxu0
  %v484 = vadd.f32 0.0, %v483
  %v485 = vpop.f32.mrf.mxu0
  %v486 = vpop.f32.mrf.mxu0
  %v487 = vpop.f32.mrf.mxu0
  %488 = vdwg.mxu0
  %v489 = vmul.f32 %v92, 0.25
  %v490 = vmul.f32 %v148, 0.25
  %v491 = vmul.f32 %v204, 0.25
  %v492 = vmul.f32 %v260, 0.25
  %v493 = vmul.f32 %v316, 0.25
  %v494 = vmul.f32 %v372, 0.25
  %v495 = vmul.f32 %v428, 0.25
  %v496 = vmul.f32 %v484, 0.25
  %v497 = vadd.f32 %v489, %v26
  %v498 = vadd.f32 %v490, %v26
  %v499 = vadd.f32 %v491, %v26
  %v500 = vadd.f32 %v492, %v26
  %v501 = vadd.f32 %v493, %v26
  %v502 = vadd.f32 %v494, %v26
  %v503 = vadd.f32 %v495, %v26
  %v504 = vadd.f32 %v496, %v26
  %vm505 = vcmask 27648
  %v506 = vsel %vm505, %v497, -inf
  %507 = vmax.xlane.f32.xlu0 %v506
  %v508 = vpop.xlane.xlu0 %507
  %v509 = vsel %vm505, %v498, -inf
  %510 = vmax.xlane.f32.xlu0 %v509
  %v511 = vpop.xlane.xlu0 %510
  %v512 = vsel %vm505, %v499, -inf
  %513 = vmax.xlane.f32.xlu0 %v512
  %v514 = vpop.xlane.xlu0 %513
  %v515 = vsel %vm505, %v500, -inf
  %516 = vmax.xlane.f32.xlu0 %v515
  %v517 = vpop.xlane.xlu0 %516
  %v518 = vsel %vm505, %v501, -inf
  %519 = vmax.xlane.f32.xlu0 %v518
  %v520 = vpop.xlane.xlu0 %519
  %v521 = vsel %vm505, %v502, -inf
  %522 = vmax.xlane.f32.xlu0 %v521
  %v523 = vpop.xlane.xlu0 %522
  %v524 = vsel %vm505, %v503, -inf
  %525 = vmax.xlane.f32.xlu0 %v524
  %v526 = vpop.xlane.xlu0 %525
  %v527 = vsel %vm505, %v504, -inf
  %528 = vmax.xlane.f32.xlu0 %v527
  %v529 = vpop.xlane.xlu0 %528
  %v530 = vsub.f32 %v497, %v508
  %v531 = vsub.f32 %v498, %v511
  %v532 = vsub.f32 %v499, %v514
  %v533 = vsub.f32 %v500, %v517
  %v534 = vsub.f32 %v501, %v520
  %v535 = vsub.f32 %v502, %v523
  %v536 = vsub.f32 %v503, %v526
  %v537 = vsub.f32 %v504, %v529
  %v538 = vmul.f32 %v530, 1.442695
  %v539 = vpow.pop %v538
  %v540 = vmul.f32 %v531, 1.442695
  %v541 = vpow.pop %v540
  %v542 = vmul.f32 %v532, 1.442695
  %v543 = vpow.pop %v542
  %v544 = vmul.f32 %v533, 1.442695
  %v545 = vpow.pop %v544
  %v546 = vmul.f32 %v534, 1.442695
  %v547 = vpow.pop %v546
  %v548 = vmul.f32 %v535, 1.442695
  %v549 = vpow.pop %v548
  %v550 = vmul.f32 %v536, 1.442695
  %v551 = vpow.pop %v550
  %v552 = vmul.f32 %v537, 1.442695
  %v553 = vpow.pop %v552
  %v554 = vsel %vm505, %v539, 0.0
  %555 = vadd.xlane.f32.xlu0 %v554
  %v556 = vpop.xlane.xlu0 %555
  %v557 = vsel %vm505, %v541, 0.0
  %558 = vadd.xlane.f32.xlu0 %v557
  %v559 = vpop.xlane.xlu0 %558
  %v560 = vsel %vm505, %v543, 0.0
  %561 = vadd.xlane.f32.xlu0 %v560
  %v562 = vpop.xlane.xlu0 %561
  %v563 = vsel %vm505, %v545, 0.0
  %564 = vadd.xlane.f32.xlu0 %v563
  %v565 = vpop.xlane.xlu0 %564
  %v566 = vsel %vm505, %v547, 0.0
  %567 = vadd.xlane.f32.xlu0 %v566
  %v568 = vpop.xlane.xlu0 %567
  %v569 = vsel %vm505, %v549, 0.0
  %570 = vadd.xlane.f32.xlu0 %v569
  %v571 = vpop.xlane.xlu0 %570
  %v572 = vsel %vm505, %v551, 0.0
  %573 = vadd.xlane.f32.xlu0 %v572
  %v574 = vpop.xlane.xlu0 %573
  %v575 = vsel %vm505, %v553, 0.0
  %576 = vadd.xlane.f32.xlu0 %v575
  %v577 = vpop.xlane.xlu0 %576
  %v578 = vrcp.pop %v556
  %v579 = vrcp.pop %v559
  %v580 = vrcp.pop %v562
  %v581 = vrcp.pop %v565
  %v582 = vrcp.pop %v568
  %v583 = vrcp.pop %v571
  %v584 = vrcp.pop %v574
  %v585 = vrcp.pop %v577
  %v586 = vmul.f32 %v539, %v578
  %v587 = vmul.f32 %v541, %v579
  %v588 = vmul.f32 %v543, %v580
  %v589 = vmul.f32 %v545, %v581
  %v590 = vmul.f32 %v547, %v582
  %v591 = vmul.f32 %v549, %v583
  %v592 = vmul.f32 %v551, %v584
  %v593 = vmul.f32 %v553, %v585
  %v594 = vpack.c.bf16 %v586, %v586
  %v595 = vpack.c.bf16 %v587, %v587
  %v596 = vpack.c.bf16 %v588, %v588
  %v597 = vpack.c.bf16 %v589, %v589
  %v598 = vpack.c.bf16 %v590, %v590
  %v599 = vpack.c.bf16 %v591, %v591
  %v600 = vpack.c.bf16 %v592, %v592
  %v601 = vpack.c.bf16 %v593, %v593
  %602 = vrot.lane.b32.xlu0 %v47, 64
  %v603 = vpop.permute.xlu0 %602
  %vm604 = vcmask 31744
  %v606 = vsel %vm604, %v594, 0
  %vm608 = vcmask 1041408
  %v610 = vsel %vm608, %v603, 0
  %612 = vmatprep.subr.bf16.mxu0 0
  %613 = vmatpush1.bf16.msra.mxu0 0
  %614 = vmatprep.subr.bf16.mxu0 0
  %615 = vmatpush1.bf16.msra.mxu0 0
  %616 = vmatprep.subr.bf16.mxu0 0
  %617 = vmatpush1.bf16.msra.mxu0 0
  %618 = vmatprep.subr.bf16.mxu0 0
  %619 = vmatpush1.bf16.msra.mxu0 0
  %620 = vmatprep.subr.bf16.mxu0 0
  %621 = vmatpush1.bf16.msra.mxu0 0
  %622 = vmatprep.subr.bf16.mxu0 0
  %623 = vmatpush1.bf16.msra.mxu0 0
  %624 = vmatprep.subr.bf16.mxu0 0
  %625 = vmatpush1.bf16.msra.mxu0 0
  %626 = vmatprep.subr.bf16.mxu0 0
  %627 = vmatpush1.bf16.msra.mxu0 %v610
  %628 = vmatprep.subr.bf16.mxu0 0
  %629 = vmatpush2.bf16.msra.mxu0 0
  %630 = vmatprep.subr.bf16.mxu0 0
  %631 = vmatpush2.bf16.msra.mxu0 0
  %632 = vmatprep.subr.bf16.mxu0 0
  %633 = vmatpush2.bf16.msra.mxu0 0
  %634 = vmatprep.subr.bf16.mxu0 0
  %635 = vmatpush2.bf16.msra.mxu0 0
  %636 = vmatprep.subr.bf16.mxu0 0
  %637 = vmatpush2.bf16.msra.mxu0 0
  %638 = vmatprep.subr.bf16.mxu0 0
  %639 = vmatpush2.bf16.msra.mxu0 0
  %640 = vmatprep.subr.bf16.mxu0 0
  %641 = vmatpush2.bf16.msra.mxu0 0
  %642 = vmatprep.subr.bf16.mxu0 0
  %643 = vmatpush2.bf16.msra.mxu0 0
  %644 = vmatprep.mubr.bf16.mxu0 0
  %645 = vmatmul.mubr.bf16.gmra.mxu0 %v606
  %v646 = vpop.f32.mrf.mxu0
  %v647 = vadd.f32 0.0, %v646
  %v648 = vpop.f32.mrf.mxu0
  %v649 = vpop.f32.mrf.mxu0
  %v650 = vpop.f32.mrf.mxu0
  %651 = vdwg.mxu0
  %652 = vrot.lane.b32.xlu0 %v104, 64
  %v653 = vpop.permute.xlu0 %652
  %v655 = vsel %vm604, %v595, 0
  %v658 = vsel %vm608, %v653, 0
  %660 = vmatprep.subr.bf16.mxu0 0
  %661 = vmatpush1.bf16.msra.mxu0 0
  %662 = vmatprep.subr.bf16.mxu0 0
  %663 = vmatpush1.bf16.msra.mxu0 0
  %664 = vmatprep.subr.bf16.mxu0 0
  %665 = vmatpush1.bf16.msra.mxu0 0
  %666 = vmatprep.subr.bf16.mxu0 0
  %667 = vmatpush1.bf16.msra.mxu0 0
  %668 = vmatprep.subr.bf16.mxu0 0
  %669 = vmatpush1.bf16.msra.mxu0 0
  %670 = vmatprep.subr.bf16.mxu0 0
  %671 = vmatpush1.bf16.msra.mxu0 0
  %672 = vmatprep.subr.bf16.mxu0 0
  %673 = vmatpush1.bf16.msra.mxu0 0
  %674 = vmatprep.subr.bf16.mxu0 0
  %675 = vmatpush1.bf16.msra.mxu0 %v658
  %676 = vmatprep.subr.bf16.mxu0 0
  %677 = vmatpush2.bf16.msra.mxu0 0
  %678 = vmatprep.subr.bf16.mxu0 0
  %679 = vmatpush2.bf16.msra.mxu0 0
  %680 = vmatprep.subr.bf16.mxu0 0
  %681 = vmatpush2.bf16.msra.mxu0 0
  %682 = vmatprep.subr.bf16.mxu0 0
  %683 = vmatpush2.bf16.msra.mxu0 0
  %684 = vmatprep.subr.bf16.mxu0 0
  %685 = vmatpush2.bf16.msra.mxu0 0
  %686 = vmatprep.subr.bf16.mxu0 0
  %687 = vmatpush2.bf16.msra.mxu0 0
  %688 = vmatprep.subr.bf16.mxu0 0
  %689 = vmatpush2.bf16.msra.mxu0 0
  %690 = vmatprep.subr.bf16.mxu0 0
  %691 = vmatpush2.bf16.msra.mxu0 0
  %692 = vmatprep.mubr.bf16.mxu0 0
  %693 = vmatmul.mubr.bf16.gmra.mxu0 %v655
  %v694 = vpop.f32.mrf.mxu0
  %v695 = vadd.f32 0.0, %v694
  %v696 = vpop.f32.mrf.mxu0
  %v697 = vpop.f32.mrf.mxu0
  %v698 = vpop.f32.mrf.mxu0
  %699 = vdwg.mxu0
  %700 = vrot.lane.b32.xlu0 %v160, 64
  %v701 = vpop.permute.xlu0 %700
  %v703 = vsel %vm604, %v596, 0
  %v706 = vsel %vm608, %v701, 0
  %708 = vmatprep.subr.bf16.mxu0 0
  %709 = vmatpush1.bf16.msra.mxu0 0
  %710 = vmatprep.subr.bf16.mxu0 0
  %711 = vmatpush1.bf16.msra.mxu0 0
  %712 = vmatprep.subr.bf16.mxu0 0
  %713 = vmatpush1.bf16.msra.mxu0 0
  %714 = vmatprep.subr.bf16.mxu0 0
  %715 = vmatpush1.bf16.msra.mxu0 0
  %716 = vmatprep.subr.bf16.mxu0 0
  %717 = vmatpush1.bf16.msra.mxu0 0
  %718 = vmatprep.subr.bf16.mxu0 0
  %719 = vmatpush1.bf16.msra.mxu0 0
  %720 = vmatprep.subr.bf16.mxu0 0
  %721 = vmatpush1.bf16.msra.mxu0 0
  %722 = vmatprep.subr.bf16.mxu0 0
  %723 = vmatpush1.bf16.msra.mxu0 %v706
  %724 = vmatprep.subr.bf16.mxu0 0
  %725 = vmatpush2.bf16.msra.mxu0 0
  %726 = vmatprep.subr.bf16.mxu0 0
  %727 = vmatpush2.bf16.msra.mxu0 0
  %728 = vmatprep.subr.bf16.mxu0 0
  %729 = vmatpush2.bf16.msra.mxu0 0
  %730 = vmatprep.subr.bf16.mxu0 0
  %731 = vmatpush2.bf16.msra.mxu0 0
  %732 = vmatprep.subr.bf16.mxu0 0
  %733 = vmatpush2.bf16.msra.mxu0 0
  %734 = vmatprep.subr.bf16.mxu0 0
  %735 = vmatpush2.bf16.msra.mxu0 0
  %736 = vmatprep.subr.bf16.mxu0 0
  %737 = vmatpush2.bf16.msra.mxu0 0
  %738 = vmatprep.subr.bf16.mxu0 0
  %739 = vmatpush2.bf16.msra.mxu0 0
  %740 = vmatprep.mubr.bf16.mxu0 0
  %741 = vmatmul.mubr.bf16.gmra.mxu0 %v703
  %v742 = vpop.f32.mrf.mxu0
  %v743 = vadd.f32 0.0, %v742
  %v744 = vpop.f32.mrf.mxu0
  %v745 = vpop.f32.mrf.mxu0
  %v746 = vpop.f32.mrf.mxu0
  %747 = vdwg.mxu0
  %748 = vrot.lane.b32.xlu0 %v216, 64
  %v749 = vpop.permute.xlu0 %748
  %v751 = vsel %vm604, %v597, 0
  %v754 = vsel %vm608, %v749, 0
  %756 = vmatprep.subr.bf16.mxu0 0
  %757 = vmatpush1.bf16.msra.mxu0 0
  %758 = vmatprep.subr.bf16.mxu0 0
  %759 = vmatpush1.bf16.msra.mxu0 0
  %760 = vmatprep.subr.bf16.mxu0 0
  %761 = vmatpush1.bf16.msra.mxu0 0
  %762 = vmatprep.subr.bf16.mxu0 0
  %763 = vmatpush1.bf16.msra.mxu0 0
  %764 = vmatprep.subr.bf16.mxu0 0
  %765 = vmatpush1.bf16.msra.mxu0 0
  %766 = vmatprep.subr.bf16.mxu0 0
  %767 = vmatpush1.bf16.msra.mxu0 0
  %768 = vmatprep.subr.bf16.mxu0 0
  %769 = vmatpush1.bf16.msra.mxu0 0
  %770 = vmatprep.subr.bf16.mxu0 0
  %771 = vmatpush1.bf16.msra.mxu0 %v754
  %772 = vmatprep.subr.bf16.mxu0 0
  %773 = vmatpush2.bf16.msra.mxu0 0
  %774 = vmatprep.subr.bf16.mxu0 0
  %775 = vmatpush2.bf16.msra.mxu0 0
  %776 = vmatprep.subr.bf16.mxu0 0
  %777 = vmatpush2.bf16.msra.mxu0 0
  %778 = vmatprep.subr.bf16.mxu0 0
  %779 = vmatpush2.bf16.msra.mxu0 0
  %780 = vmatprep.subr.bf16.mxu0 0
  %781 = vmatpush2.bf16.msra.mxu0 0
  %782 = vmatprep.subr.bf16.mxu0 0
  %783 = vmatpush2.bf16.msra.mxu0 0
  %784 = vmatprep.subr.bf16.mxu0 0
  %785 = vmatpush2.bf16.msra.mxu0 0
  %786 = vmatprep.subr.bf16.mxu0 0
  %787 = vmatpush2.bf16.msra.mxu0 0
  %788 = vmatprep.mubr.bf16.mxu0 0
  %789 = vmatmul.mubr.bf16.gmra.mxu0 %v751
  %v790 = vpop.f32.mrf.mxu0
  %v791 = vadd.f32 0.0, %v790
  %v792 = vpop.f32.mrf.mxu0
  %v793 = vpop.f32.mrf.mxu0
  %v794 = vpop.f32.mrf.mxu0
  %795 = vdwg.mxu0
  %796 = vrot.lane.b32.xlu0 %v272, 64
  %v797 = vpop.permute.xlu0 %796
  %v799 = vsel %vm604, %v598, 0
  %v802 = vsel %vm608, %v797, 0
  %804 = vmatprep.subr.bf16.mxu0 0
  %805 = vmatpush1.bf16.msra.mxu0 0
  %806 = vmatprep.subr.bf16.mxu0 0
  %807 = vmatpush1.bf16.msra.mxu0 0
  %808 = vmatprep.subr.bf16.mxu0 0
  %809 = vmatpush1.bf16.msra.mxu0 0
  %810 = vmatprep.subr.bf16.mxu0 0
  %811 = vmatpush1.bf16.msra.mxu0 0
  %812 = vmatprep.subr.bf16.mxu0 0
  %813 = vmatpush1.bf16.msra.mxu0 0
  %814 = vmatprep.subr.bf16.mxu0 0
  %815 = vmatpush1.bf16.msra.mxu0 0
  %816 = vmatprep.subr.bf16.mxu0 0
  %817 = vmatpush1.bf16.msra.mxu0 0
  %818 = vmatprep.subr.bf16.mxu0 0
  %819 = vmatpush1.bf16.msra.mxu0 %v802
  %820 = vmatprep.subr.bf16.mxu0 0
  %821 = vmatpush2.bf16.msra.mxu0 0
  %822 = vmatprep.subr.bf16.mxu0 0
  %823 = vmatpush2.bf16.msra.mxu0 0
  %824 = vmatprep.subr.bf16.mxu0 0
  %825 = vmatpush2.bf16.msra.mxu0 0
  %826 = vmatprep.subr.bf16.mxu0 0
  %827 = vmatpush2.bf16.msra.mxu0 0
  %828 = vmatprep.subr.bf16.mxu0 0
  %829 = vmatpush2.bf16.msra.mxu0 0
  %830 = vmatprep.subr.bf16.mxu0 0
  %831 = vmatpush2.bf16.msra.mxu0 0
  %832 = vmatprep.subr.bf16.mxu0 0
  %833 = vmatpush2.bf16.msra.mxu0 0
  %834 = vmatprep.subr.bf16.mxu0 0
  %835 = vmatpush2.bf16.msra.mxu0 0
  %836 = vmatprep.mubr.bf16.mxu0 0
  %837 = vmatmul.mubr.bf16.gmra.mxu0 %v799
  %v838 = vpop.f32.mrf.mxu0
  %v839 = vadd.f32 0.0, %v838
  %v840 = vpop.f32.mrf.mxu0
  %v841 = vpop.f32.mrf.mxu0
  %v842 = vpop.f32.mrf.mxu0
  %843 = vdwg.mxu0
  %844 = vrot.lane.b32.xlu0 %v328, 64
  %v845 = vpop.permute.xlu0 %844
  %v847 = vsel %vm604, %v599, 0
  %v850 = vsel %vm608, %v845, 0
  %852 = vmatprep.subr.bf16.mxu0 0
  %853 = vmatpush1.bf16.msra.mxu0 0
  %854 = vmatprep.subr.bf16.mxu0 0
  %855 = vmatpush1.bf16.msra.mxu0 0
  %856 = vmatprep.subr.bf16.mxu0 0
  %857 = vmatpush1.bf16.msra.mxu0 0
  %858 = vmatprep.subr.bf16.mxu0 0
  %859 = vmatpush1.bf16.msra.mxu0 0
  %860 = vmatprep.subr.bf16.mxu0 0
  %861 = vmatpush1.bf16.msra.mxu0 0
  %862 = vmatprep.subr.bf16.mxu0 0
  %863 = vmatpush1.bf16.msra.mxu0 0
  %864 = vmatprep.subr.bf16.mxu0 0
  %865 = vmatpush1.bf16.msra.mxu0 0
  %866 = vmatprep.subr.bf16.mxu0 0
  %867 = vmatpush1.bf16.msra.mxu0 %v850
  %868 = vmatprep.subr.bf16.mxu0 0
  %869 = vmatpush2.bf16.msra.mxu0 0
  %870 = vmatprep.subr.bf16.mxu0 0
  %871 = vmatpush2.bf16.msra.mxu0 0
  %872 = vmatprep.subr.bf16.mxu0 0
  %873 = vmatpush2.bf16.msra.mxu0 0
  %874 = vmatprep.subr.bf16.mxu0 0
  %875 = vmatpush2.bf16.msra.mxu0 0
  %876 = vmatprep.subr.bf16.mxu0 0
  %877 = vmatpush2.bf16.msra.mxu0 0
  %878 = vmatprep.subr.bf16.mxu0 0
  %879 = vmatpush2.bf16.msra.mxu0 0
  %880 = vmatprep.subr.bf16.mxu0 0
  %881 = vmatpush2.bf16.msra.mxu0 0
  %882 = vmatprep.subr.bf16.mxu0 0
  %883 = vmatpush2.bf16.msra.mxu0 0
  %884 = vmatprep.mubr.bf16.mxu0 0
  %885 = vmatmul.mubr.bf16.gmra.mxu0 %v847
  %v886 = vpop.f32.mrf.mxu0
  %v887 = vadd.f32 0.0, %v886
  %v888 = vpop.f32.mrf.mxu0
  %v889 = vpop.f32.mrf.mxu0
  %v890 = vpop.f32.mrf.mxu0
  %891 = vdwg.mxu0
  %892 = vrot.lane.b32.xlu0 %v384, 64
  %v893 = vpop.permute.xlu0 %892
  %v895 = vsel %vm604, %v600, 0
  %v898 = vsel %vm608, %v893, 0
  %900 = vmatprep.subr.bf16.mxu0 0
  %901 = vmatpush1.bf16.msra.mxu0 0
  %902 = vmatprep.subr.bf16.mxu0 0
  %903 = vmatpush1.bf16.msra.mxu0 0
  %904 = vmatprep.subr.bf16.mxu0 0
  %905 = vmatpush1.bf16.msra.mxu0 0
  %906 = vmatprep.subr.bf16.mxu0 0
  %907 = vmatpush1.bf16.msra.mxu0 0
  %908 = vmatprep.subr.bf16.mxu0 0
  %909 = vmatpush1.bf16.msra.mxu0 0
  %910 = vmatprep.subr.bf16.mxu0 0
  %911 = vmatpush1.bf16.msra.mxu0 0
  %912 = vmatprep.subr.bf16.mxu0 0
  %913 = vmatpush1.bf16.msra.mxu0 0
  %914 = vmatprep.subr.bf16.mxu0 0
  %915 = vmatpush1.bf16.msra.mxu0 %v898
  %916 = vmatprep.subr.bf16.mxu0 0
  %917 = vmatpush2.bf16.msra.mxu0 0
  %918 = vmatprep.subr.bf16.mxu0 0
  %919 = vmatpush2.bf16.msra.mxu0 0
  %920 = vmatprep.subr.bf16.mxu0 0
  %921 = vmatpush2.bf16.msra.mxu0 0
  %922 = vmatprep.subr.bf16.mxu0 0
  %923 = vmatpush2.bf16.msra.mxu0 0
  %924 = vmatprep.subr.bf16.mxu0 0
  %925 = vmatpush2.bf16.msra.mxu0 0
  %926 = vmatprep.subr.bf16.mxu0 0
  %927 = vmatpush2.bf16.msra.mxu0 0
  %928 = vmatprep.subr.bf16.mxu0 0
  %929 = vmatpush2.bf16.msra.mxu0 0
  %930 = vmatprep.subr.bf16.mxu0 0
  %931 = vmatpush2.bf16.msra.mxu0 0
  %932 = vmatprep.mubr.bf16.mxu0 0
  %933 = vmatmul.mubr.bf16.gmra.mxu0 %v895
  %v934 = vpop.f32.mrf.mxu0
  %v935 = vadd.f32 0.0, %v934
  %v936 = vpop.f32.mrf.mxu0
  %v937 = vpop.f32.mrf.mxu0
  %v938 = vpop.f32.mrf.mxu0
  %939 = vdwg.mxu0
  %940 = vrot.lane.b32.xlu0 %v440, 64
  %v941 = vpop.permute.xlu0 %940
  %v943 = vsel %vm604, %v601, 0
  %v946 = vsel %vm608, %v941, 0
  %948 = vmatprep.subr.bf16.mxu0 0
  %949 = vmatpush1.bf16.msra.mxu0 0
  %950 = vmatprep.subr.bf16.mxu0 0
  %951 = vmatpush1.bf16.msra.mxu0 0
  %952 = vmatprep.subr.bf16.mxu0 0
  %953 = vmatpush1.bf16.msra.mxu0 0
  %954 = vmatprep.subr.bf16.mxu0 0
  %955 = vmatpush1.bf16.msra.mxu0 0
  %956 = vmatprep.subr.bf16.mxu0 0
  %957 = vmatpush1.bf16.msra.mxu0 0
  %958 = vmatprep.subr.bf16.mxu0 0
  %959 = vmatpush1.bf16.msra.mxu0 0
  %960 = vmatprep.subr.bf16.mxu0 0
  %961 = vmatpush1.bf16.msra.mxu0 0
  %962 = vmatprep.subr.bf16.mxu0 0
  %963 = vmatpush1.bf16.msra.mxu0 %v946
  %964 = vmatprep.subr.bf16.mxu0 0
  %965 = vmatpush2.bf16.msra.mxu0 0
  %966 = vmatprep.subr.bf16.mxu0 0
  %967 = vmatpush2.bf16.msra.mxu0 0
  %968 = vmatprep.subr.bf16.mxu0 0
  %969 = vmatpush2.bf16.msra.mxu0 0
  %970 = vmatprep.subr.bf16.mxu0 0
  %971 = vmatpush2.bf16.msra.mxu0 0
  %972 = vmatprep.subr.bf16.mxu0 0
  %973 = vmatpush2.bf16.msra.mxu0 0
  %974 = vmatprep.subr.bf16.mxu0 0
  %975 = vmatpush2.bf16.msra.mxu0 0
  %976 = vmatprep.subr.bf16.mxu0 0
  %977 = vmatpush2.bf16.msra.mxu0 0
  %978 = vmatprep.subr.bf16.mxu0 0
  %979 = vmatpush2.bf16.msra.mxu0 0
  %980 = vmatprep.mubr.bf16.mxu0 0
  %981 = vmatmul.mubr.bf16.gmra.mxu0 %v943
  %v982 = vpop.f32.mrf.mxu0
  %v983 = vadd.f32 0.0, %v982
  %v984 = vpop.f32.mrf.mxu0
  %v985 = vpop.f32.mrf.mxu0
  %v986 = vpop.f32.mrf.mxu0
  %987 = vdwg.mxu0
  %v996 = vcombine.low %v647, %v695
  %v997 = vcombine.low %v743, %v791
  %v998 = vcombine.low %v839, %v887
  %v999 = vcombine.low %v935, %v983
  %v1004 = vpack.c.bf16 %v997, %v996
  %v1005 = vpack.c.bf16 %v999, %v998
  %v1008 = vunpack.c.l.b16 %v28
  %v1009 = vunpack.c.l.b16 %v29
  %v1010 = vpack.c.b16 %v1009, %v1008
  %v1013 = vsel %vm50, %v1004, 0
  %v1016 = vsel %vm50, %v1005, 0
  %1018 = vmatprep.subr.bf16.mxu0 0
  %1019 = vmatpush1.bf16.msra.mxu0 0
  %1020 = vmatprep.subr.bf16.mxu0 0
  %1021 = vmatpush1.bf16.msra.mxu0 0
  %1022 = vmatprep.subr.bf16.mxu0 0
  %1023 = vmatpush1.bf16.msra.mxu0 0
  %1024 = vmatprep.subr.bf16.mxu0 0
  %1025 = vmatpush1.bf16.msra.mxu0 0
  %1026 = vmatprep.subr.bf16.mxu0 0
  %1027 = vmatpush1.bf16.msra.mxu0 0
  %1028 = vmatprep.subr.bf16.mxu0 0
  %1029 = vmatpush1.bf16.msra.mxu0 0
  %1030 = vmatprep.subr.bf16.mxu0 0
  %1031 = vmatpush1.bf16.msra.mxu0 0
  %1032 = vmatprep.subr.bf16.mxu0 0
  %1033 = vmatpush1.bf16.msra.mxu0 %v1010
  %1034 = vmatprep.subr.bf16.mxu0 0
  %1035 = vmatpush2.bf16.msra.mxu0 0
  %1036 = vmatprep.subr.bf16.mxu0 0
  %1037 = vmatpush2.bf16.msra.mxu0 0
  %1038 = vmatprep.subr.bf16.mxu0 0
  %1039 = vmatpush2.bf16.msra.mxu0 0
  %1040 = vmatprep.subr.bf16.mxu0 0
  %1041 = vmatpush2.bf16.msra.mxu0 0
  %1042 = vmatprep.subr.bf16.mxu0 0
  %1043 = vmatpush2.bf16.msra.mxu0 0
  %1044 = vmatprep.subr.bf16.mxu0 0
  %1045 = vmatpush2.bf16.msra.mxu0 0
  %1046 = vmatprep.subr.bf16.mxu0 0
  %1047 = vmatpush2.bf16.msra.mxu0 0
  %1048 = vmatprep.subr.bf16.mxu0 0
  %1049 = vmatpush2.bf16.msra.mxu0 0
  %1050 = vmatprep.mubr.bf16.mxu0 0
  %1051 = vmatmul.mubr.bf16.gmra.mxu0 %v1013
  %v1052 = vpop.f32.mrf.mxu0
  %v1053 = vadd.f32 0.0, %v1052
  %v1054 = vpop.f32.mrf.mxu0
  %v1055 = vpop.f32.mrf.mxu0
  %v1056 = vadd.f32 0.0, %v1055
  %v1057 = vpop.f32.mrf.mxu0
  %1058 = vmatprep.mubr.bf16.mxu0 0
  %1059 = vmatmul.mubr.bf16.gmra.mxu0 %v1016
  %v1060 = vpop.f32.mrf.mxu0
  %v1061 = vadd.f32 0.0, %v1060
  %v1062 = vpop.f32.mrf.mxu0
  %v1063 = vpop.f32.mrf.mxu0
  %v1064 = vadd.f32 0.0, %v1063
  %v1065 = vpop.f32.mrf.mxu0
  %1066 = vdwg.mxu0
  %v1067 = vadd.f32 %v39, %v1053
  %v1068 = vadd.f32 %v39, %v1056
  %v1069 = vadd.f32 %v39, %v1061
  %v1070 = vadd.f32 %v39, %v1064
  %1071 = vrot.lane.b32.xlu0 %v47, 112
  %v1072 = vpop.permute.xlu0 %1071
  %1073 = vrot.lane.b32.xlu0 %v47, 80
  %v1074 = vpop.permute.xlu0 %1073
  %v1076 = vsel %vm50, %v1072, 0
  %v1079 = vsel %vm50, %v1074, 0
  %1081 = vmatprep.subr.bf16.mxu0 0
  %1082 = vmatpush1.bf16.xpose.msra.mxu0 0
  %1083 = vmatprep.subr.bf16.mxu0 0
  %1084 = vmatpush1.bf16.xpose.msra.mxu0 0
  %1085 = vmatprep.subr.bf16.mxu0 0
  %1086 = vmatpush1.bf16.xpose.msra.mxu0 0
  %1087 = vmatprep.subr.bf16.mxu0 0
  %1088 = vmatpush1.bf16.xpose.msra.mxu0 0
  %1089 = vmatprep.subr.bf16.mxu0 0
  %1090 = vmatpush1.bf16.xpose.msra.mxu0 0
  %1091 = vmatprep.subr.bf16.mxu0 0
  %1092 = vmatpush1.bf16.xpose.msra.mxu0 0
  %1093 = vmatprep.subr.bf16.mxu0 0
  %1094 = vmatpush1.bf16.xpose.msra.mxu0 0
  %1095 = vmatprep.subr.bf16.mxu0 0
  %1096 = vmatpush1.bf16.xpose.msra.mxu0 %v1079
  %1097 = vmatprep.subr.bf16.mxu0 0
  %1098 = vmatpush2.bf16.xpose.msra.mxu0 0
  %1099 = vmatprep.subr.bf16.mxu0 0
  %1100 = vmatpush2.bf16.xpose.msra.mxu0 0
  %1101 = vmatprep.subr.bf16.mxu0 0
  %1102 = vmatpush2.bf16.xpose.msra.mxu0 0
  %1103 = vmatprep.subr.bf16.mxu0 0
  %1104 = vmatpush2.bf16.xpose.msra.mxu0 0
  %1105 = vmatprep.subr.bf16.mxu0 0
  %1106 = vmatpush2.bf16.xpose.msra.mxu0 0
  %1107 = vmatprep.subr.bf16.mxu0 0
  %1108 = vmatpush2.bf16.xpose.msra.mxu0 0
  %1109 = vmatprep.subr.bf16.mxu0 0
  %1110 = vmatpush2.bf16.xpose.msra.mxu0 0
  %1111 = vmatprep.subr.bf16.mxu0 0
  %1112 = vmatpush2.bf16.xpose.msra.mxu0 0
  %1113 = vmatprep.mubr.bf16.mxu0 0
  %1114 = vmatmul.mubr.bf16.gmra.mxu0 %v1076
  %v1115 = vpop.f32.mrf.mxu0
  %v1116 = vadd.f32 0.0, %v1115
  %v1117 = vpop.f32.mrf.mxu0
  %v1118 = vpop.f32.mrf.mxu0
  %v1119 = vpop.f32.mrf.mxu0
  %1120 = vdwg.mxu0
  %1121 = vrot.lane.b32.xlu0 %v104, 112
  %v1122 = vpop.permute.xlu0 %1121
  %1123 = vrot.lane.b32.xlu0 %v104, 80
  %v1124 = vpop.permute.xlu0 %1123
  %v1126 = vsel %vm50, %v1122, 0
  %v1129 = vsel %vm50, %v1124, 0
  %1131 = vmatprep.subr.bf16.mxu0 0
  %1132 = vmatpush1.bf16.xpose.msra.mxu0 0
  %1133 = vmatprep.subr.bf16.mxu0 0
  %1134 = vmatpush1.bf16.xpose.msra.mxu0 0
  %1135 = vmatprep.subr.bf16.mxu0 0
  %1136 = vmatpush1.bf16.xpose.msra.mxu0 0
  %1137 = vmatprep.subr.bf16.mxu0 0
  %1138 = vmatpush1.bf16.xpose.msra.mxu0 0
  %1139 = vmatprep.subr.bf16.mxu0 0
  %1140 = vmatpush1.bf16.xpose.msra.mxu0 0
  %1141 = vmatprep.subr.bf16.mxu0 0
  %1142 = vmatpush1.bf16.xpose.msra.mxu0 0
  %1143 = vmatprep.subr.bf16.mxu0 0
  %1144 = vmatpush1.bf16.xpose.msra.mxu0 0
  %1145 = vmatprep.subr.bf16.mxu0 0
  %1146 = vmatpush1.bf16.xpose.msra.mxu0 %v1129
  %1147 = vmatprep.subr.bf16.mxu0 0
  %1148 = vmatpush2.bf16.xpose.msra.mxu0 0
  %1149 = vmatprep.subr.bf16.mxu0 0
  %1150 = vmatpush2.bf16.xpose.msra.mxu0 0
  %1151 = vmatprep.subr.bf16.mxu0 0
  %1152 = vmatpush2.bf16.xpose.msra.mxu0 0
  %1153 = vmatprep.subr.bf16.mxu0 0
  %1154 = vmatpush2.bf16.xpose.msra.mxu0 0
  %1155 = vmatprep.subr.bf16.mxu0 0
  %1156 = vmatpush2.bf16.xpose.msra.mxu0 0
  %1157 = vmatprep.subr.bf16.mxu0 0
  %1158 = vmatpush2.bf16.xpose.msra.mxu0 0
  %1159 = vmatprep.subr.bf16.mxu0 0
  %1160 = vmatpush2.bf16.xpose.msra.mxu0 0
  %1161 = vmatprep.subr.bf16.mxu0 0
  %1162 = vmatpush2.bf16.xpose.msra.mxu0 0
  %1163 = vmatprep.mubr.bf16.mxu0 0
  %1164 = vmatmul.mubr.bf16.gmra.mxu0 %v1126
  %v1165 = vpop.f32.mrf.mxu0
  %v1166 = vadd.f32 0.0, %v1165
  %v1167 = vpop.f32.mrf.mxu0
  %v1168 = vpop.f32.mrf.mxu0
  %v1169 = vpop.f32.mrf.mxu0
  %1170 = vdwg.mxu0
  %1171 = vrot.lane.b32.xlu0 %v160, 112
  %v1172 = vpop.permute.xlu0 %1171
  %1173 = vrot.lane.b32.xlu0 %v160, 80
  %v1174 = vpop.permute.xlu0 %1173
  %v1176 = vsel %vm50, %v1172, 0
  %v1179 = vsel %vm50, %v1174, 0
  %1181 = vmatprep.subr.bf16.mxu0 0
  %1182 = vmatpush1.bf16.xpose.msra.mxu0 0
  %1183 = vmatprep.subr.bf16.mxu0 0
  %1184 = vmatpush1.bf16.xpose.msra.mxu0 0
  %1185 = vmatprep.subr.bf16.mxu0 0
  %1186 = vmatpush1.bf16.xpose.msra.mxu0 0
  %1187 = vmatprep.subr.bf16.mxu0 0
  %1188 = vmatpush1.bf16.xpose.msra.mxu0 0
  %1189 = vmatprep.subr.bf16.mxu0 0
  %1190 = vmatpush1.bf16.xpose.msra.mxu0 0
  %1191 = vmatprep.subr.bf16.mxu0 0
  %1192 = vmatpush1.bf16.xpose.msra.mxu0 0
  %1193 = vmatprep.subr.bf16.mxu0 0
  %1194 = vmatpush1.bf16.xpose.msra.mxu0 0
  %1195 = vmatprep.subr.bf16.mxu0 0
  %1196 = vmatpush1.bf16.xpose.msra.mxu0 %v1179
  %1197 = vmatprep.subr.bf16.mxu0 0
  %1198 = vmatpush2.bf16.xpose.msra.mxu0 0
  %1199 = vmatprep.subr.bf16.mxu0 0
  %1200 = vmatpush2.bf16.xpose.msra.mxu0 0
  %1201 = vmatprep.subr.bf16.mxu0 0
  %1202 = vmatpush2.bf16.xpose.msra.mxu0 0
  %1203 = vmatprep.subr.bf16.mxu0 0
  %1204 = vmatpush2.bf16.xpose.msra.mxu0 0
  %1205 = vmatprep.subr.bf16.mxu0 0
  %1206 = vmatpush2.bf16.xpose.msra.mxu0 0
  %1207 = vmatprep.subr.bf16.mxu0 0
  %1208 = vmatpush2.bf16.xpose.msra.mxu0 0
  %1209 = vmatprep.subr.bf16.mxu0 0
  %1210 = vmatpush2.bf16.xpose.msra.mxu0 0
  %1211 = vmatprep.subr.bf16.mxu0 0
  %1212 = vmatpush2.bf16.xpose.msra.mxu0 0
  %1213 = vmatprep.mubr.bf16.mxu0 0
  %1214 = vmatmul.mubr.bf16.gmra.mxu0 %v1176
  %v1215 = vpop.f32.mrf.mxu0
  %v1216 = vadd.f32 0.0, %v1215
  %v1217 = vpop.f32.mrf.mxu0
  %v1218 = vpop.f32.mrf.mxu0
  %v1219 = vpop.f32.mrf.mxu0
  %1220 = vdwg.mxu0
  %1221 = vrot.lane.b32.xlu0 %v216, 112
  %v1222 = vpop.permute.xlu0 %1221
  %1223 = vrot.lane.b32.xlu0 %v216, 80
  %v1224 = vpop.permute.xlu0 %1223
  %v1226 = vsel %vm50, %v1222, 0
  %v1229 = vsel %vm50, %v1224, 0
  %1231 = vmatprep.subr.bf16.mxu0 0
  %1232 = vmatpush1.bf16.xpose.msra.mxu0 0
  %1233 = vmatprep.subr.bf16.mxu0 0
  %1234 = vmatpush1.bf16.xpose.msra.mxu0 0
  %1235 = vmatprep.subr.bf16.mxu0 0
  %1236 = vmatpush1.bf16.xpose.msra.mxu0 0
  %1237 = vmatprep.subr.bf16.mxu0 0
  %1238 = vmatpush1.bf16.xpose.msra.mxu0 0
  %1239 = vmatprep.subr.bf16.mxu0 0
  %1240 = vmatpush1.bf16.xpose.msra.mxu0 0
  %1241 = vmatprep.subr.bf16.mxu0 0
  %1242 = vmatpush1.bf16.xpose.msra.mxu0 0
  %1243 = vmatprep.subr.bf16.mxu0 0
  %1244 = vmatpush1.bf16.xpose.msra.mxu0 0
  %1245 = vmatprep.subr.bf16.mxu0 0
  %1246 = vmatpush1.bf16.xpose.msra.mxu0 %v1229
  %1247 = vmatprep.subr.bf16.mxu0 0
  %1248 = vmatpush2.bf16.xpose.msra.mxu0 0
  %1249 = vmatprep.subr.bf16.mxu0 0
  %1250 = vmatpush2.bf16.xpose.msra.mxu0 0
  %1251 = vmatprep.subr.bf16.mxu0 0
  %1252 = vmatpush2.bf16.xpose.msra.mxu0 0
  %1253 = vmatprep.subr.bf16.mxu0 0
  %1254 = vmatpush2.bf16.xpose.msra.mxu0 0
  %1255 = vmatprep.subr.bf16.mxu0 0
  %1256 = vmatpush2.bf16.xpose.msra.mxu0 0
  %1257 = vmatprep.subr.bf16.mxu0 0
  %1258 = vmatpush2.bf16.xpose.msra.mxu0 0
  %1259 = vmatprep.subr.bf16.mxu0 0
  %1260 = vmatpush2.bf16.xpose.msra.mxu0 0
  %1261 = vmatprep.subr.bf16.mxu0 0
  %1262 = vmatpush2.bf16.xpose.msra.mxu0 0
  %1263 = vmatprep.mubr.bf16.mxu0 0
  %1264 = vmatmul.mubr.bf16.gmra.mxu0 %v1226
  %v1265 = vpop.f32.mrf.mxu0
  %v1266 = vadd.f32 0.0, %v1265
  %v1267 = vpop.f32.mrf.mxu0
  %v1268 = vpop.f32.mrf.mxu0
  %v1269 = vpop.f32.mrf.mxu0
  %1270 = vdwg.mxu0
  %1271 = vrot.lane.b32.xlu0 %v272, 112
  %v1272 = vpop.permute.xlu0 %1271
  %1273 = vrot.lane.b32.xlu0 %v272, 80
  %v1274 = vpop.permute.xlu0 %1273
  %v1276 = vsel %vm50, %v1272, 0
  %v1279 = vsel %vm50, %v1274, 0
  %1281 = vmatprep.subr.bf16.mxu0 0
  %1282 = vmatpush1.bf16.xpose.msra.mxu0 0
  %1283 = vmatprep.subr.bf16.mxu0 0
  %1284 = vmatpush1.bf16.xpose.msra.mxu0 0
  %1285 = vmatprep.subr.bf16.mxu0 0
  %1286 = vmatpush1.bf16.xpose.msra.mxu0 0
  %1287 = vmatprep.subr.bf16.mxu0 0
  %1288 = vmatpush1.bf16.xpose.msra.mxu0 0
  %1289 = vmatprep.subr.bf16.mxu0 0
  %1290 = vmatpush1.bf16.xpose.msra.mxu0 0
  %1291 = vmatprep.subr.bf16.mxu0 0
  %1292 = vmatpush1.bf16.xpose.msra.mxu0 0
  %1293 = vmatprep.subr.bf16.mxu0 0
  %1294 = vmatpush1.bf16.xpose.msra.mxu0 0
  %1295 = vmatprep.subr.bf16.mxu0 0
  %1296 = vmatpush1.bf16.xpose.msra.mxu0 %v1279
  %1297 = vmatprep.subr.bf16.mxu0 0
  %1298 = vmatpush2.bf16.xpose.msra.mxu0 0
  %1299 = vmatprep.subr.bf16.mxu0 0
  %1300 = vmatpush2.bf16.xpose.msra.mxu0 0
  %1301 = vmatprep.subr.bf16.mxu0 0
  %1302 = vmatpush2.bf16.xpose.msra.mxu0 0
  %1303 = vmatprep.subr.bf16.mxu0 0
  %1304 = vmatpush2.bf16.xpose.msra.mxu0 0
  %1305 = vmatprep.subr.bf16.mxu0 0
  %1306 = vmatpush2.bf16.xpose.msra.mxu0 0
  %1307 = vmatprep.subr.bf16.mxu0 0
  %1308 = vmatpush2.bf16.xpose.msra.mxu0 0
  %1309 = vmatprep.subr.bf16.mxu0 0
  %1310 = vmatpush2.bf16.xpose.msra.mxu0 0
  %1311 = vmatprep.subr.bf16.mxu0 0
  %1312 = vmatpush2.bf16.xpose.msra.mxu0 0
  %1313 = vmatprep.mubr.bf16.mxu0 0
  %1314 = vmatmul.mubr.bf16.gmra.mxu0 %v1276
  %v1315 = vpop.f32.mrf.mxu0
  %v1316 = vadd.f32 0.0, %v1315
  %v1317 = vpop.f32.mrf.mxu0
  %v1318 = vpop.f32.mrf.mxu0
  %v1319 = vpop.f32.mrf.mxu0
  %1320 = vdwg.mxu0
  %1321 = vrot.lane.b32.xlu0 %v328, 112
  %v1322 = vpop.permute.xlu0 %1321
  %1323 = vrot.lane.b32.xlu0 %v328, 80
  %v1324 = vpop.permute.xlu0 %1323
  %v1326 = vsel %vm50, %v1322, 0
  %v1329 = vsel %vm50, %v1324, 0
  %1331 = vmatprep.subr.bf16.mxu0 0
  %1332 = vmatpush1.bf16.xpose.msra.mxu0 0
  %1333 = vmatprep.subr.bf16.mxu0 0
  %1334 = vmatpush1.bf16.xpose.msra.mxu0 0
  %1335 = vmatprep.subr.bf16.mxu0 0
  %1336 = vmatpush1.bf16.xpose.msra.mxu0 0
  %1337 = vmatprep.subr.bf16.mxu0 0
  %1338 = vmatpush1.bf16.xpose.msra.mxu0 0
  %1339 = vmatprep.subr.bf16.mxu0 0
  %1340 = vmatpush1.bf16.xpose.msra.mxu0 0
  %1341 = vmatprep.subr.bf16.mxu0 0
  %1342 = vmatpush1.bf16.xpose.msra.mxu0 0
  %1343 = vmatprep.subr.bf16.mxu0 0
  %1344 = vmatpush1.bf16.xpose.msra.mxu0 0
  %1345 = vmatprep.subr.bf16.mxu0 0
  %1346 = vmatpush1.bf16.xpose.msra.mxu0 %v1329
  %1347 = vmatprep.subr.bf16.mxu0 0
  %1348 = vmatpush2.bf16.xpose.msra.mxu0 0
  %1349 = vmatprep.subr.bf16.mxu0 0
  %1350 = vmatpush2.bf16.xpose.msra.mxu0 0
  %1351 = vmatprep.subr.bf16.mxu0 0
  %1352 = vmatpush2.bf16.xpose.msra.mxu0 0
  %1353 = vmatprep.subr.bf16.mxu0 0
  %1354 = vmatpush2.bf16.xpose.msra.mxu0 0
  %1355 = vmatprep.subr.bf16.mxu0 0
  %1356 = vmatpush2.bf16.xpose.msra.mxu0 0
  %1357 = vmatprep.subr.bf16.mxu0 0
  %1358 = vmatpush2.bf16.xpose.msra.mxu0 0
  %1359 = vmatprep.subr.bf16.mxu0 0
  %1360 = vmatpush2.bf16.xpose.msra.mxu0 0
  %1361 = vmatprep.subr.bf16.mxu0 0
  %1362 = vmatpush2.bf16.xpose.msra.mxu0 0
  %1363 = vmatprep.mubr.bf16.mxu0 0
  %1364 = vmatmul.mubr.bf16.gmra.mxu0 %v1326
  %v1365 = vpop.f32.mrf.mxu0
  %v1366 = vadd.f32 0.0, %v1365
  %v1367 = vpop.f32.mrf.mxu0
  %v1368 = vpop.f32.mrf.mxu0
  %v1369 = vpop.f32.mrf.mxu0
  %1370 = vdwg.mxu0
  %1371 = vrot.lane.b32.xlu0 %v384, 112
  %v1372 = vpop.permute.xlu0 %1371
  %1373 = vrot.lane.b32.xlu0 %v384, 80
  %v1374 = vpop.permute.xlu0 %1373
  %v1376 = vsel %vm50, %v1372, 0
  %v1379 = vsel %vm50, %v1374, 0
  %1381 = vmatprep.subr.bf16.mxu0 0
  %1382 = vmatpush1.bf16.xpose.msra.mxu0 0
  %1383 = vmatprep.subr.bf16.mxu0 0
  %1384 = vmatpush1.bf16.xpose.msra.mxu0 0
  %1385 = vmatprep.subr.bf16.mxu0 0
  %1386 = vmatpush1.bf16.xpose.msra.mxu0 0
  %1387 = vmatprep.subr.bf16.mxu0 0
  %1388 = vmatpush1.bf16.xpose.msra.mxu0 0
  %1389 = vmatprep.subr.bf16.mxu0 0
  %1390 = vmatpush1.bf16.xpose.msra.mxu0 0
  %1391 = vmatprep.subr.bf16.mxu0 0
  %1392 = vmatpush1.bf16.xpose.msra.mxu0 0
  %1393 = vmatprep.subr.bf16.mxu0 0
  %1394 = vmatpush1.bf16.xpose.msra.mxu0 0
  %1395 = vmatprep.subr.bf16.mxu0 0
  %1396 = vmatpush1.bf16.xpose.msra.mxu0 %v1379
  %1397 = vmatprep.subr.bf16.mxu0 0
  %1398 = vmatpush2.bf16.xpose.msra.mxu0 0
  %1399 = vmatprep.subr.bf16.mxu0 0
  %1400 = vmatpush2.bf16.xpose.msra.mxu0 0
  %1401 = vmatprep.subr.bf16.mxu0 0
  %1402 = vmatpush2.bf16.xpose.msra.mxu0 0
  %1403 = vmatprep.subr.bf16.mxu0 0
  %1404 = vmatpush2.bf16.xpose.msra.mxu0 0
  %1405 = vmatprep.subr.bf16.mxu0 0
  %1406 = vmatpush2.bf16.xpose.msra.mxu0 0
  %1407 = vmatprep.subr.bf16.mxu0 0
  %1408 = vmatpush2.bf16.xpose.msra.mxu0 0
  %1409 = vmatprep.subr.bf16.mxu0 0
  %1410 = vmatpush2.bf16.xpose.msra.mxu0 0
  %1411 = vmatprep.subr.bf16.mxu0 0
  %1412 = vmatpush2.bf16.xpose.msra.mxu0 0
  %1413 = vmatprep.mubr.bf16.mxu0 0
  %1414 = vmatmul.mubr.bf16.gmra.mxu0 %v1376
  %v1415 = vpop.f32.mrf.mxu0
  %v1416 = vadd.f32 0.0, %v1415
  %v1417 = vpop.f32.mrf.mxu0
  %v1418 = vpop.f32.mrf.mxu0
  %v1419 = vpop.f32.mrf.mxu0
  %1420 = vdwg.mxu0
  %1421 = vrot.lane.b32.xlu0 %v440, 112
  %v1422 = vpop.permute.xlu0 %1421
  %1423 = vrot.lane.b32.xlu0 %v440, 80
  %v1424 = vpop.permute.xlu0 %1423
  %v1426 = vsel %vm50, %v1422, 0
  %v1429 = vsel %vm50, %v1424, 0
  %1431 = vmatprep.subr.bf16.mxu0 0
  %1432 = vmatpush1.bf16.xpose.msra.mxu0 0
  %1433 = vmatprep.subr.bf16.mxu0 0
  %1434 = vmatpush1.bf16.xpose.msra.mxu0 0
  %1435 = vmatprep.subr.bf16.mxu0 0
  %1436 = vmatpush1.bf16.xpose.msra.mxu0 0
  %1437 = vmatprep.subr.bf16.mxu0 0
  %1438 = vmatpush1.bf16.xpose.msra.mxu0 0
  %1439 = vmatprep.subr.bf16.mxu0 0
  %1440 = vmatpush1.bf16.xpose.msra.mxu0 0
  %1441 = vmatprep.subr.bf16.mxu0 0
  %1442 = vmatpush1.bf16.xpose.msra.mxu0 0
  %1443 = vmatprep.subr.bf16.mxu0 0
  %1444 = vmatpush1.bf16.xpose.msra.mxu0 0
  %1445 = vmatprep.subr.bf16.mxu0 0
  %1446 = vmatpush1.bf16.xpose.msra.mxu0 %v1429
  %1447 = vmatprep.subr.bf16.mxu0 0
  %1448 = vmatpush2.bf16.xpose.msra.mxu0 0
  %1449 = vmatprep.subr.bf16.mxu0 0
  %1450 = vmatpush2.bf16.xpose.msra.mxu0 0
  %1451 = vmatprep.subr.bf16.mxu0 0
  %1452 = vmatpush2.bf16.xpose.msra.mxu0 0
  %1453 = vmatprep.subr.bf16.mxu0 0
  %1454 = vmatpush2.bf16.xpose.msra.mxu0 0
  %1455 = vmatprep.subr.bf16.mxu0 0
  %1456 = vmatpush2.bf16.xpose.msra.mxu0 0
  %1457 = vmatprep.subr.bf16.mxu0 0
  %1458 = vmatpush2.bf16.xpose.msra.mxu0 0
  %1459 = vmatprep.subr.bf16.mxu0 0
  %1460 = vmatpush2.bf16.xpose.msra.mxu0 0
  %1461 = vmatprep.subr.bf16.mxu0 0
  %1462 = vmatpush2.bf16.xpose.msra.mxu0 0
  %1463 = vmatprep.mubr.bf16.mxu0 0
  %1464 = vmatmul.mubr.bf16.gmra.mxu0 %v1426
  %v1465 = vpop.f32.mrf.mxu0
  %v1466 = vadd.f32 0.0, %v1465
  %v1467 = vpop.f32.mrf.mxu0
  %v1468 = vpop.f32.mrf.mxu0
  %v1469 = vpop.f32.mrf.mxu0
  %1470 = vdwg.mxu0
  %v1471 = vmul.f32 %v1116, 0.25
  %v1472 = vmul.f32 %v1166, 0.25
  %v1473 = vmul.f32 %v1216, 0.25
  %v1474 = vmul.f32 %v1266, 0.25
  %v1475 = vmul.f32 %v1316, 0.25
  %v1476 = vmul.f32 %v1366, 0.25
  %v1477 = vmul.f32 %v1416, 0.25
  %v1478 = vmul.f32 %v1466, 0.25
  %v1479 = vadd.f32 %v1471, %v27
  %v1480 = vadd.f32 %v1472, %v27
  %v1481 = vadd.f32 %v1473, %v27
  %v1482 = vadd.f32 %v1474, %v27
  %v1483 = vadd.f32 %v1475, %v27
  %v1484 = vadd.f32 %v1476, %v27
  %v1485 = vadd.f32 %v1477, %v27
  %v1486 = vadd.f32 %v1478, %v27
  %v1487 = vsel %vm505, %v1479, -inf
  %1488 = vmax.xlane.f32.xlu0 %v1487
  %v1489 = vpop.xlane.xlu0 %1488
  %v1490 = vsel %vm505, %v1480, -inf
  %1491 = vmax.xlane.f32.xlu0 %v1490
  %v1492 = vpop.xlane.xlu0 %1491
  %v1493 = vsel %vm505, %v1481, -inf
  %1494 = vmax.xlane.f32.xlu0 %v1493
  %v1495 = vpop.xlane.xlu0 %1494
  %v1496 = vsel %vm505, %v1482, -inf
  %1497 = vmax.xlane.f32.xlu0 %v1496
  %v1498 = vpop.xlane.xlu0 %1497
  %v1499 = vsel %vm505, %v1483, -inf
  %1500 = vmax.xlane.f32.xlu0 %v1499
  %v1501 = vpop.xlane.xlu0 %1500
  %v1502 = vsel %vm505, %v1484, -inf
  %1503 = vmax.xlane.f32.xlu0 %v1502
  %v1504 = vpop.xlane.xlu0 %1503
  %v1505 = vsel %vm505, %v1485, -inf
  %1506 = vmax.xlane.f32.xlu0 %v1505
  %v1507 = vpop.xlane.xlu0 %1506
  %v1508 = vsel %vm505, %v1486, -inf
  %1509 = vmax.xlane.f32.xlu0 %v1508
  %v1510 = vpop.xlane.xlu0 %1509
  %v1511 = vsub.f32 %v1479, %v1489
  %v1512 = vsub.f32 %v1480, %v1492
  %v1513 = vsub.f32 %v1481, %v1495
  %v1514 = vsub.f32 %v1482, %v1498
  %v1515 = vsub.f32 %v1483, %v1501
  %v1516 = vsub.f32 %v1484, %v1504
  %v1517 = vsub.f32 %v1485, %v1507
  %v1518 = vsub.f32 %v1486, %v1510
  %v1519 = vmul.f32 %v1511, 1.442695
  %v1520 = vpow.pop %v1519
  %v1521 = vmul.f32 %v1512, 1.442695
  %v1522 = vpow.pop %v1521
  %v1523 = vmul.f32 %v1513, 1.442695
  %v1524 = vpow.pop %v1523
  %v1525 = vmul.f32 %v1514, 1.442695
  %v1526 = vpow.pop %v1525
  %v1527 = vmul.f32 %v1515, 1.442695
  %v1528 = vpow.pop %v1527
  %v1529 = vmul.f32 %v1516, 1.442695
  %v1530 = vpow.pop %v1529
  %v1531 = vmul.f32 %v1517, 1.442695
  %v1532 = vpow.pop %v1531
  %v1533 = vmul.f32 %v1518, 1.442695
  %v1534 = vpow.pop %v1533
  %v1535 = vsel %vm505, %v1520, 0.0
  %1536 = vadd.xlane.f32.xlu0 %v1535
  %v1537 = vpop.xlane.xlu0 %1536
  %v1538 = vsel %vm505, %v1522, 0.0
  %1539 = vadd.xlane.f32.xlu0 %v1538
  %v1540 = vpop.xlane.xlu0 %1539
  %v1541 = vsel %vm505, %v1524, 0.0
  %1542 = vadd.xlane.f32.xlu0 %v1541
  %v1543 = vpop.xlane.xlu0 %1542
  %v1544 = vsel %vm505, %v1526, 0.0
  %1545 = vadd.xlane.f32.xlu0 %v1544
  %v1546 = vpop.xlane.xlu0 %1545
  %v1547 = vsel %vm505, %v1528, 0.0
  %1548 = vadd.xlane.f32.xlu0 %v1547
  %v1549 = vpop.xlane.xlu0 %1548
  %v1550 = vsel %vm505, %v1530, 0.0
  %1551 = vadd.xlane.f32.xlu0 %v1550
  %v1552 = vpop.xlane.xlu0 %1551
  %v1553 = vsel %vm505, %v1532, 0.0
  %1554 = vadd.xlane.f32.xlu0 %v1553
  %v1555 = vpop.xlane.xlu0 %1554
  %v1556 = vsel %vm505, %v1534, 0.0
  %1557 = vadd.xlane.f32.xlu0 %v1556
  %v1558 = vpop.xlane.xlu0 %1557
  %v1559 = vrcp.pop %v1537
  %v1560 = vrcp.pop %v1540
  %v1561 = vrcp.pop %v1543
  %v1562 = vrcp.pop %v1546
  %v1563 = vrcp.pop %v1549
  %v1564 = vrcp.pop %v1552
  %v1565 = vrcp.pop %v1555
  %v1566 = vrcp.pop %v1558
  %v1567 = vmul.f32 %v1520, %v1559
  %v1568 = vmul.f32 %v1522, %v1560
  %v1569 = vmul.f32 %v1524, %v1561
  %v1570 = vmul.f32 %v1526, %v1562
  %v1571 = vmul.f32 %v1528, %v1563
  %v1572 = vmul.f32 %v1530, %v1564
  %v1573 = vmul.f32 %v1532, %v1565
  %v1574 = vmul.f32 %v1534, %v1566
  %v1575 = vpack.c.bf16 %v1567, %v1567
  %v1576 = vpack.c.bf16 %v1568, %v1568
  %v1577 = vpack.c.bf16 %v1569, %v1569
  %v1578 = vpack.c.bf16 %v1570, %v1570
  %v1579 = vpack.c.bf16 %v1571, %v1571
  %v1580 = vpack.c.bf16 %v1572, %v1572
  %v1581 = vpack.c.bf16 %v1573, %v1573
  %v1582 = vpack.c.bf16 %v1574, %v1574
  %1583 = vrot.lane.b32.xlu0 %v47, 48
  %v1584 = vpop.permute.xlu0 %1583
  %v1586 = vsel %vm604, %v1575, 0
  %v1589 = vsel %vm608, %v1584, 0
  %1591 = vmatprep.subr.bf16.mxu0 0
  %1592 = vmatpush1.bf16.msra.mxu0 0
  %1593 = vmatprep.subr.bf16.mxu0 0
  %1594 = vmatpush1.bf16.msra.mxu0 0
  %1595 = vmatprep.subr.bf16.mxu0 0
  %1596 = vmatpush1.bf16.msra.mxu0 0
  %1597 = vmatprep.subr.bf16.mxu0 0
  %1598 = vmatpush1.bf16.msra.mxu0 0
  %1599 = vmatprep.subr.bf16.mxu0 0
  %1600 = vmatpush1.bf16.msra.mxu0 0
  %1601 = vmatprep.subr.bf16.mxu0 0
  %1602 = vmatpush1.bf16.msra.mxu0 0
  %1603 = vmatprep.subr.bf16.mxu0 0
  %1604 = vmatpush1.bf16.msra.mxu0 0
  %1605 = vmatprep.subr.bf16.mxu0 0
  %1606 = vmatpush1.bf16.msra.mxu0 %v1589
  %1607 = vmatprep.subr.bf16.mxu0 0
  %1608 = vmatpush2.bf16.msra.mxu0 0
  %1609 = vmatprep.subr.bf16.mxu0 0
  %1610 = vmatpush2.bf16.msra.mxu0 0
  %1611 = vmatprep.subr.bf16.mxu0 0
  %1612 = vmatpush2.bf16.msra.mxu0 0
  %1613 = vmatprep.subr.bf16.mxu0 0
  %1614 = vmatpush2.bf16.msra.mxu0 0
  %1615 = vmatprep.subr.bf16.mxu0 0
  %1616 = vmatpush2.bf16.msra.mxu0 0
  %1617 = vmatprep.subr.bf16.mxu0 0
  %1618 = vmatpush2.bf16.msra.mxu0 0
  %1619 = vmatprep.subr.bf16.mxu0 0
  %1620 = vmatpush2.bf16.msra.mxu0 0
  %1621 = vmatprep.subr.bf16.mxu0 0
  %1622 = vmatpush2.bf16.msra.mxu0 0
  %1623 = vmatprep.mubr.bf16.mxu0 0
  %1624 = vmatmul.mubr.bf16.gmra.mxu0 %v1586
  %v1625 = vpop.f32.mrf.mxu0
  %v1626 = vadd.f32 0.0, %v1625
  %v1627 = vpop.f32.mrf.mxu0
  %v1628 = vpop.f32.mrf.mxu0
  %v1629 = vpop.f32.mrf.mxu0
  %1630 = vdwg.mxu0
  %1631 = vrot.lane.b32.xlu0 %v104, 48
  %v1632 = vpop.permute.xlu0 %1631
  %v1634 = vsel %vm604, %v1576, 0
  %v1637 = vsel %vm608, %v1632, 0
  %1639 = vmatprep.subr.bf16.mxu0 0
  %1640 = vmatpush1.bf16.msra.mxu0 0
  %1641 = vmatprep.subr.bf16.mxu0 0
  %1642 = vmatpush1.bf16.msra.mxu0 0
  %1643 = vmatprep.subr.bf16.mxu0 0
  %1644 = vmatpush1.bf16.msra.mxu0 0
  %1645 = vmatprep.subr.bf16.mxu0 0
  %1646 = vmatpush1.bf16.msra.mxu0 0
  %1647 = vmatprep.subr.bf16.mxu0 0
  %1648 = vmatpush1.bf16.msra.mxu0 0
  %1649 = vmatprep.subr.bf16.mxu0 0
  %1650 = vmatpush1.bf16.msra.mxu0 0
  %1651 = vmatprep.subr.bf16.mxu0 0
  %1652 = vmatpush1.bf16.msra.mxu0 0
  %1653 = vmatprep.subr.bf16.mxu0 0
  %1654 = vmatpush1.bf16.msra.mxu0 %v1637
  %1655 = vmatprep.subr.bf16.mxu0 0
  %1656 = vmatpush2.bf16.msra.mxu0 0
  %1657 = vmatprep.subr.bf16.mxu0 0
  %1658 = vmatpush2.bf16.msra.mxu0 0
  %1659 = vmatprep.subr.bf16.mxu0 0
  %1660 = vmatpush2.bf16.msra.mxu0 0
  %1661 = vmatprep.subr.bf16.mxu0 0
  %1662 = vmatpush2.bf16.msra.mxu0 0
  %1663 = vmatprep.subr.bf16.mxu0 0
  %1664 = vmatpush2.bf16.msra.mxu0 0
  %1665 = vmatprep.subr.bf16.mxu0 0
  %1666 = vmatpush2.bf16.msra.mxu0 0
  %1667 = vmatprep.subr.bf16.mxu0 0
  %1668 = vmatpush2.bf16.msra.mxu0 0
  %1669 = vmatprep.subr.bf16.mxu0 0
  %1670 = vmatpush2.bf16.msra.mxu0 0
  %1671 = vmatprep.mubr.bf16.mxu0 0
  %1672 = vmatmul.mubr.bf16.gmra.mxu0 %v1634
  %v1673 = vpop.f32.mrf.mxu0
  %v1674 = vadd.f32 0.0, %v1673
  %v1675 = vpop.f32.mrf.mxu0
  %v1676 = vpop.f32.mrf.mxu0
  %v1677 = vpop.f32.mrf.mxu0
  %1678 = vdwg.mxu0
  %1679 = vrot.lane.b32.xlu0 %v160, 48
  %v1680 = vpop.permute.xlu0 %1679
  %v1682 = vsel %vm604, %v1577, 0
  %v1685 = vsel %vm608, %v1680, 0
  %1687 = vmatprep.subr.bf16.mxu0 0
  %1688 = vmatpush1.bf16.msra.mxu0 0
  %1689 = vmatprep.subr.bf16.mxu0 0
  %1690 = vmatpush1.bf16.msra.mxu0 0
  %1691 = vmatprep.subr.bf16.mxu0 0
  %1692 = vmatpush1.bf16.msra.mxu0 0
  %1693 = vmatprep.subr.bf16.mxu0 0
  %1694 = vmatpush1.bf16.msra.mxu0 0
  %1695 = vmatprep.subr.bf16.mxu0 0
  %1696 = vmatpush1.bf16.msra.mxu0 0
  %1697 = vmatprep.subr.bf16.mxu0 0
  %1698 = vmatpush1.bf16.msra.mxu0 0
  %1699 = vmatprep.subr.bf16.mxu0 0
  %1700 = vmatpush1.bf16.msra.mxu0 0
  %1701 = vmatprep.subr.bf16.mxu0 0
  %1702 = vmatpush1.bf16.msra.mxu0 %v1685
  %1703 = vmatprep.subr.bf16.mxu0 0
  %1704 = vmatpush2.bf16.msra.mxu0 0
  %1705 = vmatprep.subr.bf16.mxu0 0
  %1706 = vmatpush2.bf16.msra.mxu0 0
  %1707 = vmatprep.subr.bf16.mxu0 0
  %1708 = vmatpush2.bf16.msra.mxu0 0
  %1709 = vmatprep.subr.bf16.mxu0 0
  %1710 = vmatpush2.bf16.msra.mxu0 0
  %1711 = vmatprep.subr.bf16.mxu0 0
  %1712 = vmatpush2.bf16.msra.mxu0 0
  %1713 = vmatprep.subr.bf16.mxu0 0
  %1714 = vmatpush2.bf16.msra.mxu0 0
  %1715 = vmatprep.subr.bf16.mxu0 0
  %1716 = vmatpush2.bf16.msra.mxu0 0
  %1717 = vmatprep.subr.bf16.mxu0 0
  %1718 = vmatpush2.bf16.msra.mxu0 0
  %1719 = vmatprep.mubr.bf16.mxu0 0
  %1720 = vmatmul.mubr.bf16.gmra.mxu0 %v1682
  %v1721 = vpop.f32.mrf.mxu0
  %v1722 = vadd.f32 0.0, %v1721
  %v1723 = vpop.f32.mrf.mxu0
  %v1724 = vpop.f32.mrf.mxu0
  %v1725 = vpop.f32.mrf.mxu0
  %1726 = vdwg.mxu0
  %1727 = vrot.lane.b32.xlu0 %v216, 48
  %v1728 = vpop.permute.xlu0 %1727
  %v1730 = vsel %vm604, %v1578, 0
  %v1733 = vsel %vm608, %v1728, 0
  %1735 = vmatprep.subr.bf16.mxu0 0
  %1736 = vmatpush1.bf16.msra.mxu0 0
  %1737 = vmatprep.subr.bf16.mxu0 0
  %1738 = vmatpush1.bf16.msra.mxu0 0
  %1739 = vmatprep.subr.bf16.mxu0 0
  %1740 = vmatpush1.bf16.msra.mxu0 0
  %1741 = vmatprep.subr.bf16.mxu0 0
  %1742 = vmatpush1.bf16.msra.mxu0 0
  %1743 = vmatprep.subr.bf16.mxu0 0
  %1744 = vmatpush1.bf16.msra.mxu0 0
  %1745 = vmatprep.subr.bf16.mxu0 0
  %1746 = vmatpush1.bf16.msra.mxu0 0
  %1747 = vmatprep.subr.bf16.mxu0 0
  %1748 = vmatpush1.bf16.msra.mxu0 0
  %1749 = vmatprep.subr.bf16.mxu0 0
  %1750 = vmatpush1.bf16.msra.mxu0 %v1733
  %1751 = vmatprep.subr.bf16.mxu0 0
  %1752 = vmatpush2.bf16.msra.mxu0 0
  %1753 = vmatprep.subr.bf16.mxu0 0
  %1754 = vmatpush2.bf16.msra.mxu0 0
  %1755 = vmatprep.subr.bf16.mxu0 0
  %1756 = vmatpush2.bf16.msra.mxu0 0
  %1757 = vmatprep.subr.bf16.mxu0 0
  %1758 = vmatpush2.bf16.msra.mxu0 0
  %1759 = vmatprep.subr.bf16.mxu0 0
  %1760 = vmatpush2.bf16.msra.mxu0 0
  %1761 = vmatprep.subr.bf16.mxu0 0
  %1762 = vmatpush2.bf16.msra.mxu0 0
  %1763 = vmatprep.subr.bf16.mxu0 0
  %1764 = vmatpush2.bf16.msra.mxu0 0
  %1765 = vmatprep.subr.bf16.mxu0 0
  %1766 = vmatpush2.bf16.msra.mxu0 0
  %1767 = vmatprep.mubr.bf16.mxu0 0
  %1768 = vmatmul.mubr.bf16.gmra.mxu0 %v1730
  %v1769 = vpop.f32.mrf.mxu0
  %v1770 = vadd.f32 0.0, %v1769
  %v1771 = vpop.f32.mrf.mxu0
  %v1772 = vpop.f32.mrf.mxu0
  %v1773 = vpop.f32.mrf.mxu0
  %1774 = vdwg.mxu0
  %1775 = vrot.lane.b32.xlu0 %v272, 48
  %v1776 = vpop.permute.xlu0 %1775
  %v1778 = vsel %vm604, %v1579, 0
  %v1781 = vsel %vm608, %v1776, 0
  %1783 = vmatprep.subr.bf16.mxu0 0
  %1784 = vmatpush1.bf16.msra.mxu0 0
  %1785 = vmatprep.subr.bf16.mxu0 0
  %1786 = vmatpush1.bf16.msra.mxu0 0
  %1787 = vmatprep.subr.bf16.mxu0 0
  %1788 = vmatpush1.bf16.msra.mxu0 0
  %1789 = vmatprep.subr.bf16.mxu0 0
  %1790 = vmatpush1.bf16.msra.mxu0 0
  %1791 = vmatprep.subr.bf16.mxu0 0
  %1792 = vmatpush1.bf16.msra.mxu0 0
  %1793 = vmatprep.subr.bf16.mxu0 0
  %1794 = vmatpush1.bf16.msra.mxu0 0
  %1795 = vmatprep.subr.bf16.mxu0 0
  %1796 = vmatpush1.bf16.msra.mxu0 0
  %1797 = vmatprep.subr.bf16.mxu0 0
  %1798 = vmatpush1.bf16.msra.mxu0 %v1781
  %1799 = vmatprep.subr.bf16.mxu0 0
  %1800 = vmatpush2.bf16.msra.mxu0 0
  %1801 = vmatprep.subr.bf16.mxu0 0
  %1802 = vmatpush2.bf16.msra.mxu0 0
  %1803 = vmatprep.subr.bf16.mxu0 0
  %1804 = vmatpush2.bf16.msra.mxu0 0
  %1805 = vmatprep.subr.bf16.mxu0 0
  %1806 = vmatpush2.bf16.msra.mxu0 0
  %1807 = vmatprep.subr.bf16.mxu0 0
  %1808 = vmatpush2.bf16.msra.mxu0 0
  %1809 = vmatprep.subr.bf16.mxu0 0
  %1810 = vmatpush2.bf16.msra.mxu0 0
  %1811 = vmatprep.subr.bf16.mxu0 0
  %1812 = vmatpush2.bf16.msra.mxu0 0
  %1813 = vmatprep.subr.bf16.mxu0 0
  %1814 = vmatpush2.bf16.msra.mxu0 0
  %1815 = vmatprep.mubr.bf16.mxu0 0
  %1816 = vmatmul.mubr.bf16.gmra.mxu0 %v1778
  %v1817 = vpop.f32.mrf.mxu0
  %v1818 = vadd.f32 0.0, %v1817
  %v1819 = vpop.f32.mrf.mxu0
  %v1820 = vpop.f32.mrf.mxu0
  %v1821 = vpop.f32.mrf.mxu0
  %1822 = vdwg.mxu0
  %1823 = vrot.lane.b32.xlu0 %v328, 48
  %v1824 = vpop.permute.xlu0 %1823
  %v1826 = vsel %vm604, %v1580, 0
  %v1829 = vsel %vm608, %v1824, 0
  %1831 = vmatprep.subr.bf16.mxu0 0
  %1832 = vmatpush1.bf16.msra.mxu0 0
  %1833 = vmatprep.subr.bf16.mxu0 0
  %1834 = vmatpush1.bf16.msra.mxu0 0
  %1835 = vmatprep.subr.bf16.mxu0 0
  %1836 = vmatpush1.bf16.msra.mxu0 0
  %1837 = vmatprep.subr.bf16.mxu0 0
  %1838 = vmatpush1.bf16.msra.mxu0 0
  %1839 = vmatprep.subr.bf16.mxu0 0
  %1840 = vmatpush1.bf16.msra.mxu0 0
  %1841 = vmatprep.subr.bf16.mxu0 0
  %1842 = vmatpush1.bf16.msra.mxu0 0
  %1843 = vmatprep.subr.bf16.mxu0 0
  %1844 = vmatpush1.bf16.msra.mxu0 0
  %1845 = vmatprep.subr.bf16.mxu0 0
  %1846 = vmatpush1.bf16.msra.mxu0 %v1829
  %1847 = vmatprep.subr.bf16.mxu0 0
  %1848 = vmatpush2.bf16.msra.mxu0 0
  %1849 = vmatprep.subr.bf16.mxu0 0
  %1850 = vmatpush2.bf16.msra.mxu0 0
  %1851 = vmatprep.subr.bf16.mxu0 0
  %1852 = vmatpush2.bf16.msra.mxu0 0
  %1853 = vmatprep.subr.bf16.mxu0 0
  %1854 = vmatpush2.bf16.msra.mxu0 0
  %1855 = vmatprep.subr.bf16.mxu0 0
  %1856 = vmatpush2.bf16.msra.mxu0 0
  %1857 = vmatprep.subr.bf16.mxu0 0
  %1858 = vmatpush2.bf16.msra.mxu0 0
  %1859 = vmatprep.subr.bf16.mxu0 0
  %1860 = vmatpush2.bf16.msra.mxu0 0
  %1861 = vmatprep.subr.bf16.mxu0 0
  %1862 = vmatpush2.bf16.msra.mxu0 0
  %1863 = vmatprep.mubr.bf16.mxu0 0
  %1864 = vmatmul.mubr.bf16.gmra.mxu0 %v1826
  %v1865 = vpop.f32.mrf.mxu0
  %v1866 = vadd.f32 0.0, %v1865
  %v1867 = vpop.f32.mrf.mxu0
  %v1868 = vpop.f32.mrf.mxu0
  %v1869 = vpop.f32.mrf.mxu0
  %1870 = vdwg.mxu0
  %1871 = vrot.lane.b32.xlu0 %v384, 48
  %v1872 = vpop.permute.xlu0 %1871
  %v1874 = vsel %vm604, %v1581, 0
  %v1877 = vsel %vm608, %v1872, 0
  %1879 = vmatprep.subr.bf16.mxu0 0
  %1880 = vmatpush1.bf16.msra.mxu0 0
  %1881 = vmatprep.subr.bf16.mxu0 0
  %1882 = vmatpush1.bf16.msra.mxu0 0
  %1883 = vmatprep.subr.bf16.mxu0 0
  %1884 = vmatpush1.bf16.msra.mxu0 0
  %1885 = vmatprep.subr.bf16.mxu0 0
  %1886 = vmatpush1.bf16.msra.mxu0 0
  %1887 = vmatprep.subr.bf16.mxu0 0
  %1888 = vmatpush1.bf16.msra.mxu0 0
  %1889 = vmatprep.subr.bf16.mxu0 0
  %1890 = vmatpush1.bf16.msra.mxu0 0
  %1891 = vmatprep.subr.bf16.mxu0 0
  %1892 = vmatpush1.bf16.msra.mxu0 0
  %1893 = vmatprep.subr.bf16.mxu0 0
  %1894 = vmatpush1.bf16.msra.mxu0 %v1877
  %1895 = vmatprep.subr.bf16.mxu0 0
  %1896 = vmatpush2.bf16.msra.mxu0 0
  %1897 = vmatprep.subr.bf16.mxu0 0
  %1898 = vmatpush2.bf16.msra.mxu0 0
  %1899 = vmatprep.subr.bf16.mxu0 0
  %1900 = vmatpush2.bf16.msra.mxu0 0
  %1901 = vmatprep.subr.bf16.mxu0 0
  %1902 = vmatpush2.bf16.msra.mxu0 0
  %1903 = vmatprep.subr.bf16.mxu0 0
  %1904 = vmatpush2.bf16.msra.mxu0 0
  %1905 = vmatprep.subr.bf16.mxu0 0
  %1906 = vmatpush2.bf16.msra.mxu0 0
  %1907 = vmatprep.subr.bf16.mxu0 0
  %1908 = vmatpush2.bf16.msra.mxu0 0
  %1909 = vmatprep.subr.bf16.mxu0 0
  %1910 = vmatpush2.bf16.msra.mxu0 0
  %1911 = vmatprep.mubr.bf16.mxu0 0
  %1912 = vmatmul.mubr.bf16.gmra.mxu0 %v1874
  %v1913 = vpop.f32.mrf.mxu0
  %v1914 = vadd.f32 0.0, %v1913
  %v1915 = vpop.f32.mrf.mxu0
  %v1916 = vpop.f32.mrf.mxu0
  %v1917 = vpop.f32.mrf.mxu0
  %1918 = vdwg.mxu0
  %1919 = vrot.lane.b32.xlu0 %v440, 48
  %v1920 = vpop.permute.xlu0 %1919
  %v1922 = vsel %vm604, %v1582, 0
  %v1925 = vsel %vm608, %v1920, 0
  %1927 = vmatprep.subr.bf16.mxu0 0
  %1928 = vmatpush1.bf16.msra.mxu0 0
  %1929 = vmatprep.subr.bf16.mxu0 0
  %1930 = vmatpush1.bf16.msra.mxu0 0
  %1931 = vmatprep.subr.bf16.mxu0 0
  %1932 = vmatpush1.bf16.msra.mxu0 0
  %1933 = vmatprep.subr.bf16.mxu0 0
  %1934 = vmatpush1.bf16.msra.mxu0 0
  %1935 = vmatprep.subr.bf16.mxu0 0
  %1936 = vmatpush1.bf16.msra.mxu0 0
  %1937 = vmatprep.subr.bf16.mxu0 0
  %1938 = vmatpush1.bf16.msra.mxu0 0
  %1939 = vmatprep.subr.bf16.mxu0 0
  %1940 = vmatpush1.bf16.msra.mxu0 0
  %1941 = vmatprep.subr.bf16.mxu0 0
  %1942 = vmatpush1.bf16.msra.mxu0 %v1925
  %1943 = vmatprep.subr.bf16.mxu0 0
  %1944 = vmatpush2.bf16.msra.mxu0 0
  %1945 = vmatprep.subr.bf16.mxu0 0
  %1946 = vmatpush2.bf16.msra.mxu0 0
  %1947 = vmatprep.subr.bf16.mxu0 0
  %1948 = vmatpush2.bf16.msra.mxu0 0
  %1949 = vmatprep.subr.bf16.mxu0 0
  %1950 = vmatpush2.bf16.msra.mxu0 0
  %1951 = vmatprep.subr.bf16.mxu0 0
  %1952 = vmatpush2.bf16.msra.mxu0 0
  %1953 = vmatprep.subr.bf16.mxu0 0
  %1954 = vmatpush2.bf16.msra.mxu0 0
  %1955 = vmatprep.subr.bf16.mxu0 0
  %1956 = vmatpush2.bf16.msra.mxu0 0
  %1957 = vmatprep.subr.bf16.mxu0 0
  %1958 = vmatpush2.bf16.msra.mxu0 0
  %1959 = vmatprep.mubr.bf16.mxu0 0
  %1960 = vmatmul.mubr.bf16.gmra.mxu0 %v1922
  %v1961 = vpop.f32.mrf.mxu0
  %v1962 = vadd.f32 0.0, %v1961
  %v1963 = vpop.f32.mrf.mxu0
  %v1964 = vpop.f32.mrf.mxu0
  %v1965 = vpop.f32.mrf.mxu0
  %1966 = vdwg.mxu0
  %v1975 = vcombine.low %v1626, %v1674
  %v1976 = vcombine.low %v1722, %v1770
  %v1977 = vcombine.low %v1818, %v1866
  %v1978 = vcombine.low %v1914, %v1962
  %v1983 = vpack.c.bf16 %v1976, %v1975
  %v1984 = vpack.c.bf16 %v1978, %v1977
  %v1987 = vunpack.c.l.b16 %v30
  %v1988 = vunpack.c.l.b16 %v31
  %v1989 = vpack.c.b16 %v1988, %v1987
  %v1992 = vsel %vm50, %v1983, 0
  %v1995 = vsel %vm50, %v1984, 0
  %1997 = vmatprep.subr.bf16.mxu0 0
  %1998 = vmatpush1.bf16.msra.mxu0 0
  %1999 = vmatprep.subr.bf16.mxu0 0
  %2000 = vmatpush1.bf16.msra.mxu0 0
  %2001 = vmatprep.subr.bf16.mxu0 0
  %2002 = vmatpush1.bf16.msra.mxu0 0
  %2003 = vmatprep.subr.bf16.mxu0 0
  %2004 = vmatpush1.bf16.msra.mxu0 0
  %2005 = vmatprep.subr.bf16.mxu0 0
  %2006 = vmatpush1.bf16.msra.mxu0 0
  %2007 = vmatprep.subr.bf16.mxu0 0
  %2008 = vmatpush1.bf16.msra.mxu0 0
  %2009 = vmatprep.subr.bf16.mxu0 0
  %2010 = vmatpush1.bf16.msra.mxu0 0
  %2011 = vmatprep.subr.bf16.mxu0 0
  %2012 = vmatpush1.bf16.msra.mxu0 %v1989
  %2013 = vmatprep.subr.bf16.mxu0 0
  %2014 = vmatpush2.bf16.msra.mxu0 0
  %2015 = vmatprep.subr.bf16.mxu0 0
  %2016 = vmatpush2.bf16.msra.mxu0 0
  %2017 = vmatprep.subr.bf16.mxu0 0
  %2018 = vmatpush2.bf16.msra.mxu0 0
  %2019 = vmatprep.subr.bf16.mxu0 0
  %2020 = vmatpush2.bf16.msra.mxu0 0
  %2021 = vmatprep.subr.bf16.mxu0 0
  %2022 = vmatpush2.bf16.msra.mxu0 0
  %2023 = vmatprep.subr.bf16.mxu0 0
  %2024 = vmatpush2.bf16.msra.mxu0 0
  %2025 = vmatprep.subr.bf16.mxu0 0
  %2026 = vmatpush2.bf16.msra.mxu0 0
  %2027 = vmatprep.subr.bf16.mxu0 0
  %2028 = vmatpush2.bf16.msra.mxu0 0
  %2029 = vmatprep.mubr.bf16.mxu0 0
  %2030 = vmatmul.mubr.bf16.gmra.mxu0 %v1992
  %v2031 = vpop.f32.mrf.mxu0
  %v2032 = vadd.f32 0.0, %v2031
  %v2033 = vpop.f32.mrf.mxu0
  %v2034 = vpop.f32.mrf.mxu0
  %v2035 = vadd.f32 0.0, %v2034
  %v2036 = vpop.f32.mrf.mxu0
  %2037 = vmatprep.mubr.bf16.mxu0 0
  %2038 = vmatmul.mubr.bf16.gmra.mxu0 %v1995
  %v2039 = vpop.f32.mrf.mxu0
  %v2040 = vadd.f32 0.0, %v2039
  %v2041 = vpop.f32.mrf.mxu0
  %v2042 = vpop.f32.mrf.mxu0
  %v2043 = vadd.f32 0.0, %v2042
  %v2044 = vpop.f32.mrf.mxu0
  %2045 = vdwg.mxu0
  %v2046 = vadd.f32 %v1067, %v2032
  %v2047 = vadd.f32 %v1068, %v2035
  %v2048 = vadd.f32 %v1069, %v2040
  %v2049 = vadd.f32 %v1070, %v2043
  %v2054 = vcombine.high %v2046, %v2046
  %v2055 = vcombine.high %v2047, %v2047
  %v2056 = vcombine.high %v2048, %v2048
  %v2057 = vcombine.high %v2049, %v2049
  %v2062 = vpack.c.bf16 %v2046, %v2046
  %v2063 = vpack.c.bf16 %v2054, %v2054
  %v2064 = vpack.c.bf16 %v2047, %v2047
  %v2065 = vpack.c.bf16 %v2055, %v2055
  %v2066 = vpack.c.bf16 %v2048, %v2048
  %v2067 = vpack.c.bf16 %v2056, %v2056
  %v2068 = vpack.c.bf16 %v2049, %v2049
  %v2069 = vpack.c.bf16 %v2057, %v2057
  %vm2070 = vcmask 254976
  %2071 = vst.msk [vmem:[%s4] sm:$0x3] %vm2070, %v2062
  %2072 = vst.msk [vmem:[%s4 + $0x2] sm:$0x3] %vm2070, %v2063
  %2073 = vst.msk [vmem:[%s4 + $0x4] sm:$0x3] %vm2070, %v2064
  %2074 = vst.msk [vmem:[%s4 + $0x6] sm:$0x3] %vm2070, %v2065
  %2075 = vst.msk [vmem:[%s4 + $0x8] sm:$0x3] %vm2070, %v2066
  %2076 = vst.msk [vmem:[%s4 + $0xa] sm:$0x3] %vm2070, %v2067
  %2077 = vst.msk [vmem:[%s4 + $0xc] sm:$0x3] %vm2070, %v2068
  %2078 = vst.msk [vmem:[%s4 + $0xe] sm:$0x3] %vm2070, %v2069
  // Predicated region
  $region18: #{_lambda_.32} parent=0 // pred_check
    _
  $region19: #{_lambda_.32} parent=0 // pred_check_branch
    %2080 = sbr.rel (0) target = $region21
  $region20: #{_lambda_.32} parent=0 // pred_region
    _
  $region21: #{_lambda_.32} parent=0 // pred_fallthru
    _
  // Predicated region
  $region22: #{_lambda_.32} parent=0 // pred_check
    _
  $region23: #{_lambda_.32} parent=0 // pred_check_branch
    %2082 = sbr.rel (0) target = $region25
  $region24: #{_lambda_.32} parent=0 // pred_region
    _
  $region25: #{_lambda_.32} parent=0 // pred_fallthru
    _

// kernel: _lambda_.37
$region0: #{_lambda_.37}
  #allocation0 [shape = 'u32[]', space=smem, size = 0x4, offset = 0x4, fixed_abs, tag = 'smem constant byte address 0x4 - core index']
  #allocation1 [shape = 'u32[144,128]{1,0:T(1,128)}', space=vmem, size = 0x12000, scoped, tag = 'internal scratch']
  %s0 = inlined_call_operand.vmem [shape: bf16[8,128], index: 0, kind: input, shape index: {}]
  %s1 = inlined_call_operand.vmem [shape: f32[1,128], index: 1, kind: input, shape index: {}]
  %s2 = inlined_call_operand.vmem [shape: f32[1,128], index: 2, kind: input, shape index: {}]
  %s3 = inlined_call_operand.vmem [shape: bf16[128,64], index: 3, kind: input, shape index: {}]
  %s4 = inlined_call_operand.vmem [shape: f32[1,64], index: 4, kind: input, shape index: {}]
  %s5 = inlined_call_operand.vmem [shape: bf16[8,64], index: 5, kind: output, shape index: {}]
  %s6 = sld [smem:[#allocation0]]
  $region30: #{_lambda_.37} parent=0
    _
  %s8 = ssub.s32 1, %s6
  %s9 = scalar_select 0, %s8, %s6
  // Predicated region
  $region2: #{_lambda_.37} parent=0 // pred_check
    _
  $region3: #{_lambda_.37} parent=0 // pred_check_branch
    %11 = sbr.rel (0) target = $region5
  $region4: #{_lambda_.37} parent=0 // pred_region
    _
  $region5: #{_lambda_.37} parent=0 // pred_fallthru
    _
  // Predicated region
  $region6: #{_lambda_.37} parent=0 // pred_check
    _
  $region7: #{_lambda_.37} parent=0 // pred_check_branch
    %13 = sbr.rel (0) target = $region9
  $region8: #{_lambda_.37} parent=0 // pred_region
    _
  $region9: #{_lambda_.37} parent=0 // pred_fallthru
    _
  // Predicated region
  $region10: #{_lambda_.37} parent=0 // pred_check
    _
  $region11: #{_lambda_.37} parent=0 // pred_check_branch
    %15 = sbr.rel (0) target = $region13
  $region12: #{_lambda_.37} parent=0 // pred_region
    _
  $region13: #{_lambda_.37} parent=0 // pred_fallthru
    _
  // Predicated region
  $region14: #{_lambda_.37} parent=0 // pred_check
    _
  $region15: #{_lambda_.37} parent=0 // pred_check_branch
    %17 = sbr.rel (0) target = $region17
  $region16: #{_lambda_.37} parent=0 // pred_region
    _
  $region17: #{_lambda_.37} parent=0 // pred_fallthru
    _
  // Predicated region
  $region18: #{_lambda_.37} parent=0 // pred_check
    _
  $region19: #{_lambda_.37} parent=0 // pred_check_branch
    %19 = sbr.rel (0) target = $region21
  $region20: #{_lambda_.37} parent=0 // pred_region
    _
  $region21: #{_lambda_.37} parent=0 // pred_fallthru
    _
  %v21 = vld [vmem:[%s0] sm:$0xf]
  %v22 = vunpack.c.l.bf16 %v21
  %v23 = vld [vmem:[%s1] sm:$0x1]
  %v24 = vld [vmem:[%s2] sm:$0x1]
  %25 = vadd.xlane.f32.xlu0 %v22
  %v26 = vpop.xlane.xlu0 %25
  %v27 = vrcp.pop 128.0
  %v28 = vmul.f32 %v26, %v27
  %v29 = vsub.f32 %v22, %v28
  %v30 = vmul.f32 %v29, %v29
  %31 = vadd.xlane.f32.xlu0 %v30
  %v32 = vpop.xlane.xlu0 %31
  %v33 = vmul.f32 %v32, %v27
  %v34 = vadd.f32 %v33, 1e-05
  %v35 = vrsqrt.pop %v34
  %v36 = vmul.f32 %v29, %v35
  %v38 = vlaneseq
  %v39 = vshrl.u32 %v38, 7
  %v40 = vsub.s32 0, %v39
  %v41 = vrot.slane %v23, %v40
  %v43 = vmul.f32 %v36, %v41
  %v45 = vlaneseq
  %v46 = vshrl.u32 %v45, 7
  %v47 = vsub.s32 0, %v46
  %v48 = vrot.slane %v24, %v47
  %v50 = vadd.f32 %v43, %v48
  %v51 = vpack.c.bf16 %v50, %v50
  %v52 = vld [vmem:[%s3] sm:$0xf]
  %v53 = vld [vmem:[%s3 + $0x4] sm:$0xf]
  %v54 = vld [vmem:[%s3 + $0x8] sm:$0xf]
  %v55 = vld [vmem:[%s3 + $0xc] sm:$0xf]
  %v56 = vld [vmem:[%s3 + $0x10] sm:$0xf]
  %v57 = vld [vmem:[%s3 + $0x14] sm:$0xf]
  %v58 = vld [vmem:[%s3 + $0x18] sm:$0xf]
  %v59 = vld [vmem:[%s3 + $0x1c] sm:$0xf]
  %v60 = vld [vmem:[%s3 + $0x20] sm:$0xf]
  %v61 = vld [vmem:[%s3 + $0x24] sm:$0xf]
  %v62 = vld [vmem:[%s3 + $0x28] sm:$0xf]
  %v63 = vld [vmem:[%s3 + $0x2c] sm:$0xf]
  %v64 = vld [vmem:[%s3 + $0x30] sm:$0xf]
  %v65 = vld [vmem:[%s3 + $0x34] sm:$0xf]
  %v66 = vld [vmem:[%s3 + $0x38] sm:$0xf]
  %v67 = vld [vmem:[%s3 + $0x3c] sm:$0xf]
  %v68 = vld [vmem:[%s4] sm:$0x1]
  %v70 = vlaneseq
  %v71 = vshrl.u32 %v70, 7
  %v72 = vsub.s32 0, %v71
  %v73 = vrot.slane %v68, %v72
  %v91 = vunpack.c.l.b16 %v52
  %v92 = vunpack.c.l.b16 %v53
  %v93 = vunpack.c.l.b16 %v54
  %v94 = vunpack.c.l.b16 %v55
  %v95 = vunpack.c.l.b16 %v56
  %v96 = vunpack.c.l.b16 %v57
  %v97 = vunpack.c.l.b16 %v58
  %v98 = vunpack.c.l.b16 %v59
  %v99 = vunpack.c.l.b16 %v60
  %v100 = vunpack.c.l.b16 %v61
  %v101 = vunpack.c.l.b16 %v62
  %v102 = vunpack.c.l.b16 %v63
  %v103 = vunpack.c.l.b16 %v64
  %v104 = vunpack.c.l.b16 %v65
  %v105 = vunpack.c.l.b16 %v66
  %v106 = vunpack.c.l.b16 %v67
  %v107 = vpack.c.b16 %v92, %v91
  %v108 = vpack.c.b16 %v94, %v93
  %v109 = vpack.c.b16 %v96, %v95
  %v110 = vpack.c.b16 %v98, %v97
  %v111 = vpack.c.b16 %v100, %v99
  %v112 = vpack.c.b16 %v102, %v101
  %v113 = vpack.c.b16 %v104, %v103
  %v114 = vpack.c.b16 %v106, %v105
  %123 = vmatprep.subr.bf16.mxu0 0
  %124 = vmatpush1.bf16.msra.mxu0 %v114
  %125 = vmatprep.subr.bf16.mxu0 0
  %126 = vmatpush1.bf16.msra.mxu0 %v113
  %127 = vmatprep.subr.bf16.mxu0 0
  %128 = vmatpush1.bf16.msra.mxu0 %v112
  %129 = vmatprep.subr.bf16.mxu0 0
  %130 = vmatpush1.bf16.msra.mxu0 %v111
  %131 = vmatprep.subr.bf16.mxu0 0
  %132 = vmatpush1.bf16.msra.mxu0 %v110
  %133 = vmatprep.subr.bf16.mxu0 0
  %134 = vmatpush1.bf16.msra.mxu0 %v109
  %135 = vmatprep.subr.bf16.mxu0 0
  %136 = vmatpush1.bf16.msra.mxu0 %v108
  %137 = vmatprep.subr.bf16.mxu0 0
  %138 = vmatpush1.bf16.msra.mxu0 %v107
  %139 = vmatprep.subr.bf16.mxu0 0
  %140 = vmatpush2.bf16.msra.mxu0 0
  %141 = vmatprep.subr.bf16.mxu0 0
  %142 = vmatpush2.bf16.msra.mxu0 0
  %143 = vmatprep.subr.bf16.mxu0 0
  %144 = vmatpush2.bf16.msra.mxu0 0
  %145 = vmatprep.subr.bf16.mxu0 0
  %146 = vmatpush2.bf16.msra.mxu0 0
  %147 = vmatprep.subr.bf16.mxu0 0
  %148 = vmatpush2.bf16.msra.mxu0 0
  %149 = vmatprep.subr.bf16.mxu0 0
  %150 = vmatpush2.bf16.msra.mxu0 0
  %151 = vmatprep.subr.bf16.mxu0 0
  %152 = vmatpush2.bf16.msra.mxu0 0
  %153 = vmatprep.subr.bf16.mxu0 0
  %154 = vmatpush2.bf16.msra.mxu0 0
  %155 = vmatprep.mubr.bf16.mxu0 0
  %156 = vmatmul.mubr.bf16.gmra.mxu0 %v51
  %v157 = vpop.f32.mrf.mxu0
  %v158 = vadd.f32 %v73, %v157
  %v159 = vpop.f32.mrf.mxu0
  %v160 = vpop.f32.mrf.mxu0
  %v161 = vpop.f32.mrf.mxu0
  %162 = vdwg.mxu0
  %v163 = vpack.c.bf16 %v158, %v158
  %vm164 = vcmask 519168
  %165 = vst.msk [vmem:[%s5] sm:$0xf] %vm164, %v163
  // Predicated region
  $region22: #{_lambda_.37} parent=0 // pred_check
    _
  $region23: #{_lambda_.37} parent=0 // pred_check_branch
    %167 = sbr.rel (0) target = $region25
  $region24: #{_lambda_.37} parent=0 // pred_region
    _
  $region25: #{_lambda_.37} parent=0 // pred_fallthru
    _
  // Predicated region
  $region26: #{_lambda_.37} parent=0 // pred_check
    _
  $region27: #{_lambda_.37} parent=0 // pred_check_branch
    %169 = sbr.rel (0) target = $region29
  $region28: #{_lambda_.37} parent=0 // pred_region
    _
  $region29: #{_lambda_.37} parent=0 // pred_fallthru
    _

// kernel: _lambda_.38
$region0: #{_lambda_.38}
  #allocation0 [shape = 'u32[]', space=smem, size = 0x4, offset = 0x4, fixed_abs, tag = 'smem constant byte address 0x4 - core index']
  #allocation1 [shape = 'u32[144,128]{1,0:T(1,128)}', space=vmem, size = 0x12000, scoped, tag = 'internal scratch']
  %s0 = inlined_call_operand.vmem [shape: bf16[8,64], index: 0, kind: input, shape index: {}]
  %s1 = inlined_call_operand.vmem [shape: f32[1,64], index: 1, kind: input, shape index: {}]
  %s2 = inlined_call_operand.vmem [shape: f32[1,64], index: 2, kind: input, shape index: {}]
  %s3 = inlined_call_operand.vmem [shape: bf16[64,192], index: 3, kind: input, shape index: {}]
  %s4 = inlined_call_operand.vmem [shape: f32[1,192], index: 4, kind: input, shape index: {}]
  %s5 = inlined_call_operand.vmem [shape: bf16[8,192], index: 5, kind: output, shape index: {}]
  %s6 = sld [smem:[#allocation0]]
  $region30: #{_lambda_.38} parent=0
    _
  %s8 = ssub.s32 1, %s6
  %s9 = scalar_select 0, %s8, %s6
  // Predicated region
  $region2: #{_lambda_.38} parent=0 // pred_check
    _
  $region3: #{_lambda_.38} parent=0 // pred_check_branch
    %11 = sbr.rel (0) target = $region5
  $region4: #{_lambda_.38} parent=0 // pred_region
    _
  $region5: #{_lambda_.38} parent=0 // pred_fallthru
    _
  // Predicated region
  $region6: #{_lambda_.38} parent=0 // pred_check
    _
  $region7: #{_lambda_.38} parent=0 // pred_check_branch
    %13 = sbr.rel (0) target = $region9
  $region8: #{_lambda_.38} parent=0 // pred_region
    _
  $region9: #{_lambda_.38} parent=0 // pred_fallthru
    _
  // Predicated region
  $region10: #{_lambda_.38} parent=0 // pred_check
    _
  $region11: #{_lambda_.38} parent=0 // pred_check_branch
    %15 = sbr.rel (0) target = $region13
  $region12: #{_lambda_.38} parent=0 // pred_region
    _
  $region13: #{_lambda_.38} parent=0 // pred_fallthru
    _
  // Predicated region
  $region14: #{_lambda_.38} parent=0 // pred_check
    _
  $region15: #{_lambda_.38} parent=0 // pred_check_branch
    %17 = sbr.rel (0) target = $region17
  $region16: #{_lambda_.38} parent=0 // pred_region
    _
  $region17: #{_lambda_.38} parent=0 // pred_fallthru
    _
  // Predicated region
  $region18: #{_lambda_.38} parent=0 // pred_check
    _
  $region19: #{_lambda_.38} parent=0 // pred_check_branch
    %19 = sbr.rel (0) target = $region21
  $region20: #{_lambda_.38} parent=0 // pred_region
    _
  $region21: #{_lambda_.38} parent=0 // pred_fallthru
    _
  %v21 = vld [vmem:[%s0] sm:$0xf]
  %v22 = vunpack.c.l.bf16 %v21
  %v23 = vld [vmem:[%s1] sm:$0x1]
  %v24 = vld [vmem:[%s2] sm:$0x1]
  %vm25 = vcmask 523264
  %v26 = vsel %vm25, %v22, 0.0
  %27 = vadd.xlane.f32.xlu0 %v26
  %v28 = vpop.xlane.xlu0 %27
  %v29 = vrcp.pop 64.0
  %v30 = vmul.f32 %v28, %v29
  %v31 = vsub.f32 %v22, %v30
  %v32 = vmul.f32 %v31, %v31
  %v33 = vsel %vm25, %v32, 0.0
  %34 = vadd.xlane.f32.xlu0 %v33
  %v35 = vpop.xlane.xlu0 %34
  %v36 = vmul.f32 %v35, %v29
  %v37 = vadd.f32 %v36, 1e-05
  %v38 = vrsqrt.pop %v37
  %v39 = vmul.f32 %v31, %v38
  %v41 = vlaneseq
  %v42 = vshrl.u32 %v41, 7
  %v43 = vsub.s32 0, %v42
  %v44 = vrot.slane %v23, %v43
  %v46 = vmul.f32 %v39, %v44
  %v48 = vlaneseq
  %v49 = vshrl.u32 %v48, 7
  %v50 = vsub.s32 0, %v49
  %v51 = vrot.slane %v24, %v50
  %v53 = vadd.f32 %v46, %v51
  %v54 = vpack.c.bf16 %v53, %v53
  %v55 = vld [vmem:[%s3] sm:$0xff]
  %v56 = vld [vmem:[%s3 + $0x8] sm:$0xff]
  %v57 = vld [vmem:[%s3 + $0x10] sm:$0xff]
  %v58 = vld [vmem:[%s3 + $0x18] sm:$0xff]
  %v59 = vld [vmem:[%s3 + $0x20] sm:$0xff]
  %v60 = vld [vmem:[%s3 + $0x28] sm:$0xff]
  %v61 = vld [vmem:[%s3 + $0x30] sm:$0xff]
  %v62 = vld [vmem:[%s3 + $0x38] sm:$0xff]
  %v63 = vld [vmem:[%s4] sm:$0x3]
  %v65 = vlaneseq
  %v66 = vshrl.u32 %v65, 7
  %v67 = vsub.s32 0, %v66
  %v68 = vrot.slane %v63, %v67
  %v69 = vlaneseq
  %v70 = vshrl.u32 %v69, 7
  %v71 = vsub.s32 1, %v70
  %v72 = vrot.slane %v63, %v71
  %v83 = vunpack.c.l.b16 %v55
  %v84 = vunpack.c.h.b16 %v55
  %v85 = vunpack.c.l.b16 %v56
  %v86 = vunpack.c.h.b16 %v56
  %v87 = vunpack.c.l.b16 %v57
  %v88 = vunpack.c.h.b16 %v57
  %v89 = vunpack.c.l.b16 %v58
  %v90 = vunpack.c.h.b16 %v58
  %v91 = vunpack.c.l.b16 %v59
  %v92 = vunpack.c.h.b16 %v59
  %v93 = vunpack.c.l.b16 %v60
  %v94 = vunpack.c.h.b16 %v60
  %v95 = vunpack.c.l.b16 %v61
  %v96 = vunpack.c.h.b16 %v61
  %v97 = vunpack.c.l.b16 %v62
  %v98 = vunpack.c.h.b16 %v62
  %v99 = vpack.c.b16 %v85, %v83
  %v100 = vpack.c.b16 %v86, %v84
  %v101 = vpack.c.b16 %v89, %v87
  %v102 = vpack.c.b16 %v90, %v88
  %v103 = vpack.c.b16 %v93, %v91
  %v104 = vpack.c.b16 %v94, %v92
  %v105 = vpack.c.b16 %v97, %v95
  %v106 = vpack.c.b16 %v98, %v96
  %v116 = vsel %vm25, %v54, 0
  %118 = vmatprep.subr.bf16.mxu0 0
  %119 = vmatpush1.bf16.msra.mxu0 0
  %120 = vmatprep.subr.bf16.mxu0 0
  %121 = vmatpush1.bf16.msra.mxu0 0
  %122 = vmatprep.subr.bf16.mxu0 0
  %123 = vmatpush1.bf16.msra.mxu0 0
  %124 = vmatprep.subr.bf16.mxu0 0
  %125 = vmatpush1.bf16.msra.mxu0 0
  %126 = vmatprep.subr.bf16.mxu0 %v106
  %127 = vmatpush1.bf16.msra.mxu0 %v105
  %128 = vmatprep.subr.bf16.mxu0 %v104
  %129 = vmatpush1.bf16.msra.mxu0 %v103
  %130 = vmatprep.subr.bf16.mxu0 %v102
  %131 = vmatpush1.bf16.msra.mxu0 %v101
  %132 = vmatprep.subr.bf16.mxu0 %v100
  %133 = vmatpush1.bf16.msra.mxu0 %v99
  %134 = vmatprep.subr.bf16.mxu0 0
  %135 = vmatpush2.bf16.msra.mxu0 0
  %136 = vmatprep.subr.bf16.mxu0 0
  %137 = vmatpush2.bf16.msra.mxu0 0
  %138 = vmatprep.subr.bf16.mxu0 0
  %139 = vmatpush2.bf16.msra.mxu0 0
  %140 = vmatprep.subr.bf16.mxu0 0
  %141 = vmatpush2.bf16.msra.mxu0 0
  %142 = vmatprep.subr.bf16.mxu0 0
  %143 = vmatpush2.bf16.msra.mxu0 0
  %144 = vmatprep.subr.bf16.mxu0 0
  %145 = vmatpush2.bf16.msra.mxu0 0
  %146 = vmatprep.subr.bf16.mxu0 0
  %147 = vmatpush2.bf16.msra.mxu0 0
  %148 = vmatprep.subr.bf16.mxu0 0
  %149 = vmatpush2.bf16.msra.mxu0 0
  %150 = vmatprep.mubr.bf16.mxu0 0
  %151 = vmatmul.mubr.bf16.gmra.mxu0 %v116
  %v152 = vpop.f32.mrf.mxu0
  %v153 = vadd.f32 %v68, %v152
  %v154 = vpop.f32.mrf.mxu0
  %v155 = vadd.f32 %v72, %v154
  %v156 = vpop.f32.mrf.mxu0
  %v157 = vpop.f32.mrf.mxu0
  %158 = vdwg.mxu0
  %v159 = vpack.c.bf16 %v153, %v153
  %v160 = vpack.c.bf16 %v155, %v155
  %v163 = vunpack.c.l.b16 %v159
  %v164 = vunpack.c.l.b16 %v160
  %v165 = vpack.c.b16 %v164, %v163
  %vm167 = vcmask 1043456
  %vm168 = vcmask 523268
  %vm169 = vmor %vm168, %vm167
  %170 = vst.msk [vmem:[%s5] sm:$0xff] %vm169, %v165
  // Predicated region
  $region22: #{_lambda_.38} parent=0 // pred_check
    _
  $region23: #{_lambda_.38} parent=0 // pred_check_branch
    %172 = sbr.rel (0) target = $region25
  $region24: #{_lambda_.38} parent=0 // pred_region
    _
  $region25: #{_lambda_.38} parent=0 // pred_fallthru
    _
  // Predicated region
  $region26: #{_lambda_.38} parent=0 // pred_check
    _
  $region27: #{_lambda_.38} parent=0 // pred_check_branch
    %174 = sbr.rel (0) target = $region29
  $region28: #{_lambda_.38} parent=0 // pred_region
    _
  $region29: #{_lambda_.38} parent=0 // pred_fallthru
    _

// kernel: _lambda_.35
$region0: #{_lambda_.35}
  #allocation0 [shape = 'u32[]', space=smem, size = 0x4, offset = 0x4, fixed_abs, tag = 'smem constant byte address 0x4 - core index']
  #allocation1 [shape = 'u32[144,128]{1,0:T(1,128)}', space=vmem, size = 0x12000, scoped, tag = 'internal scratch']
  %s0 = inlined_call_operand.vmem [shape: bf16[4,2,4,96], index: 0, kind: input, shape index: {}]
  %s1 = inlined_call_operand.vmem [shape: f32[2,4,4], index: 1, kind: input, shape index: {}]
  %s2 = inlined_call_operand.vmem [shape: f32[4,4,4], index: 2, kind: input, shape index: {}]
  %s3 = inlined_call_operand.vmem [shape: bf16[32,32], index: 3, kind: input, shape index: {}]
  %s4 = inlined_call_operand.vmem [shape: f32[1,32], index: 4, kind: input, shape index: {}]
  %s5 = inlined_call_operand.vmem [shape: bf16[4,2,4,32], index: 5, kind: output, shape index: {}]
  %s6 = sld [smem:[#allocation0]]
  $region30: #{_lambda_.35} parent=0
    _
  %s8 = ssub.s32 1, %s6
  %s9 = scalar_select 0, %s8, %s6
  // Predicated region
  $region2: #{_lambda_.35} parent=0 // pred_check
    _
  $region3: #{_lambda_.35} parent=0 // pred_check_branch
    %11 = sbr.rel (0) target = $region5
  $region4: #{_lambda_.35} parent=0 // pred_region
    _
  $region5: #{_lambda_.35} parent=0 // pred_fallthru
    _
  // Predicated region
  $region6: #{_lambda_.35} parent=0 // pred_check
    _
  $region7: #{_lambda_.35} parent=0 // pred_check_branch
    %13 = sbr.rel (0) target = $region9
  $region8: #{_lambda_.35} parent=0 // pred_region
    _
  $region9: #{_lambda_.35} parent=0 // pred_fallthru
    _
  // Predicated region
  $region10: #{_lambda_.35} parent=0 // pred_check
    _
  $region11: #{_lambda_.35} parent=0 // pred_check_branch
    %15 = sbr.rel (0) target = $region13
  $region12: #{_lambda_.35} parent=0 // pred_region
    _
  $region13: #{_lambda_.35} parent=0 // pred_fallthru
    _
  // Predicated region
  $region14: #{_lambda_.35} parent=0 // pred_check
    _
  $region15: #{_lambda_.35} parent=0 // pred_check_branch
    %17 = sbr.rel (0) target = $region17
  $region16: #{_lambda_.35} parent=0 // pred_region
    _
  $region17: #{_lambda_.35} parent=0 // pred_fallthru
    _
  // Predicated region
  $region18: #{_lambda_.35} parent=0 // pred_check
    _
  $region19: #{_lambda_.35} parent=0 // pred_check_branch
    %19 = sbr.rel (0) target = $region21
  $region20: #{_lambda_.35} parent=0 // pred_region
    _
  $region21: #{_lambda_.35} parent=0 // pred_fallthru
    _
  %v21 = vld [vmem:[%s0] sm:$0x3]
  %v22 = vld [vmem:[%s0 + $0x2] sm:$0x3]
  %v23 = vld [vmem:[%s0 + $0x4] sm:$0x3]
  %v24 = vld [vmem:[%s0 + $0x6] sm:$0x3]
  %v25 = vld [vmem:[%s0 + $0x8] sm:$0x3]
  %v26 = vld [vmem:[%s0 + $0xa] sm:$0x3]
  %v27 = vld [vmem:[%s0 + $0xc] sm:$0x3]
  %v28 = vld [vmem:[%s0 + $0xe] sm:$0x3]
  %v29 = vld [vmem:[%s1] sm:$0xf]
  %v30 = vld [vmem:[%s1 + $0x4] sm:$0xf]
  %v31 = vld [vmem:[%s2] sm:$0xf]
  %v32 = vld [vmem:[%s2 + $0x4] sm:$0xf]
  %v33 = vld [vmem:[%s2 + $0x8] sm:$0xf]
  %v34 = vld [vmem:[%s2 + $0xc] sm:$0xf]
  %v35 = vld [vmem:[%s3] sm:$0xf]
  %v36 = vld [vmem:[%s3 + $0x4] sm:$0xf]
  %v37 = vld [vmem:[%s3 + $0x8] sm:$0xf]
  %v38 = vld [vmem:[%s3 + $0xc] sm:$0xf]
  %v39 = vld [vmem:[%s4] sm:$0x1]
  %v41 = vlaneseq
  %v42 = vshrl.u32 %v41, 7
  %v43 = vsub.s32 0, %v42
  %v44 = vrot.slane %v39, %v43
  %v46 = vadd.f32 %v44, 0.0
  %v49 = vunpack.c.l.s4 1983009808
  %v50 = vunpack.c.0.s8 %v49
  %v51 = vlaneseq
  %v52 = vshrl.u32 %v51, 7
  %v53 = vsub.s32 %v50, %v52
  %v54 = vrot.slane %v21, %v53
  %55 = vrot.lane.b32.xlu0 %v54, 96
  %v56 = vpop.permute.xlu0 %55
  %vm57 = vcmask 130048
  %v59 = vsel %vm57, %v21, 0
  %v62 = vsel %vm57, %v56, 0
  %64 = vmatprep.subr.bf16.mxu0 0
  %65 = vmatpush1.bf16.xpose.msra.mxu0 0
  %66 = vmatprep.subr.bf16.mxu0 0
  %67 = vmatpush1.bf16.xpose.msra.mxu0 0
  %68 = vmatprep.subr.bf16.mxu0 0
  %69 = vmatpush1.bf16.xpose.msra.mxu0 0
  %70 = vmatprep.subr.bf16.mxu0 0
  %71 = vmatpush1.bf16.xpose.msra.mxu0 0
  %72 = vmatprep.subr.bf16.mxu0 0
  %73 = vmatpush1.bf16.xpose.msra.mxu0 0
  %74 = vmatprep.subr.bf16.mxu0 0
  %75 = vmatpush1.bf16.xpose.msra.mxu0 0
  %76 = vmatprep.subr.bf16.mxu0 0
  %77 = vmatpush1.bf16.xpose.msra.mxu0 0
  %78 = vmatprep.subr.bf16.mxu0 0
  %79 = vmatpush1.bf16.xpose.msra.mxu0 %v62
  %80 = vmatprep.subr.bf16.mxu0 0
  %81 = vmatpush2.bf16.xpose.msra.mxu0 0
  %82 = vmatprep.subr.bf16.mxu0 0
  %83 = vmatpush2.bf16.xpose.msra.mxu0 0
  %84 = vmatprep.subr.bf16.mxu0 0
  %85 = vmatpush2.bf16.xpose.msra.mxu0 0
  %86 = vmatprep.subr.bf16.mxu0 0
  %87 = vmatpush2.bf16.xpose.msra.mxu0 0
  %88 = vmatprep.subr.bf16.mxu0 0
  %89 = vmatpush2.bf16.xpose.msra.mxu0 0
  %90 = vmatprep.subr.bf16.mxu0 0
  %91 = vmatpush2.bf16.xpose.msra.mxu0 0
  %92 = vmatprep.subr.bf16.mxu0 0
  %93 = vmatpush2.bf16.xpose.msra.mxu0 0
  %94 = vmatprep.subr.bf16.mxu0 0
  %95 = vmatpush2.bf16.xpose.msra.mxu0 0
  %96 = vmatprep.mubr.bf16.mxu0 0
  %97 = vmatmul.mubr.bf16.gmra.mxu0 %v59
  %v98 = vpop.f32.mrf.mxu0
  %v99 = vadd.f32 0.0, %v98
  %v100 = vpop.f32.mrf.mxu0
  %v101 = vpop.f32.mrf.mxu0
  %v102 = vpop.f32.mrf.mxu0
  %103 = vdwg.mxu0
  %v106 = vunpack.c.l.s4 1983009808
  %v107 = vunpack.c.0.s8 %v106
  %v108 = vlaneseq
  %v109 = vshrl.u32 %v108, 7
  %v110 = vsub.s32 %v107, %v109
  %v111 = vrot.slane %v22, %v110
  %112 = vrot.lane.b32.xlu0 %v111, 96
  %v113 = vpop.permute.xlu0 %112
  %v115 = vsel %vm57, %v22, 0
  %v118 = vsel %vm57, %v113, 0
  %120 = vmatprep.subr.bf16.mxu0 0
  %121 = vmatpush1.bf16.xpose.msra.mxu0 0
  %122 = vmatprep.subr.bf16.mxu0 0
  %123 = vmatpush1.bf16.xpose.msra.mxu0 0
  %124 = vmatprep.subr.bf16.mxu0 0
  %125 = vmatpush1.bf16.xpose.msra.mxu0 0
  %126 = vmatprep.subr.bf16.mxu0 0
  %127 = vmatpush1.bf16.xpose.msra.mxu0 0
  %128 = vmatprep.subr.bf16.mxu0 0
  %129 = vmatpush1.bf16.xpose.msra.mxu0 0
  %130 = vmatprep.subr.bf16.mxu0 0
  %131 = vmatpush1.bf16.xpose.msra.mxu0 0
  %132 = vmatprep.subr.bf16.mxu0 0
  %133 = vmatpush1.bf16.xpose.msra.mxu0 0
  %134 = vmatprep.subr.bf16.mxu0 0
  %135 = vmatpush1.bf16.xpose.msra.mxu0 %v118
  %136 = vmatprep.subr.bf16.mxu0 0
  %137 = vmatpush2.bf16.xpose.msra.mxu0 0
  %138 = vmatprep.subr.bf16.mxu0 0
  %139 = vmatpush2.bf16.xpose.msra.mxu0 0
  %140 = vmatprep.subr.bf16.mxu0 0
  %141 = vmatpush2.bf16.xpose.msra.mxu0 0
  %142 = vmatprep.subr.bf16.mxu0 0
  %143 = vmatpush2.bf16.xpose.msra.mxu0 0
  %144 = vmatprep.subr.bf16.mxu0 0
  %145 = vmatpush2.bf16.xpose.msra.mxu0 0
  %146 = vmatprep.subr.bf16.mxu0 0
  %147 = vmatpush2.bf16.xpose.msra.mxu0 0
  %148 = vmatprep.subr.bf16.mxu0 0
  %149 = vmatpush2.bf16.xpose.msra.mxu0 0
  %150 = vmatprep.subr.bf16.mxu0 0
  %151 = vmatpush2.bf16.xpose.msra.mxu0 0
  %152 = vmatprep.mubr.bf16.mxu0 0
  %153 = vmatmul.mubr.bf16.gmra.mxu0 %v115
  %v154 = vpop.f32.mrf.mxu0
  %v155 = vadd.f32 0.0, %v154
  %v156 = vpop.f32.mrf.mxu0
  %v157 = vpop.f32.mrf.mxu0
  %v158 = vpop.f32.mrf.mxu0
  %159 = vdwg.mxu0
  %v162 = vunpack.c.l.s4 1983009808
  %v163 = vunpack.c.0.s8 %v162
  %v164 = vlaneseq
  %v165 = vshrl.u32 %v164, 7
  %v166 = vsub.s32 %v163, %v165
  %v167 = vrot.slane %v23, %v166
  %168 = vrot.lane.b32.xlu0 %v167, 96
  %v169 = vpop.permute.xlu0 %168
  %v171 = vsel %vm57, %v23, 0
  %v174 = vsel %vm57, %v169, 0
  %176 = vmatprep.subr.bf16.mxu0 0
  %177 = vmatpush1.bf16.xpose.msra.mxu0 0
  %178 = vmatprep.subr.bf16.mxu0 0
  %179 = vmatpush1.bf16.xpose.msra.mxu0 0
  %180 = vmatprep.subr.bf16.mxu0 0
  %181 = vmatpush1.bf16.xpose.msra.mxu0 0
  %182 = vmatprep.subr.bf16.mxu0 0
  %183 = vmatpush1.bf16.xpose.msra.mxu0 0
  %184 = vmatprep.subr.bf16.mxu0 0
  %185 = vmatpush1.bf16.xpose.msra.mxu0 0
  %186 = vmatprep.subr.bf16.mxu0 0
  %187 = vmatpush1.bf16.xpose.msra.mxu0 0
  %188 = vmatprep.subr.bf16.mxu0 0
  %189 = vmatpush1.bf16.xpose.msra.mxu0 0
  %190 = vmatprep.subr.bf16.mxu0 0
  %191 = vmatpush1.bf16.xpose.msra.mxu0 %v174
  %192 = vmatprep.subr.bf16.mxu0 0
  %193 = vmatpush2.bf16.xpose.msra.mxu0 0
  %194 = vmatprep.subr.bf16.mxu0 0
  %195 = vmatpush2.bf16.xpose.msra.mxu0 0
  %196 = vmatprep.subr.bf16.mxu0 0
  %197 = vmatpush2.bf16.xpose.msra.mxu0 0
  %198 = vmatprep.subr.bf16.mxu0 0
  %199 = vmatpush2.bf16.xpose.msra.mxu0 0
  %200 = vmatprep.subr.bf16.mxu0 0
  %201 = vmatpush2.bf16.xpose.msra.mxu0 0
  %202 = vmatprep.subr.bf16.mxu0 0
  %203 = vmatpush2.bf16.xpose.msra.mxu0 0
  %204 = vmatprep.subr.bf16.mxu0 0
  %205 = vmatpush2.bf16.xpose.msra.mxu0 0
  %206 = vmatprep.subr.bf16.mxu0 0
  %207 = vmatpush2.bf16.xpose.msra.mxu0 0
  %208 = vmatprep.mubr.bf16.mxu0 0
  %209 = vmatmul.mubr.bf16.gmra.mxu0 %v171
  %v210 = vpop.f32.mrf.mxu0
  %v211 = vadd.f32 0.0, %v210
  %v212 = vpop.f32.mrf.mxu0
  %v213 = vpop.f32.mrf.mxu0
  %v214 = vpop.f32.mrf.mxu0
  %215 = vdwg.mxu0
  %v218 = vunpack.c.l.s4 1983009808
  %v219 = vunpack.c.0.s8 %v218
  %v220 = vlaneseq
  %v221 = vshrl.u32 %v220, 7
  %v222 = vsub.s32 %v219, %v221
  %v223 = vrot.slane %v24, %v222
  %224 = vrot.lane.b32.xlu0 %v223, 96
  %v225 = vpop.permute.xlu0 %224
  %v227 = vsel %vm57, %v24, 0
  %v230 = vsel %vm57, %v225, 0
  %232 = vmatprep.subr.bf16.mxu0 0
  %233 = vmatpush1.bf16.xpose.msra.mxu0 0
  %234 = vmatprep.subr.bf16.mxu0 0
  %235 = vmatpush1.bf16.xpose.msra.mxu0 0
  %236 = vmatprep.subr.bf16.mxu0 0
  %237 = vmatpush1.bf16.xpose.msra.mxu0 0
  %238 = vmatprep.subr.bf16.mxu0 0
  %239 = vmatpush1.bf16.xpose.msra.mxu0 0
  %240 = vmatprep.subr.bf16.mxu0 0
  %241 = vmatpush1.bf16.xpose.msra.mxu0 0
  %242 = vmatprep.subr.bf16.mxu0 0
  %243 = vmatpush1.bf16.xpose.msra.mxu0 0
  %244 = vmatprep.subr.bf16.mxu0 0
  %245 = vmatpush1.bf16.xpose.msra.mxu0 0
  %246 = vmatprep.subr.bf16.mxu0 0
  %247 = vmatpush1.bf16.xpose.msra.mxu0 %v230
  %248 = vmatprep.subr.bf16.mxu0 0
  %249 = vmatpush2.bf16.xpose.msra.mxu0 0
  %250 = vmatprep.subr.bf16.mxu0 0
  %251 = vmatpush2.bf16.xpose.msra.mxu0 0
  %252 = vmatprep.subr.bf16.mxu0 0
  %253 = vmatpush2.bf16.xpose.msra.mxu0 0
  %254 = vmatprep.subr.bf16.mxu0 0
  %255 = vmatpush2.bf16.xpose.msra.mxu0 0
  %256 = vmatprep.subr.bf16.mxu0 0
  %257 = vmatpush2.bf16.xpose.msra.mxu0 0
  %258 = vmatprep.subr.bf16.mxu0 0
  %259 = vmatpush2.bf16.xpose.msra.mxu0 0
  %260 = vmatprep.subr.bf16.mxu0 0
  %261 = vmatpush2.bf16.xpose.msra.mxu0 0
  %262 = vmatprep.subr.bf16.mxu0 0
  %263 = vmatpush2.bf16.xpose.msra.mxu0 0
  %264 = vmatprep.mubr.bf16.mxu0 0
  %265 = vmatmul.mubr.bf16.gmra.mxu0 %v227
  %v266 = vpop.f32.mrf.mxu0
  %v267 = vadd.f32 0.0, %v266
  %v268 = vpop.f32.mrf.mxu0
  %v269 = vpop.f32.mrf.mxu0
  %v270 = vpop.f32.mrf.mxu0
  %271 = vdwg.mxu0
  %v274 = vunpack.c.l.s4 1983009808
  %v275 = vunpack.c.0.s8 %v274
  %v276 = vlaneseq
  %v277 = vshrl.u32 %v276, 7
  %v278 = vsub.s32 %v275, %v277
  %v279 = vrot.slane %v25, %v278
  %280 = vrot.lane.b32.xlu0 %v279, 96
  %v281 = vpop.permute.xlu0 %280
  %v283 = vsel %vm57, %v25, 0
  %v286 = vsel %vm57, %v281, 0
  %288 = vmatprep.subr.bf16.mxu0 0
  %289 = vmatpush1.bf16.xpose.msra.mxu0 0
  %290 = vmatprep.subr.bf16.mxu0 0
  %291 = vmatpush1.bf16.xpose.msra.mxu0 0
  %292 = vmatprep.subr.bf16.mxu0 0
  %293 = vmatpush1.bf16.xpose.msra.mxu0 0
  %294 = vmatprep.subr.bf16.mxu0 0
  %295 = vmatpush1.bf16.xpose.msra.mxu0 0
  %296 = vmatprep.subr.bf16.mxu0 0
  %297 = vmatpush1.bf16.xpose.msra.mxu0 0
  %298 = vmatprep.subr.bf16.mxu0 0
  %299 = vmatpush1.bf16.xpose.msra.mxu0 0
  %300 = vmatprep.subr.bf16.mxu0 0
  %301 = vmatpush1.bf16.xpose.msra.mxu0 0
  %302 = vmatprep.subr.bf16.mxu0 0
  %303 = vmatpush1.bf16.xpose.msra.mxu0 %v286
  %304 = vmatprep.subr.bf16.mxu0 0
  %305 = vmatpush2.bf16.xpose.msra.mxu0 0
  %306 = vmatprep.subr.bf16.mxu0 0
  %307 = vmatpush2.bf16.xpose.msra.mxu0 0
  %308 = vmatprep.subr.bf16.mxu0 0
  %309 = vmatpush2.bf16.xpose.msra.mxu0 0
  %310 = vmatprep.subr.bf16.mxu0 0
  %311 = vmatpush2.bf16.xpose.msra.mxu0 0
  %312 = vmatprep.subr.bf16.mxu0 0
  %313 = vmatpush2.bf16.xpose.msra.mxu0 0
  %314 = vmatprep.subr.bf16.mxu0 0
  %315 = vmatpush2.bf16.xpose.msra.mxu0 0
  %316 = vmatprep.subr.bf16.mxu0 0
  %317 = vmatpush2.bf16.xpose.msra.mxu0 0
  %318 = vmatprep.subr.bf16.mxu0 0
  %319 = vmatpush2.bf16.xpose.msra.mxu0 0
  %320 = vmatprep.mubr.bf16.mxu0 0
  %321 = vmatmul.mubr.bf16.gmra.mxu0 %v283
  %v322 = vpop.f32.mrf.mxu0
  %v323 = vadd.f32 0.0, %v322
  %v324 = vpop.f32.mrf.mxu0
  %v325 = vpop.f32.mrf.mxu0
  %v326 = vpop.f32.mrf.mxu0
  %327 = vdwg.mxu0
  %v330 = vunpack.c.l.s4 1983009808
  %v331 = vunpack.c.0.s8 %v330
  %v332 = vlaneseq
  %v333 = vshrl.u32 %v332, 7
  %v334 = vsub.s32 %v331, %v333
  %v335 = vrot.slane %v26, %v334
  %336 = vrot.lane.b32.xlu0 %v335, 96
  %v337 = vpop.permute.xlu0 %336
  %v339 = vsel %vm57, %v26, 0
  %v342 = vsel %vm57, %v337, 0
  %344 = vmatprep.subr.bf16.mxu0 0
  %345 = vmatpush1.bf16.xpose.msra.mxu0 0
  %346 = vmatprep.subr.bf16.mxu0 0
  %347 = vmatpush1.bf16.xpose.msra.mxu0 0
  %348 = vmatprep.subr.bf16.mxu0 0
  %349 = vmatpush1.bf16.xpose.msra.mxu0 0
  %350 = vmatprep.subr.bf16.mxu0 0
  %351 = vmatpush1.bf16.xpose.msra.mxu0 0
  %352 = vmatprep.subr.bf16.mxu0 0
  %353 = vmatpush1.bf16.xpose.msra.mxu0 0
  %354 = vmatprep.subr.bf16.mxu0 0
  %355 = vmatpush1.bf16.xpose.msra.mxu0 0
  %356 = vmatprep.subr.bf16.mxu0 0
  %357 = vmatpush1.bf16.xpose.msra.mxu0 0
  %358 = vmatprep.subr.bf16.mxu0 0
  %359 = vmatpush1.bf16.xpose.msra.mxu0 %v342
  %360 = vmatprep.subr.bf16.mxu0 0
  %361 = vmatpush2.bf16.xpose.msra.mxu0 0
  %362 = vmatprep.subr.bf16.mxu0 0
  %363 = vmatpush2.bf16.xpose.msra.mxu0 0
  %364 = vmatprep.subr.bf16.mxu0 0
  %365 = vmatpush2.bf16.xpose.msra.mxu0 0
  %366 = vmatprep.subr.bf16.mxu0 0
  %367 = vmatpush2.bf16.xpose.msra.mxu0 0
  %368 = vmatprep.subr.bf16.mxu0 0
  %369 = vmatpush2.bf16.xpose.msra.mxu0 0
  %370 = vmatprep.subr.bf16.mxu0 0
  %371 = vmatpush2.bf16.xpose.msra.mxu0 0
  %372 = vmatprep.subr.bf16.mxu0 0
  %373 = vmatpush2.bf16.xpose.msra.mxu0 0
  %374 = vmatprep.subr.bf16.mxu0 0
  %375 = vmatpush2.bf16.xpose.msra.mxu0 0
  %376 = vmatprep.mubr.bf16.mxu0 0
  %377 = vmatmul.mubr.bf16.gmra.mxu0 %v339
  %v378 = vpop.f32.mrf.mxu0
  %v379 = vadd.f32 0.0, %v378
  %v380 = vpop.f32.mrf.mxu0
  %v381 = vpop.f32.mrf.mxu0
  %v382 = vpop.f32.mrf.mxu0
  %383 = vdwg.mxu0
  %v386 = vunpack.c.l.s4 1983009808
  %v387 = vunpack.c.0.s8 %v386
  %v388 = vlaneseq
  %v389 = vshrl.u32 %v388, 7
  %v390 = vsub.s32 %v387, %v389
  %v391 = vrot.slane %v27, %v390
  %392 = vrot.lane.b32.xlu0 %v391, 96
  %v393 = vpop.permute.xlu0 %392
  %v395 = vsel %vm57, %v27, 0
  %v398 = vsel %vm57, %v393, 0
  %400 = vmatprep.subr.bf16.mxu0 0
  %401 = vmatpush1.bf16.xpose.msra.mxu0 0
  %402 = vmatprep.subr.bf16.mxu0 0
  %403 = vmatpush1.bf16.xpose.msra.mxu0 0
  %404 = vmatprep.subr.bf16.mxu0 0
  %405 = vmatpush1.bf16.xpose.msra.mxu0 0
  %406 = vmatprep.subr.bf16.mxu0 0
  %407 = vmatpush1.bf16.xpose.msra.mxu0 0
  %408 = vmatprep.subr.bf16.mxu0 0
  %409 = vmatpush1.bf16.xpose.msra.mxu0 0
  %410 = vmatprep.subr.bf16.mxu0 0
  %411 = vmatpush1.bf16.xpose.msra.mxu0 0
  %412 = vmatprep.subr.bf16.mxu0 0
  %413 = vmatpush1.bf16.xpose.msra.mxu0 0
  %414 = vmatprep.subr.bf16.mxu0 0
  %415 = vmatpush1.bf16.xpose.msra.mxu0 %v398
  %416 = vmatprep.subr.bf16.mxu0 0
  %417 = vmatpush2.bf16.xpose.msra.mxu0 0
  %418 = vmatprep.subr.bf16.mxu0 0
  %419 = vmatpush2.bf16.xpose.msra.mxu0 0
  %420 = vmatprep.subr.bf16.mxu0 0
  %421 = vmatpush2.bf16.xpose.msra.mxu0 0
  %422 = vmatprep.subr.bf16.mxu0 0
  %423 = vmatpush2.bf16.xpose.msra.mxu0 0
  %424 = vmatprep.subr.bf16.mxu0 0
  %425 = vmatpush2.bf16.xpose.msra.mxu0 0
  %426 = vmatprep.subr.bf16.mxu0 0
  %427 = vmatpush2.bf16.xpose.msra.mxu0 0
  %428 = vmatprep.subr.bf16.mxu0 0
  %429 = vmatpush2.bf16.xpose.msra.mxu0 0
  %430 = vmatprep.subr.bf16.mxu0 0
  %431 = vmatpush2.bf16.xpose.msra.mxu0 0
  %432 = vmatprep.mubr.bf16.mxu0 0
  %433 = vmatmul.mubr.bf16.gmra.mxu0 %v395
  %v434 = vpop.f32.mrf.mxu0
  %v435 = vadd.f32 0.0, %v434
  %v436 = vpop.f32.mrf.mxu0
  %v437 = vpop.f32.mrf.mxu0
  %v438 = vpop.f32.mrf.mxu0
  %439 = vdwg.mxu0
  %v442 = vunpack.c.l.s4 1983009808
  %v443 = vunpack.c.0.s8 %v442
  %v444 = vlaneseq
  %v445 = vshrl.u32 %v444, 7
  %v446 = vsub.s32 %v443, %v445
  %v447 = vrot.slane %v28, %v446
  %448 = vrot.lane.b32.xlu0 %v447, 96
  %v449 = vpop.permute.xlu0 %448
  %v451 = vsel %vm57, %v28, 0
  %v454 = vsel %vm57, %v449, 0
  %456 = vmatprep.subr.bf16.mxu0 0
  %457 = vmatpush1.bf16.xpose.msra.mxu0 0
  %458 = vmatprep.subr.bf16.mxu0 0
  %459 = vmatpush1.bf16.xpose.msra.mxu0 0
  %460 = vmatprep.subr.bf16.mxu0 0
  %461 = vmatpush1.bf16.xpose.msra.mxu0 0
  %462 = vmatprep.subr.bf16.mxu0 0
  %463 = vmatpush1.bf16.xpose.msra.mxu0 0
  %464 = vmatprep.subr.bf16.mxu0 0
  %465 = vmatpush1.bf16.xpose.msra.mxu0 0
  %466 = vmatprep.subr.bf16.mxu0 0
  %467 = vmatpush1.bf16.xpose.msra.mxu0 0
  %468 = vmatprep.subr.bf16.mxu0 0
  %469 = vmatpush1.bf16.xpose.msra.mxu0 0
  %470 = vmatprep.subr.bf16.mxu0 0
  %471 = vmatpush1.bf16.xpose.msra.mxu0 %v454
  %472 = vmatprep.subr.bf16.mxu0 0
  %473 = vmatpush2.bf16.xpose.msra.mxu0 0
  %474 = vmatprep.subr.bf16.mxu0 0
  %475 = vmatpush2.bf16.xpose.msra.mxu0 0
  %476 = vmatprep.subr.bf16.mxu0 0
  %477 = vmatpush2.bf16.xpose.msra.mxu0 0
  %478 = vmatprep.subr.bf16.mxu0 0
  %479 = vmatpush2.bf16.xpose.msra.mxu0 0
  %480 = vmatprep.subr.bf16.mxu0 0
  %481 = vmatpush2.bf16.xpose.msra.mxu0 0
  %482 = vmatprep.subr.bf16.mxu0 0
  %483 = vmatpush2.bf16.xpose.msra.mxu0 0
  %484 = vmatprep.subr.bf16.mxu0 0
  %485 = vmatpush2.bf16.xpose.msra.mxu0 0
  %486 = vmatprep.subr.bf16.mxu0 0
  %487 = vmatpush2.bf16.xpose.msra.mxu0 0
  %488 = vmatprep.mubr.bf16.mxu0 0
  %489 = vmatmul.mubr.bf16.gmra.mxu0 %v451
  %v490 = vpop.f32.mrf.mxu0
  %v491 = vadd.f32 0.0, %v490
  %v492 = vpop.f32.mrf.mxu0
  %v493 = vpop.f32.mrf.mxu0
  %v494 = vpop.f32.mrf.mxu0
  %495 = vdwg.mxu0
  %v496 = vmul.f32 %v99, 0.25
  %v497 = vmul.f32 %v155, 0.25
  %v498 = vmul.f32 %v211, 0.25
  %v499 = vmul.f32 %v267, 0.25
  %v500 = vmul.f32 %v323, 0.25
  %v501 = vmul.f32 %v379, 0.25
  %v502 = vmul.f32 %v435, 0.25
  %v503 = vmul.f32 %v491, 0.25
  %v504 = vadd.f32 %v496, %v29
  %v505 = vadd.f32 %v497, %v29
  %v506 = vadd.f32 %v498, %v29
  %v507 = vadd.f32 %v499, %v29
  %v508 = vadd.f32 %v500, %v29
  %v509 = vadd.f32 %v501, %v29
  %v510 = vadd.f32 %v502, %v29
  %v511 = vadd.f32 %v503, %v29
  %v512 = vadd.f32 %v504, %v31
  %v513 = vadd.f32 %v505, %v31
  %v514 = vadd.f32 %v506, %v32
  %v515 = vadd.f32 %v507, %v32
  %v516 = vadd.f32 %v508, %v33
  %v517 = vadd.f32 %v509, %v33
  %v518 = vadd.f32 %v510, %v34
  %v519 = vadd.f32 %v511, %v34
  %vm520 = vcmask 27648
  %v521 = vsel %vm520, %v512, -inf
  %522 = vmax.xlane.f32.xlu0 %v521
  %v523 = vpop.xlane.xlu0 %522
  %v524 = vsel %vm520, %v513, -inf
  %525 = vmax.xlane.f32.xlu0 %v524
  %v526 = vpop.xlane.xlu0 %525
  %v527 = vsel %vm520, %v514, -inf
  %528 = vmax.xlane.f32.xlu0 %v527
  %v529 = vpop.xlane.xlu0 %528
  %v530 = vsel %vm520, %v515, -inf
  %531 = vmax.xlane.f32.xlu0 %v530
  %v532 = vpop.xlane.xlu0 %531
  %v533 = vsel %vm520, %v516, -inf
  %534 = vmax.xlane.f32.xlu0 %v533
  %v535 = vpop.xlane.xlu0 %534
  %v536 = vsel %vm520, %v517, -inf
  %537 = vmax.xlane.f32.xlu0 %v536
  %v538 = vpop.xlane.xlu0 %537
  %v539 = vsel %vm520, %v518, -inf
  %540 = vmax.xlane.f32.xlu0 %v539
  %v541 = vpop.xlane.xlu0 %540
  %v542 = vsel %vm520, %v519, -inf
  %543 = vmax.xlane.f32.xlu0 %v542
  %v544 = vpop.xlane.xlu0 %543
  %v545 = vsub.f32 %v512, %v523
  %v546 = vsub.f32 %v513, %v526
  %v547 = vsub.f32 %v514, %v529
  %v548 = vsub.f32 %v515, %v532
  %v549 = vsub.f32 %v516, %v535
  %v550 = vsub.f32 %v517, %v538
  %v551 = vsub.f32 %v518, %v541
  %v552 = vsub.f32 %v519, %v544
  %v553 = vmul.f32 %v545, 1.442695
  %v554 = vpow.pop %v553
  %v555 = vmul.f32 %v546, 1.442695
  %v556 = vpow.pop %v555
  %v557 = vmul.f32 %v547, 1.442695
  %v558 = vpow.pop %v557
  %v559 = vmul.f32 %v548, 1.442695
  %v560 = vpow.pop %v559
  %v561 = vmul.f32 %v549, 1.442695
  %v562 = vpow.pop %v561
  %v563 = vmul.f32 %v550, 1.442695
  %v564 = vpow.pop %v563
  %v565 = vmul.f32 %v551, 1.442695
  %v566 = vpow.pop %v565
  %v567 = vmul.f32 %v552, 1.442695
  %v568 = vpow.pop %v567
  %v569 = vsel %vm520, %v554, 0.0
  %570 = vadd.xlane.f32.xlu0 %v569
  %v571 = vpop.xlane.xlu0 %570
  %v572 = vsel %vm520, %v556, 0.0
  %573 = vadd.xlane.f32.xlu0 %v572
  %v574 = vpop.xlane.xlu0 %573
  %v575 = vsel %vm520, %v558, 0.0
  %576 = vadd.xlane.f32.xlu0 %v575
  %v577 = vpop.xlane.xlu0 %576
  %v578 = vsel %vm520, %v560, 0.0
  %579 = vadd.xlane.f32.xlu0 %v578
  %v580 = vpop.xlane.xlu0 %579
  %v581 = vsel %vm520, %v562, 0.0
  %582 = vadd.xlane.f32.xlu0 %v581
  %v583 = vpop.xlane.xlu0 %582
  %v584 = vsel %vm520, %v564, 0.0
  %585 = vadd.xlane.f32.xlu0 %v584
  %v586 = vpop.xlane.xlu0 %585
  %v587 = vsel %vm520, %v566, 0.0
  %588 = vadd.xlane.f32.xlu0 %v587
  %v589 = vpop.xlane.xlu0 %588
  %v590 = vsel %vm520, %v568, 0.0
  %591 = vadd.xlane.f32.xlu0 %v590
  %v592 = vpop.xlane.xlu0 %591
  %v593 = vrcp.pop %v571
  %v594 = vrcp.pop %v574
  %v595 = vrcp.pop %v577
  %v596 = vrcp.pop %v580
  %v597 = vrcp.pop %v583
  %v598 = vrcp.pop %v586
  %v599 = vrcp.pop %v589
  %v600 = vrcp.pop %v592
  %v601 = vmul.f32 %v554, %v593
  %v602 = vmul.f32 %v556, %v594
  %v603 = vmul.f32 %v558, %v595
  %v604 = vmul.f32 %v560, %v596
  %v605 = vmul.f32 %v562, %v597
  %v606 = vmul.f32 %v564, %v598
  %v607 = vmul.f32 %v566, %v599
  %v608 = vmul.f32 %v568, %v600
  %v609 = vpack.c.bf16 %v601, %v601
  %v610 = vpack.c.bf16 %v602, %v602
  %v611 = vpack.c.bf16 %v603, %v603
  %v612 = vpack.c.bf16 %v604, %v604
  %v613 = vpack.c.bf16 %v605, %v605
  %v614 = vpack.c.bf16 %v606, %v606
  %v615 = vpack.c.bf16 %v607, %v607
  %v616 = vpack.c.bf16 %v608, %v608
  %617 = vrot.lane.b32.xlu0 %v54, 64
  %v618 = vpop.permute.xlu0 %617
  %vm619 = vcmask 31744
  %v621 = vsel %vm619, %v609, 0
  %vm623 = vcmask 1041408
  %v625 = vsel %vm623, %v618, 0
  %627 = vmatprep.subr.bf16.mxu0 0
  %628 = vmatpush1.bf16.msra.mxu0 0
  %629 = vmatprep.subr.bf16.mxu0 0
  %630 = vmatpush1.bf16.msra.mxu0 0
  %631 = vmatprep.subr.bf16.mxu0 0
  %632 = vmatpush1.bf16.msra.mxu0 0
  %633 = vmatprep.subr.bf16.mxu0 0
  %634 = vmatpush1.bf16.msra.mxu0 0
  %635 = vmatprep.subr.bf16.mxu0 0
  %636 = vmatpush1.bf16.msra.mxu0 0
  %637 = vmatprep.subr.bf16.mxu0 0
  %638 = vmatpush1.bf16.msra.mxu0 0
  %639 = vmatprep.subr.bf16.mxu0 0
  %640 = vmatpush1.bf16.msra.mxu0 0
  %641 = vmatprep.subr.bf16.mxu0 0
  %642 = vmatpush1.bf16.msra.mxu0 %v625
  %643 = vmatprep.subr.bf16.mxu0 0
  %644 = vmatpush2.bf16.msra.mxu0 0
  %645 = vmatprep.subr.bf16.mxu0 0
  %646 = vmatpush2.bf16.msra.mxu0 0
  %647 = vmatprep.subr.bf16.mxu0 0
  %648 = vmatpush2.bf16.msra.mxu0 0
  %649 = vmatprep.subr.bf16.mxu0 0
  %650 = vmatpush2.bf16.msra.mxu0 0
  %651 = vmatprep.subr.bf16.mxu0 0
  %652 = vmatpush2.bf16.msra.mxu0 0
  %653 = vmatprep.subr.bf16.mxu0 0
  %654 = vmatpush2.bf16.msra.mxu0 0
  %655 = vmatprep.subr.bf16.mxu0 0
  %656 = vmatpush2.bf16.msra.mxu0 0
  %657 = vmatprep.subr.bf16.mxu0 0
  %658 = vmatpush2.bf16.msra.mxu0 0
  %659 = vmatprep.mubr.bf16.mxu0 0
  %660 = vmatmul.mubr.bf16.gmra.mxu0 %v621
  %v661 = vpop.f32.mrf.mxu0
  %v662 = vadd.f32 0.0, %v661
  %v663 = vpop.f32.mrf.mxu0
  %v664 = vpop.f32.mrf.mxu0
  %v665 = vpop.f32.mrf.mxu0
  %666 = vdwg.mxu0
  %667 = vrot.lane.b32.xlu0 %v111, 64
  %v668 = vpop.permute.xlu0 %667
  %v670 = vsel %vm619, %v610, 0
  %v673 = vsel %vm623, %v668, 0
  %675 = vmatprep.subr.bf16.mxu0 0
  %676 = vmatpush1.bf16.msra.mxu0 0
  %677 = vmatprep.subr.bf16.mxu0 0
  %678 = vmatpush1.bf16.msra.mxu0 0
  %679 = vmatprep.subr.bf16.mxu0 0
  %680 = vmatpush1.bf16.msra.mxu0 0
  %681 = vmatprep.subr.bf16.mxu0 0
  %682 = vmatpush1.bf16.msra.mxu0 0
  %683 = vmatprep.subr.bf16.mxu0 0
  %684 = vmatpush1.bf16.msra.mxu0 0
  %685 = vmatprep.subr.bf16.mxu0 0
  %686 = vmatpush1.bf16.msra.mxu0 0
  %687 = vmatprep.subr.bf16.mxu0 0
  %688 = vmatpush1.bf16.msra.mxu0 0
  %689 = vmatprep.subr.bf16.mxu0 0
  %690 = vmatpush1.bf16.msra.mxu0 %v673
  %691 = vmatprep.subr.bf16.mxu0 0
  %692 = vmatpush2.bf16.msra.mxu0 0
  %693 = vmatprep.subr.bf16.mxu0 0
  %694 = vmatpush2.bf16.msra.mxu0 0
  %695 = vmatprep.subr.bf16.mxu0 0
  %696 = vmatpush2.bf16.msra.mxu0 0
  %697 = vmatprep.subr.bf16.mxu0 0
  %698 = vmatpush2.bf16.msra.mxu0 0
  %699 = vmatprep.subr.bf16.mxu0 0
  %700 = vmatpush2.bf16.msra.mxu0 0
  %701 = vmatprep.subr.bf16.mxu0 0
  %702 = vmatpush2.bf16.msra.mxu0 0
  %703 = vmatprep.subr.bf16.mxu0 0
  %704 = vmatpush2.bf16.msra.mxu0 0
  %705 = vmatprep.subr.bf16.mxu0 0
  %706 = vmatpush2.bf16.msra.mxu0 0
  %707 = vmatprep.mubr.bf16.mxu0 0
  %708 = vmatmul.mubr.bf16.gmra.mxu0 %v670
  %v709 = vpop.f32.mrf.mxu0
  %v710 = vadd.f32 0.0, %v709
  %v711 = vpop.f32.mrf.mxu0
  %v712 = vpop.f32.mrf.mxu0
  %v713 = vpop.f32.mrf.mxu0
  %714 = vdwg.mxu0
  %715 = vrot.lane.b32.xlu0 %v167, 64
  %v716 = vpop.permute.xlu0 %715
  %v718 = vsel %vm619, %v611, 0
  %v721 = vsel %vm623, %v716, 0
  %723 = vmatprep.subr.bf16.mxu0 0
  %724 = vmatpush1.bf16.msra.mxu0 0
  %725 = vmatprep.subr.bf16.mxu0 0
  %726 = vmatpush1.bf16.msra.mxu0 0
  %727 = vmatprep.subr.bf16.mxu0 0
  %728 = vmatpush1.bf16.msra.mxu0 0
  %729 = vmatprep.subr.bf16.mxu0 0
  %730 = vmatpush1.bf16.msra.mxu0 0
  %731 = vmatprep.subr.bf16.mxu0 0
  %732 = vmatpush1.bf16.msra.mxu0 0
  %733 = vmatprep.subr.bf16.mxu0 0
  %734 = vmatpush1.bf16.msra.mxu0 0
  %735 = vmatprep.subr.bf16.mxu0 0
  %736 = vmatpush1.bf16.msra.mxu0 0
  %737 = vmatprep.subr.bf16.mxu0 0
  %738 = vmatpush1.bf16.msra.mxu0 %v721
  %739 = vmatprep.subr.bf16.mxu0 0
  %740 = vmatpush2.bf16.msra.mxu0 0
  %741 = vmatprep.subr.bf16.mxu0 0
  %742 = vmatpush2.bf16.msra.mxu0 0
  %743 = vmatprep.subr.bf16.mxu0 0
  %744 = vmatpush2.bf16.msra.mxu0 0
  %745 = vmatprep.subr.bf16.mxu0 0
  %746 = vmatpush2.bf16.msra.mxu0 0
  %747 = vmatprep.subr.bf16.mxu0 0
  %748 = vmatpush2.bf16.msra.mxu0 0
  %749 = vmatprep.subr.bf16.mxu0 0
  %750 = vmatpush2.bf16.msra.mxu0 0
  %751 = vmatprep.subr.bf16.mxu0 0
  %752 = vmatpush2.bf16.msra.mxu0 0
  %753 = vmatprep.subr.bf16.mxu0 0
  %754 = vmatpush2.bf16.msra.mxu0 0
  %755 = vmatprep.mubr.bf16.mxu0 0
  %756 = vmatmul.mubr.bf16.gmra.mxu0 %v718
  %v757 = vpop.f32.mrf.mxu0
  %v758 = vadd.f32 0.0, %v757
  %v759 = vpop.f32.mrf.mxu0
  %v760 = vpop.f32.mrf.mxu0
  %v761 = vpop.f32.mrf.mxu0
  %762 = vdwg.mxu0
  %763 = vrot.lane.b32.xlu0 %v223, 64
  %v764 = vpop.permute.xlu0 %763
  %v766 = vsel %vm619, %v612, 0
  %v769 = vsel %vm623, %v764, 0
  %771 = vmatprep.subr.bf16.mxu0 0
  %772 = vmatpush1.bf16.msra.mxu0 0
  %773 = vmatprep.subr.bf16.mxu0 0
  %774 = vmatpush1.bf16.msra.mxu0 0
  %775 = vmatprep.subr.bf16.mxu0 0
  %776 = vmatpush1.bf16.msra.mxu0 0
  %777 = vmatprep.subr.bf16.mxu0 0
  %778 = vmatpush1.bf16.msra.mxu0 0
  %779 = vmatprep.subr.bf16.mxu0 0
  %780 = vmatpush1.bf16.msra.mxu0 0
  %781 = vmatprep.subr.bf16.mxu0 0
  %782 = vmatpush1.bf16.msra.mxu0 0
  %783 = vmatprep.subr.bf16.mxu0 0
  %784 = vmatpush1.bf16.msra.mxu0 0
  %785 = vmatprep.subr.bf16.mxu0 0
  %786 = vmatpush1.bf16.msra.mxu0 %v769
  %787 = vmatprep.subr.bf16.mxu0 0
  %788 = vmatpush2.bf16.msra.mxu0 0
  %789 = vmatprep.subr.bf16.mxu0 0
  %790 = vmatpush2.bf16.msra.mxu0 0
  %791 = vmatprep.subr.bf16.mxu0 0
  %792 = vmatpush2.bf16.msra.mxu0 0
  %793 = vmatprep.subr.bf16.mxu0 0
  %794 = vmatpush2.bf16.msra.mxu0 0
  %795 = vmatprep.subr.bf16.mxu0 0
  %796 = vmatpush2.bf16.msra.mxu0 0
  %797 = vmatprep.subr.bf16.mxu0 0
  %798 = vmatpush2.bf16.msra.mxu0 0
  %799 = vmatprep.subr.bf16.mxu0 0
  %800 = vmatpush2.bf16.msra.mxu0 0
  %801 = vmatprep.subr.bf16.mxu0 0
  %802 = vmatpush2.bf16.msra.mxu0 0
  %803 = vmatprep.mubr.bf16.mxu0 0
  %804 = vmatmul.mubr.bf16.gmra.mxu0 %v766
  %v805 = vpop.f32.mrf.mxu0
  %v806 = vadd.f32 0.0, %v805
  %v807 = vpop.f32.mrf.mxu0
  %v808 = vpop.f32.mrf.mxu0
  %v809 = vpop.f32.mrf.mxu0
  %810 = vdwg.mxu0
  %811 = vrot.lane.b32.xlu0 %v279, 64
  %v812 = vpop.permute.xlu0 %811
  %v814 = vsel %vm619, %v613, 0
  %v817 = vsel %vm623, %v812, 0
  %819 = vmatprep.subr.bf16.mxu0 0
  %820 = vmatpush1.bf16.msra.mxu0 0
  %821 = vmatprep.subr.bf16.mxu0 0
  %822 = vmatpush1.bf16.msra.mxu0 0
  %823 = vmatprep.subr.bf16.mxu0 0
  %824 = vmatpush1.bf16.msra.mxu0 0
  %825 = vmatprep.subr.bf16.mxu0 0
  %826 = vmatpush1.bf16.msra.mxu0 0
  %827 = vmatprep.subr.bf16.mxu0 0
  %828 = vmatpush1.bf16.msra.mxu0 0
  %829 = vmatprep.subr.bf16.mxu0 0
  %830 = vmatpush1.bf16.msra.mxu0 0
  %831 = vmatprep.subr.bf16.mxu0 0
  %832 = vmatpush1.bf16.msra.mxu0 0
  %833 = vmatprep.subr.bf16.mxu0 0
  %834 = vmatpush1.bf16.msra.mxu0 %v817
  %835 = vmatprep.subr.bf16.mxu0 0
  %836 = vmatpush2.bf16.msra.mxu0 0
  %837 = vmatprep.subr.bf16.mxu0 0
  %838 = vmatpush2.bf16.msra.mxu0 0
  %839 = vmatprep.subr.bf16.mxu0 0
  %840 = vmatpush2.bf16.msra.mxu0 0
  %841 = vmatprep.subr.bf16.mxu0 0
  %842 = vmatpush2.bf16.msra.mxu0 0
  %843 = vmatprep.subr.bf16.mxu0 0
  %844 = vmatpush2.bf16.msra.mxu0 0
  %845 = vmatprep.subr.bf16.mxu0 0
  %846 = vmatpush2.bf16.msra.mxu0 0
  %847 = vmatprep.subr.bf16.mxu0 0
  %848 = vmatpush2.bf16.msra.mxu0 0
  %849 = vmatprep.subr.bf16.mxu0 0
  %850 = vmatpush2.bf16.msra.mxu0 0
  %851 = vmatprep.mubr.bf16.mxu0 0
  %852 = vmatmul.mubr.bf16.gmra.mxu0 %v814
  %v853 = vpop.f32.mrf.mxu0
  %v854 = vadd.f32 0.0, %v853
  %v855 = vpop.f32.mrf.mxu0
  %v856 = vpop.f32.mrf.mxu0
  %v857 = vpop.f32.mrf.mxu0
  %858 = vdwg.mxu0
  %859 = vrot.lane.b32.xlu0 %v335, 64
  %v860 = vpop.permute.xlu0 %859
  %v862 = vsel %vm619, %v614, 0
  %v865 = vsel %vm623, %v860, 0
  %867 = vmatprep.subr.bf16.mxu0 0
  %868 = vmatpush1.bf16.msra.mxu0 0
  %869 = vmatprep.subr.bf16.mxu0 0
  %870 = vmatpush1.bf16.msra.mxu0 0
  %871 = vmatprep.subr.bf16.mxu0 0
  %872 = vmatpush1.bf16.msra.mxu0 0
  %873 = vmatprep.subr.bf16.mxu0 0
  %874 = vmatpush1.bf16.msra.mxu0 0
  %875 = vmatprep.subr.bf16.mxu0 0
  %876 = vmatpush1.bf16.msra.mxu0 0
  %877 = vmatprep.subr.bf16.mxu0 0
  %878 = vmatpush1.bf16.msra.mxu0 0
  %879 = vmatprep.subr.bf16.mxu0 0
  %880 = vmatpush1.bf16.msra.mxu0 0
  %881 = vmatprep.subr.bf16.mxu0 0
  %882 = vmatpush1.bf16.msra.mxu0 %v865
  %883 = vmatprep.subr.bf16.mxu0 0
  %884 = vmatpush2.bf16.msra.mxu0 0
  %885 = vmatprep.subr.bf16.mxu0 0
  %886 = vmatpush2.bf16.msra.mxu0 0
  %887 = vmatprep.subr.bf16.mxu0 0
  %888 = vmatpush2.bf16.msra.mxu0 0
  %889 = vmatprep.subr.bf16.mxu0 0
  %890 = vmatpush2.bf16.msra.mxu0 0
  %891 = vmatprep.subr.bf16.mxu0 0
  %892 = vmatpush2.bf16.msra.mxu0 0
  %893 = vmatprep.subr.bf16.mxu0 0
  %894 = vmatpush2.bf16.msra.mxu0 0
  %895 = vmatprep.subr.bf16.mxu0 0
  %896 = vmatpush2.bf16.msra.mxu0 0
  %897 = vmatprep.subr.bf16.mxu0 0
  %898 = vmatpush2.bf16.msra.mxu0 0
  %899 = vmatprep.mubr.bf16.mxu0 0
  %900 = vmatmul.mubr.bf16.gmra.mxu0 %v862
  %v901 = vpop.f32.mrf.mxu0
  %v902 = vadd.f32 0.0, %v901
  %v903 = vpop.f32.mrf.mxu0
  %v904 = vpop.f32.mrf.mxu0
  %v905 = vpop.f32.mrf.mxu0
  %906 = vdwg.mxu0
  %907 = vrot.lane.b32.xlu0 %v391, 64
  %v908 = vpop.permute.xlu0 %907
  %v910 = vsel %vm619, %v615, 0
  %v913 = vsel %vm623, %v908, 0
  %915 = vmatprep.subr.bf16.mxu0 0
  %916 = vmatpush1.bf16.msra.mxu0 0
  %917 = vmatprep.subr.bf16.mxu0 0
  %918 = vmatpush1.bf16.msra.mxu0 0
  %919 = vmatprep.subr.bf16.mxu0 0
  %920 = vmatpush1.bf16.msra.mxu0 0
  %921 = vmatprep.subr.bf16.mxu0 0
  %922 = vmatpush1.bf16.msra.mxu0 0
  %923 = vmatprep.subr.bf16.mxu0 0
  %924 = vmatpush1.bf16.msra.mxu0 0
  %925 = vmatprep.subr.bf16.mxu0 0
  %926 = vmatpush1.bf16.msra.mxu0 0
  %927 = vmatprep.subr.bf16.mxu0 0
  %928 = vmatpush1.bf16.msra.mxu0 0
  %929 = vmatprep.subr.bf16.mxu0 0
  %930 = vmatpush1.bf16.msra.mxu0 %v913
  %931 = vmatprep.subr.bf16.mxu0 0
  %932 = vmatpush2.bf16.msra.mxu0 0
  %933 = vmatprep.subr.bf16.mxu0 0
  %934 = vmatpush2.bf16.msra.mxu0 0
  %935 = vmatprep.subr.bf16.mxu0 0
  %936 = vmatpush2.bf16.msra.mxu0 0
  %937 = vmatprep.subr.bf16.mxu0 0
  %938 = vmatpush2.bf16.msra.mxu0 0
  %939 = vmatprep.subr.bf16.mxu0 0
  %940 = vmatpush2.bf16.msra.mxu0 0
  %941 = vmatprep.subr.bf16.mxu0 0
  %942 = vmatpush2.bf16.msra.mxu0 0
  %943 = vmatprep.subr.bf16.mxu0 0
  %944 = vmatpush2.bf16.msra.mxu0 0
  %945 = vmatprep.subr.bf16.mxu0 0
  %946 = vmatpush2.bf16.msra.mxu0 0
  %947 = vmatprep.mubr.bf16.mxu0 0
  %948 = vmatmul.mubr.bf16.gmra.mxu0 %v910
  %v949 = vpop.f32.mrf.mxu0
  %v950 = vadd.f32 0.0, %v949
  %v951 = vpop.f32.mrf.mxu0
  %v952 = vpop.f32.mrf.mxu0
  %v953 = vpop.f32.mrf.mxu0
  %954 = vdwg.mxu0
  %955 = vrot.lane.b32.xlu0 %v447, 64
  %v956 = vpop.permute.xlu0 %955
  %v958 = vsel %vm619, %v616, 0
  %v961 = vsel %vm623, %v956, 0
  %963 = vmatprep.subr.bf16.mxu0 0
  %964 = vmatpush1.bf16.msra.mxu0 0
  %965 = vmatprep.subr.bf16.mxu0 0
  %966 = vmatpush1.bf16.msra.mxu0 0
  %967 = vmatprep.subr.bf16.mxu0 0
  %968 = vmatpush1.bf16.msra.mxu0 0
  %969 = vmatprep.subr.bf16.mxu0 0
  %970 = vmatpush1.bf16.msra.mxu0 0
  %971 = vmatprep.subr.bf16.mxu0 0
  %972 = vmatpush1.bf16.msra.mxu0 0
  %973 = vmatprep.subr.bf16.mxu0 0
  %974 = vmatpush1.bf16.msra.mxu0 0
  %975 = vmatprep.subr.bf16.mxu0 0
  %976 = vmatpush1.bf16.msra.mxu0 0
  %977 = vmatprep.subr.bf16.mxu0 0
  %978 = vmatpush1.bf16.msra.mxu0 %v961
  %979 = vmatprep.subr.bf16.mxu0 0
  %980 = vmatpush2.bf16.msra.mxu0 0
  %981 = vmatprep.subr.bf16.mxu0 0
  %982 = vmatpush2.bf16.msra.mxu0 0
  %983 = vmatprep.subr.bf16.mxu0 0
  %984 = vmatpush2.bf16.msra.mxu0 0
  %985 = vmatprep.subr.bf16.mxu0 0
  %986 = vmatpush2.bf16.msra.mxu0 0
  %987 = vmatprep.subr.bf16.mxu0 0
  %988 = vmatpush2.bf16.msra.mxu0 0
  %989 = vmatprep.subr.bf16.mxu0 0
  %990 = vmatpush2.bf16.msra.mxu0 0
  %991 = vmatprep.subr.bf16.mxu0 0
  %992 = vmatpush2.bf16.msra.mxu0 0
  %993 = vmatprep.subr.bf16.mxu0 0
  %994 = vmatpush2.bf16.msra.mxu0 0
  %995 = vmatprep.mubr.bf16.mxu0 0
  %996 = vmatmul.mubr.bf16.gmra.mxu0 %v958
  %v997 = vpop.f32.mrf.mxu0
  %v998 = vadd.f32 0.0, %v997
  %v999 = vpop.f32.mrf.mxu0
  %v1000 = vpop.f32.mrf.mxu0
  %v1001 = vpop.f32.mrf.mxu0
  %1002 = vdwg.mxu0
  %v1011 = vcombine.low %v662, %v710
  %v1012 = vcombine.low %v758, %v806
  %v1013 = vcombine.low %v854, %v902
  %v1014 = vcombine.low %v950, %v998
  %v1019 = vpack.c.bf16 %v1012, %v1011
  %v1020 = vpack.c.bf16 %v1014, %v1013
  %v1023 = vunpack.c.l.b16 %v35
  %v1024 = vunpack.c.l.b16 %v36
  %v1025 = vpack.c.b16 %v1024, %v1023
  %v1028 = vsel %vm57, %v1019, 0
  %v1031 = vsel %vm57, %v1020, 0
  %1033 = vmatprep.subr.bf16.mxu0 0
  %1034 = vmatpush1.bf16.msra.mxu0 0
  %1035 = vmatprep.subr.bf16.mxu0 0
  %1036 = vmatpush1.bf16.msra.mxu0 0
  %1037 = vmatprep.subr.bf16.mxu0 0
  %1038 = vmatpush1.bf16.msra.mxu0 0
  %1039 = vmatprep.subr.bf16.mxu0 0
  %1040 = vmatpush1.bf16.msra.mxu0 0
  %1041 = vmatprep.subr.bf16.mxu0 0
  %1042 = vmatpush1.bf16.msra.mxu0 0
  %1043 = vmatprep.subr.bf16.mxu0 0
  %1044 = vmatpush1.bf16.msra.mxu0 0
  %1045 = vmatprep.subr.bf16.mxu0 0
  %1046 = vmatpush1.bf16.msra.mxu0 0
  %1047 = vmatprep.subr.bf16.mxu0 0
  %1048 = vmatpush1.bf16.msra.mxu0 %v1025
  %1049 = vmatprep.subr.bf16.mxu0 0
  %1050 = vmatpush2.bf16.msra.mxu0 0
  %1051 = vmatprep.subr.bf16.mxu0 0
  %1052 = vmatpush2.bf16.msra.mxu0 0
  %1053 = vmatprep.subr.bf16.mxu0 0
  %1054 = vmatpush2.bf16.msra.mxu0 0
  %1055 = vmatprep.subr.bf16.mxu0 0
  %1056 = vmatpush2.bf16.msra.mxu0 0
  %1057 = vmatprep.subr.bf16.mxu0 0
  %1058 = vmatpush2.bf16.msra.mxu0 0
  %1059 = vmatprep.subr.bf16.mxu0 0
  %1060 = vmatpush2.bf16.msra.mxu0 0
  %1061 = vmatprep.subr.bf16.mxu0 0
  %1062 = vmatpush2.bf16.msra.mxu0 0
  %1063 = vmatprep.subr.bf16.mxu0 0
  %1064 = vmatpush2.bf16.msra.mxu0 0
  %1065 = vmatprep.mubr.bf16.mxu0 0
  %1066 = vmatmul.mubr.bf16.gmra.mxu0 %v1028
  %v1067 = vpop.f32.mrf.mxu0
  %v1068 = vadd.f32 0.0, %v1067
  %v1069 = vpop.f32.mrf.mxu0
  %v1070 = vpop.f32.mrf.mxu0
  %v1071 = vadd.f32 0.0, %v1070
  %v1072 = vpop.f32.mrf.mxu0
  %1073 = vmatprep.mubr.bf16.mxu0 0
  %1074 = vmatmul.mubr.bf16.gmra.mxu0 %v1031
  %v1075 = vpop.f32.mrf.mxu0
  %v1076 = vadd.f32 0.0, %v1075
  %v1077 = vpop.f32.mrf.mxu0
  %v1078 = vpop.f32.mrf.mxu0
  %v1079 = vadd.f32 0.0, %v1078
  %v1080 = vpop.f32.mrf.mxu0
  %1081 = vdwg.mxu0
  %v1082 = vadd.f32 %v46, %v1068
  %v1083 = vadd.f32 %v46, %v1071
  %v1084 = vadd.f32 %v46, %v1076
  %v1085 = vadd.f32 %v46, %v1079
  %1086 = vrot.lane.b32.xlu0 %v54, 112
  %v1087 = vpop.permute.xlu0 %1086
  %1088 = vrot.lane.b32.xlu0 %v54, 80
  %v1089 = vpop.permute.xlu0 %1088
  %v1091 = vsel %vm57, %v1087, 0
  %v1094 = vsel %vm57, %v1089, 0
  %1096 = vmatprep.subr.bf16.mxu0 0
  %1097 = vmatpush1.bf16.xpose.msra.mxu0 0
  %1098 = vmatprep.subr.bf16.mxu0 0
  %1099 = vmatpush1.bf16.xpose.msra.mxu0 0
  %1100 = vmatprep.subr.bf16.mxu0 0
  %1101 = vmatpush1.bf16.xpose.msra.mxu0 0
  %1102 = vmatprep.subr.bf16.mxu0 0
  %1103 = vmatpush1.bf16.xpose.msra.mxu0 0
  %1104 = vmatprep.subr.bf16.mxu0 0
  %1105 = vmatpush1.bf16.xpose.msra.mxu0 0
  %1106 = vmatprep.subr.bf16.mxu0 0
  %1107 = vmatpush1.bf16.xpose.msra.mxu0 0
  %1108 = vmatprep.subr.bf16.mxu0 0
  %1109 = vmatpush1.bf16.xpose.msra.mxu0 0
  %1110 = vmatprep.subr.bf16.mxu0 0
  %1111 = vmatpush1.bf16.xpose.msra.mxu0 %v1094
  %1112 = vmatprep.subr.bf16.mxu0 0
  %1113 = vmatpush2.bf16.xpose.msra.mxu0 0
  %1114 = vmatprep.subr.bf16.mxu0 0
  %1115 = vmatpush2.bf16.xpose.msra.mxu0 0
  %1116 = vmatprep.subr.bf16.mxu0 0
  %1117 = vmatpush2.bf16.xpose.msra.mxu0 0
  %1118 = vmatprep.subr.bf16.mxu0 0
  %1119 = vmatpush2.bf16.xpose.msra.mxu0 0
  %1120 = vmatprep.subr.bf16.mxu0 0
  %1121 = vmatpush2.bf16.xpose.msra.mxu0 0
  %1122 = vmatprep.subr.bf16.mxu0 0
  %1123 = vmatpush2.bf16.xpose.msra.mxu0 0
  %1124 = vmatprep.subr.bf16.mxu0 0
  %1125 = vmatpush2.bf16.xpose.msra.mxu0 0
  %1126 = vmatprep.subr.bf16.mxu0 0
  %1127 = vmatpush2.bf16.xpose.msra.mxu0 0
  %1128 = vmatprep.mubr.bf16.mxu0 0
  %1129 = vmatmul.mubr.bf16.gmra.mxu0 %v1091
  %v1130 = vpop.f32.mrf.mxu0
  %v1131 = vadd.f32 0.0, %v1130
  %v1132 = vpop.f32.mrf.mxu0
  %v1133 = vpop.f32.mrf.mxu0
  %v1134 = vpop.f32.mrf.mxu0
  %1135 = vdwg.mxu0
  %1136 = vrot.lane.b32.xlu0 %v111, 112
  %v1137 = vpop.permute.xlu0 %1136
  %1138 = vrot.lane.b32.xlu0 %v111, 80
  %v1139 = vpop.permute.xlu0 %1138
  %v1141 = vsel %vm57, %v1137, 0
  %v1144 = vsel %vm57, %v1139, 0
  %1146 = vmatprep.subr.bf16.mxu0 0
  %1147 = vmatpush1.bf16.xpose.msra.mxu0 0
  %1148 = vmatprep.subr.bf16.mxu0 0
  %1149 = vmatpush1.bf16.xpose.msra.mxu0 0
  %1150 = vmatprep.subr.bf16.mxu0 0
  %1151 = vmatpush1.bf16.xpose.msra.mxu0 0
  %1152 = vmatprep.subr.bf16.mxu0 0
  %1153 = vmatpush1.bf16.xpose.msra.mxu0 0
  %1154 = vmatprep.subr.bf16.mxu0 0
  %1155 = vmatpush1.bf16.xpose.msra.mxu0 0
  %1156 = vmatprep.subr.bf16.mxu0 0
  %1157 = vmatpush1.bf16.xpose.msra.mxu0 0
  %1158 = vmatprep.subr.bf16.mxu0 0
  %1159 = vmatpush1.bf16.xpose.msra.mxu0 0
  %1160 = vmatprep.subr.bf16.mxu0 0
  %1161 = vmatpush1.bf16.xpose.msra.mxu0 %v1144
  %1162 = vmatprep.subr.bf16.mxu0 0
  %1163 = vmatpush2.bf16.xpose.msra.mxu0 0
  %1164 = vmatprep.subr.bf16.mxu0 0
  %1165 = vmatpush2.bf16.xpose.msra.mxu0 0
  %1166 = vmatprep.subr.bf16.mxu0 0
  %1167 = vmatpush2.bf16.xpose.msra.mxu0 0
  %1168 = vmatprep.subr.bf16.mxu0 0
  %1169 = vmatpush2.bf16.xpose.msra.mxu0 0
  %1170 = vmatprep.subr.bf16.mxu0 0
  %1171 = vmatpush2.bf16.xpose.msra.mxu0 0
  %1172 = vmatprep.subr.bf16.mxu0 0
  %1173 = vmatpush2.bf16.xpose.msra.mxu0 0
  %1174 = vmatprep.subr.bf16.mxu0 0
  %1175 = vmatpush2.bf16.xpose.msra.mxu0 0
  %1176 = vmatprep.subr.bf16.mxu0 0
  %1177 = vmatpush2.bf16.xpose.msra.mxu0 0
  %1178 = vmatprep.mubr.bf16.mxu0 0
  %1179 = vmatmul.mubr.bf16.gmra.mxu0 %v1141
  %v1180 = vpop.f32.mrf.mxu0
  %v1181 = vadd.f32 0.0, %v1180
  %v1182 = vpop.f32.mrf.mxu0
  %v1183 = vpop.f32.mrf.mxu0
  %v1184 = vpop.f32.mrf.mxu0
  %1185 = vdwg.mxu0
  %1186 = vrot.lane.b32.xlu0 %v167, 112
  %v1187 = vpop.permute.xlu0 %1186
  %1188 = vrot.lane.b32.xlu0 %v167, 80
  %v1189 = vpop.permute.xlu0 %1188
  %v1191 = vsel %vm57, %v1187, 0
  %v1194 = vsel %vm57, %v1189, 0
  %1196 = vmatprep.subr.bf16.mxu0 0
  %1197 = vmatpush1.bf16.xpose.msra.mxu0 0
  %1198 = vmatprep.subr.bf16.mxu0 0
  %1199 = vmatpush1.bf16.xpose.msra.mxu0 0
  %1200 = vmatprep.subr.bf16.mxu0 0
  %1201 = vmatpush1.bf16.xpose.msra.mxu0 0
  %1202 = vmatprep.subr.bf16.mxu0 0
  %1203 = vmatpush1.bf16.xpose.msra.mxu0 0
  %1204 = vmatprep.subr.bf16.mxu0 0
  %1205 = vmatpush1.bf16.xpose.msra.mxu0 0
  %1206 = vmatprep.subr.bf16.mxu0 0
  %1207 = vmatpush1.bf16.xpose.msra.mxu0 0
  %1208 = vmatprep.subr.bf16.mxu0 0
  %1209 = vmatpush1.bf16.xpose.msra.mxu0 0
  %1210 = vmatprep.subr.bf16.mxu0 0
  %1211 = vmatpush1.bf16.xpose.msra.mxu0 %v1194
  %1212 = vmatprep.subr.bf16.mxu0 0
  %1213 = vmatpush2.bf16.xpose.msra.mxu0 0
  %1214 = vmatprep.subr.bf16.mxu0 0
  %1215 = vmatpush2.bf16.xpose.msra.mxu0 0
  %1216 = vmatprep.subr.bf16.mxu0 0
  %1217 = vmatpush2.bf16.xpose.msra.mxu0 0
  %1218 = vmatprep.subr.bf16.mxu0 0
  %1219 = vmatpush2.bf16.xpose.msra.mxu0 0
  %1220 = vmatprep.subr.bf16.mxu0 0
  %1221 = vmatpush2.bf16.xpose.msra.mxu0 0
  %1222 = vmatprep.subr.bf16.mxu0 0
  %1223 = vmatpush2.bf16.xpose.msra.mxu0 0
  %1224 = vmatprep.subr.bf16.mxu0 0
  %1225 = vmatpush2.bf16.xpose.msra.mxu0 0
  %1226 = vmatprep.subr.bf16.mxu0 0
  %1227 = vmatpush2.bf16.xpose.msra.mxu0 0
  %1228 = vmatprep.mubr.bf16.mxu0 0
  %1229 = vmatmul.mubr.bf16.gmra.mxu0 %v1191
  %v1230 = vpop.f32.mrf.mxu0
  %v1231 = vadd.f32 0.0, %v1230
  %v1232 = vpop.f32.mrf.mxu0
  %v1233 = vpop.f32.mrf.mxu0
  %v1234 = vpop.f32.mrf.mxu0
  %1235 = vdwg.mxu0
  %1236 = vrot.lane.b32.xlu0 %v223, 112
  %v1237 = vpop.permute.xlu0 %1236
  %1238 = vrot.lane.b32.xlu0 %v223, 80
  %v1239 = vpop.permute.xlu0 %1238
  %v1241 = vsel %vm57, %v1237, 0
  %v1244 = vsel %vm57, %v1239, 0
  %1246 = vmatprep.subr.bf16.mxu0 0
  %1247 = vmatpush1.bf16.xpose.msra.mxu0 0
  %1248 = vmatprep.subr.bf16.mxu0 0
  %1249 = vmatpush1.bf16.xpose.msra.mxu0 0
  %1250 = vmatprep.subr.bf16.mxu0 0
  %1251 = vmatpush1.bf16.xpose.msra.mxu0 0
  %1252 = vmatprep.subr.bf16.mxu0 0
  %1253 = vmatpush1.bf16.xpose.msra.mxu0 0
  %1254 = vmatprep.subr.bf16.mxu0 0
  %1255 = vmatpush1.bf16.xpose.msra.mxu0 0
  %1256 = vmatprep.subr.bf16.mxu0 0
  %1257 = vmatpush1.bf16.xpose.msra.mxu0 0
  %1258 = vmatprep.subr.bf16.mxu0 0
  %1259 = vmatpush1.bf16.xpose.msra.mxu0 0
  %1260 = vmatprep.subr.bf16.mxu0 0
  %1261 = vmatpush1.bf16.xpose.msra.mxu0 %v1244
  %1262 = vmatprep.subr.bf16.mxu0 0
  %1263 = vmatpush2.bf16.xpose.msra.mxu0 0
  %1264 = vmatprep.subr.bf16.mxu0 0
  %1265 = vmatpush2.bf16.xpose.msra.mxu0 0
  %1266 = vmatprep.subr.bf16.mxu0 0
  %1267 = vmatpush2.bf16.xpose.msra.mxu0 0
  %1268 = vmatprep.subr.bf16.mxu0 0
  %1269 = vmatpush2.bf16.xpose.msra.mxu0 0
  %1270 = vmatprep.subr.bf16.mxu0 0
  %1271 = vmatpush2.bf16.xpose.msra.mxu0 0
  %1272 = vmatprep.subr.bf16.mxu0 0
  %1273 = vmatpush2.bf16.xpose.msra.mxu0 0
  %1274 = vmatprep.subr.bf16.mxu0 0
  %1275 = vmatpush2.bf16.xpose.msra.mxu0 0
  %1276 = vmatprep.subr.bf16.mxu0 0
  %1277 = vmatpush2.bf16.xpose.msra.mxu0 0
  %1278 = vmatprep.mubr.bf16.mxu0 0
  %1279 = vmatmul.mubr.bf16.gmra.mxu0 %v1241
  %v1280 = vpop.f32.mrf.mxu0
  %v1281 = vadd.f32 0.0, %v1280
  %v1282 = vpop.f32.mrf.mxu0
  %v1283 = vpop.f32.mrf.mxu0
  %v1284 = vpop.f32.mrf.mxu0
  %1285 = vdwg.mxu0
  %1286 = vrot.lane.b32.xlu0 %v279, 112
  %v1287 = vpop.permute.xlu0 %1286
  %1288 = vrot.lane.b32.xlu0 %v279, 80
  %v1289 = vpop.permute.xlu0 %1288
  %v1291 = vsel %vm57, %v1287, 0
  %v1294 = vsel %vm57, %v1289, 0
  %1296 = vmatprep.subr.bf16.mxu0 0
  %1297 = vmatpush1.bf16.xpose.msra.mxu0 0
  %1298 = vmatprep.subr.bf16.mxu0 0
  %1299 = vmatpush1.bf16.xpose.msra.mxu0 0
  %1300 = vmatprep.subr.bf16.mxu0 0
  %1301 = vmatpush1.bf16.xpose.msra.mxu0 0
  %1302 = vmatprep.subr.bf16.mxu0 0
  %1303 = vmatpush1.bf16.xpose.msra.mxu0 0
  %1304 = vmatprep.subr.bf16.mxu0 0
  %1305 = vmatpush1.bf16.xpose.msra.mxu0 0
  %1306 = vmatprep.subr.bf16.mxu0 0
  %1307 = vmatpush1.bf16.xpose.msra.mxu0 0
  %1308 = vmatprep.subr.bf16.mxu0 0
  %1309 = vmatpush1.bf16.xpose.msra.mxu0 0
  %1310 = vmatprep.subr.bf16.mxu0 0
  %1311 = vmatpush1.bf16.xpose.msra.mxu0 %v1294
  %1312 = vmatprep.subr.bf16.mxu0 0
  %1313 = vmatpush2.bf16.xpose.msra.mxu0 0
  %1314 = vmatprep.subr.bf16.mxu0 0
  %1315 = vmatpush2.bf16.xpose.msra.mxu0 0
  %1316 = vmatprep.subr.bf16.mxu0 0
  %1317 = vmatpush2.bf16.xpose.msra.mxu0 0
  %1318 = vmatprep.subr.bf16.mxu0 0
  %1319 = vmatpush2.bf16.xpose.msra.mxu0 0
  %1320 = vmatprep.subr.bf16.mxu0 0
  %1321 = vmatpush2.bf16.xpose.msra.mxu0 0
  %1322 = vmatprep.subr.bf16.mxu0 0
  %1323 = vmatpush2.bf16.xpose.msra.mxu0 0
  %1324 = vmatprep.subr.bf16.mxu0 0
  %1325 = vmatpush2.bf16.xpose.msra.mxu0 0
  %1326 = vmatprep.subr.bf16.mxu0 0
  %1327 = vmatpush2.bf16.xpose.msra.mxu0 0
  %1328 = vmatprep.mubr.bf16.mxu0 0
  %1329 = vmatmul.mubr.bf16.gmra.mxu0 %v1291
  %v1330 = vpop.f32.mrf.mxu0
  %v1331 = vadd.f32 0.0, %v1330
  %v1332 = vpop.f32.mrf.mxu0
  %v1333 = vpop.f32.mrf.mxu0
  %v1334 = vpop.f32.mrf.mxu0
  %1335 = vdwg.mxu0
  %1336 = vrot.lane.b32.xlu0 %v335, 112
  %v1337 = vpop.permute.xlu0 %1336
  %1338 = vrot.lane.b32.xlu0 %v335, 80
  %v1339 = vpop.permute.xlu0 %1338
  %v1341 = vsel %vm57, %v1337, 0
  %v1344 = vsel %vm57, %v1339, 0
  %1346 = vmatprep.subr.bf16.mxu0 0
  %1347 = vmatpush1.bf16.xpose.msra.mxu0 0
  %1348 = vmatprep.subr.bf16.mxu0 0
  %1349 = vmatpush1.bf16.xpose.msra.mxu0 0
  %1350 = vmatprep.subr.bf16.mxu0 0
  %1351 = vmatpush1.bf16.xpose.msra.mxu0 0
  %1352 = vmatprep.subr.bf16.mxu0 0
  %1353 = vmatpush1.bf16.xpose.msra.mxu0 0
  %1354 = vmatprep.subr.bf16.mxu0 0
  %1355 = vmatpush1.bf16.xpose.msra.mxu0 0
  %1356 = vmatprep.subr.bf16.mxu0 0
  %1357 = vmatpush1.bf16.xpose.msra.mxu0 0
  %1358 = vmatprep.subr.bf16.mxu0 0
  %1359 = vmatpush1.bf16.xpose.msra.mxu0 0
  %1360 = vmatprep.subr.bf16.mxu0 0
  %1361 = vmatpush1.bf16.xpose.msra.mxu0 %v1344
  %1362 = vmatprep.subr.bf16.mxu0 0
  %1363 = vmatpush2.bf16.xpose.msra.mxu0 0
  %1364 = vmatprep.subr.bf16.mxu0 0
  %1365 = vmatpush2.bf16.xpose.msra.mxu0 0
  %1366 = vmatprep.subr.bf16.mxu0 0
  %1367 = vmatpush2.bf16.xpose.msra.mxu0 0
  %1368 = vmatprep.subr.bf16.mxu0 0
  %1369 = vmatpush2.bf16.xpose.msra.mxu0 0
  %1370 = vmatprep.subr.bf16.mxu0 0
  %1371 = vmatpush2.bf16.xpose.msra.mxu0 0
  %1372 = vmatprep.subr.bf16.mxu0 0
  %1373 = vmatpush2.bf16.xpose.msra.mxu0 0
  %1374 = vmatprep.subr.bf16.mxu0 0
  %1375 = vmatpush2.bf16.xpose.msra.mxu0 0
  %1376 = vmatprep.subr.bf16.mxu0 0
  %1377 = vmatpush2.bf16.xpose.msra.mxu0 0
  %1378 = vmatprep.mubr.bf16.mxu0 0
  %1379 = vmatmul.mubr.bf16.gmra.mxu0 %v1341
  %v1380 = vpop.f32.mrf.mxu0
  %v1381 = vadd.f32 0.0, %v1380
  %v1382 = vpop.f32.mrf.mxu0
  %v1383 = vpop.f32.mrf.mxu0
  %v1384 = vpop.f32.mrf.mxu0
  %1385 = vdwg.mxu0
  %1386 = vrot.lane.b32.xlu0 %v391, 112
  %v1387 = vpop.permute.xlu0 %1386
  %1388 = vrot.lane.b32.xlu0 %v391, 80
  %v1389 = vpop.permute.xlu0 %1388
  %v1391 = vsel %vm57, %v1387, 0
  %v1394 = vsel %vm57, %v1389, 0
  %1396 = vmatprep.subr.bf16.mxu0 0
  %1397 = vmatpush1.bf16.xpose.msra.mxu0 0
  %1398 = vmatprep.subr.bf16.mxu0 0
  %1399 = vmatpush1.bf16.xpose.msra.mxu0 0
  %1400 = vmatprep.subr.bf16.mxu0 0
  %1401 = vmatpush1.bf16.xpose.msra.mxu0 0
  %1402 = vmatprep.subr.bf16.mxu0 0
  %1403 = vmatpush1.bf16.xpose.msra.mxu0 0
  %1404 = vmatprep.subr.bf16.mxu0 0
  %1405 = vmatpush1.bf16.xpose.msra.mxu0 0
  %1406 = vmatprep.subr.bf16.mxu0 0
  %1407 = vmatpush1.bf16.xpose.msra.mxu0 0
  %1408 = vmatprep.subr.bf16.mxu0 0
  %1409 = vmatpush1.bf16.xpose.msra.mxu0 0
  %1410 = vmatprep.subr.bf16.mxu0 0
  %1411 = vmatpush1.bf16.xpose.msra.mxu0 %v1394
  %1412 = vmatprep.subr.bf16.mxu0 0
  %1413 = vmatpush2.bf16.xpose.msra.mxu0 0
  %1414 = vmatprep.subr.bf16.mxu0 0
  %1415 = vmatpush2.bf16.xpose.msra.mxu0 0
  %1416 = vmatprep.subr.bf16.mxu0 0
  %1417 = vmatpush2.bf16.xpose.msra.mxu0 0
  %1418 = vmatprep.subr.bf16.mxu0 0
  %1419 = vmatpush2.bf16.xpose.msra.mxu0 0
  %1420 = vmatprep.subr.bf16.mxu0 0
  %1421 = vmatpush2.bf16.xpose.msra.mxu0 0
  %1422 = vmatprep.subr.bf16.mxu0 0
  %1423 = vmatpush2.bf16.xpose.msra.mxu0 0
  %1424 = vmatprep.subr.bf16.mxu0 0
  %1425 = vmatpush2.bf16.xpose.msra.mxu0 0
  %1426 = vmatprep.subr.bf16.mxu0 0
  %1427 = vmatpush2.bf16.xpose.msra.mxu0 0
  %1428 = vmatprep.mubr.bf16.mxu0 0
  %1429 = vmatmul.mubr.bf16.gmra.mxu0 %v1391
  %v1430 = vpop.f32.mrf.mxu0
  %v1431 = vadd.f32 0.0, %v1430
  %v1432 = vpop.f32.mrf.mxu0
  %v1433 = vpop.f32.mrf.mxu0
  %v1434 = vpop.f32.mrf.mxu0
  %1435 = vdwg.mxu0
  %1436 = vrot.lane.b32.xlu0 %v447, 112
  %v1437 = vpop.permute.xlu0 %1436
  %1438 = vrot.lane.b32.xlu0 %v447, 80
  %v1439 = vpop.permute.xlu0 %1438
  %v1441 = vsel %vm57, %v1437, 0
  %v1444 = vsel %vm57, %v1439, 0
  %1446 = vmatprep.subr.bf16.mxu0 0
  %1447 = vmatpush1.bf16.xpose.msra.mxu0 0
  %1448 = vmatprep.subr.bf16.mxu0 0
  %1449 = vmatpush1.bf16.xpose.msra.mxu0 0
  %1450 = vmatprep.subr.bf16.mxu0 0
  %1451 = vmatpush1.bf16.xpose.msra.mxu0 0
  %1452 = vmatprep.subr.bf16.mxu0 0
  %1453 = vmatpush1.bf16.xpose.msra.mxu0 0
  %1454 = vmatprep.subr.bf16.mxu0 0
  %1455 = vmatpush1.bf16.xpose.msra.mxu0 0
  %1456 = vmatprep.subr.bf16.mxu0 0
  %1457 = vmatpush1.bf16.xpose.msra.mxu0 0
  %1458 = vmatprep.subr.bf16.mxu0 0
  %1459 = vmatpush1.bf16.xpose.msra.mxu0 0
  %1460 = vmatprep.subr.bf16.mxu0 0
  %1461 = vmatpush1.bf16.xpose.msra.mxu0 %v1444
  %1462 = vmatprep.subr.bf16.mxu0 0
  %1463 = vmatpush2.bf16.xpose.msra.mxu0 0
  %1464 = vmatprep.subr.bf16.mxu0 0
  %1465 = vmatpush2.bf16.xpose.msra.mxu0 0
  %1466 = vmatprep.subr.bf16.mxu0 0
  %1467 = vmatpush2.bf16.xpose.msra.mxu0 0
  %1468 = vmatprep.subr.bf16.mxu0 0
  %1469 = vmatpush2.bf16.xpose.msra.mxu0 0
  %1470 = vmatprep.subr.bf16.mxu0 0
  %1471 = vmatpush2.bf16.xpose.msra.mxu0 0
  %1472 = vmatprep.subr.bf16.mxu0 0
  %1473 = vmatpush2.bf16.xpose.msra.mxu0 0
  %1474 = vmatprep.subr.bf16.mxu0 0
  %1475 = vmatpush2.bf16.xpose.msra.mxu0 0
  %1476 = vmatprep.subr.bf16.mxu0 0
  %1477 = vmatpush2.bf16.xpose.msra.mxu0 0
  %1478 = vmatprep.mubr.bf16.mxu0 0
  %1479 = vmatmul.mubr.bf16.gmra.mxu0 %v1441
  %v1480 = vpop.f32.mrf.mxu0
  %v1481 = vadd.f32 0.0, %v1480
  %v1482 = vpop.f32.mrf.mxu0
  %v1483 = vpop.f32.mrf.mxu0
  %v1484 = vpop.f32.mrf.mxu0
  %1485 = vdwg.mxu0
  %v1486 = vmul.f32 %v1131, 0.25
  %v1487 = vmul.f32 %v1181, 0.25
  %v1488 = vmul.f32 %v1231, 0.25
  %v1489 = vmul.f32 %v1281, 0.25
  %v1490 = vmul.f32 %v1331, 0.25
  %v1491 = vmul.f32 %v1381, 0.25
  %v1492 = vmul.f32 %v1431, 0.25
  %v1493 = vmul.f32 %v1481, 0.25
  %v1494 = vadd.f32 %v1486, %v30
  %v1495 = vadd.f32 %v1487, %v30
  %v1496 = vadd.f32 %v1488, %v30
  %v1497 = vadd.f32 %v1489, %v30
  %v1498 = vadd.f32 %v1490, %v30
  %v1499 = vadd.f32 %v1491, %v30
  %v1500 = vadd.f32 %v1492, %v30
  %v1501 = vadd.f32 %v1493, %v30
  %v1502 = vadd.f32 %v1494, %v31
  %v1503 = vadd.f32 %v1495, %v31
  %v1504 = vadd.f32 %v1496, %v32
  %v1505 = vadd.f32 %v1497, %v32
  %v1506 = vadd.f32 %v1498, %v33
  %v1507 = vadd.f32 %v1499, %v33
  %v1508 = vadd.f32 %v1500, %v34
  %v1509 = vadd.f32 %v1501, %v34
  %v1510 = vsel %vm520, %v1502, -inf
  %1511 = vmax.xlane.f32.xlu0 %v1510
  %v1512 = vpop.xlane.xlu0 %1511
  %v1513 = vsel %vm520, %v1503, -inf
  %1514 = vmax.xlane.f32.xlu0 %v1513
  %v1515 = vpop.xlane.xlu0 %1514
  %v1516 = vsel %vm520, %v1504, -inf
  %1517 = vmax.xlane.f32.xlu0 %v1516
  %v1518 = vpop.xlane.xlu0 %1517
  %v1519 = vsel %vm520, %v1505, -inf
  %1520 = vmax.xlane.f32.xlu0 %v1519
  %v1521 = vpop.xlane.xlu0 %1520
  %v1522 = vsel %vm520, %v1506, -inf
  %1523 = vmax.xlane.f32.xlu0 %v1522
  %v1524 = vpop.xlane.xlu0 %1523
  %v1525 = vsel %vm520, %v1507, -inf
  %1526 = vmax.xlane.f32.xlu0 %v1525
  %v1527 = vpop.xlane.xlu0 %1526
  %v1528 = vsel %vm520, %v1508, -inf
  %1529 = vmax.xlane.f32.xlu0 %v1528
  %v1530 = vpop.xlane.xlu0 %1529
  %v1531 = vsel %vm520, %v1509, -inf
  %1532 = vmax.xlane.f32.xlu0 %v1531
  %v1533 = vpop.xlane.xlu0 %1532
  %v1534 = vsub.f32 %v1502, %v1512
  %v1535 = vsub.f32 %v1503, %v1515
  %v1536 = vsub.f32 %v1504, %v1518
  %v1537 = vsub.f32 %v1505, %v1521
  %v1538 = vsub.f32 %v1506, %v1524
  %v1539 = vsub.f32 %v1507, %v1527
  %v1540 = vsub.f32 %v1508, %v1530
  %v1541 = vsub.f32 %v1509, %v1533
  %v1542 = vmul.f32 %v1534, 1.442695
  %v1543 = vpow.pop %v1542
  %v1544 = vmul.f32 %v1535, 1.442695
  %v1545 = vpow.pop %v1544
  %v1546 = vmul.f32 %v1536, 1.442695
  %v1547 = vpow.pop %v1546
  %v1548 = vmul.f32 %v1537, 1.442695
  %v1549 = vpow.pop %v1548
  %v1550 = vmul.f32 %v1538, 1.442695
  %v1551 = vpow.pop %v1550
  %v1552 = vmul.f32 %v1539, 1.442695
  %v1553 = vpow.pop %v1552
  %v1554 = vmul.f32 %v1540, 1.442695
  %v1555 = vpow.pop %v1554
  %v1556 = vmul.f32 %v1541, 1.442695
  %v1557 = vpow.pop %v1556
  %v1558 = vsel %vm520, %v1543, 0.0
  %1559 = vadd.xlane.f32.xlu0 %v1558
  %v1560 = vpop.xlane.xlu0 %1559
  %v1561 = vsel %vm520, %v1545, 0.0
  %1562 = vadd.xlane.f32.xlu0 %v1561
  %v1563 = vpop.xlane.xlu0 %1562
  %v1564 = vsel %vm520, %v1547, 0.0
  %1565 = vadd.xlane.f32.xlu0 %v1564
  %v1566 = vpop.xlane.xlu0 %1565
  %v1567 = vsel %vm520, %v1549, 0.0
  %1568 = vadd.xlane.f32.xlu0 %v1567
  %v1569 = vpop.xlane.xlu0 %1568
  %v1570 = vsel %vm520, %v1551, 0.0
  %1571 = vadd.xlane.f32.xlu0 %v1570
  %v1572 = vpop.xlane.xlu0 %1571
  %v1573 = vsel %vm520, %v1553, 0.0
  %1574 = vadd.xlane.f32.xlu0 %v1573
  %v1575 = vpop.xlane.xlu0 %1574
  %v1576 = vsel %vm520, %v1555, 0.0
  %1577 = vadd.xlane.f32.xlu0 %v1576
  %v1578 = vpop.xlane.xlu0 %1577
  %v1579 = vsel %vm520, %v1557, 0.0
  %1580 = vadd.xlane.f32.xlu0 %v1579
  %v1581 = vpop.xlane.xlu0 %1580
  %v1582 = vrcp.pop %v1560
  %v1583 = vrcp.pop %v1563
  %v1584 = vrcp.pop %v1566
  %v1585 = vrcp.pop %v1569
  %v1586 = vrcp.pop %v1572
  %v1587 = vrcp.pop %v1575
  %v1588 = vrcp.pop %v1578
  %v1589 = vrcp.pop %v1581
  %v1590 = vmul.f32 %v1543, %v1582
  %v1591 = vmul.f32 %v1545, %v1583
  %v1592 = vmul.f32 %v1547, %v1584
  %v1593 = vmul.f32 %v1549, %v1585
  %v1594 = vmul.f32 %v1551, %v1586
  %v1595 = vmul.f32 %v1553, %v1587
  %v1596 = vmul.f32 %v1555, %v1588
  %v1597 = vmul.f32 %v1557, %v1589
  %v1598 = vpack.c.bf16 %v1590, %v1590
  %v1599 = vpack.c.bf16 %v1591, %v1591
  %v1600 = vpack.c.bf16 %v1592, %v1592
  %v1601 = vpack.c.bf16 %v1593, %v1593
  %v1602 = vpack.c.bf16 %v1594, %v1594
  %v1603 = vpack.c.bf16 %v1595, %v1595
  %v1604 = vpack.c.bf16 %v1596, %v1596
  %v1605 = vpack.c.bf16 %v1597, %v1597
  %1606 = vrot.lane.b32.xlu0 %v54, 48
  %v1607 = vpop.permute.xlu0 %1606
  %v1609 = vsel %vm619, %v1598, 0
  %v1612 = vsel %vm623, %v1607, 0
  %1614 = vmatprep.subr.bf16.mxu0 0
  %1615 = vmatpush1.bf16.msra.mxu0 0
  %1616 = vmatprep.subr.bf16.mxu0 0
  %1617 = vmatpush1.bf16.msra.mxu0 0
  %1618 = vmatprep.subr.bf16.mxu0 0
  %1619 = vmatpush1.bf16.msra.mxu0 0
  %1620 = vmatprep.subr.bf16.mxu0 0
  %1621 = vmatpush1.bf16.msra.mxu0 0
  %1622 = vmatprep.subr.bf16.mxu0 0
  %1623 = vmatpush1.bf16.msra.mxu0 0
  %1624 = vmatprep.subr.bf16.mxu0 0
  %1625 = vmatpush1.bf16.msra.mxu0 0
  %1626 = vmatprep.subr.bf16.mxu0 0
  %1627 = vmatpush1.bf16.msra.mxu0 0
  %1628 = vmatprep.subr.bf16.mxu0 0
  %1629 = vmatpush1.bf16.msra.mxu0 %v1612
  %1630 = vmatprep.subr.bf16.mxu0 0
  %1631 = vmatpush2.bf16.msra.mxu0 0
  %1632 = vmatprep.subr.bf16.mxu0 0
  %1633 = vmatpush2.bf16.msra.mxu0 0
  %1634 = vmatprep.subr.bf16.mxu0 0
  %1635 = vmatpush2.bf16.msra.mxu0 0
  %1636 = vmatprep.subr.bf16.mxu0 0
  %1637 = vmatpush2.bf16.msra.mxu0 0
  %1638 = vmatprep.subr.bf16.mxu0 0
  %1639 = vmatpush2.bf16.msra.mxu0 0
  %1640 = vmatprep.subr.bf16.mxu0 0
  %1641 = vmatpush2.bf16.msra.mxu0 0
  %1642 = vmatprep.subr.bf16.mxu0 0
  %1643 = vmatpush2.bf16.msra.mxu0 0
  %1644 = vmatprep.subr.bf16.mxu0 0
  %1645 = vmatpush2.bf16.msra.mxu0 0
  %1646 = vmatprep.mubr.bf16.mxu0 0
  %1647 = vmatmul.mubr.bf16.gmra.mxu0 %v1609
  %v1648 = vpop.f32.mrf.mxu0
  %v1649 = vadd.f32 0.0, %v1648
  %v1650 = vpop.f32.mrf.mxu0
  %v1651 = vpop.f32.mrf.mxu0
  %v1652 = vpop.f32.mrf.mxu0
  %1653 = vdwg.mxu0
  %1654 = vrot.lane.b32.xlu0 %v111, 48
  %v1655 = vpop.permute.xlu0 %1654
  %v1657 = vsel %vm619, %v1599, 0
  %v1660 = vsel %vm623, %v1655, 0
  %1662 = vmatprep.subr.bf16.mxu0 0
  %1663 = vmatpush1.bf16.msra.mxu0 0
  %1664 = vmatprep.subr.bf16.mxu0 0
  %1665 = vmatpush1.bf16.msra.mxu0 0
  %1666 = vmatprep.subr.bf16.mxu0 0
  %1667 = vmatpush1.bf16.msra.mxu0 0
  %1668 = vmatprep.subr.bf16.mxu0 0
  %1669 = vmatpush1.bf16.msra.mxu0 0
  %1670 = vmatprep.subr.bf16.mxu0 0
  %1671 = vmatpush1.bf16.msra.mxu0 0
  %1672 = vmatprep.subr.bf16.mxu0 0
  %1673 = vmatpush1.bf16.msra.mxu0 0
  %1674 = vmatprep.subr.bf16.mxu0 0
  %1675 = vmatpush1.bf16.msra.mxu0 0
  %1676 = vmatprep.subr.bf16.mxu0 0
  %1677 = vmatpush1.bf16.msra.mxu0 %v1660
  %1678 = vmatprep.subr.bf16.mxu0 0
  %1679 = vmatpush2.bf16.msra.mxu0 0
  %1680 = vmatprep.subr.bf16.mxu0 0
  %1681 = vmatpush2.bf16.msra.mxu0 0
  %1682 = vmatprep.subr.bf16.mxu0 0
  %1683 = vmatpush2.bf16.msra.mxu0 0
  %1684 = vmatprep.subr.bf16.mxu0 0
  %1685 = vmatpush2.bf16.msra.mxu0 0
  %1686 = vmatprep.subr.bf16.mxu0 0
  %1687 = vmatpush2.bf16.msra.mxu0 0
  %1688 = vmatprep.subr.bf16.mxu0 0
  %1689 = vmatpush2.bf16.msra.mxu0 0
  %1690 = vmatprep.subr.bf16.mxu0 0
  %1691 = vmatpush2.bf16.msra.mxu0 0
  %1692 = vmatprep.subr.bf16.mxu0 0
  %1693 = vmatpush2.bf16.msra.mxu0 0
  %1694 = vmatprep.mubr.bf16.mxu0 0
  %1695 = vmatmul.mubr.bf16.gmra.mxu0 %v1657
  %v1696 = vpop.f32.mrf.mxu0
  %v1697 = vadd.f32 0.0, %v1696
  %v1698 = vpop.f32.mrf.mxu0
  %v1699 = vpop.f32.mrf.mxu0
  %v1700 = vpop.f32.mrf.mxu0
  %1701 = vdwg.mxu0
  %1702 = vrot.lane.b32.xlu0 %v167, 48
  %v1703 = vpop.permute.xlu0 %1702
  %v1705 = vsel %vm619, %v1600, 0
  %v1708 = vsel %vm623, %v1703, 0
  %1710 = vmatprep.subr.bf16.mxu0 0
  %1711 = vmatpush1.bf16.msra.mxu0 0
  %1712 = vmatprep.subr.bf16.mxu0 0
  %1713 = vmatpush1.bf16.msra.mxu0 0
  %1714 = vmatprep.subr.bf16.mxu0 0
  %1715 = vmatpush1.bf16.msra.mxu0 0
  %1716 = vmatprep.subr.bf16.mxu0 0
  %1717 = vmatpush1.bf16.msra.mxu0 0
  %1718 = vmatprep.subr.bf16.mxu0 0
  %1719 = vmatpush1.bf16.msra.mxu0 0
  %1720 = vmatprep.subr.bf16.mxu0 0
  %1721 = vmatpush1.bf16.msra.mxu0 0
  %1722 = vmatprep.subr.bf16.mxu0 0
  %1723 = vmatpush1.bf16.msra.mxu0 0
  %1724 = vmatprep.subr.bf16.mxu0 0
  %1725 = vmatpush1.bf16.msra.mxu0 %v1708
  %1726 = vmatprep.subr.bf16.mxu0 0
  %1727 = vmatpush2.bf16.msra.mxu0 0
  %1728 = vmatprep.subr.bf16.mxu0 0
  %1729 = vmatpush2.bf16.msra.mxu0 0
  %1730 = vmatprep.subr.bf16.mxu0 0
  %1731 = vmatpush2.bf16.msra.mxu0 0
  %1732 = vmatprep.subr.bf16.mxu0 0
  %1733 = vmatpush2.bf16.msra.mxu0 0
  %1734 = vmatprep.subr.bf16.mxu0 0
  %1735 = vmatpush2.bf16.msra.mxu0 0
  %1736 = vmatprep.subr.bf16.mxu0 0
  %1737 = vmatpush2.bf16.msra.mxu0 0
  %1738 = vmatprep.subr.bf16.mxu0 0
  %1739 = vmatpush2.bf16.msra.mxu0 0
  %1740 = vmatprep.subr.bf16.mxu0 0
  %1741 = vmatpush2.bf16.msra.mxu0 0
  %1742 = vmatprep.mubr.bf16.mxu0 0
  %1743 = vmatmul.mubr.bf16.gmra.mxu0 %v1705
  %v1744 = vpop.f32.mrf.mxu0
  %v1745 = vadd.f32 0.0, %v1744
  %v1746 = vpop.f32.mrf.mxu0
  %v1747 = vpop.f32.mrf.mxu0
  %v1748 = vpop.f32.mrf.mxu0
  %1749 = vdwg.mxu0
  %1750 = vrot.lane.b32.xlu0 %v223, 48
  %v1751 = vpop.permute.xlu0 %1750
  %v1753 = vsel %vm619, %v1601, 0
  %v1756 = vsel %vm623, %v1751, 0
  %1758 = vmatprep.subr.bf16.mxu0 0
  %1759 = vmatpush1.bf16.msra.mxu0 0
  %1760 = vmatprep.subr.bf16.mxu0 0
  %1761 = vmatpush1.bf16.msra.mxu0 0
  %1762 = vmatprep.subr.bf16.mxu0 0
  %1763 = vmatpush1.bf16.msra.mxu0 0
  %1764 = vmatprep.subr.bf16.mxu0 0
  %1765 = vmatpush1.bf16.msra.mxu0 0
  %1766 = vmatprep.subr.bf16.mxu0 0
  %1767 = vmatpush1.bf16.msra.mxu0 0
  %1768 = vmatprep.subr.bf16.mxu0 0
  %1769 = vmatpush1.bf16.msra.mxu0 0
  %1770 = vmatprep.subr.bf16.mxu0 0
  %1771 = vmatpush1.bf16.msra.mxu0 0
  %1772 = vmatprep.subr.bf16.mxu0 0
  %1773 = vmatpush1.bf16.msra.mxu0 %v1756
  %1774 = vmatprep.subr.bf16.mxu0 0
  %1775 = vmatpush2.bf16.msra.mxu0 0
  %1776 = vmatprep.subr.bf16.mxu0 0
  %1777 = vmatpush2.bf16.msra.mxu0 0
  %1778 = vmatprep.subr.bf16.mxu0 0
  %1779 = vmatpush2.bf16.msra.mxu0 0
  %1780 = vmatprep.subr.bf16.mxu0 0
  %1781 = vmatpush2.bf16.msra.mxu0 0
  %1782 = vmatprep.subr.bf16.mxu0 0
  %1783 = vmatpush2.bf16.msra.mxu0 0
  %1784 = vmatprep.subr.bf16.mxu0 0
  %1785 = vmatpush2.bf16.msra.mxu0 0
  %1786 = vmatprep.subr.bf16.mxu0 0
  %1787 = vmatpush2.bf16.msra.mxu0 0
  %1788 = vmatprep.subr.bf16.mxu0 0
  %1789 = vmatpush2.bf16.msra.mxu0 0
  %1790 = vmatprep.mubr.bf16.mxu0 0
  %1791 = vmatmul.mubr.bf16.gmra.mxu0 %v1753
  %v1792 = vpop.f32.mrf.mxu0
  %v1793 = vadd.f32 0.0, %v1792
  %v1794 = vpop.f32.mrf.mxu0
  %v1795 = vpop.f32.mrf.mxu0
  %v1796 = vpop.f32.mrf.mxu0
  %1797 = vdwg.mxu0
  %1798 = vrot.lane.b32.xlu0 %v279, 48
  %v1799 = vpop.permute.xlu0 %1798
  %v1801 = vsel %vm619, %v1602, 0
  %v1804 = vsel %vm623, %v1799, 0
  %1806 = vmatprep.subr.bf16.mxu0 0
  %1807 = vmatpush1.bf16.msra.mxu0 0
  %1808 = vmatprep.subr.bf16.mxu0 0
  %1809 = vmatpush1.bf16.msra.mxu0 0
  %1810 = vmatprep.subr.bf16.mxu0 0
  %1811 = vmatpush1.bf16.msra.mxu0 0
  %1812 = vmatprep.subr.bf16.mxu0 0
  %1813 = vmatpush1.bf16.msra.mxu0 0
  %1814 = vmatprep.subr.bf16.mxu0 0
  %1815 = vmatpush1.bf16.msra.mxu0 0
  %1816 = vmatprep.subr.bf16.mxu0 0
  %1817 = vmatpush1.bf16.msra.mxu0 0
  %1818 = vmatprep.subr.bf16.mxu0 0
  %1819 = vmatpush1.bf16.msra.mxu0 0
  %1820 = vmatprep.subr.bf16.mxu0 0
  %1821 = vmatpush1.bf16.msra.mxu0 %v1804
  %1822 = vmatprep.subr.bf16.mxu0 0
  %1823 = vmatpush2.bf16.msra.mxu0 0
  %1824 = vmatprep.subr.bf16.mxu0 0
  %1825 = vmatpush2.bf16.msra.mxu0 0
  %1826 = vmatprep.subr.bf16.mxu0 0
  %1827 = vmatpush2.bf16.msra.mxu0 0
  %1828 = vmatprep.subr.bf16.mxu0 0
  %1829 = vmatpush2.bf16.msra.mxu0 0
  %1830 = vmatprep.subr.bf16.mxu0 0
  %1831 = vmatpush2.bf16.msra.mxu0 0
  %1832 = vmatprep.subr.bf16.mxu0 0
  %1833 = vmatpush2.bf16.msra.mxu0 0
  %1834 = vmatprep.subr.bf16.mxu0 0
  %1835 = vmatpush2.bf16.msra.mxu0 0
  %1836 = vmatprep.subr.bf16.mxu0 0
  %1837 = vmatpush2.bf16.msra.mxu0 0
  %1838 = vmatprep.mubr.bf16.mxu0 0
  %1839 = vmatmul.mubr.bf16.gmra.mxu0 %v1801
  %v1840 = vpop.f32.mrf.mxu0
  %v1841 = vadd.f32 0.0, %v1840
  %v1842 = vpop.f32.mrf.mxu0
  %v1843 = vpop.f32.mrf.mxu0
  %v1844 = vpop.f32.mrf.mxu0
  %1845 = vdwg.mxu0
  %1846 = vrot.lane.b32.xlu0 %v335, 48
  %v1847 = vpop.permute.xlu0 %1846
  %v1849 = vsel %vm619, %v1603, 0
  %v1852 = vsel %vm623, %v1847, 0
  %1854 = vmatprep.subr.bf16.mxu0 0
  %1855 = vmatpush1.bf16.msra.mxu0 0
  %1856 = vmatprep.subr.bf16.mxu0 0
  %1857 = vmatpush1.bf16.msra.mxu0 0
  %1858 = vmatprep.subr.bf16.mxu0 0
  %1859 = vmatpush1.bf16.msra.mxu0 0
  %1860 = vmatprep.subr.bf16.mxu0 0
  %1861 = vmatpush1.bf16.msra.mxu0 0
  %1862 = vmatprep.subr.bf16.mxu0 0
  %1863 = vmatpush1.bf16.msra.mxu0 0
  %1864 = vmatprep.subr.bf16.mxu0 0
  %1865 = vmatpush1.bf16.msra.mxu0 0
  %1866 = vmatprep.subr.bf16.mxu0 0
  %1867 = vmatpush1.bf16.msra.mxu0 0
  %1868 = vmatprep.subr.bf16.mxu0 0
  %1869 = vmatpush1.bf16.msra.mxu0 %v1852
  %1870 = vmatprep.subr.bf16.mxu0 0
  %1871 = vmatpush2.bf16.msra.mxu0 0
  %1872 = vmatprep.subr.bf16.mxu0 0
  %1873 = vmatpush2.bf16.msra.mxu0 0
  %1874 = vmatprep.subr.bf16.mxu0 0
  %1875 = vmatpush2.bf16.msra.mxu0 0
  %1876 = vmatprep.subr.bf16.mxu0 0
  %1877 = vmatpush2.bf16.msra.mxu0 0
  %1878 = vmatprep.subr.bf16.mxu0 0
  %1879 = vmatpush2.bf16.msra.mxu0 0
  %1880 = vmatprep.subr.bf16.mxu0 0
  %1881 = vmatpush2.bf16.msra.mxu0 0
  %1882 = vmatprep.subr.bf16.mxu0 0
  %1883 = vmatpush2.bf16.msra.mxu0 0
  %1884 = vmatprep.subr.bf16.mxu0 0
  %1885 = vmatpush2.bf16.msra.mxu0 0
  %1886 = vmatprep.mubr.bf16.mxu0 0
  %1887 = vmatmul.mubr.bf16.gmra.mxu0 %v1849
  %v1888 = vpop.f32.mrf.mxu0
  %v1889 = vadd.f32 0.0, %v1888
  %v1890 = vpop.f32.mrf.mxu0
  %v1891 = vpop.f32.mrf.mxu0
  %v1892 = vpop.f32.mrf.mxu0
  %1893 = vdwg.mxu0
  %1894 = vrot.lane.b32.xlu0 %v391, 48
  %v1895 = vpop.permute.xlu0 %1894
  %v1897 = vsel %vm619, %v1604, 0
  %v1900 = vsel %vm623, %v1895, 0
  %1902 = vmatprep.subr.bf16.mxu0 0
  %1903 = vmatpush1.bf16.msra.mxu0 0
  %1904 = vmatprep.subr.bf16.mxu0 0
  %1905 = vmatpush1.bf16.msra.mxu0 0
  %1906 = vmatprep.subr.bf16.mxu0 0
  %1907 = vmatpush1.bf16.msra.mxu0 0
  %1908 = vmatprep.subr.bf16.mxu0 0
  %1909 = vmatpush1.bf16.msra.mxu0 0
  %1910 = vmatprep.subr.bf16.mxu0 0
  %1911 = vmatpush1.bf16.msra.mxu0 0
  %1912 = vmatprep.subr.bf16.mxu0 0
  %1913 = vmatpush1.bf16.msra.mxu0 0
  %1914 = vmatprep.subr.bf16.mxu0 0
  %1915 = vmatpush1.bf16.msra.mxu0 0
  %1916 = vmatprep.subr.bf16.mxu0 0
  %1917 = vmatpush1.bf16.msra.mxu0 %v1900
  %1918 = vmatprep.subr.bf16.mxu0 0
  %1919 = vmatpush2.bf16.msra.mxu0 0
  %1920 = vmatprep.subr.bf16.mxu0 0
  %1921 = vmatpush2.bf16.msra.mxu0 0
  %1922 = vmatprep.subr.bf16.mxu0 0
  %1923 = vmatpush2.bf16.msra.mxu0 0
  %1924 = vmatprep.subr.bf16.mxu0 0
  %1925 = vmatpush2.bf16.msra.mxu0 0
  %1926 = vmatprep.subr.bf16.mxu0 0
  %1927 = vmatpush2.bf16.msra.mxu0 0
  %1928 = vmatprep.subr.bf16.mxu0 0
  %1929 = vmatpush2.bf16.msra.mxu0 0
  %1930 = vmatprep.subr.bf16.mxu0 0
  %1931 = vmatpush2.bf16.msra.mxu0 0
  %1932 = vmatprep.subr.bf16.mxu0 0
  %1933 = vmatpush2.bf16.msra.mxu0 0
  %1934 = vmatprep.mubr.bf16.mxu0 0
  %1935 = vmatmul.mubr.bf16.gmra.mxu0 %v1897
  %v1936 = vpop.f32.mrf.mxu0
  %v1937 = vadd.f32 0.0, %v1936
  %v1938 = vpop.f32.mrf.mxu0
  %v1939 = vpop.f32.mrf.mxu0
  %v1940 = vpop.f32.mrf.mxu0
  %1941 = vdwg.mxu0
  %1942 = vrot.lane.b32.xlu0 %v447, 48
  %v1943 = vpop.permute.xlu0 %1942
  %v1945 = vsel %vm619, %v1605, 0
  %v1948 = vsel %vm623, %v1943, 0
  %1950 = vmatprep.subr.bf16.mxu0 0
  %1951 = vmatpush1.bf16.msra.mxu0 0
  %1952 = vmatprep.subr.bf16.mxu0 0
  %1953 = vmatpush1.bf16.msra.mxu0 0
  %1954 = vmatprep.subr.bf16.mxu0 0
  %1955 = vmatpush1.bf16.msra.mxu0 0
  %1956 = vmatprep.subr.bf16.mxu0 0
  %1957 = vmatpush1.bf16.msra.mxu0 0
  %1958 = vmatprep.subr.bf16.mxu0 0
  %1959 = vmatpush1.bf16.msra.mxu0 0
  %1960 = vmatprep.subr.bf16.mxu0 0
  %1961 = vmatpush1.bf16.msra.mxu0 0
  %1962 = vmatprep.subr.bf16.mxu0 0
  %1963 = vmatpush1.bf16.msra.mxu0 0
  %1964 = vmatprep.subr.bf16.mxu0 0
  %1965 = vmatpush1.bf16.msra.mxu0 %v1948
  %1966 = vmatprep.subr.bf16.mxu0 0
  %1967 = vmatpush2.bf16.msra.mxu0 0
  %1968 = vmatprep.subr.bf16.mxu0 0
  %1969 = vmatpush2.bf16.msra.mxu0 0
  %1970 = vmatprep.subr.bf16.mxu0 0
  %1971 = vmatpush2.bf16.msra.mxu0 0
  %1972 = vmatprep.subr.bf16.mxu0 0
  %1973 = vmatpush2.bf16.msra.mxu0 0
  %1974 = vmatprep.subr.bf16.mxu0 0
  %1975 = vmatpush2.bf16.msra.mxu0 0
  %1976 = vmatprep.subr.bf16.mxu0 0
  %1977 = vmatpush2.bf16.msra.mxu0 0
  %1978 = vmatprep.subr.bf16.mxu0 0
  %1979 = vmatpush2.bf16.msra.mxu0 0
  %1980 = vmatprep.subr.bf16.mxu0 0
  %1981 = vmatpush2.bf16.msra.mxu0 0
  %1982 = vmatprep.mubr.bf16.mxu0 0
  %1983 = vmatmul.mubr.bf16.gmra.mxu0 %v1945
  %v1984 = vpop.f32.mrf.mxu0
  %v1985 = vadd.f32 0.0, %v1984
  %v1986 = vpop.f32.mrf.mxu0
  %v1987 = vpop.f32.mrf.mxu0
  %v1988 = vpop.f32.mrf.mxu0
  %1989 = vdwg.mxu0
  %v1998 = vcombine.low %v1649, %v1697
  %v1999 = vcombine.low %v1745, %v1793
  %v2000 = vcombine.low %v1841, %v1889
  %v2001 = vcombine.low %v1937, %v1985
  %v2006 = vpack.c.bf16 %v1999, %v1998
  %v2007 = vpack.c.bf16 %v2001, %v2000
  %v2010 = vunpack.c.l.b16 %v37
  %v2011 = vunpack.c.l.b16 %v38
  %v2012 = vpack.c.b16 %v2011, %v2010
  %v2015 = vsel %vm57, %v2006, 0
  %v2018 = vsel %vm57, %v2007, 0
  %2020 = vmatprep.subr.bf16.mxu0 0
  %2021 = vmatpush1.bf16.msra.mxu0 0
  %2022 = vmatprep.subr.bf16.mxu0 0
  %2023 = vmatpush1.bf16.msra.mxu0 0
  %2024 = vmatprep.subr.bf16.mxu0 0
  %2025 = vmatpush1.bf16.msra.mxu0 0
  %2026 = vmatprep.subr.bf16.mxu0 0
  %2027 = vmatpush1.bf16.msra.mxu0 0
  %2028 = vmatprep.subr.bf16.mxu0 0
  %2029 = vmatpush1.bf16.msra.mxu0 0
  %2030 = vmatprep.subr.bf16.mxu0 0
  %2031 = vmatpush1.bf16.msra.mxu0 0
  %2032 = vmatprep.subr.bf16.mxu0 0
  %2033 = vmatpush1.bf16.msra.mxu0 0
  %2034 = vmatprep.subr.bf16.mxu0 0
  %2035 = vmatpush1.bf16.msra.mxu0 %v2012
  %2036 = vmatprep.subr.bf16.mxu0 0
  %2037 = vmatpush2.bf16.msra.mxu0 0
  %2038 = vmatprep.subr.bf16.mxu0 0
  %2039 = vmatpush2.bf16.msra.mxu0 0
  %2040 = vmatprep.subr.bf16.mxu0 0
  %2041 = vmatpush2.bf16.msra.mxu0 0
  %2042 = vmatprep.subr.bf16.mxu0 0
  %2043 = vmatpush2.bf16.msra.mxu0 0
  %2044 = vmatprep.subr.bf16.mxu0 0
  %2045 = vmatpush2.bf16.msra.mxu0 0
  %2046 = vmatprep.subr.bf16.mxu0 0
  %2047 = vmatpush2.bf16.msra.mxu0 0
  %2048 = vmatprep.subr.bf16.mxu0 0
  %2049 = vmatpush2.bf16.msra.mxu0 0
  %2050 = vmatprep.subr.bf16.mxu0 0
  %2051 = vmatpush2.bf16.msra.mxu0 0
  %2052 = vmatprep.mubr.bf16.mxu0 0
  %2053 = vmatmul.mubr.bf16.gmra.mxu0 %v2015
  %v2054 = vpop.f32.mrf.mxu0
  %v2055 = vadd.f32 0.0, %v2054
  %v2056 = vpop.f32.mrf.mxu0
  %v2057 = vpop.f32.mrf.mxu0
  %v2058 = vadd.f32 0.0, %v2057
  %v2059 = vpop.f32.mrf.mxu0
  %2060 = vmatprep.mubr.bf16.mxu0 0
  %2061 = vmatmul.mubr.bf16.gmra.mxu0 %v2018
  %v2062 = vpop.f32.mrf.mxu0
  %v2063 = vadd.f32 0.0, %v2062
  %v2064 = vpop.f32.mrf.mxu0
  %v2065 = vpop.f32.mrf.mxu0
  %v2066 = vadd.f32 0.0, %v2065
  %v2067 = vpop.f32.mrf.mxu0
  %2068 = vdwg.mxu0
  %v2069 = vadd.f32 %v1082, %v2055
  %v2070 = vadd.f32 %v1083, %v2058
  %v2071 = vadd.f32 %v1084, %v2063
  %v2072 = vadd.f32 %v1085, %v2066
  %v2077 = vcombine.high %v2069, %v2069
  %v2078 = vcombine.high %v2070, %v2070
  %v2079 = vcombine.high %v2071, %v2071
  %v2080 = vcombine.high %v2072, %v2072
  %v2085 = vpack.c.bf16 %v2069, %v2069
  %v2086 = vpack.c.bf16 %v2077, %v2077
  %v2087 = vpack.c.bf16 %v2070, %v2070
  %v2088 = vpack.c.bf16 %v2078, %v2078
  %v2089 = vpack.c.bf16 %v2071, %v2071
  %v2090 = vpack.c.bf16 %v2079, %v2079
  %v2091 = vpack.c.bf16 %v2072, %v2072
  %v2092 = vpack.c.bf16 %v2080, %v2080
  %vm2093 = vcmask 254976
  %2094 = vst.msk [vmem:[%s5] sm:$0x3] %vm2093, %v2085
  %2095 = vst.msk [vmem:[%s5 + $0x2] sm:$0x3] %vm2093, %v2086
  %2096 = vst.msk [vmem:[%s5 + $0x4] sm:$0x3] %vm2093, %v2087
  %2097 = vst.msk [vmem:[%s5 + $0x6] sm:$0x3] %vm2093, %v2088
  %2098 = vst.msk [vmem:[%s5 + $0x8] sm:$0x3] %vm2093, %v2089
  %2099 = vst.msk [vmem:[%s5 + $0xa] sm:$0x3] %vm2093, %v2090
  %2100 = vst.msk [vmem:[%s5 + $0xc] sm:$0x3] %vm2093, %v2091
  %2101 = vst.msk [vmem:[%s5 + $0xe] sm:$0x3] %vm2093, %v2092
  // Predicated region
  $region22: #{_lambda_.35} parent=0 // pred_check
    _
  $region23: #{_lambda_.35} parent=0 // pred_check_branch
    %2103 = sbr.rel (0) target = $region25
  $region24: #{_lambda_.35} parent=0 // pred_region
    _
  $region25: #{_lambda_.35} parent=0 // pred_fallthru
    _
  // Predicated region
  $region26: #{_lambda_.35} parent=0 // pred_check
    _
  $region27: #{_lambda_.35} parent=0 // pred_check_branch
    %2105 = sbr.rel (0) target = $region29
  $region28: #{_lambda_.35} parent=0 // pred_region
    _
  $region29: #{_lambda_.35} parent=0 // pred_fallthru
    _

// kernel: _lambda_.39
$region0: #{_lambda_.39}
  #allocation0 [shape = 'u32[]', space=smem, size = 0x4, offset = 0x4, fixed_abs, tag = 'smem constant byte address 0x4 - core index']
  #allocation1 [shape = 'u32[144,128]{1,0:T(1,128)}', space=vmem, size = 0x12000, scoped, tag = 'internal scratch']
  %s0 = inlined_call_operand.vmem [shape: bf16[1,2,4,192], index: 0, kind: input, shape index: {}]
  %s1 = inlined_call_operand.vmem [shape: f32[4,4,4], index: 1, kind: input, shape index: {}]
  %s2 = inlined_call_operand.vmem [shape: bf16[64,64], index: 2, kind: input, shape index: {}]
  %s3 = inlined_call_operand.vmem [shape: f32[1,64], index: 3, kind: input, shape index: {}]
  %s4 = inlined_call_operand.vmem [shape: bf16[1,2,4,64], index: 4, kind: output, shape index: {}]
  %s5 = sld [smem:[#allocation0]]
  $region26: #{_lambda_.39} parent=0
    _
  %s7 = ssub.s32 1, %s5
  %s8 = scalar_select 0, %s7, %s5
  // Predicated region
  $region2: #{_lambda_.39} parent=0 // pred_check
    _
  $region3: #{_lambda_.39} parent=0 // pred_check_branch
    %10 = sbr.rel (0) target = $region5
  $region4: #{_lambda_.39} parent=0 // pred_region
    _
  $region5: #{_lambda_.39} parent=0 // pred_fallthru
    _
  // Predicated region
  $region6: #{_lambda_.39} parent=0 // pred_check
    _
  $region7: #{_lambda_.39} parent=0 // pred_check_branch
    %12 = sbr.rel (0) target = $region9
  $region8: #{_lambda_.39} parent=0 // pred_region
    _
  $region9: #{_lambda_.39} parent=0 // pred_fallthru
    _
  // Predicated region
  $region10: #{_lambda_.39} parent=0 // pred_check
    _
  $region11: #{_lambda_.39} parent=0 // pred_check_branch
    %14 = sbr.rel (0) target = $region13
  $region12: #{_lambda_.39} parent=0 // pred_region
    _
  $region13: #{_lambda_.39} parent=0 // pred_fallthru
    _
  // Predicated region
  $region14: #{_lambda_.39} parent=0 // pred_check
    _
  $region15: #{_lambda_.39} parent=0 // pred_check_branch
    %16 = sbr.rel (0) target = $region17
  $region16: #{_lambda_.39} parent=0 // pred_region
    _
  $region17: #{_lambda_.39} parent=0 // pred_fallthru
    _
  %v18 = vld [vmem:[%s0] sm:$0xf]
  %v19 = vld [vmem:[%s0 + $0x4] sm:$0xf]
  %v20 = vld [vmem:[%s1] sm:$0xf]
  %v21 = vld [vmem:[%s1 + $0x4] sm:$0xf]
  %v22 = vld [vmem:[%s1 + $0x8] sm:$0xf]
  %v23 = vld [vmem:[%s1 + $0xc] sm:$0xf]
  %v24 = vld [vmem:[%s2] sm:$0xf]
  %v25 = vld [vmem:[%s2 + $0x4] sm:$0xf]
  %v26 = vld [vmem:[%s2 + $0x8] sm:$0xf]
  %v27 = vld [vmem:[%s2 + $0xc] sm:$0xf]
  %v28 = vld [vmem:[%s2 + $0x10] sm:$0xf]
  %v29 = vld [vmem:[%s2 + $0x14] sm:$0xf]
  %v30 = vld [vmem:[%s2 + $0x18] sm:$0xf]
  %v31 = vld [vmem:[%s2 + $0x1c] sm:$0xf]
  %v32 = vld [vmem:[%s3] sm:$0x1]
  %v34 = vlaneseq
  %v35 = vshrl.u32 %v34, 7
  %v36 = vsub.s32 0, %v35
  %v37 = vrot.slane %v32, %v36
  %v39 = vadd.f32 %v37, 0.0
  %v42 = vrot.slane %v18, 2
  %v43 = vrot.slane %v19, 2
  %v45 = vunpack.c.l.s4 1983009808
  %v46 = vunpack.c.0.s8 %v45
  %v47 = vlaneseq
  %v48 = vshrl.u32 %v47, 7
  %v49 = vsub.s32 %v46, %v48
  %v50 = vrot.slane %v18, %v49
  %51 = vrot.lane.b32.xlu0 %v50, 64
  %v52 = vpop.permute.xlu0 %51
  %vm53 = vcmask 130048
  %v55 = vsel %vm53, %v18, 0
  %v58 = vsel %vm53, %v52, 0
  %60 = vmatprep.subr.bf16.mxu0 0
  %61 = vmatpush1.bf16.xpose.msra.mxu0 0
  %62 = vmatprep.subr.bf16.mxu0 0
  %63 = vmatpush1.bf16.xpose.msra.mxu0 0
  %64 = vmatprep.subr.bf16.mxu0 0
  %65 = vmatpush1.bf16.xpose.msra.mxu0 0
  %66 = vmatprep.subr.bf16.mxu0 0
  %67 = vmatpush1.bf16.xpose.msra.mxu0 0
  %68 = vmatprep.subr.bf16.mxu0 0
  %69 = vmatpush1.bf16.xpose.msra.mxu0 0
  %70 = vmatprep.subr.bf16.mxu0 0
  %71 = vmatpush1.bf16.xpose.msra.mxu0 0
  %72 = vmatprep.subr.bf16.mxu0 0
  %73 = vmatpush1.bf16.xpose.msra.mxu0 0
  %74 = vmatprep.subr.bf16.mxu0 0
  %75 = vmatpush1.bf16.xpose.msra.mxu0 %v58
  %76 = vmatprep.subr.bf16.mxu0 0
  %77 = vmatpush2.bf16.xpose.msra.mxu0 0
  %78 = vmatprep.subr.bf16.mxu0 0
  %79 = vmatpush2.bf16.xpose.msra.mxu0 0
  %80 = vmatprep.subr.bf16.mxu0 0
  %81 = vmatpush2.bf16.xpose.msra.mxu0 0
  %82 = vmatprep.subr.bf16.mxu0 0
  %83 = vmatpush2.bf16.xpose.msra.mxu0 0
  %84 = vmatprep.subr.bf16.mxu0 0
  %85 = vmatpush2.bf16.xpose.msra.mxu0 0
  %86 = vmatprep.subr.bf16.mxu0 0
  %87 = vmatpush2.bf16.xpose.msra.mxu0 0
  %88 = vmatprep.subr.bf16.mxu0 0
  %89 = vmatpush2.bf16.xpose.msra.mxu0 0
  %90 = vmatprep.subr.bf16.mxu0 0
  %91 = vmatpush2.bf16.xpose.msra.mxu0 0
  %92 = vmatprep.mubr.bf16.mxu0 0
  %93 = vmatmul.mubr.bf16.gmra.mxu0 %v55
  %v94 = vpop.f32.mrf.mxu0
  %v95 = vadd.f32 0.0, %v94
  %v96 = vpop.f32.mrf.mxu0
  %v97 = vpop.f32.mrf.mxu0
  %v98 = vpop.f32.mrf.mxu0
  %99 = vdwg.mxu0
  %v101 = vunpack.c.l.s4 1983009808
  %v102 = vunpack.c.0.s8 %v101
  %v103 = vlaneseq
  %v104 = vshrl.u32 %v103, 7
  %v105 = vsub.s32 %v102, %v104
  %v106 = vrot.slane %v19, %v105
  %107 = vrot.lane.b32.xlu0 %v106, 64
  %v108 = vpop.permute.xlu0 %107
  %v110 = vsel %vm53, %v19, 0
  %v113 = vsel %vm53, %v108, 0
  %115 = vmatprep.subr.bf16.mxu0 0
  %116 = vmatpush1.bf16.xpose.msra.mxu0 0
  %117 = vmatprep.subr.bf16.mxu0 0
  %118 = vmatpush1.bf16.xpose.msra.mxu0 0
  %119 = vmatprep.subr.bf16.mxu0 0
  %120 = vmatpush1.bf16.xpose.msra.mxu0 0
  %121 = vmatprep.subr.bf16.mxu0 0
  %122 = vmatpush1.bf16.xpose.msra.mxu0 0
  %123 = vmatprep.subr.bf16.mxu0 0
  %124 = vmatpush1.bf16.xpose.msra.mxu0 0
  %125 = vmatprep.subr.bf16.mxu0 0
  %126 = vmatpush1.bf16.xpose.msra.mxu0 0
  %127 = vmatprep.subr.bf16.mxu0 0
  %128 = vmatpush1.bf16.xpose.msra.mxu0 0
  %129 = vmatprep.subr.bf16.mxu0 0
  %130 = vmatpush1.bf16.xpose.msra.mxu0 %v113
  %131 = vmatprep.subr.bf16.mxu0 0
  %132 = vmatpush2.bf16.xpose.msra.mxu0 0
  %133 = vmatprep.subr.bf16.mxu0 0
  %134 = vmatpush2.bf16.xpose.msra.mxu0 0
  %135 = vmatprep.subr.bf16.mxu0 0
  %136 = vmatpush2.bf16.xpose.msra.mxu0 0
  %137 = vmatprep.subr.bf16.mxu0 0
  %138 = vmatpush2.bf16.xpose.msra.mxu0 0
  %139 = vmatprep.subr.bf16.mxu0 0
  %140 = vmatpush2.bf16.xpose.msra.mxu0 0
  %141 = vmatprep.subr.bf16.mxu0 0
  %142 = vmatpush2.bf16.xpose.msra.mxu0 0
  %143 = vmatprep.subr.bf16.mxu0 0
  %144 = vmatpush2.bf16.xpose.msra.mxu0 0
  %145 = vmatprep.subr.bf16.mxu0 0
  %146 = vmatpush2.bf16.xpose.msra.mxu0 0
  %147 = vmatprep.mubr.bf16.mxu0 0
  %148 = vmatmul.mubr.bf16.gmra.mxu0 %v110
  %v149 = vpop.f32.mrf.mxu0
  %v150 = vadd.f32 0.0, %v149
  %v151 = vpop.f32.mrf.mxu0
  %v152 = vpop.f32.mrf.mxu0
  %v153 = vpop.f32.mrf.mxu0
  %154 = vdwg.mxu0
  %v155 = vmul.f32 %v95, 0.25
  %v156 = vmul.f32 %v150, 0.25
  %v157 = vadd.f32 %v155, %v20
  %v158 = vadd.f32 %v156, %v20
  %vm159 = vcmask 27648
  %v160 = vsel %vm159, %v157, -inf
  %161 = vmax.xlane.f32.xlu0 %v160
  %v162 = vpop.xlane.xlu0 %161
  %v163 = vsel %vm159, %v158, -inf
  %164 = vmax.xlane.f32.xlu0 %v163
  %v165 = vpop.xlane.xlu0 %164
  %v166 = vsub.f32 %v157, %v162
  %v167 = vsub.f32 %v158, %v165
  %v168 = vmul.f32 %v166, 1.442695
  %v169 = vpow.pop %v168
  %v170 = vmul.f32 %v167, 1.442695
  %v171 = vpow.pop %v170
  %v172 = vsel %vm159, %v169, 0.0
  %173 = vadd.xlane.f32.xlu0 %v172
  %v174 = vpop.xlane.xlu0 %173
  %v175 = vsel %vm159, %v171, 0.0
  %176 = vadd.xlane.f32.xlu0 %v175
  %v177 = vpop.xlane.xlu0 %176
  %v178 = vrcp.pop %v174
  %v179 = vrcp.pop %v177
  %v180 = vmul.f32 %v169, %v178
  %v181 = vmul.f32 %v171, %v179
  %v182 = vpack.c.bf16 %v180, %v180
  %v183 = vpack.c.bf16 %v181, %v181
  %vm184 = vcmask 31744
  %v186 = vsel %vm184, %v182, 0
  %vm188 = vcmask 1041408
  %v190 = vsel %vm188, %v42, 0
  %192 = vmatprep.subr.bf16.mxu0 0
  %193 = vmatpush1.bf16.msra.mxu0 0
  %194 = vmatprep.subr.bf16.mxu0 0
  %195 = vmatpush1.bf16.msra.mxu0 0
  %196 = vmatprep.subr.bf16.mxu0 0
  %197 = vmatpush1.bf16.msra.mxu0 0
  %198 = vmatprep.subr.bf16.mxu0 0
  %199 = vmatpush1.bf16.msra.mxu0 0
  %200 = vmatprep.subr.bf16.mxu0 0
  %201 = vmatpush1.bf16.msra.mxu0 0
  %202 = vmatprep.subr.bf16.mxu0 0
  %203 = vmatpush1.bf16.msra.mxu0 0
  %204 = vmatprep.subr.bf16.mxu0 0
  %205 = vmatpush1.bf16.msra.mxu0 0
  %206 = vmatprep.subr.bf16.mxu0 0
  %207 = vmatpush1.bf16.msra.mxu0 %v190
  %208 = vmatprep.subr.bf16.mxu0 0
  %209 = vmatpush2.bf16.msra.mxu0 0
  %210 = vmatprep.subr.bf16.mxu0 0
  %211 = vmatpush2.bf16.msra.mxu0 0
  %212 = vmatprep.subr.bf16.mxu0 0
  %213 = vmatpush2.bf16.msra.mxu0 0
  %214 = vmatprep.subr.bf16.mxu0 0
  %215 = vmatpush2.bf16.msra.mxu0 0
  %216 = vmatprep.subr.bf16.mxu0 0
  %217 = vmatpush2.bf16.msra.mxu0 0
  %218 = vmatprep.subr.bf16.mxu0 0
  %219 = vmatpush2.bf16.msra.mxu0 0
  %220 = vmatprep.subr.bf16.mxu0 0
  %221 = vmatpush2.bf16.msra.mxu0 0
  %222 = vmatprep.subr.bf16.mxu0 0
  %223 = vmatpush2.bf16.msra.mxu0 0
  %224 = vmatprep.mubr.bf16.mxu0 0
  %225 = vmatmul.mubr.bf16.gmra.mxu0 %v186
  %v226 = vpop.f32.mrf.mxu0
  %v227 = vadd.f32 0.0, %v226
  %v228 = vpop.f32.mrf.mxu0
  %v229 = vpop.f32.mrf.mxu0
  %v230 = vpop.f32.mrf.mxu0
  %231 = vdwg.mxu0
  %v233 = vsel %vm184, %v183, 0
  %v236 = vsel %vm188, %v43, 0
  %238 = vmatprep.subr.bf16.mxu0 0
  %239 = vmatpush1.bf16.msra.mxu0 0
  %240 = vmatprep.subr.bf16.mxu0 0
  %241 = vmatpush1.bf16.msra.mxu0 0
  %242 = vmatprep.subr.bf16.mxu0 0
  %243 = vmatpush1.bf16.msra.mxu0 0
  %244 = vmatprep.subr.bf16.mxu0 0
  %245 = vmatpush1.bf16.msra.mxu0 0
  %246 = vmatprep.subr.bf16.mxu0 0
  %247 = vmatpush1.bf16.msra.mxu0 0
  %248 = vmatprep.subr.bf16.mxu0 0
  %249 = vmatpush1.bf16.msra.mxu0 0
  %250 = vmatprep.subr.bf16.mxu0 0
  %251 = vmatpush1.bf16.msra.mxu0 0
  %252 = vmatprep.subr.bf16.mxu0 0
  %253 = vmatpush1.bf16.msra.mxu0 %v236
  %254 = vmatprep.subr.bf16.mxu0 0
  %255 = vmatpush2.bf16.msra.mxu0 0
  %256 = vmatprep.subr.bf16.mxu0 0
  %257 = vmatpush2.bf16.msra.mxu0 0
  %258 = vmatprep.subr.bf16.mxu0 0
  %259 = vmatpush2.bf16.msra.mxu0 0
  %260 = vmatprep.subr.bf16.mxu0 0
  %261 = vmatpush2.bf16.msra.mxu0 0
  %262 = vmatprep.subr.bf16.mxu0 0
  %263 = vmatpush2.bf16.msra.mxu0 0
  %264 = vmatprep.subr.bf16.mxu0 0
  %265 = vmatpush2.bf16.msra.mxu0 0
  %266 = vmatprep.subr.bf16.mxu0 0
  %267 = vmatpush2.bf16.msra.mxu0 0
  %268 = vmatprep.subr.bf16.mxu0 0
  %269 = vmatpush2.bf16.msra.mxu0 0
  %270 = vmatprep.mubr.bf16.mxu0 0
  %271 = vmatmul.mubr.bf16.gmra.mxu0 %v233
  %v272 = vpop.f32.mrf.mxu0
  %v273 = vadd.f32 0.0, %v272
  %v274 = vpop.f32.mrf.mxu0
  %v275 = vpop.f32.mrf.mxu0
  %v276 = vpop.f32.mrf.mxu0
  %277 = vdwg.mxu0
  %v280 = vcombine.low %v227, %v273
  %v282 = vpack.c.bf16 %v280, %v280
  %v285 = vunpack.c.l.b16 %v24
  %v286 = vunpack.c.l.b16 %v25
  %v287 = vpack.c.b16 %v286, %v285
  %v290 = vsel %vm53, %v282, 0
  %292 = vmatprep.subr.bf16.mxu0 0
  %293 = vmatpush1.bf16.msra.mxu0 0
  %294 = vmatprep.subr.bf16.mxu0 0
  %295 = vmatpush1.bf16.msra.mxu0 0
  %296 = vmatprep.subr.bf16.mxu0 0
  %297 = vmatpush1.bf16.msra.mxu0 0
  %298 = vmatprep.subr.bf16.mxu0 0
  %299 = vmatpush1.bf16.msra.mxu0 0
  %300 = vmatprep.subr.bf16.mxu0 0
  %301 = vmatpush1.bf16.msra.mxu0 0
  %302 = vmatprep.subr.bf16.mxu0 0
  %303 = vmatpush1.bf16.msra.mxu0 0
  %304 = vmatprep.subr.bf16.mxu0 0
  %305 = vmatpush1.bf16.msra.mxu0 0
  %306 = vmatprep.subr.bf16.mxu0 0
  %307 = vmatpush1.bf16.msra.mxu0 %v287
  %308 = vmatprep.subr.bf16.mxu0 0
  %309 = vmatpush2.bf16.msra.mxu0 0
  %310 = vmatprep.subr.bf16.mxu0 0
  %311 = vmatpush2.bf16.msra.mxu0 0
  %312 = vmatprep.subr.bf16.mxu0 0
  %313 = vmatpush2.bf16.msra.mxu0 0
  %314 = vmatprep.subr.bf16.mxu0 0
  %315 = vmatpush2.bf16.msra.mxu0 0
  %316 = vmatprep.subr.bf16.mxu0 0
  %317 = vmatpush2.bf16.msra.mxu0 0
  %318 = vmatprep.subr.bf16.mxu0 0
  %319 = vmatpush2.bf16.msra.mxu0 0
  %320 = vmatprep.subr.bf16.mxu0 0
  %321 = vmatpush2.bf16.msra.mxu0 0
  %322 = vmatprep.subr.bf16.mxu0 0
  %323 = vmatpush2.bf16.msra.mxu0 0
  %324 = vmatprep.mubr.bf16.mxu0 0
  %325 = vmatmul.mubr.bf16.gmra.mxu0 %v290
  %v326 = vpop.f32.mrf.mxu0
  %v327 = vadd.f32 0.0, %v326
  %v328 = vpop.f32.mrf.mxu0
  %v329 = vpop.f32.mrf.mxu0
  %v330 = vpop.f32.mrf.mxu0
  %331 = vdwg.mxu0
  %v332 = vadd.f32 %v39, %v327
  %333 = vrot.lane.b32.xlu0 %v18, 112
  %v334 = vpop.permute.xlu0 %333
  %335 = vrot.lane.b32.xlu0 %v19, 112
  %v336 = vpop.permute.xlu0 %335
  %v337 = vrot.slane %v334, 2
  %v338 = vrot.slane %v336, 2
  %339 = vrot.lane.b32.xlu0 %v50, 112
  %v340 = vpop.permute.xlu0 %339
  %341 = vrot.lane.b32.xlu0 %v50, 48
  %v342 = vpop.permute.xlu0 %341
  %v344 = vsel %vm53, %v340, 0
  %v347 = vsel %vm53, %v342, 0
  %349 = vmatprep.subr.bf16.mxu0 0
  %350 = vmatpush1.bf16.xpose.msra.mxu0 0
  %351 = vmatprep.subr.bf16.mxu0 0
  %352 = vmatpush1.bf16.xpose.msra.mxu0 0
  %353 = vmatprep.subr.bf16.mxu0 0
  %354 = vmatpush1.bf16.xpose.msra.mxu0 0
  %355 = vmatprep.subr.bf16.mxu0 0
  %356 = vmatpush1.bf16.xpose.msra.mxu0 0
  %357 = vmatprep.subr.bf16.mxu0 0
  %358 = vmatpush1.bf16.xpose.msra.mxu0 0
  %359 = vmatprep.subr.bf16.mxu0 0
  %360 = vmatpush1.bf16.xpose.msra.mxu0 0
  %361 = vmatprep.subr.bf16.mxu0 0
  %362 = vmatpush1.bf16.xpose.msra.mxu0 0
  %363 = vmatprep.subr.bf16.mxu0 0
  %364 = vmatpush1.bf16.xpose.msra.mxu0 %v347
  %365 = vmatprep.subr.bf16.mxu0 0
  %366 = vmatpush2.bf16.xpose.msra.mxu0 0
  %367 = vmatprep.subr.bf16.mxu0 0
  %368 = vmatpush2.bf16.xpose.msra.mxu0 0
  %369 = vmatprep.subr.bf16.mxu0 0
  %370 = vmatpush2.bf16.xpose.msra.mxu0 0
  %371 = vmatprep.subr.bf16.mxu0 0
  %372 = vmatpush2.bf16.xpose.msra.mxu0 0
  %373 = vmatprep.subr.bf16.mxu0 0
  %374 = vmatpush2.bf16.xpose.msra.mxu0 0
  %375 = vmatprep.subr.bf16.mxu0 0
  %376 = vmatpush2.bf16.xpose.msra.mxu0 0
  %377 = vmatprep.subr.bf16.mxu0 0
  %378 = vmatpush2.bf16.xpose.msra.mxu0 0
  %379 = vmatprep.subr.bf16.mxu0 0
  %380 = vmatpush2.bf16.xpose.msra.mxu0 0
  %381 = vmatprep.mubr.bf16.mxu0 0
  %382 = vmatmul.mubr.bf16.gmra.mxu0 %v344
  %v383 = vpop.f32.mrf.mxu0
  %v384 = vadd.f32 0.0, %v383
  %v385 = vpop.f32.mrf.mxu0
  %v386 = vpop.f32.mrf.mxu0
  %v387 = vpop.f32.mrf.mxu0
  %388 = vdwg.mxu0
  %389 = vrot.lane.b32.xlu0 %v106, 112
  %v390 = vpop.permute.xlu0 %389
  %391 = vrot.lane.b32.xlu0 %v106, 48
  %v392 = vpop.permute.xlu0 %391
  %v394 = vsel %vm53, %v390, 0
  %v397 = vsel %vm53, %v392, 0
  %399 = vmatprep.subr.bf16.mxu0 0
  %400 = vmatpush1.bf16.xpose.msra.mxu0 0
  %401 = vmatprep.subr.bf16.mxu0 0
  %402 = vmatpush1.bf16.xpose.msra.mxu0 0
  %403 = vmatprep.subr.bf16.mxu0 0
  %404 = vmatpush1.bf16.xpose.msra.mxu0 0
  %405 = vmatprep.subr.bf16.mxu0 0
  %406 = vmatpush1.bf16.xpose.msra.mxu0 0
  %407 = vmatprep.subr.bf16.mxu0 0
  %408 = vmatpush1.bf16.xpose.msra.mxu0 0
  %409 = vmatprep.subr.bf16.mxu0 0
  %410 = vmatpush1.bf16.xpose.msra.mxu0 0
  %411 = vmatprep.subr.bf16.mxu0 0
  %412 = vmatpush1.bf16.xpose.msra.mxu0 0
  %413 = vmatprep.subr.bf16.mxu0 0
  %414 = vmatpush1.bf16.xpose.msra.mxu0 %v397
  %415 = vmatprep.subr.bf16.mxu0 0
  %416 = vmatpush2.bf16.xpose.msra.mxu0 0
  %417 = vmatprep.subr.bf16.mxu0 0
  %418 = vmatpush2.bf16.xpose.msra.mxu0 0
  %419 = vmatprep.subr.bf16.mxu0 0
  %420 = vmatpush2.bf16.xpose.msra.mxu0 0
  %421 = vmatprep.subr.bf16.mxu0 0
  %422 = vmatpush2.bf16.xpose.msra.mxu0 0
  %423 = vmatprep.subr.bf16.mxu0 0
  %424 = vmatpush2.bf16.xpose.msra.mxu0 0
  %425 = vmatprep.subr.bf16.mxu0 0
  %426 = vmatpush2.bf16.xpose.msra.mxu0 0
  %427 = vmatprep.subr.bf16.mxu0 0
  %428 = vmatpush2.bf16.xpose.msra.mxu0 0
  %429 = vmatprep.subr.bf16.mxu0 0
  %430 = vmatpush2.bf16.xpose.msra.mxu0 0
  %431 = vmatprep.mubr.bf16.mxu0 0
  %432 = vmatmul.mubr.bf16.gmra.mxu0 %v394
  %v433 = vpop.f32.mrf.mxu0
  %v434 = vadd.f32 0.0, %v433
  %v435 = vpop.f32.mrf.mxu0
  %v436 = vpop.f32.mrf.mxu0
  %v437 = vpop.f32.mrf.mxu0
  %438 = vdwg.mxu0
  %v439 = vmul.f32 %v384, 0.25
  %v440 = vmul.f32 %v434, 0.25
  %v441 = vadd.f32 %v439, %v21
  %v442 = vadd.f32 %v440, %v21
  %v443 = vsel %vm159, %v441, -inf
  %444 = vmax.xlane.f32.xlu0 %v443
  %v445 = vpop.xlane.xlu0 %444
  %v446 = vsel %vm159, %v442, -inf
  %447 = vmax.xlane.f32.xlu0 %v446
  %v448 = vpop.xlane.xlu0 %447
  %v449 = vsub.f32 %v441, %v445
  %v450 = vsub.f32 %v442, %v448
  %v451 = vmul.f32 %v449, 1.442695
  %v452 = vpow.pop %v451
  %v453 = vmul.f32 %v450, 1.442695
  %v454 = vpow.pop %v453
  %v455 = vsel %vm159, %v452, 0.0
  %456 = vadd.xlane.f32.xlu0 %v455
  %v457 = vpop.xlane.xlu0 %456
  %v458 = vsel %vm159, %v454, 0.0
  %459 = vadd.xlane.f32.xlu0 %v458
  %v460 = vpop.xlane.xlu0 %459
  %v461 = vrcp.pop %v457
  %v462 = vrcp.pop %v460
  %v463 = vmul.f32 %v452, %v461
  %v464 = vmul.f32 %v454, %v462
  %v465 = vpack.c.bf16 %v463, %v463
  %v466 = vpack.c.bf16 %v464, %v464
  %v468 = vsel %vm184, %v465, 0
  %v471 = vsel %vm188, %v337, 0
  %473 = vmatprep.subr.bf16.mxu0 0
  %474 = vmatpush1.bf16.msra.mxu0 0
  %475 = vmatprep.subr.bf16.mxu0 0
  %476 = vmatpush1.bf16.msra.mxu0 0
  %477 = vmatprep.subr.bf16.mxu0 0
  %478 = vmatpush1.bf16.msra.mxu0 0
  %479 = vmatprep.subr.bf16.mxu0 0
  %480 = vmatpush1.bf16.msra.mxu0 0
  %481 = vmatprep.subr.bf16.mxu0 0
  %482 = vmatpush1.bf16.msra.mxu0 0
  %483 = vmatprep.subr.bf16.mxu0 0
  %484 = vmatpush1.bf16.msra.mxu0 0
  %485 = vmatprep.subr.bf16.mxu0 0
  %486 = vmatpush1.bf16.msra.mxu0 0
  %487 = vmatprep.subr.bf16.mxu0 0
  %488 = vmatpush1.bf16.msra.mxu0 %v471
  %489 = vmatprep.subr.bf16.mxu0 0
  %490 = vmatpush2.bf16.msra.mxu0 0
  %491 = vmatprep.subr.bf16.mxu0 0
  %492 = vmatpush2.bf16.msra.mxu0 0
  %493 = vmatprep.subr.bf16.mxu0 0
  %494 = vmatpush2.bf16.msra.mxu0 0
  %495 = vmatprep.subr.bf16.mxu0 0
  %496 = vmatpush2.bf16.msra.mxu0 0
  %497 = vmatprep.subr.bf16.mxu0 0
  %498 = vmatpush2.bf16.msra.mxu0 0
  %499 = vmatprep.subr.bf16.mxu0 0
  %500 = vmatpush2.bf16.msra.mxu0 0
  %501 = vmatprep.subr.bf16.mxu0 0
  %502 = vmatpush2.bf16.msra.mxu0 0
  %503 = vmatprep.subr.bf16.mxu0 0
  %504 = vmatpush2.bf16.msra.mxu0 0
  %505 = vmatprep.mubr.bf16.mxu0 0
  %506 = vmatmul.mubr.bf16.gmra.mxu0 %v468
  %v507 = vpop.f32.mrf.mxu0
  %v508 = vadd.f32 0.0, %v507
  %v509 = vpop.f32.mrf.mxu0
  %v510 = vpop.f32.mrf.mxu0
  %v511 = vpop.f32.mrf.mxu0
  %512 = vdwg.mxu0
  %v514 = vsel %vm184, %v466, 0
  %v517 = vsel %vm188, %v338, 0
  %519 = vmatprep.subr.bf16.mxu0 0
  %520 = vmatpush1.bf16.msra.mxu0 0
  %521 = vmatprep.subr.bf16.mxu0 0
  %522 = vmatpush1.bf16.msra.mxu0 0
  %523 = vmatprep.subr.bf16.mxu0 0
  %524 = vmatpush1.bf16.msra.mxu0 0
  %525 = vmatprep.subr.bf16.mxu0 0
  %526 = vmatpush1.bf16.msra.mxu0 0
  %527 = vmatprep.subr.bf16.mxu0 0
  %528 = vmatpush1.bf16.msra.mxu0 0
  %529 = vmatprep.subr.bf16.mxu0 0
  %530 = vmatpush1.bf16.msra.mxu0 0
  %531 = vmatprep.subr.bf16.mxu0 0
  %532 = vmatpush1.bf16.msra.mxu0 0
  %533 = vmatprep.subr.bf16.mxu0 0
  %534 = vmatpush1.bf16.msra.mxu0 %v517
  %535 = vmatprep.subr.bf16.mxu0 0
  %536 = vmatpush2.bf16.msra.mxu0 0
  %537 = vmatprep.subr.bf16.mxu0 0
  %538 = vmatpush2.bf16.msra.mxu0 0
  %539 = vmatprep.subr.bf16.mxu0 0
  %540 = vmatpush2.bf16.msra.mxu0 0
  %541 = vmatprep.subr.bf16.mxu0 0
  %542 = vmatpush2.bf16.msra.mxu0 0
  %543 = vmatprep.subr.bf16.mxu0 0
  %544 = vmatpush2.bf16.msra.mxu0 0
  %545 = vmatprep.subr.bf16.mxu0 0
  %546 = vmatpush2.bf16.msra.mxu0 0
  %547 = vmatprep.subr.bf16.mxu0 0
  %548 = vmatpush2.bf16.msra.mxu0 0
  %549 = vmatprep.subr.bf16.mxu0 0
  %550 = vmatpush2.bf16.msra.mxu0 0
  %551 = vmatprep.mubr.bf16.mxu0 0
  %552 = vmatmul.mubr.bf16.gmra.mxu0 %v514
  %v553 = vpop.f32.mrf.mxu0
  %v554 = vadd.f32 0.0, %v553
  %v555 = vpop.f32.mrf.mxu0
  %v556 = vpop.f32.mrf.mxu0
  %v557 = vpop.f32.mrf.mxu0
  %558 = vdwg.mxu0
  %v561 = vcombine.low %v508, %v554
  %v563 = vpack.c.bf16 %v561, %v561
  %v566 = vunpack.c.l.b16 %v26
  %v567 = vunpack.c.l.b16 %v27
  %v568 = vpack.c.b16 %v567, %v566
  %v571 = vsel %vm53, %v563, 0
  %573 = vmatprep.subr.bf16.mxu0 0
  %574 = vmatpush1.bf16.msra.mxu0 0
  %575 = vmatprep.subr.bf16.mxu0 0
  %576 = vmatpush1.bf16.msra.mxu0 0
  %577 = vmatprep.subr.bf16.mxu0 0
  %578 = vmatpush1.bf16.msra.mxu0 0
  %579 = vmatprep.subr.bf16.mxu0 0
  %580 = vmatpush1.bf16.msra.mxu0 0
  %581 = vmatprep.subr.bf16.mxu0 0
  %582 = vmatpush1.bf16.msra.mxu0 0
  %583 = vmatprep.subr.bf16.mxu0 0
  %584 = vmatpush1.bf16.msra.mxu0 0
  %585 = vmatprep.subr.bf16.mxu0 0
  %586 = vmatpush1.bf16.msra.mxu0 0
  %587 = vmatprep.subr.bf16.mxu0 0
  %588 = vmatpush1.bf16.msra.mxu0 %v568
  %589 = vmatprep.subr.bf16.mxu0 0
  %590 = vmatpush2.bf16.msra.mxu0 0
  %591 = vmatprep.subr.bf16.mxu0 0
  %592 = vmatpush2.bf16.msra.mxu0 0
  %593 = vmatprep.subr.bf16.mxu0 0
  %594 = vmatpush2.bf16.msra.mxu0 0
  %595 = vmatprep.subr.bf16.mxu0 0
  %596 = vmatpush2.bf16.msra.mxu0 0
  %597 = vmatprep.subr.bf16.mxu0 0
  %598 = vmatpush2.bf16.msra.mxu0 0
  %599 = vmatprep.subr.bf16.mxu0 0
  %600 = vmatpush2.bf16.msra.mxu0 0
  %601 = vmatprep.subr.bf16.mxu0 0
  %602 = vmatpush2.bf16.msra.mxu0 0
  %603 = vmatprep.subr.bf16.mxu0 0
  %604 = vmatpush2.bf16.msra.mxu0 0
  %605 = vmatprep.mubr.bf16.mxu0 0
  %606 = vmatmul.mubr.bf16.gmra.mxu0 %v571
  %v607 = vpop.f32.mrf.mxu0
  %v608 = vadd.f32 0.0, %v607
  %v609 = vpop.f32.mrf.mxu0
  %v610 = vpop.f32.mrf.mxu0
  %v611 = vpop.f32.mrf.mxu0
  %612 = vdwg.mxu0
  %v613 = vadd.f32 %v332, %v608
  %614 = vrot.lane.b32.xlu0 %v18, 96
  %v615 = vpop.permute.xlu0 %614
  %616 = vrot.lane.b32.xlu0 %v19, 96
  %v617 = vpop.permute.xlu0 %616
  %v618 = vrot.slane %v615, 2
  %v619 = vrot.slane %v617, 2
  %620 = vrot.lane.b32.xlu0 %v50, 96
  %v621 = vpop.permute.xlu0 %620
  %622 = vrot.lane.b32.xlu0 %v50, 32
  %v623 = vpop.permute.xlu0 %622
  %v625 = vsel %vm53, %v621, 0
  %v628 = vsel %vm53, %v623, 0
  %630 = vmatprep.subr.bf16.mxu0 0
  %631 = vmatpush1.bf16.xpose.msra.mxu0 0
  %632 = vmatprep.subr.bf16.mxu0 0
  %633 = vmatpush1.bf16.xpose.msra.mxu0 0
  %634 = vmatprep.subr.bf16.mxu0 0
  %635 = vmatpush1.bf16.xpose.msra.mxu0 0
  %636 = vmatprep.subr.bf16.mxu0 0
  %637 = vmatpush1.bf16.xpose.msra.mxu0 0
  %638 = vmatprep.subr.bf16.mxu0 0
  %639 = vmatpush1.bf16.xpose.msra.mxu0 0
  %640 = vmatprep.subr.bf16.mxu0 0
  %641 = vmatpush1.bf16.xpose.msra.mxu0 0
  %642 = vmatprep.subr.bf16.mxu0 0
  %643 = vmatpush1.bf16.xpose.msra.mxu0 0
  %644 = vmatprep.subr.bf16.mxu0 0
  %645 = vmatpush1.bf16.xpose.msra.mxu0 %v628
  %646 = vmatprep.subr.bf16.mxu0 0
  %647 = vmatpush2.bf16.xpose.msra.mxu0 0
  %648 = vmatprep.subr.bf16.mxu0 0
  %649 = vmatpush2.bf16.xpose.msra.mxu0 0
  %650 = vmatprep.subr.bf16.mxu0 0
  %651 = vmatpush2.bf16.xpose.msra.mxu0 0
  %652 = vmatprep.subr.bf16.mxu0 0
  %653 = vmatpush2.bf16.xpose.msra.mxu0 0
  %654 = vmatprep.subr.bf16.mxu0 0
  %655 = vmatpush2.bf16.xpose.msra.mxu0 0
  %656 = vmatprep.subr.bf16.mxu0 0
  %657 = vmatpush2.bf16.xpose.msra.mxu0 0
  %658 = vmatprep.subr.bf16.mxu0 0
  %659 = vmatpush2.bf16.xpose.msra.mxu0 0
  %660 = vmatprep.subr.bf16.mxu0 0
  %661 = vmatpush2.bf16.xpose.msra.mxu0 0
  %662 = vmatprep.mubr.bf16.mxu0 0
  %663 = vmatmul.mubr.bf16.gmra.mxu0 %v625
  %v664 = vpop.f32.mrf.mxu0
  %v665 = vadd.f32 0.0, %v664
  %v666 = vpop.f32.mrf.mxu0
  %v667 = vpop.f32.mrf.mxu0
  %v668 = vpop.f32.mrf.mxu0
  %669 = vdwg.mxu0
  %670 = vrot.lane.b32.xlu0 %v106, 96
  %v671 = vpop.permute.xlu0 %670
  %672 = vrot.lane.b32.xlu0 %v106, 32
  %v673 = vpop.permute.xlu0 %672
  %v675 = vsel %vm53, %v671, 0
  %v678 = vsel %vm53, %v673, 0
  %680 = vmatprep.subr.bf16.mxu0 0
  %681 = vmatpush1.bf16.xpose.msra.mxu0 0
  %682 = vmatprep.subr.bf16.mxu0 0
  %683 = vmatpush1.bf16.xpose.msra.mxu0 0
  %684 = vmatprep.subr.bf16.mxu0 0
  %685 = vmatpush1.bf16.xpose.msra.mxu0 0
  %686 = vmatprep.subr.bf16.mxu0 0
  %687 = vmatpush1.bf16.xpose.msra.mxu0 0
  %688 = vmatprep.subr.bf16.mxu0 0
  %689 = vmatpush1.bf16.xpose.msra.mxu0 0
  %690 = vmatprep.subr.bf16.mxu0 0
  %691 = vmatpush1.bf16.xpose.msra.mxu0 0
  %692 = vmatprep.subr.bf16.mxu0 0
  %693 = vmatpush1.bf16.xpose.msra.mxu0 0
  %694 = vmatprep.subr.bf16.mxu0 0
  %695 = vmatpush1.bf16.xpose.msra.mxu0 %v678
  %696 = vmatprep.subr.bf16.mxu0 0
  %697 = vmatpush2.bf16.xpose.msra.mxu0 0
  %698 = vmatprep.subr.bf16.mxu0 0
  %699 = vmatpush2.bf16.xpose.msra.mxu0 0
  %700 = vmatprep.subr.bf16.mxu0 0
  %701 = vmatpush2.bf16.xpose.msra.mxu0 0
  %702 = vmatprep.subr.bf16.mxu0 0
  %703 = vmatpush2.bf16.xpose.msra.mxu0 0
  %704 = vmatprep.subr.bf16.mxu0 0
  %705 = vmatpush2.bf16.xpose.msra.mxu0 0
  %706 = vmatprep.subr.bf16.mxu0 0
  %707 = vmatpush2.bf16.xpose.msra.mxu0 0
  %708 = vmatprep.subr.bf16.mxu0 0
  %709 = vmatpush2.bf16.xpose.msra.mxu0 0
  %710 = vmatprep.subr.bf16.mxu0 0
  %711 = vmatpush2.bf16.xpose.msra.mxu0 0
  %712 = vmatprep.mubr.bf16.mxu0 0
  %713 = vmatmul.mubr.bf16.gmra.mxu0 %v675
  %v714 = vpop.f32.mrf.mxu0
  %v715 = vadd.f32 0.0, %v714
  %v716 = vpop.f32.mrf.mxu0
  %v717 = vpop.f32.mrf.mxu0
  %v718 = vpop.f32.mrf.mxu0
  %719 = vdwg.mxu0
  %v720 = vmul.f32 %v665, 0.25
  %v721 = vmul.f32 %v715, 0.25
  %v722 = vadd.f32 %v720, %v22
  %v723 = vadd.f32 %v721, %v22
  %v724 = vsel %vm159, %v722, -inf
  %725 = vmax.xlane.f32.xlu0 %v724
  %v726 = vpop.xlane.xlu0 %725
  %v727 = vsel %vm159, %v723, -inf
  %728 = vmax.xlane.f32.xlu0 %v727
  %v729 = vpop.xlane.xlu0 %728
  %v730 = vsub.f32 %v722, %v726
  %v731 = vsub.f32 %v723, %v729
  %v732 = vmul.f32 %v730, 1.442695
  %v733 = vpow.pop %v732
  %v734 = vmul.f32 %v731, 1.442695
  %v735 = vpow.pop %v734
  %v736 = vsel %vm159, %v733, 0.0
  %737 = vadd.xlane.f32.xlu0 %v736
  %v738 = vpop.xlane.xlu0 %737
  %v739 = vsel %vm159, %v735, 0.0
  %740 = vadd.xlane.f32.xlu0 %v739
  %v741 = vpop.xlane.xlu0 %740
  %v742 = vrcp.pop %v738
  %v743 = vrcp.pop %v741
  %v744 = vmul.f32 %v733, %v742
  %v745 = vmul.f32 %v735, %v743
  %v746 = vpack.c.bf16 %v744, %v744
  %v747 = vpack.c.bf16 %v745, %v745
  %v749 = vsel %vm184, %v746, 0
  %v752 = vsel %vm188, %v618, 0
  %754 = vmatprep.subr.bf16.mxu0 0
  %755 = vmatpush1.bf16.msra.mxu0 0
  %756 = vmatprep.subr.bf16.mxu0 0
  %757 = vmatpush1.bf16.msra.mxu0 0
  %758 = vmatprep.subr.bf16.mxu0 0
  %759 = vmatpush1.bf16.msra.mxu0 0
  %760 = vmatprep.subr.bf16.mxu0 0
  %761 = vmatpush1.bf16.msra.mxu0 0
  %762 = vmatprep.subr.bf16.mxu0 0
  %763 = vmatpush1.bf16.msra.mxu0 0
  %764 = vmatprep.subr.bf16.mxu0 0
  %765 = vmatpush1.bf16.msra.mxu0 0
  %766 = vmatprep.subr.bf16.mxu0 0
  %767 = vmatpush1.bf16.msra.mxu0 0
  %768 = vmatprep.subr.bf16.mxu0 0
  %769 = vmatpush1.bf16.msra.mxu0 %v752
  %770 = vmatprep.subr.bf16.mxu0 0
  %771 = vmatpush2.bf16.msra.mxu0 0
  %772 = vmatprep.subr.bf16.mxu0 0
  %773 = vmatpush2.bf16.msra.mxu0 0
  %774 = vmatprep.subr.bf16.mxu0 0
  %775 = vmatpush2.bf16.msra.mxu0 0
  %776 = vmatprep.subr.bf16.mxu0 0
  %777 = vmatpush2.bf16.msra.mxu0 0
  %778 = vmatprep.subr.bf16.mxu0 0
  %779 = vmatpush2.bf16.msra.mxu0 0
  %780 = vmatprep.subr.bf16.mxu0 0
  %781 = vmatpush2.bf16.msra.mxu0 0
  %782 = vmatprep.subr.bf16.mxu0 0
  %783 = vmatpush2.bf16.msra.mxu0 0
  %784 = vmatprep.subr.bf16.mxu0 0
  %785 = vmatpush2.bf16.msra.mxu0 0
  %786 = vmatprep.mubr.bf16.mxu0 0
  %787 = vmatmul.mubr.bf16.gmra.mxu0 %v749
  %v788 = vpop.f32.mrf.mxu0
  %v789 = vadd.f32 0.0, %v788
  %v790 = vpop.f32.mrf.mxu0
  %v791 = vpop.f32.mrf.mxu0
  %v792 = vpop.f32.mrf.mxu0
  %793 = vdwg.mxu0
  %v795 = vsel %vm184, %v747, 0
  %v798 = vsel %vm188, %v619, 0
  %800 = vmatprep.subr.bf16.mxu0 0
  %801 = vmatpush1.bf16.msra.mxu0 0
  %802 = vmatprep.subr.bf16.mxu0 0
  %803 = vmatpush1.bf16.msra.mxu0 0
  %804 = vmatprep.subr.bf16.mxu0 0
  %805 = vmatpush1.bf16.msra.mxu0 0
  %806 = vmatprep.subr.bf16.mxu0 0
  %807 = vmatpush1.bf16.msra.mxu0 0
  %808 = vmatprep.subr.bf16.mxu0 0
  %809 = vmatpush1.bf16.msra.mxu0 0
  %810 = vmatprep.subr.bf16.mxu0 0
  %811 = vmatpush1.bf16.msra.mxu0 0
  %812 = vmatprep.subr.bf16.mxu0 0
  %813 = vmatpush1.bf16.msra.mxu0 0
  %814 = vmatprep.subr.bf16.mxu0 0
  %815 = vmatpush1.bf16.msra.mxu0 %v798
  %816 = vmatprep.subr.bf16.mxu0 0
  %817 = vmatpush2.bf16.msra.mxu0 0
  %818 = vmatprep.subr.bf16.mxu0 0
  %819 = vmatpush2.bf16.msra.mxu0 0
  %820 = vmatprep.subr.bf16.mxu0 0
  %821 = vmatpush2.bf16.msra.mxu0 0
  %822 = vmatprep.subr.bf16.mxu0 0
  %823 = vmatpush2.bf16.msra.mxu0 0
  %824 = vmatprep.subr.bf16.mxu0 0
  %825 = vmatpush2.bf16.msra.mxu0 0
  %826 = vmatprep.subr.bf16.mxu0 0
  %827 = vmatpush2.bf16.msra.mxu0 0
  %828 = vmatprep.subr.bf16.mxu0 0
  %829 = vmatpush2.bf16.msra.mxu0 0
  %830 = vmatprep.subr.bf16.mxu0 0
  %831 = vmatpush2.bf16.msra.mxu0 0
  %832 = vmatprep.mubr.bf16.mxu0 0
  %833 = vmatmul.mubr.bf16.gmra.mxu0 %v795
  %v834 = vpop.f32.mrf.mxu0
  %v835 = vadd.f32 0.0, %v834
  %v836 = vpop.f32.mrf.mxu0
  %v837 = vpop.f32.mrf.mxu0
  %v838 = vpop.f32.mrf.mxu0
  %839 = vdwg.mxu0
  %v842 = vcombine.low %v789, %v835
  %v844 = vpack.c.bf16 %v842, %v842
  %v847 = vunpack.c.l.b16 %v28
  %v848 = vunpack.c.l.b16 %v29
  %v849 = vpack.c.b16 %v848, %v847
  %v852 = vsel %vm53, %v844, 0
  %854 = vmatprep.subr.bf16.mxu0 0
  %855 = vmatpush1.bf16.msra.mxu0 0
  %856 = vmatprep.subr.bf16.mxu0 0
  %857 = vmatpush1.bf16.msra.mxu0 0
  %858 = vmatprep.subr.bf16.mxu0 0
  %859 = vmatpush1.bf16.msra.mxu0 0
  %860 = vmatprep.subr.bf16.mxu0 0
  %861 = vmatpush1.bf16.msra.mxu0 0
  %862 = vmatprep.subr.bf16.mxu0 0
  %863 = vmatpush1.bf16.msra.mxu0 0
  %864 = vmatprep.subr.bf16.mxu0 0
  %865 = vmatpush1.bf16.msra.mxu0 0
  %866 = vmatprep.subr.bf16.mxu0 0
  %867 = vmatpush1.bf16.msra.mxu0 0
  %868 = vmatprep.subr.bf16.mxu0 0
  %869 = vmatpush1.bf16.msra.mxu0 %v849
  %870 = vmatprep.subr.bf16.mxu0 0
  %871 = vmatpush2.bf16.msra.mxu0 0
  %872 = vmatprep.subr.bf16.mxu0 0
  %873 = vmatpush2.bf16.msra.mxu0 0
  %874 = vmatprep.subr.bf16.mxu0 0
  %875 = vmatpush2.bf16.msra.mxu0 0
  %876 = vmatprep.subr.bf16.mxu0 0
  %877 = vmatpush2.bf16.msra.mxu0 0
  %878 = vmatprep.subr.bf16.mxu0 0
  %879 = vmatpush2.bf16.msra.mxu0 0
  %880 = vmatprep.subr.bf16.mxu0 0
  %881 = vmatpush2.bf16.msra.mxu0 0
  %882 = vmatprep.subr.bf16.mxu0 0
  %883 = vmatpush2.bf16.msra.mxu0 0
  %884 = vmatprep.subr.bf16.mxu0 0
  %885 = vmatpush2.bf16.msra.mxu0 0
  %886 = vmatprep.mubr.bf16.mxu0 0
  %887 = vmatmul.mubr.bf16.gmra.mxu0 %v852
  %v888 = vpop.f32.mrf.mxu0
  %v889 = vadd.f32 0.0, %v888
  %v890 = vpop.f32.mrf.mxu0
  %v891 = vpop.f32.mrf.mxu0
  %v892 = vpop.f32.mrf.mxu0
  %893 = vdwg.mxu0
  %v894 = vadd.f32 %v613, %v889
  %895 = vrot.lane.b32.xlu0 %v18, 80
  %v896 = vpop.permute.xlu0 %895
  %897 = vrot.lane.b32.xlu0 %v19, 80
  %v898 = vpop.permute.xlu0 %897
  %v899 = vrot.slane %v896, 2
  %v900 = vrot.slane %v898, 2
  %901 = vrot.lane.b32.xlu0 %v50, 80
  %v902 = vpop.permute.xlu0 %901
  %903 = vrot.lane.b32.xlu0 %v50, 16
  %v904 = vpop.permute.xlu0 %903
  %v906 = vsel %vm53, %v902, 0
  %v909 = vsel %vm53, %v904, 0
  %911 = vmatprep.subr.bf16.mxu0 0
  %912 = vmatpush1.bf16.xpose.msra.mxu0 0
  %913 = vmatprep.subr.bf16.mxu0 0
  %914 = vmatpush1.bf16.xpose.msra.mxu0 0
  %915 = vmatprep.subr.bf16.mxu0 0
  %916 = vmatpush1.bf16.xpose.msra.mxu0 0
  %917 = vmatprep.subr.bf16.mxu0 0
  %918 = vmatpush1.bf16.xpose.msra.mxu0 0
  %919 = vmatprep.subr.bf16.mxu0 0
  %920 = vmatpush1.bf16.xpose.msra.mxu0 0
  %921 = vmatprep.subr.bf16.mxu0 0
  %922 = vmatpush1.bf16.xpose.msra.mxu0 0
  %923 = vmatprep.subr.bf16.mxu0 0
  %924 = vmatpush1.bf16.xpose.msra.mxu0 0
  %925 = vmatprep.subr.bf16.mxu0 0
  %926 = vmatpush1.bf16.xpose.msra.mxu0 %v909
  %927 = vmatprep.subr.bf16.mxu0 0
  %928 = vmatpush2.bf16.xpose.msra.mxu0 0
  %929 = vmatprep.subr.bf16.mxu0 0
  %930 = vmatpush2.bf16.xpose.msra.mxu0 0
  %931 = vmatprep.subr.bf16.mxu0 0
  %932 = vmatpush2.bf16.xpose.msra.mxu0 0
  %933 = vmatprep.subr.bf16.mxu0 0
  %934 = vmatpush2.bf16.xpose.msra.mxu0 0
  %935 = vmatprep.subr.bf16.mxu0 0
  %936 = vmatpush2.bf16.xpose.msra.mxu0 0
  %937 = vmatprep.subr.bf16.mxu0 0
  %938 = vmatpush2.bf16.xpose.msra.mxu0 0
  %939 = vmatprep.subr.bf16.mxu0 0
  %940 = vmatpush2.bf16.xpose.msra.mxu0 0
  %941 = vmatprep.subr.bf16.mxu0 0
  %942 = vmatpush2.bf16.xpose.msra.mxu0 0
  %943 = vmatprep.mubr.bf16.mxu0 0
  %944 = vmatmul.mubr.bf16.gmra.mxu0 %v906
  %v945 = vpop.f32.mrf.mxu0
  %v946 = vadd.f32 0.0, %v945
  %v947 = vpop.f32.mrf.mxu0
  %v948 = vpop.f32.mrf.mxu0
  %v949 = vpop.f32.mrf.mxu0
  %950 = vdwg.mxu0
  %951 = vrot.lane.b32.xlu0 %v106, 80
  %v952 = vpop.permute.xlu0 %951
  %953 = vrot.lane.b32.xlu0 %v106, 16
  %v954 = vpop.permute.xlu0 %953
  %v956 = vsel %vm53, %v952, 0
  %v959 = vsel %vm53, %v954, 0
  %961 = vmatprep.subr.bf16.mxu0 0
  %962 = vmatpush1.bf16.xpose.msra.mxu0 0
  %963 = vmatprep.subr.bf16.mxu0 0
  %964 = vmatpush1.bf16.xpose.msra.mxu0 0
  %965 = vmatprep.subr.bf16.mxu0 0
  %966 = vmatpush1.bf16.xpose.msra.mxu0 0
  %967 = vmatprep.subr.bf16.mxu0 0
  %968 = vmatpush1.bf16.xpose.msra.mxu0 0
  %969 = vmatprep.subr.bf16.mxu0 0
  %970 = vmatpush1.bf16.xpose.msra.mxu0 0
  %971 = vmatprep.subr.bf16.mxu0 0
  %972 = vmatpush1.bf16.xpose.msra.mxu0 0
  %973 = vmatprep.subr.bf16.mxu0 0
  %974 = vmatpush1.bf16.xpose.msra.mxu0 0
  %975 = vmatprep.subr.bf16.mxu0 0
  %976 = vmatpush1.bf16.xpose.msra.mxu0 %v959
  %977 = vmatprep.subr.bf16.mxu0 0
  %978 = vmatpush2.bf16.xpose.msra.mxu0 0
  %979 = vmatprep.subr.bf16.mxu0 0
  %980 = vmatpush2.bf16.xpose.msra.mxu0 0
  %981 = vmatprep.subr.bf16.mxu0 0
  %982 = vmatpush2.bf16.xpose.msra.mxu0 0
  %983 = vmatprep.subr.bf16.mxu0 0
  %984 = vmatpush2.bf16.xpose.msra.mxu0 0
  %985 = vmatprep.subr.bf16.mxu0 0
  %986 = vmatpush2.bf16.xpose.msra.mxu0 0
  %987 = vmatprep.subr.bf16.mxu0 0
  %988 = vmatpush2.bf16.xpose.msra.mxu0 0
  %989 = vmatprep.subr.bf16.mxu0 0
  %990 = vmatpush2.bf16.xpose.msra.mxu0 0
  %991 = vmatprep.subr.bf16.mxu0 0
  %992 = vmatpush2.bf16.xpose.msra.mxu0 0
  %993 = vmatprep.mubr.bf16.mxu0 0
  %994 = vmatmul.mubr.bf16.gmra.mxu0 %v956
  %v995 = vpop.f32.mrf.mxu0
  %v996 = vadd.f32 0.0, %v995
  %v997 = vpop.f32.mrf.mxu0
  %v998 = vpop.f32.mrf.mxu0
  %v999 = vpop.f32.mrf.mxu0
  %1000 = vdwg.mxu0
  %v1001 = vmul.f32 %v946, 0.25
  %v1002 = vmul.f32 %v996, 0.25
  %v1003 = vadd.f32 %v1001, %v23
  %v1004 = vadd.f32 %v1002, %v23
  %v1005 = vsel %vm159, %v1003, -inf
  %1006 = vmax.xlane.f32.xlu0 %v1005
  %v1007 = vpop.xlane.xlu0 %1006
  %v1008 = vsel %vm159, %v1004, -inf
  %1009 = vmax.xlane.f32.xlu0 %v1008
  %v1010 = vpop.xlane.xlu0 %1009
  %v1011 = vsub.f32 %v1003, %v1007
  %v1012 = vsub.f32 %v1004, %v1010
  %v1013 = vmul.f32 %v1011, 1.442695
  %v1014 = vpow.pop %v1013
  %v1015 = vmul.f32 %v1012, 1.442695
  %v1016 = vpow.pop %v1015
  %v1017 = vsel %vm159, %v1014, 0.0
  %1018 = vadd.xlane.f32.xlu0 %v1017
  %v1019 = vpop.xlane.xlu0 %1018
  %v1020 = vsel %vm159, %v1016, 0.0
  %1021 = vadd.xlane.f32.xlu0 %v1020
  %v1022 = vpop.xlane.xlu0 %1021
  %v1023 = vrcp.pop %v1019
  %v1024 = vrcp.pop %v1022
  %v1025 = vmul.f32 %v1014, %v1023
  %v1026 = vmul.f32 %v1016, %v1024
  %v1027 = vpack.c.bf16 %v1025, %v1025
  %v1028 = vpack.c.bf16 %v1026, %v1026
  %v1030 = vsel %vm184, %v1027, 0
  %v1033 = vsel %vm188, %v899, 0
  %1035 = vmatprep.subr.bf16.mxu0 0
  %1036 = vmatpush1.bf16.msra.mxu0 0
  %1037 = vmatprep.subr.bf16.mxu0 0
  %1038 = vmatpush1.bf16.msra.mxu0 0
  %1039 = vmatprep.subr.bf16.mxu0 0
  %1040 = vmatpush1.bf16.msra.mxu0 0
  %1041 = vmatprep.subr.bf16.mxu0 0
  %1042 = vmatpush1.bf16.msra.mxu0 0
  %1043 = vmatprep.subr.bf16.mxu0 0
  %1044 = vmatpush1.bf16.msra.mxu0 0
  %1045 = vmatprep.subr.bf16.mxu0 0
  %1046 = vmatpush1.bf16.msra.mxu0 0
  %1047 = vmatprep.subr.bf16.mxu0 0
  %1048 = vmatpush1.bf16.msra.mxu0 0
  %1049 = vmatprep.subr.bf16.mxu0 0
  %1050 = vmatpush1.bf16.msra.mxu0 %v1033
  %1051 = vmatprep.subr.bf16.mxu0 0
  %1052 = vmatpush2.bf16.msra.mxu0 0
  %1053 = vmatprep.subr.bf16.mxu0 0
  %1054 = vmatpush2.bf16.msra.mxu0 0
  %1055 = vmatprep.subr.bf16.mxu0 0
  %1056 = vmatpush2.bf16.msra.mxu0 0
  %1057 = vmatprep.subr.bf16.mxu0 0
  %1058 = vmatpush2.bf16.msra.mxu0 0
  %1059 = vmatprep.subr.bf16.mxu0 0
  %1060 = vmatpush2.bf16.msra.mxu0 0
  %1061 = vmatprep.subr.bf16.mxu0 0
  %1062 = vmatpush2.bf16.msra.mxu0 0
  %1063 = vmatprep.subr.bf16.mxu0 0
  %1064 = vmatpush2.bf16.msra.mxu0 0
  %1065 = vmatprep.subr.bf16.mxu0 0
  %1066 = vmatpush2.bf16.msra.mxu0 0
  %1067 = vmatprep.mubr.bf16.mxu0 0
  %1068 = vmatmul.mubr.bf16.gmra.mxu0 %v1030
  %v1069 = vpop.f32.mrf.mxu0
  %v1070 = vadd.f32 0.0, %v1069
  %v1071 = vpop.f32.mrf.mxu0
  %v1072 = vpop.f32.mrf.mxu0
  %v1073 = vpop.f32.mrf.mxu0
  %1074 = vdwg.mxu0
  %v1076 = vsel %vm184, %v1028, 0
  %v1079 = vsel %vm188, %v900, 0
  %1081 = vmatprep.subr.bf16.mxu0 0
  %1082 = vmatpush1.bf16.msra.mxu0 0
  %1083 = vmatprep.subr.bf16.mxu0 0
  %1084 = vmatpush1.bf16.msra.mxu0 0
  %1085 = vmatprep.subr.bf16.mxu0 0
  %1086 = vmatpush1.bf16.msra.mxu0 0
  %1087 = vmatprep.subr.bf16.mxu0 0
  %1088 = vmatpush1.bf16.msra.mxu0 0
  %1089 = vmatprep.subr.bf16.mxu0 0
  %1090 = vmatpush1.bf16.msra.mxu0 0
  %1091 = vmatprep.subr.bf16.mxu0 0
  %1092 = vmatpush1.bf16.msra.mxu0 0
  %1093 = vmatprep.subr.bf16.mxu0 0
  %1094 = vmatpush1.bf16.msra.mxu0 0
  %1095 = vmatprep.subr.bf16.mxu0 0
  %1096 = vmatpush1.bf16.msra.mxu0 %v1079
  %1097 = vmatprep.subr.bf16.mxu0 0
  %1098 = vmatpush2.bf16.msra.mxu0 0
  %1099 = vmatprep.subr.bf16.mxu0 0
  %1100 = vmatpush2.bf16.msra.mxu0 0
  %1101 = vmatprep.subr.bf16.mxu0 0
  %1102 = vmatpush2.bf16.msra.mxu0 0
  %1103 = vmatprep.subr.bf16.mxu0 0
  %1104 = vmatpush2.bf16.msra.mxu0 0
  %1105 = vmatprep.subr.bf16.mxu0 0
  %1106 = vmatpush2.bf16.msra.mxu0 0
  %1107 = vmatprep.subr.bf16.mxu0 0
  %1108 = vmatpush2.bf16.msra.mxu0 0
  %1109 = vmatprep.subr.bf16.mxu0 0
  %1110 = vmatpush2.bf16.msra.mxu0 0
  %1111 = vmatprep.subr.bf16.mxu0 0
  %1112 = vmatpush2.bf16.msra.mxu0 0
  %1113 = vmatprep.mubr.bf16.mxu0 0
  %1114 = vmatmul.mubr.bf16.gmra.mxu0 %v1076
  %v1115 = vpop.f32.mrf.mxu0
  %v1116 = vadd.f32 0.0, %v1115
  %v1117 = vpop.f32.mrf.mxu0
  %v1118 = vpop.f32.mrf.mxu0
  %v1119 = vpop.f32.mrf.mxu0
  %1120 = vdwg.mxu0
  %v1123 = vcombine.low %v1070, %v1116
  %v1125 = vpack.c.bf16 %v1123, %v1123
  %v1128 = vunpack.c.l.b16 %v30
  %v1129 = vunpack.c.l.b16 %v31
  %v1130 = vpack.c.b16 %v1129, %v1128
  %v1133 = vsel %vm53, %v1125, 0
  %1135 = vmatprep.subr.bf16.mxu0 0
  %1136 = vmatpush1.bf16.msra.mxu0 0
  %1137 = vmatprep.subr.bf16.mxu0 0
  %1138 = vmatpush1.bf16.msra.mxu0 0
  %1139 = vmatprep.subr.bf16.mxu0 0
  %1140 = vmatpush1.bf16.msra.mxu0 0
  %1141 = vmatprep.subr.bf16.mxu0 0
  %1142 = vmatpush1.bf16.msra.mxu0 0
  %1143 = vmatprep.subr.bf16.mxu0 0
  %1144 = vmatpush1.bf16.msra.mxu0 0
  %1145 = vmatprep.subr.bf16.mxu0 0
  %1146 = vmatpush1.bf16.msra.mxu0 0
  %1147 = vmatprep.subr.bf16.mxu0 0
  %1148 = vmatpush1.bf16.msra.mxu0 0
  %1149 = vmatprep.subr.bf16.mxu0 0
  %1150 = vmatpush1.bf16.msra.mxu0 %v1130
  %1151 = vmatprep.subr.bf16.mxu0 0
  %1152 = vmatpush2.bf16.msra.mxu0 0
  %1153 = vmatprep.subr.bf16.mxu0 0
  %1154 = vmatpush2.bf16.msra.mxu0 0
  %1155 = vmatprep.subr.bf16.mxu0 0
  %1156 = vmatpush2.bf16.msra.mxu0 0
  %1157 = vmatprep.subr.bf16.mxu0 0
  %1158 = vmatpush2.bf16.msra.mxu0 0
  %1159 = vmatprep.subr.bf16.mxu0 0
  %1160 = vmatpush2.bf16.msra.mxu0 0
  %1161 = vmatprep.subr.bf16.mxu0 0
  %1162 = vmatpush2.bf16.msra.mxu0 0
  %1163 = vmatprep.subr.bf16.mxu0 0
  %1164 = vmatpush2.bf16.msra.mxu0 0
  %1165 = vmatprep.subr.bf16.mxu0 0
  %1166 = vmatpush2.bf16.msra.mxu0 0
  %1167 = vmatprep.mubr.bf16.mxu0 0
  %1168 = vmatmul.mubr.bf16.gmra.mxu0 %v1133
  %v1169 = vpop.f32.mrf.mxu0
  %v1170 = vadd.f32 0.0, %v1169
  %v1171 = vpop.f32.mrf.mxu0
  %v1172 = vpop.f32.mrf.mxu0
  %v1173 = vpop.f32.mrf.mxu0
  %1174 = vdwg.mxu0
  %v1175 = vadd.f32 %v894, %v1170
  %v1177 = vcombine.high %v1175, %v1175
  %v1179 = vpack.c.bf16 %v1175, %v1175
  %v1180 = vpack.c.bf16 %v1177, %v1177
  %vm1181 = vcmask 517120
  %1182 = vst.msk [vmem:[%s4] sm:$0x3] %vm1181, %v1179
  %1183 = vst.msk [vmem:[%s4 + $0x2] sm:$0x3] %vm1181, %v1180
  // Predicated region
  $region18: #{_lambda_.39} parent=0 // pred_check
    _
  $region19: #{_lambda_.39} parent=0 // pred_check_branch
    %1185 = sbr.rel (0) target = $region21
  $region20: #{_lambda_.39} parent=0 // pred_region
    _
  $region21: #{_lambda_.39} parent=0 // pred_fallthru
    _
  // Predicated region
  $region22: #{_lambda_.39} parent=0 // pred_check
    _
  $region23: #{_lambda_.39} parent=0 // pred_check_branch
    %1187 = sbr.rel (0) target = $region25
  $region24: #{_lambda_.39} parent=0 // pred_region
    _
  $region25: #{_lambda_.39} parent=0 // pred_fallthru
    _

// kernel: _lambda_.44
$region0: #{_lambda_.44}
  #allocation0 [shape = 'u32[]', space=smem, size = 0x4, offset = 0x4, fixed_abs, tag = 'smem constant byte address 0x4 - core index']
  #allocation1 [shape = 'u32[144,128]{1,0:T(1,128)}', space=vmem, size = 0x12000, scoped, tag = 'internal scratch']
  %s0 = inlined_call_operand.vmem [shape: bf16[8,64], index: 0, kind: input, shape index: {}]
  %s1 = inlined_call_operand.vmem [shape: f32[1,64], index: 1, kind: input, shape index: {}]
  %s2 = inlined_call_operand.vmem [shape: f32[1,64], index: 2, kind: input, shape index: {}]
  %s3 = inlined_call_operand.vmem [shape: f32[8,64], index: 3, kind: output, shape index: {}]
  %s4 = sld [smem:[#allocation0]]
  $region22: #{_lambda_.44} parent=0
    _
  %s6 = ssub.s32 1, %s4
  %s7 = scalar_select 0, %s6, %s4
  // Predicated region
  $region2: #{_lambda_.44} parent=0 // pred_check
    _
  $region3: #{_lambda_.44} parent=0 // pred_check_branch
    %9 = sbr.rel (0) target = $region5
  $region4: #{_lambda_.44} parent=0 // pred_region
    _
  $region5: #{_lambda_.44} parent=0 // pred_fallthru
    _
  // Predicated region
  $region6: #{_lambda_.44} parent=0 // pred_check
    _
  $region7: #{_lambda_.44} parent=0 // pred_check_branch
    %11 = sbr.rel (0) target = $region9
  $region8: #{_lambda_.44} parent=0 // pred_region
    _
  $region9: #{_lambda_.44} parent=0 // pred_fallthru
    _
  // Predicated region
  $region10: #{_lambda_.44} parent=0 // pred_check
    _
  $region11: #{_lambda_.44} parent=0 // pred_check_branch
    %13 = sbr.rel (0) target = $region13
  $region12: #{_lambda_.44} parent=0 // pred_region
    _
  $region13: #{_lambda_.44} parent=0 // pred_fallthru
    _
  %v14 = vld [vmem:[%s0] sm:$0xf]
  %v15 = vunpack.c.l.bf16 %v14
  %v16 = vld [vmem:[%s1] sm:$0x1]
  %v17 = vld [vmem:[%s2] sm:$0x1]
  %vm18 = vcmask 523264
  %v19 = vsel %vm18, %v15, 0.0
  %20 = vadd.xlane.f32.xlu0 %v19
  %v21 = vpop.xlane.xlu0 %20
  %v22 = vrcp.pop 64.0
  %v23 = vmul.f32 %v21, %v22
  %v24 = vsub.f32 %v15, %v23
  %v25 = vmul.f32 %v24, %v24
  %v26 = vsel %vm18, %v25, 0.0
  %27 = vadd.xlane.f32.xlu0 %v26
  %v28 = vpop.xlane.xlu0 %27
  %v29 = vmul.f32 %v28, %v22
  %v30 = vadd.f32 %v29, 1e-05
  %v31 = vrsqrt.pop %v30
  %v32 = vmul.f32 %v24, %v31
  %v34 = vlaneseq
  %v35 = vshrl.u32 %v34, 7
  %v36 = vsub.s32 0, %v35
  %v37 = vrot.slane %v16, %v36
  %v39 = vmul.f32 %v32, %v37
  %v41 = vlaneseq
  %v42 = vshrl.u32 %v41, 7
  %v43 = vsub.s32 0, %v42
  %v44 = vrot.slane %v17, %v43
  %v46 = vadd.f32 %v39, %v44
  %47 = vst.msk [vmem:[%s3] sm:$0xff] %vm18, %v46
  // Predicated region
  $region14: #{_lambda_.44} parent=0 // pred_check
    _
  $region15: #{_lambda_.44} parent=0 // pred_check_branch
    %49 = sbr.rel (0) target = $region17
  $region16: #{_lambda_.44} parent=0 // pred_region
    _
  $region17: #{_lambda_.44} parent=0 // pred_fallthru
    _
  // Predicated region
  $region18: #{_lambda_.44} parent=0 // pred_check
    _
  $region19: #{_lambda_.44} parent=0 // pred_check_branch
    %51 = sbr.rel (0) target = $region21
  $region20: #{_lambda_.44} parent=0 // pred_region
    _
  $region21: #{_lambda_.44} parent=0 // pred_fallthru
    _

// kernel: _lambda_.40
$region0: #{_lambda_.40}
  #allocation0 [shape = 'u32[]', space=smem, size = 0x4, offset = 0x4, fixed_abs, tag = 'smem constant byte address 0x4 - core index']
  #allocation1 [shape = 'u32[144,128]{1,0:T(1,128)}', space=vmem, size = 0x12000, scoped, tag = 'internal scratch']
  %s0 = inlined_call_operand.vmem [shape: bf16[8,64], index: 0, kind: input, shape index: {}]
  %s1 = inlined_call_operand.vmem [shape: bf16[8,64], index: 1, kind: input, shape index: {}]
  %s2 = inlined_call_operand.vmem [shape: f32[1,64], index: 2, kind: input, shape index: {}]
  %s3 = inlined_call_operand.vmem [shape: f32[1,64], index: 3, kind: input, shape index: {}, may-alias: {3,7}]
  %s4 = inlined_call_operand.vmem [shape: bf16[64,256], index: 4, kind: input, shape index: {}]
  %s5 = inlined_call_operand.vmem [shape: f32[1,256], index: 5, kind: input, shape index: {}]
  %s6 = inlined_call_operand.vmem [shape: bf16[256,64], index: 6, kind: input, shape index: {}]
  %s7 = inlined_call_operand.vmem [shape: f32[1,64], index: 7, kind: input, shape index: {}, may-alias: {3,7}]
  %s8 = inlined_call_operand.vmem [shape: bf16[8,64], index: 8, kind: output, shape index: {}]
  %s9 = sld [smem:[#allocation0]]
  $region42: #{_lambda_.40} parent=0
    _
  %s11 = ssub.s32 1, %s9
  %s12 = scalar_select 0, %s11, %s9
  // Predicated region
  $region2: #{_lambda_.40} parent=0 // pred_check
    _
  $region3: #{_lambda_.40} parent=0 // pred_check_branch
    %14 = sbr.rel (0) target = $region5
  $region4: #{_lambda_.40} parent=0 // pred_region
    _
  $region5: #{_lambda_.40} parent=0 // pred_fallthru
    _
  // Predicated region
  $region6: #{_lambda_.40} parent=0 // pred_check
    _
  $region7: #{_lambda_.40} parent=0 // pred_check_branch
    %16 = sbr.rel (0) target = $region9
  $region8: #{_lambda_.40} parent=0 // pred_region
    _
  $region9: #{_lambda_.40} parent=0 // pred_fallthru
    _
  // Predicated region
  $region10: #{_lambda_.40} parent=0 // pred_check
    _
  $region11: #{_lambda_.40} parent=0 // pred_check_branch
    %18 = sbr.rel (0) target = $region13
  $region12: #{_lambda_.40} parent=0 // pred_region
    _
  $region13: #{_lambda_.40} parent=0 // pred_fallthru
    _
  // Predicated region
  $region14: #{_lambda_.40} parent=0 // pred_check
    _
  $region15: #{_lambda_.40} parent=0 // pred_check_branch
    %20 = sbr.rel (0) target = $region17
  $region16: #{_lambda_.40} parent=0 // pred_region
    _
  $region17: #{_lambda_.40} parent=0 // pred_fallthru
    _
  // Predicated region
  $region18: #{_lambda_.40} parent=0 // pred_check
    _
  $region19: #{_lambda_.40} parent=0 // pred_check_branch
    %22 = sbr.rel (0) target = $region21
  $region20: #{_lambda_.40} parent=0 // pred_region
    _
  $region21: #{_lambda_.40} parent=0 // pred_fallthru
    _
  // Predicated region
  $region22: #{_lambda_.40} parent=0 // pred_check
    _
  $region23: #{_lambda_.40} parent=0 // pred_check_branch
    %24 = sbr.rel (0) target = $region25
  $region24: #{_lambda_.40} parent=0 // pred_region
    _
  $region25: #{_lambda_.40} parent=0 // pred_fallthru
    _
  // Predicated region
  $region26: #{_lambda_.40} parent=0 // pred_check
    _
  $region27: #{_lambda_.40} parent=0 // pred_check_branch
    %26 = sbr.rel (0) target = $region29
  $region28: #{_lambda_.40} parent=0 // pred_region
    _
  $region29: #{_lambda_.40} parent=0 // pred_fallthru
    _
  // Predicated region
  $region30: #{_lambda_.40} parent=0 // pred_check
    _
  $region31: #{_lambda_.40} parent=0 // pred_check_branch
    %28 = sbr.rel (0) target = $region33
  $region32: #{_lambda_.40} parent=0 // pred_region
    _
  $region33: #{_lambda_.40} parent=0 // pred_fallthru
    _
  %v30 = vld [vmem:[%s0] sm:$0xf]
  %v31 = vunpack.c.l.bf16 %v30
  %v32 = vld [vmem:[%s1] sm:$0xf]
  %v33 = vunpack.c.l.bf16 %v32
  %v34 = vadd.f32 %v31, %v33
  %v35 = vld [vmem:[%s2] sm:$0x1]
  %v36 = vld [vmem:[%s3] sm:$0x1]
  %vm37 = vcmask 523264
  %v38 = vsel %vm37, %v34, 0.0
  %39 = vadd.xlane.f32.xlu0 %v38
  %v40 = vpop.xlane.xlu0 %39
  %v41 = vrcp.pop 64.0
  %v42 = vmul.f32 %v40, %v41
  %v43 = vsub.f32 %v34, %v42
  %v44 = vmul.f32 %v43, %v43
  %v45 = vsel %vm37, %v44, 0.0
  %46 = vadd.xlane.f32.xlu0 %v45
  %v47 = vpop.xlane.xlu0 %46
  %v48 = vmul.f32 %v47, %v41
  %v49 = vadd.f32 %v48, 1e-05
  %v50 = vrsqrt.pop %v49
  %v51 = vmul.f32 %v43, %v50
  %v53 = vlaneseq
  %v54 = vshrl.u32 %v53, 7
  %v55 = vsub.s32 0, %v54
  %v56 = vrot.slane %v35, %v55
  %v58 = vmul.f32 %v51, %v56
  %v60 = vlaneseq
  %v61 = vshrl.u32 %v60, 7
  %v62 = vsub.s32 0, %v61
  %v63 = vrot.slane %v36, %v62
  %v65 = vadd.f32 %v58, %v63
  %v66 = vpack.c.bf16 %v65, %v65
  %v67 = vld [vmem:[%s4] sm:$0xff]
  %v68 = vld [vmem:[%s4 + $0x8] sm:$0xff]
  %v69 = vld [vmem:[%s4 + $0x10] sm:$0xff]
  %v70 = vld [vmem:[%s4 + $0x18] sm:$0xff]
  %v71 = vld [vmem:[%s4 + $0x20] sm:$0xff]
  %v72 = vld [vmem:[%s4 + $0x28] sm:$0xff]
  %v73 = vld [vmem:[%s4 + $0x30] sm:$0xff]
  %v74 = vld [vmem:[%s4 + $0x38] sm:$0xff]
  %v75 = vld [vmem:[%s5] sm:$0x3]
  %v77 = vlaneseq
  %v78 = vshrl.u32 %v77, 7
  %v79 = vsub.s32 0, %v78
  %v80 = vrot.slane %v75, %v79
  %v81 = vlaneseq
  %v82 = vshrl.u32 %v81, 7
  %v83 = vsub.s32 1, %v82
  %v84 = vrot.slane %v75, %v83
  %v95 = vunpack.c.l.b16 %v67
  %v96 = vunpack.c.h.b16 %v67
  %v97 = vunpack.c.l.b16 %v68
  %v98 = vunpack.c.h.b16 %v68
  %v99 = vunpack.c.l.b16 %v69
  %v100 = vunpack.c.h.b16 %v69
  %v101 = vunpack.c.l.b16 %v70
  %v102 = vunpack.c.h.b16 %v70
  %v103 = vunpack.c.l.b16 %v71
  %v104 = vunpack.c.h.b16 %v71
  %v105 = vunpack.c.l.b16 %v72
  %v106 = vunpack.c.h.b16 %v72
  %v107 = vunpack.c.l.b16 %v73
  %v108 = vunpack.c.h.b16 %v73
  %v109 = vunpack.c.l.b16 %v74
  %v110 = vunpack.c.h.b16 %v74
  %v111 = vpack.c.b16 %v97, %v95
  %v112 = vpack.c.b16 %v98, %v96
  %v113 = vpack.c.b16 %v101, %v99
  %v114 = vpack.c.b16 %v102, %v100
  %v115 = vpack.c.b16 %v105, %v103
  %v116 = vpack.c.b16 %v106, %v104
  %v117 = vpack.c.b16 %v109, %v107
  %v118 = vpack.c.b16 %v110, %v108
  %v128 = vsel %vm37, %v66, 0
  %130 = vmatprep.subr.bf16.mxu0 0
  %131 = vmatpush1.bf16.msra.mxu0 0
  %132 = vmatprep.subr.bf16.mxu0 0
  %133 = vmatpush1.bf16.msra.mxu0 0
  %134 = vmatprep.subr.bf16.mxu0 0
  %135 = vmatpush1.bf16.msra.mxu0 0
  %136 = vmatprep.subr.bf16.mxu0 0
  %137 = vmatpush1.bf16.msra.mxu0 0
  %138 = vmatprep.subr.bf16.mxu0 %v118
  %139 = vmatpush1.bf16.msra.mxu0 %v117
  %140 = vmatprep.subr.bf16.mxu0 %v116
  %141 = vmatpush1.bf16.msra.mxu0 %v115
  %142 = vmatprep.subr.bf16.mxu0 %v114
  %143 = vmatpush1.bf16.msra.mxu0 %v113
  %144 = vmatprep.subr.bf16.mxu0 %v112
  %145 = vmatpush1.bf16.msra.mxu0 %v111
  %146 = vmatprep.subr.bf16.mxu0 0
  %147 = vmatpush2.bf16.msra.mxu0 0
  %148 = vmatprep.subr.bf16.mxu0 0
  %149 = vmatpush2.bf16.msra.mxu0 0
  %150 = vmatprep.subr.bf16.mxu0 0
  %151 = vmatpush2.bf16.msra.mxu0 0
  %152 = vmatprep.subr.bf16.mxu0 0
  %153 = vmatpush2.bf16.msra.mxu0 0
  %154 = vmatprep.subr.bf16.mxu0 0
  %155 = vmatpush2.bf16.msra.mxu0 0
  %156 = vmatprep.subr.bf16.mxu0 0
  %157 = vmatpush2.bf16.msra.mxu0 0
  %158 = vmatprep.subr.bf16.mxu0 0
  %159 = vmatpush2.bf16.msra.mxu0 0
  %160 = vmatprep.subr.bf16.mxu0 0
  %161 = vmatpush2.bf16.msra.mxu0 0
  %162 = vmatprep.mubr.bf16.mxu0 0
  %163 = vmatmul.mubr.bf16.gmra.mxu0 %v128
  %v164 = vpop.f32.mrf.mxu0
  %v165 = vadd.f32 %v80, %v164
  %v166 = vpop.f32.mrf.mxu0
  %v167 = vadd.f32 %v84, %v166
  %v168 = vpop.f32.mrf.mxu0
  %v169 = vpop.f32.mrf.mxu0
  %170 = vdwg.mxu0
  %v171 = vmul.f32 %v165, 0.5
  %v172 = vmul.f32 %v167, 0.5
  %v173 = vmul.f32 %v165, 0.044715
  %v174 = vmul.f32 %v167, 0.044715
  %v175 = vmul.f32 %v173, %v165
  %v176 = vmul.f32 %v174, %v167
  %v177 = vmul.f32 %v175, %v165
  %v178 = vmul.f32 %v176, %v167
  %v179 = vadd.f32 %v165, %v177
  %v180 = vadd.f32 %v167, %v178
  %v181 = vmul.f32 %v179, 0.7978846
  %v182 = vmul.f32 %v180, 0.7978846
  %v183 = vtanh.pop %v181
  %v184 = vtanh.pop %v182
  %v185 = vadd.f32 %v183, 1.0
  %v186 = vadd.f32 %v184, 1.0
  %v187 = vmul.f32 %v171, %v185
  %v188 = vmul.f32 %v172, %v186
  %v189 = vpack.c.bf16 %v187, %v187
  %v190 = vpack.c.bf16 %v188, %v188
  %v191 = vld [vmem:[%s6] sm:$0xf]
  %v192 = vld [vmem:[%s6 + $0x4] sm:$0xf]
  %v193 = vld [vmem:[%s6 + $0x8] sm:$0xf]
  %v194 = vld [vmem:[%s6 + $0xc] sm:$0xf]
  %v195 = vld [vmem:[%s6 + $0x10] sm:$0xf]
  %v196 = vld [vmem:[%s6 + $0x14] sm:$0xf]
  %v197 = vld [vmem:[%s6 + $0x18] sm:$0xf]
  %v198 = vld [vmem:[%s6 + $0x1c] sm:$0xf]
  %v199 = vld [vmem:[%s6 + $0x20] sm:$0xf]
  %v200 = vld [vmem:[%s6 + $0x24] sm:$0xf]
  %v201 = vld [vmem:[%s6 + $0x28] sm:$0xf]
  %v202 = vld [vmem:[%s6 + $0x2c] sm:$0xf]
  %v203 = vld [vmem:[%s6 + $0x30] sm:$0xf]
  %v204 = vld [vmem:[%s6 + $0x34] sm:$0xf]
  %v205 = vld [vmem:[%s6 + $0x38] sm:$0xf]
  %v206 = vld [vmem:[%s6 + $0x3c] sm:$0xf]
  %v207 = vld [vmem:[%s6 + $0x40] sm:$0xf]
  %v208 = vld [vmem:[%s6 + $0x44] sm:$0xf]
  %v209 = vld [vmem:[%s6 + $0x48] sm:$0xf]
  %v210 = vld [vmem:[%s6 + $0x4c] sm:$0xf]
  %v211 = vld [vmem:[%s6 + $0x50] sm:$0xf]
  %v212 = vld [vmem:[%s6 + $0x54] sm:$0xf]
  %v213 = vld [vmem:[%s6 + $0x58] sm:$0xf]
  %v214 = vld [vmem:[%s6 + $0x5c] sm:$0xf]
  %v215 = vld [vmem:[%s6 + $0x60] sm:$0xf]
  %v216 = vld [vmem:[%s6 + $0x64] sm:$0xf]
  %v217 = vld [vmem:[%s6 + $0x68] sm:$0xf]
  %v218 = vld [vmem:[%s6 + $0x6c] sm:$0xf]
  %v219 = vld [vmem:[%s6 + $0x70] sm:$0xf]
  %v220 = vld [vmem:[%s6 + $0x74] sm:$0xf]
  %v221 = vld [vmem:[%s6 + $0x78] sm:$0xf]
  %v222 = vld [vmem:[%s6 + $0x7c] sm:$0xf]
  %v223 = vld [vmem:[%s7] sm:$0x1]
  %v225 = vlaneseq
  %v226 = vshrl.u32 %v225, 7
  %v227 = vsub.s32 0, %v226
  %v228 = vrot.slane %v223, %v227
  %v262 = vunpack.c.l.b16 %v191
  %v263 = vunpack.c.l.b16 %v192
  %v264 = vunpack.c.l.b16 %v193
  %v265 = vunpack.c.l.b16 %v194
  %v266 = vunpack.c.l.b16 %v195
  %v267 = vunpack.c.l.b16 %v196
  %v268 = vunpack.c.l.b16 %v197
  %v269 = vunpack.c.l.b16 %v198
  %v270 = vunpack.c.l.b16 %v199
  %v271 = vunpack.c.l.b16 %v200
  %v272 = vunpack.c.l.b16 %v201
  %v273 = vunpack.c.l.b16 %v202
  %v274 = vunpack.c.l.b16 %v203
  %v275 = vunpack.c.l.b16 %v204
  %v276 = vunpack.c.l.b16 %v205
  %v277 = vunpack.c.l.b16 %v206
  %v278 = vunpack.c.l.b16 %v207
  %v279 = vunpack.c.l.b16 %v208
  %v280 = vunpack.c.l.b16 %v209
  %v281 = vunpack.c.l.b16 %v210
  %v282 = vunpack.c.l.b16 %v211
  %v283 = vunpack.c.l.b16 %v212
  %v284 = vunpack.c.l.b16 %v213
  %v285 = vunpack.c.l.b16 %v214
  %v286 = vunpack.c.l.b16 %v215
  %v287 = vunpack.c.l.b16 %v216
  %v288 = vunpack.c.l.b16 %v217
  %v289 = vunpack.c.l.b16 %v218
  %v290 = vunpack.c.l.b16 %v219
  %v291 = vunpack.c.l.b16 %v220
  %v292 = vunpack.c.l.b16 %v221
  %v293 = vunpack.c.l.b16 %v222
  %v294 = vpack.c.b16 %v263, %v262
  %v295 = vpack.c.b16 %v265, %v264
  %v296 = vpack.c.b16 %v267, %v266
  %v297 = vpack.c.b16 %v269, %v268
  %v298 = vpack.c.b16 %v271, %v270
  %v299 = vpack.c.b16 %v273, %v272
  %v300 = vpack.c.b16 %v275, %v274
  %v301 = vpack.c.b16 %v277, %v276
  %v302 = vpack.c.b16 %v279, %v278
  %v303 = vpack.c.b16 %v281, %v280
  %v304 = vpack.c.b16 %v283, %v282
  %v305 = vpack.c.b16 %v285, %v284
  %v306 = vpack.c.b16 %v287, %v286
  %v307 = vpack.c.b16 %v289, %v288
  %v308 = vpack.c.b16 %v291, %v290
  %v309 = vpack.c.b16 %v293, %v292
  %326 = vmatprep.subr.bf16.mxu0 0
  %327 = vmatpush1.bf16.msra.mxu0 %v301
  %328 = vmatprep.subr.bf16.mxu0 0
  %329 = vmatpush1.bf16.msra.mxu0 %v300
  %330 = vmatprep.subr.bf16.mxu0 0
  %331 = vmatpush1.bf16.msra.mxu0 %v299
  %332 = vmatprep.subr.bf16.mxu0 0
  %333 = vmatpush1.bf16.msra.mxu0 %v298
  %334 = vmatprep.subr.bf16.mxu0 0
  %335 = vmatpush1.bf16.msra.mxu0 %v297
  %336 = vmatprep.subr.bf16.mxu0 0
  %337 = vmatpush1.bf16.msra.mxu0 %v296
  %338 = vmatprep.subr.bf16.mxu0 0
  %339 = vmatpush1.bf16.msra.mxu0 %v295
  %340 = vmatprep.subr.bf16.mxu0 0
  %341 = vmatpush1.bf16.msra.mxu0 %v294
  %342 = vmatprep.subr.bf16.mxu0 0
  %343 = vmatpush2.bf16.msra.mxu0 %v309
  %344 = vmatprep.subr.bf16.mxu0 0
  %345 = vmatpush2.bf16.msra.mxu0 %v308
  %346 = vmatprep.subr.bf16.mxu0 0
  %347 = vmatpush2.bf16.msra.mxu0 %v307
  %348 = vmatprep.subr.bf16.mxu0 0
  %349 = vmatpush2.bf16.msra.mxu0 %v306
  %350 = vmatprep.subr.bf16.mxu0 0
  %351 = vmatpush2.bf16.msra.mxu0 %v305
  %352 = vmatprep.subr.bf16.mxu0 0
  %353 = vmatpush2.bf16.msra.mxu0 %v304
  %354 = vmatprep.subr.bf16.mxu0 0
  %355 = vmatpush2.bf16.msra.mxu0 %v303
  %356 = vmatprep.subr.bf16.mxu0 0
  %357 = vmatpush2.bf16.msra.mxu0 %v302
  %358 = vmatprep.mubr.bf16.mxu0 %v190
  %359 = vmatmul.mubr.bf16.gmra.mxu0 %v189
  %v360 = vpop.f32.mrf.mxu0
  %v361 = vadd.f32 %v228, %v360
  %v362 = vpop.f32.mrf.mxu0
  %v363 = vpop.f32.mrf.mxu0
  %v364 = vpop.f32.mrf.mxu0
  %365 = vdwg.mxu0
  %v366 = vadd.f32 %v34, %v361
  %v367 = vpack.c.bf16 %v366, %v366
  %vm368 = vcmask 519168
  %369 = vst.msk [vmem:[%s8] sm:$0xf] %vm368, %v367
  // Predicated region
  $region34: #{_lambda_.40} parent=0 // pred_check
    _
  $region35: #{_lambda_.40} parent=0 // pred_check_branch
    %371 = sbr.rel (0) target = $region37
  $region36: #{_lambda_.40} parent=0 // pred_region
    _
  $region37: #{_lambda_.40} parent=0 // pred_fallthru
    _
  // Predicated region
  $region38: #{_lambda_.40} parent=0 // pred_check
    _
  $region39: #{_lambda_.40} parent=0 // pred_check_branch
    %373 = sbr.rel (0) target = $region41
  $region40: #{_lambda_.40} parent=0 // pred_region
    _
  $region41: #{_lambda_.40} parent=0 // pred_fallthru
    _

</llo_original>
